<compile_context>
chip_gen: v5e
topology: v5e:2x2
jax: 0.10.0
libtpu: 0.0.40
codegen_flags: <defaults>
</compile_context>

<pallas_src>
import functools

import jax
import jax.numpy as jnp
from jax.experimental import pallas as pl
from jax.experimental.pallas import tpu as pltpu


# ----------------------------------------------------------------------------
# Banded-weight construction (plain JAX, tiny)
# ----------------------------------------------------------------------------
def make_band_weights(w, W, *, pad_output):
    """Turn a (3,3,Cin,Cout) conv weight into 3 banded matrices so that a 3x3
    'same' conv becomes   out = sum_ky  Xpad[ky:ky+H, :] @ band[ky]
    on the row-flattened layout  Xpad[r, p*Cin + c] = x_padded[r, p, c].

    band[ky] : ((W+2)*Cin, Lout),
      Lout = (W+2)*Cout  (output already in padded-column layout, pad cols = 0)
             if pad_output else W*Cout.
    """
    kh, kw, Cin, Cout = w.shape
    Wp = W + kw - 1
    p = jnp.arange(Wp)
    kx = jnp.arange(kw)
    if pad_output:
        q = jnp.arange(Wp)                     # output column (padded coords)
        ws = q - 1                             # spatial output column
        valid = (q >= 1) & (q <= W)
        sel = (p[None, :, None] == ws[None, None, :] + kx[:, None, None]) \
            & valid[None, None, :]
    else:
        ws = jnp.arange(W)
        sel = p[None, :, None] == ws[None, None, :] + kx[:, None, None]
    sel = sel.astype(w.dtype)                  # (kw, Wp, Q)
    band = jnp.einsum("xpq,yxcd->ypcqd", sel, w)   # (kh, Wp, Cin, Q, Cout)
    return band.reshape(kh, Wp * Cin, sel.shape[-1] * Cout)


def make_band_bias(b, W, *, pad_output):
    Cout = b.shape[0]
    bw = jnp.tile(b, W)
    if pad_output:
        z = jnp.zeros((Cout,), b.dtype)
        bw = jnp.concatenate([z, bw, z])
    return bw[None, :]                         # (1, Lout)


# ----------------------------------------------------------------------------
# Pallas kernels
# ----------------------------------------------------------------------------
def _conv3x3_kernel(*refs, H, relu, pad_out, has_res):
    """3x3 conv as 3 MXU matmuls over the row-flattened padded layout."""
    if has_res:
        xp_ref, w_ref, b_ref, res_ref, o_ref = refs
    else:
        xp_ref, w_ref, b_ref, o_ref = refs
        res_ref = None
    f32 = jnp.float32
    acc = jnp.dot(xp_ref[0, 0:H, :], w_ref[0], preferred_element_type=f32)
    acc = acc + jnp.dot(xp_ref[0, 1:H + 1, :], w_ref[1], preferred_element_type=f32)
    acc = acc + jnp.dot(xp_ref[0, 2:H + 2, :], w_ref[2], preferred_element_type=f32)
    acc = acc + b_ref[...].astype(f32)
    if relu:
        acc = jnp.maximum(acc, 0.0)
    if has_res:                                    # fused residual epilogue
        acc = acc + res_ref[0].astype(f32)
    out = acc.astype(o_ref.dtype)
    if pad_out:
        # output stays in padded layout for the next conv (border rows = 0,
        # border columns are already 0 because the band weights produce them).
        o_ref[...] = jnp.zeros_like(o_ref)
        o_ref[0, 1:H + 1, :] = out
    else:
        o_ref[0] = out


def _resblock_kernel(*refs, H, has_extra):
    """Fused ResBlock: conv3x3+ReLU -> conv3x3 -> + skip (+ optional extra
    residual).  The padded intermediate activation lives only in VMEM."""
    if has_extra:
        xp_ref, w1_ref, b1_ref, w2_ref, b2_ref, xres_ref, o_ref, hp_ref = refs
    else:
        xp_ref, w1_ref, b1_ref, w2_ref, b2_ref, o_ref, hp_ref = refs
        xres_ref = None
    f32 = jnp.float32

    # conv1 + ReLU (output already in padded-column layout)
    h = jnp.dot(xp_ref[0, 0:H, :], w1_ref[0], preferred_element_type=f32)
    h = h + jnp.dot(xp_ref[0, 1:H + 1, :], w1_ref[1], preferred_element_type=f32)
    h = h + jnp.dot(xp_ref[0, 2:H + 2, :], w1_ref[2], preferred_element_type=f32)
    h = jnp.maximum(h + b1_ref[...].astype(f32), 0.0)

    # stage the zero-padded intermediate in VMEM scratch (no HBM round trip)
    hp_ref[...] = jnp.zeros_like(hp_ref)
    hp_ref[1:H + 1, :] = h

    # conv2
    acc = jnp.dot(hp_ref[0:H, :], w2_ref[0], preferred_element_type=f32)
    acc = acc + jnp.dot(hp_ref[1:H + 1, :], w2_ref[1], preferred_element_type=f32)
    acc = acc + jnp.dot(hp_ref[2:H + 2, :], w2_ref[2], preferred_element_type=f32)
    acc = acc + b2_ref[...].astype(f32)

    # ResBlock skip (+ fused outer residual)
    acc = acc + xp_ref[0, 1:H + 1, :].astype(f32)
    if has_extra:
        acc = acc + xres_ref[0, 1:H + 1, :].astype(f32)

    o_ref[...] = jnp.zeros_like(o_ref)
    o_ref[0, 1:H + 1, :] = acc.astype(o_ref.dtype)


# ----------------------------------------------------------------------------
# pallas_call wrappers
# ----------------------------------------------------------------------------
def _grid_spec(N, in_specs, out_spec, scratch_shapes=()):
    return pltpu.PrefetchScalarGridSpec(
        num_scalar_prefetch=0,
        grid=(N,),
        in_specs=in_specs,
        out_specs=out_spec,
        scratch_shapes=list(scratch_shapes))


def conv3x3(xp_flat, w, b, *, relu=False, pad_out=True, residual=None):
    """3x3 'same' conv on the row-flattened padded layout.

    xp_flat : (N, H+2, (W+2)*Cin)   zero-padded input
    w, b    : (3, 3, Cin, Cout), (Cout,)
    residual: optional (N, H, W*Cout), only with pad_out=False (fused add)
    returns (N, H+2, (W+2)*Cout) if pad_out else (N, H, W*Cout)
    """
    N, Hp, Lin = xp_flat.shape
    H = Hp - 2
    Cin, Cout = w.shape[2], w.shape[3]
    Wp = Lin // Cin
    W = Wp - 2
    assert Wp * Cin == Lin, (Wp, Cin, Lin)

    wband = make_band_weights(w, W, pad_output=pad_out)
    bband = make_band_bias(b, W, pad_output=pad_out)
    Lout = wband.shape[-1]

    if pad_out:
        out_struct = jax.ShapeDtypeStruct((N, Hp, Lout), xp_flat.dtype)
        out_spec = pl.BlockSpec((1, Hp, Lout), lambda n: (n, 0, 0))
    else:
        out_struct = jax.ShapeDtypeStruct((N, H, Lout), xp_flat.dtype)
        out_spec = pl.BlockSpec((1, H, Lout), lambda n: (n, 0, 0))

    inputs = [xp_flat, wband, bband]
    in_specs = [
        pl.BlockSpec((1, Hp, Lin), lambda n: (n, 0, 0)),
        pl.BlockSpec((3, Wp * Cin, Lout), lambda n: (0, 0, 0)),
        pl.BlockSpec((1, Lout), lambda n: (0, 0)),
    ]
    has_res = residual is not None
    if has_res:
        assert not pad_out
        assert residual.shape == (N, H, Lout), residual.shape
        inputs.append(residual)
        in_specs.append(pl.BlockSpec((1, H, Lout), lambda n: (n, 0, 0)))

    kernel = functools.partial(_conv3x3_kernel, H=H, relu=relu,
                               pad_out=pad_out, has_res=has_res)
    return pl.pallas_call(
        kernel,
        out_shape=out_struct,
        grid_spec=_grid_spec(N, in_specs, out_spec),
        compiler_params=pltpu.CompilerParams(
            dimension_semantics=("parallel",)),
    )(*inputs)


def resblock(xp_flat, p, *, extra_residual=None):
    """Fused ResBlock on the padded layout: returns padded output of same shape."""
    N, Hp, L = xp_flat.shape
    H = Hp - 2
    C = p["w1"].shape[2]
    Wp = L // C
    W = Wp - 2
    assert Wp * C == L, (Wp, C, L)

    w1b = make_band_weights(p["w1"], W, pad_output=True)
    b1b = make_band_bias(p["b1"], W, pad_output=True)
    w2b = make_band_weights(p["w2"], W, pad_output=True)
    b2b = make_band_bias(p["b2"], W, pad_output=True)

    inputs = [xp_flat, w1b, b1b, w2b, b2b]
    in_specs = [
        pl.BlockSpec((1, Hp, L), lambda n: (n, 0, 0)),
        pl.BlockSpec((3, L, L), lambda n: (0, 0, 0)),
        pl.BlockSpec((1, L), lambda n: (0, 0)),
        pl.BlockSpec((3, L, L), lambda n: (0, 0, 0)),
        pl.BlockSpec((1, L), lambda n: (0, 0)),
    ]
    has_extra = extra_residual is not None
    if has_extra:
        assert extra_residual.shape == xp_flat.shape
        inputs.append(extra_residual)
        in_specs.append(pl.BlockSpec((1, Hp, L), lambda n: (n, 0, 0)))

    kernel = functools.partial(_resblock_kernel, H=H, has_extra=has_extra)
    out_spec = pl.BlockSpec((1, Hp, L), lambda n: (n, 0, 0))
    return pl.pallas_call(
        kernel,
        out_shape=jax.ShapeDtypeStruct((N, Hp, L), xp_flat.dtype),
        grid_spec=_grid_spec(N, in_specs, out_spec,
                             scratch_shapes=[pltpu.VMEM((Hp, L), jnp.float32)]),
        compiler_params=pltpu.CompilerParams(
            dimension_semantics=("parallel",)),
    )(*inputs)


# ----------------------------------------------------------------------------
# Plain-JAX glue (layout, padding, pixel shuffle)
# ----------------------------------------------------------------------------
def pad_flatten(x_nhwc):
    """(N, H, W, C) -> (N, H+2, (W+2)*C) zero-padded, row-flattened."""
    N, H, W, C = x_nhwc.shape
    xp = jnp.pad(x_nhwc, ((0, 0), (1, 1), (1, 1), (0, 0)))
    return xp.reshape(N, H + 2, (W + 2) * C)


def unflatten_padded(xp_flat, C):
    """(N, H+2, (W+2)*C) -> interior (N, H, W, C)."""
    N, Hp, L = xp_flat.shape
    Wp = L // C
    x = xp_flat.reshape(N, Hp, Wp, C)
    return x[:, 1:Hp - 1, 1:Wp - 1, :]


def pixel_shuffle_nhwc(x, r):
    # matches torch.nn.PixelShuffle: in-channel index = c*r*r + i*r + j
    N, H, W, C = x.shape
    c = C // (r * r)
    x = x.reshape(N, H, W, c, r, r)
    x = jnp.transpose(x, (0, 1, 4, 2, 5, 3))
    return x.reshape(N, H * r, W * r, c)


# ----------------------------------------------------------------------------
# Full forward pass (11 pallas_calls, residual adds fused into epilogues)
# ----------------------------------------------------------------------------
def usr_forward(x_nchw, params, *, scale=2):
    N, n_colors, H, W = x_nchw.shape
    nf = params["head"]["w"].shape[-1]
    x = jnp.transpose(x_nchw, (0, 2, 3, 1))            # NCHW -> NHWC

    # head conv
    x0p = conv3x3(pad_flatten(x), params["head"]["w"], params["head"]["b"],
                  pad_out=True)                         # (N, H+2, (W+2)*nf)

    # x = x + resblocks(x)  (outer skip fused into the 2nd resblock)
    r1p = resblock(x0p, params["resblocks"][0])
    r2p = resblock(r1p, params["resblocks"][1], extra_residual=x0p)

    # upsample: conv(nf -> 4*nf) + PixelShuffle(2) + conv(nf -> n_colors)
    u = conv3x3(r2p, params["up"]["w"], params["up"]["b"], pad_out=False)
    u = u.reshape(N, H, W, scale * scale * nf)
    u = pixel_shuffle_nhwc(u, scale)                    # (N, 2H, 2W, nf)
    H2, W2 = H * scale, W * scale
    xsr_p = conv3x3(pad_flatten(u), params["up_tail"]["w"],
                    params["up_tail"]["b"], pad_out=True)
    xsr = unflatten_padded(xsr_p, n_colors)             # (N, H2, W2, nc)

    # y = x + vdsr(x)  (residual fused into the tail conv's epilogue)
    v = conv3x3(xsr_p, params["vdsr_head"]["w"], params["vdsr_head"]["b"],
                pad_out=True)
    for rb in params["vdsr_blocks"]:
        v = resblock(v, rb)
    y = conv3x3(v, params["vdsr_tail"]["w"], params["vdsr_tail"]["b"],
                pad_out=False,
                residual=xsr.reshape(N, H2, W2 * n_colors))
    y = y.reshape(N, H2, W2, n_colors)

    return (jnp.transpose(xsr, (0, 3, 1, 2)),           # back to NCHW
            jnp.transpose(y, (0, 3, 1, 2)))


# ----------------------------------------------------------------------------
# Plain-XLA reference (for a numerical cross-check)
# ----------------------------------------------------------------------------
def _conv_ref(x, w, b):
    y = jax.lax.conv_general_dilated(
        x, w, window_strides=(1, 1), padding="SAME",
        dimension_numbers=("NHWC", "HWIO", "NHWC"),
        precision=jax.lax.Precision.HIGHEST)
    return y + b


def _resblock_ref(x, p):
    h = jnp.maximum(_conv_ref(x, p["w1"], p["b1"]), 0.0)
    return x + _conv_ref(h, p["w2"], p["b2"])


def usr_forward_ref(x_nchw, params, *, scale=2):
    x = jnp.transpose(x_nchw, (0, 2, 3, 1))
    x = _conv_ref(x, params["head"]["w"], params["head"]["b"])
    r = x
    for rb in params["resblocks"]:
        r = _resblock_ref(r, rb)
    x = x + r
    x = _conv_ref(x, params["up"]["w"], params["up"]["b"])
    x = pixel_shuffle_nhwc(x, scale)
    x = _conv_ref(x, params["up_tail"]["w"], params["up_tail"]["b"])
    v = _conv_ref(x, params["vdsr_head"]["w"], params["vdsr_head"]["b"])
    for rb in params["vdsr_blocks"]:
        v = _resblock_ref(v, rb)
    v = _conv_ref(v, params["vdsr_tail"]["w"], params["vdsr_tail"]["b"])
    y = x + v
    return jnp.transpose(x, (0, 3, 1, 2)), jnp.transpose(y, (0, 3, 1, 2))


# ----------------------------------------------------------------------------
# Deterministic parameter init (synthetic weights, no checkpoint)
# ----------------------------------------------------------------------------
def _init_conv(key, cin, cout, k=3):
    kw, kb = jax.random.split(key)
    fan_in = cin * k * k
    w = jax.random.normal(kw, (k, k, cin, cout), jnp.float32) / jnp.sqrt(fan_in)
    b = jax.random.normal(kb, (cout,), jnp.float32) * 0.01
    return {"w": w, "b": b}


def _init_resblock(key, nf):
    k1, k2 = jax.random.split(key)
    c1 = _init_conv(k1, nf, nf)
    c2 = _init_conv(k2, nf, nf)
    return {"w1": c1["w"], "b1": c1["b"], "w2": c2["w"], "b2": c2["b"]}


def init_params(key, scale, depth, n_colors, n_feats):
    keys = jax.random.split(key, 8 + 2 + depth)
    return {
        "head": _init_conv(keys[0], n_colors, n_feats),
        "resblocks": [_init_resblock(keys[1], n_feats),
                      _init_resblock(keys[2], n_feats)],
        "up": _init_conv(keys[3], n_feats, n_feats * scale * scale),
        "up_tail": _init_conv(keys[4], n_feats, n_colors),
        "vdsr_head": _init_conv(keys[5], n_colors, n_feats),
        "vdsr_blocks": [_init_resblock(keys[6 + i], n_feats)
                        for i in range(depth)],
        "vdsr_tail": _init_conv(keys[6 + depth], n_feats, n_colors),
    }


# ----------------------------------------------------------------------------
if __name__ == "__main__":
    key = jax.random.PRNGKey(0)

    # small config consistent with the module (scale=2, depth=4, n_colors=3)
    N, n_colors, H, W = 2, 3, 8, 8
    n_feats, scale, depth = 16, 2, 4

    params = init_params(key, scale, depth, n_colors, n_feats)
    x = jax.random.normal(jax.random.fold_in(key, 1234),
                          (N, n_colors, H, W), jnp.float32)

    fwd = jax.jit(functools.partial(usr_forward, scale=scale))
    x_sr, y_sr = fwd(x, params)
    jax.block_until_ready((x_sr, y_sr))

    assert x_sr.shape == (N, n_colors, H * scale, W * scale), x_sr.shape
    assert y_sr.shape == (N, n_colors, H * scale, W * scale), y_sr.shape
    assert x_sr.dtype == jnp.float32 and y_sr.dtype == jnp.float32

    # numerical cross-check against a plain-XLA reference of the same forward
    x_ref, y_ref = jax.jit(functools.partial(usr_forward_ref, scale=scale))(x, params)
    assert jnp.allclose(x_sr, x_ref, atol=5e-2, rtol=5e-2), \
        float(jnp.max(jnp.abs(x_sr - x_ref)))
    assert jnp.allclose(y_sr, y_ref, atol=5e-2, rtol=5e-2), \
        float(jnp.max(jnp.abs(y_sr - y_ref)))

    print("KERNEL_OK")
</pallas_src>

<mosaic_0001>
module attributes {stable_mosaic.version = 11 : i64} {
  func.func @_conv3x3_kernel(%arg0: i32, %arg1: memref<1x10x30xf32, #tpu.memory_space<vmem>>, %arg2: memref<3x30x160xf32, #tpu.memory_space<vmem>>, %arg3: memref<1x160xf32, #tpu.memory_space<vmem>>, %arg4: memref<1x10x160xf32, #tpu.memory_space<vmem>>) attributes {dimension_semantics = [#tpu.dimension_semantics<parallel>], iteration_bounds = array<i64: 2>, scalar_prefetch = 0 : i64, scratch_operands = 0 : i64, tpu.core_type = #tpu.core_type<tc>, window_params = [{transform_indices = @transform_0, window_bounds = array<i64: 1, 10, 30>}, {pipeline_mode = #tpu.pipeline_mode<synchronous>, transform_indices = @transform_1, window_bounds = array<i64: 3, 30, 160>}, {pipeline_mode = #tpu.pipeline_mode<synchronous>, transform_indices = @transform_2, window_bounds = array<i64: 1, 160>}, {transform_indices = @transform_3, window_bounds = array<i64: 1, 10, 160>}]} {
    %c0 = arith.constant 0 : index
    %c0_0 = arith.constant 0 : index
    %c0_1 = arith.constant 0 : index
    %0 = vector.load %arg1[%c0, %c0_0, %c0_1] : memref<1x10x30xf32, #tpu.memory_space<vmem>>, vector<1x8x30xf32>
    %1 = vector.shape_cast %0 : vector<1x8x30xf32> to vector<8x30xf32>
    %c0_2 = arith.constant 0 : index
    %c0_3 = arith.constant 0 : index
    %c0_4 = arith.constant 0 : index
    %2 = vector.load %arg2[%c0_2, %c0_3, %c0_4] : memref<3x30x160xf32, #tpu.memory_space<vmem>>, vector<1x30x160xf32>
    %3 = vector.shape_cast %2 : vector<1x30x160xf32> to vector<30x160xf32>
    %cst = arith.constant dense<0.000000e+00> : vector<8x160xf32>
    %4 = tpu.matmul %1, %3, %cst {dimension_numbers = #tpu.dot_dimension_numbers<[1], [0], [0], [1], [0, 0, 1, 1], [], []>} : vector<8x30xf32>, vector<30x160xf32>, vector<8x160xf32> -> vector<8x160xf32>
    %c0_5 = arith.constant 0 : index
    %c1 = arith.constant 1 : index
    %c0_6 = arith.constant 0 : index
    %5 = vector.load %arg1[%c0_5, %c1, %c0_6] : memref<1x10x30xf32, #tpu.memory_space<vmem>>, vector<1x8x30xf32>
    %6 = vector.shape_cast %5 : vector<1x8x30xf32> to vector<8x30xf32>
    %c1_7 = arith.constant 1 : index
    %c0_8 = arith.constant 0 : index
    %c0_9 = arith.constant 0 : index
    %7 = vector.load %arg2[%c1_7, %c0_8, %c0_9] : memref<3x30x160xf32, #tpu.memory_space<vmem>>, vector<1x30x160xf32>
    %8 = vector.shape_cast %7 : vector<1x30x160xf32> to vector<30x160xf32>
    %cst_10 = arith.constant dense<0.000000e+00> : vector<8x160xf32>
    %9 = tpu.matmul %6, %8, %cst_10 {dimension_numbers = #tpu.dot_dimension_numbers<[1], [0], [0], [1], [0, 0, 1, 1], [], []>} : vector<8x30xf32>, vector<30x160xf32>, vector<8x160xf32> -> vector<8x160xf32>
    %10 = arith.addf %4, %9 : vector<8x160xf32>
    %c0_11 = arith.constant 0 : index
    %c2 = arith.constant 2 : index
    %c0_12 = arith.constant 0 : index
    %11 = vector.load %arg1[%c0_11, %c2, %c0_12] : memref<1x10x30xf32, #tpu.memory_space<vmem>>, vector<1x8x30xf32>
    %12 = vector.shape_cast %11 : vector<1x8x30xf32> to vector<8x30xf32>
    %c2_13 = arith.constant 2 : index
    %c0_14 = arith.constant 0 : index
    %c0_15 = arith.constant 0 : index
    %13 = vector.load %arg2[%c2_13, %c0_14, %c0_15] : memref<3x30x160xf32, #tpu.memory_space<vmem>>, vector<1x30x160xf32>
    %14 = vector.shape_cast %13 : vector<1x30x160xf32> to vector<30x160xf32>
    %cst_16 = arith.constant dense<0.000000e+00> : vector<8x160xf32>
    %15 = tpu.matmul %12, %14, %cst_16 {dimension_numbers = #tpu.dot_dimension_numbers<[1], [0], [0], [1], [0, 0, 1, 1], [], []>} : vector<8x30xf32>, vector<30x160xf32>, vector<8x160xf32> -> vector<8x160xf32>
    %16 = arith.addf %10, %15 : vector<8x160xf32>
    %c0_17 = arith.constant 0 : index
    %c0_18 = arith.constant 0 : index
    %17 = vector.load %arg3[%c0_17, %c0_18] : memref<1x160xf32, #tpu.memory_space<vmem>>, vector<1x160xf32>
    %18 = vector.broadcast %17 : vector<1x160xf32> to vector<8x160xf32>
    %19 = arith.addf %16, %18 : vector<8x160xf32>
    %cst_19 = arith.constant 0.000000e+00 : f32
    %20 = vector.broadcast %cst_19 : f32 to vector<1x10x160xf32>
    %c0_20 = arith.constant 0 : index
    %c0_21 = arith.constant 0 : index
    %c0_22 = arith.constant 0 : index
    %21 = vector.load %arg4[%c0_20, %c0_21, %c0_22] : memref<1x10x160xf32, #tpu.memory_space<vmem>>, vector<1x10x160xf32>
    tpu.vector_store %arg4[%c0_20, %c0_21, %c0_22], %20 {strides = array<i32>} : memref<1x10x160xf32, #tpu.memory_space<vmem>>, vector<1x10x160xf32>,
    %c0_23 = arith.constant 0 : index
    %c1_24 = arith.constant 1 : index
    %c0_25 = arith.constant 0 : index
    %22 = vector.load %arg4[%c0_23, %c1_24, %c0_25] : memref<1x10x160xf32, #tpu.memory_space<vmem>>, vector<1x8x160xf32>
    %23 = vector.shape_cast %22 : vector<1x8x160xf32> to vector<8x160xf32>
    %24 = vector.shape_cast %19 : vector<8x160xf32> to vector<1x8x160xf32>
    tpu.vector_store %arg4[%c0_23, %c1_24, %c0_25], %24 {strides = array<i32>} : memref<1x10x160xf32, #tpu.memory_space<vmem>>, vector<1x8x160xf32>,
    return
  }
  func.func @transform_0(%arg0: i32) -> (i32, i32, i32) {
    %c0_i32 = arith.constant 0 : i32
    %c0_i32_0 = arith.constant 0 : i32
    %c0_i32_1 = arith.constant 0 : i32
    return %arg0, %c0_i32, %c0_i32_0 : i32, i32, i32
  }
  func.func @transform_1(%arg0: i32) -> (i32, i32, i32) {
    %c0_i32 = arith.constant 0 : i32
    %c0_i32_0 = arith.constant 0 : i32
    %c0_i32_1 = arith.constant 0 : i32
    %c0_i32_2 = arith.constant 0 : i32
    return %c0_i32, %c0_i32_0, %c0_i32_1 : i32, i32, i32
  }
  func.func @transform_2(%arg0: i32) -> (i32, i32) {
    %c0_i32 = arith.constant 0 : i32
    %c0_i32_0 = arith.constant 0 : i32
    %c0_i32_1 = arith.constant 0 : i32
    return %c0_i32, %c0_i32_0 : i32, i32
  }
  func.func @transform_3(%arg0: i32) -> (i32, i32, i32) {
    %c0_i32 = arith.constant 0 : i32
    %c0_i32_0 = arith.constant 0 : i32
    %c0_i32_1 = arith.constant 0 : i32
    return %arg0, %c0_i32, %c0_i32_0 : i32, i32, i32
  }
}

module attributes {stable_mosaic.version = 11 : i64} {
  func.func @_resblock_kernel(%arg0: i32, %arg1: memref<1x10x160xf32, #tpu.memory_space<vmem>>, %arg2: memref<3x160x160xf32, #tpu.memory_space<vmem>>, %arg3: memref<1x160xf32, #tpu.memory_space<vmem>>, %arg4: memref<3x160x160xf32, #tpu.memory_space<vmem>>, %arg5: memref<1x160xf32, #tpu.memory_space<vmem>>, %arg6: memref<1x10x160xf32, #tpu.memory_space<vmem>>, %arg7: memref<10x160xf32, #tpu.memory_space<vmem>>) attributes {dimension_semantics = [#tpu.dimension_semantics<parallel>], iteration_bounds = array<i64: 2>, scalar_prefetch = 0 : i64, scratch_operands = 1 : i64, tpu.core_type = #tpu.core_type<tc>, window_params = [{transform_indices = @transform_0, window_bounds = array<i64: 1, 10, 160>}, {pipeline_mode = #tpu.pipeline_mode<synchronous>, transform_indices = @transform_1, window_bounds = array<i64: 3, 160, 160>}, {pipeline_mode = #tpu.pipeline_mode<synchronous>, transform_indices = @transform_2, window_bounds = array<i64: 1, 160>}, {pipeline_mode = #tpu.pipeline_mode<synchronous>, transform_indices = @transform_3, window_bounds = array<i64: 3, 160, 160>}, {pipeline_mode = #tpu.pipeline_mode<synchronous>, transform_indices = @transform_4, window_bounds = array<i64: 1, 160>}, {transform_indices = @transform_5, window_bounds = array<i64: 1, 10, 160>}]} {
    %c0 = arith.constant 0 : index
    %c0_0 = arith.constant 0 : index
    %c0_1 = arith.constant 0 : index
    %0 = vector.load %arg1[%c0, %c0_0, %c0_1] : memref<1x10x160xf32, #tpu.memory_space<vmem>>, vector<1x8x160xf32>
    %1 = vector.shape_cast %0 : vector<1x8x160xf32> to vector<8x160xf32>
    %c0_2 = arith.constant 0 : index
    %c0_3 = arith.constant 0 : index
    %c0_4 = arith.constant 0 : index
    %2 = vector.load %arg2[%c0_2, %c0_3, %c0_4] : memref<3x160x160xf32, #tpu.memory_space<vmem>>, vector<1x160x160xf32>
    %3 = vector.shape_cast %2 : vector<1x160x160xf32> to vector<160x160xf32>
    %cst = arith.constant dense<0.000000e+00> : vector<8x160xf32>
    %4 = tpu.matmul %1, %3, %cst {dimension_numbers = #tpu.dot_dimension_numbers<[1], [0], [0], [1], [0, 0, 1, 1], [], []>} : vector<8x160xf32>, vector<160x160xf32>, vector<8x160xf32> -> vector<8x160xf32>
    %c0_5 = arith.constant 0 : index
    %c1 = arith.constant 1 : index
    %c0_6 = arith.constant 0 : index
    %5 = vector.load %arg1[%c0_5, %c1, %c0_6] : memref<1x10x160xf32, #tpu.memory_space<vmem>>, vector<1x8x160xf32>
    %6 = vector.shape_cast %5 : vector<1x8x160xf32> to vector<8x160xf32>
    %c1_7 = arith.constant 1 : index
    %c0_8 = arith.constant 0 : index
    %c0_9 = arith.constant 0 : index
    %7 = vector.load %arg2[%c1_7, %c0_8, %c0_9] : memref<3x160x160xf32, #tpu.memory_space<vmem>>, vector<1x160x160xf32>
    %8 = vector.shape_cast %7 : vector<1x160x160xf32> to vector<160x160xf32>
    %cst_10 = arith.constant dense<0.000000e+00> : vector<8x160xf32>
    %9 = tpu.matmul %6, %8, %cst_10 {dimension_numbers = #tpu.dot_dimension_numbers<[1], [0], [0], [1], [0, 0, 1, 1], [], []>} : vector<8x160xf32>, vector<160x160xf32>, vector<8x160xf32> -> vector<8x160xf32>
    %10 = arith.addf %4, %9 : vector<8x160xf32>
    %c0_11 = arith.constant 0 : index
    %c2 = arith.constant 2 : index
    %c0_12 = arith.constant 0 : index
    %11 = vector.load %arg1[%c0_11, %c2, %c0_12] : memref<1x10x160xf32, #tpu.memory_space<vmem>>, vector<1x8x160xf32>
    %12 = vector.shape_cast %11 : vector<1x8x160xf32> to vector<8x160xf32>
    %c2_13 = arith.constant 2 : index
    %c0_14 = arith.constant 0 : index
    %c0_15 = arith.constant 0 : index
    %13 = vector.load %arg2[%c2_13, %c0_14, %c0_15] : memref<3x160x160xf32, #tpu.memory_space<vmem>>, vector<1x160x160xf32>
    %14 = vector.shape_cast %13 : vector<1x160x160xf32> to vector<160x160xf32>
    %cst_16 = arith.constant dense<0.000000e+00> : vector<8x160xf32>
    %15 = tpu.matmul %12, %14, %cst_16 {dimension_numbers = #tpu.dot_dimension_numbers<[1], [0], [0], [1], [0, 0, 1, 1], [], []>} : vector<8x160xf32>, vector<160x160xf32>, vector<8x160xf32> -> vector<8x160xf32>
    %16 = arith.addf %10, %15 : vector<8x160xf32>
    %c0_17 = arith.constant 0 : index
    %c0_18 = arith.constant 0 : index
    %17 = vector.load %arg3[%c0_17, %c0_18] : memref<1x160xf32, #tpu.memory_space<vmem>>, vector<1x160xf32>
    %18 = vector.broadcast %17 : vector<1x160xf32> to vector<8x160xf32>
    %19 = arith.addf %16, %18 : vector<8x160xf32>
    %cst_19 = arith.constant 0.000000e+00 : f32
    %20 = vector.broadcast %cst_19 : f32 to vector<8x160xf32>
    %21 = arith.maximumf %19, %20 : vector<8x160xf32>
    %cst_20 = arith.constant 0.000000e+00 : f32
    %22 = vector.broadcast %cst_20 : f32 to vector<10x160xf32>
    %c0_21 = arith.constant 0 : index
    %c0_22 = arith.constant 0 : index
    %23 = vector.load %arg7[%c0_21, %c0_22] : memref<10x160xf32, #tpu.memory_space<vmem>>, vector<10x160xf32>
    tpu.vector_store %arg7[%c0_21, %c0_22], %22 {strides = array<i32>} : memref<10x160xf32, #tpu.memory_space<vmem>>, vector<10x160xf32>,
    %c1_23 = arith.constant 1 : index
    %c0_24 = arith.constant 0 : index
    %24 = vector.load %arg7[%c1_23, %c0_24] : memref<10x160xf32, #tpu.memory_space<vmem>>, vector<8x160xf32>
    tpu.vector_store %arg7[%c1_23, %c0_24], %21 {strides = array<i32>} : memref<10x160xf32, #tpu.memory_space<vmem>>, vector<8x160xf32>,
    %c0_25 = arith.constant 0 : index
    %c0_26 = arith.constant 0 : index
    %25 = vector.load %arg7[%c0_25, %c0_26] : memref<10x160xf32, #tpu.memory_space<vmem>>, vector<8x160xf32>
    %c0_27 = arith.constant 0 : index
    %c0_28 = arith.constant 0 : index
    %c0_29 = arith.constant 0 : index
    %26 = vector.load %arg4[%c0_27, %c0_28, %c0_29] : memref<3x160x160xf32, #tpu.memory_space<vmem>>, vector<1x160x160xf32>
    %27 = vector.shape_cast %26 : vector<1x160x160xf32> to vector<160x160xf32>
    %cst_30 = arith.constant dense<0.000000e+00> : vector<8x160xf32>
    %28 = tpu.matmul %25, %27, %cst_30 {dimension_numbers = #tpu.dot_dimension_numbers<[1], [0], [0], [1], [0, 0, 1, 1], [], []>} : vector<8x160xf32>, vector<160x160xf32>, vector<8x160xf32> -> vector<8x160xf32>
    %c1_31 = arith.constant 1 : index
    %c0_32 = arith.constant 0 : index
    %29 = vector.load %arg7[%c1_31, %c0_32] : memref<10x160xf32, #tpu.memory_space<vmem>>, vector<8x160xf32>
    %c1_33 = arith.constant 1 : index
    %c0_34 = arith.constant 0 : index
    %c0_35 = arith.constant 0 : index
    %30 = vector.load %arg4[%c1_33, %c0_34, %c0_35] : memref<3x160x160xf32, #tpu.memory_space<vmem>>, vector<1x160x160xf32>
    %31 = vector.shape_cast %30 : vector<1x160x160xf32> to vector<160x160xf32>
    %cst_36 = arith.constant dense<0.000000e+00> : vector<8x160xf32>
    %32 = tpu.matmul %29, %31, %cst_36 {dimension_numbers = #tpu.dot_dimension_numbers<[1], [0], [0], [1], [0, 0, 1, 1], [], []>} : vector<8x160xf32>, vector<160x160xf32>, vector<8x160xf32> -> vector<8x160xf32>
    %33 = arith.addf %28, %32 : vector<8x160xf32>
    %c2_37 = arith.constant 2 : index
    %c0_38 = arith.constant 0 : index
    %34 = vector.load %arg7[%c2_37, %c0_38] : memref<10x160xf32, #tpu.memory_space<vmem>>, vector<8x160xf32>
    %c2_39 = arith.constant 2 : index
    %c0_40 = arith.constant 0 : index
    %c0_41 = arith.constant 0 : index
    %35 = vector.load %arg4[%c2_39, %c0_40, %c0_41] : memref<3x160x160xf32, #tpu.memory_space<vmem>>, vector<1x160x160xf32>
    %36 = vector.shape_cast %35 : vector<1x160x160xf32> to vector<160x160xf32>
    %cst_42 = arith.constant dense<0.000000e+00> : vector<8x160xf32>
    %37 = tpu.matmul %34, %36, %cst_42 {dimension_numbers = #tpu.dot_dimension_numbers<[1], [0], [0], [1], [0, 0, 1, 1], [], []>} : vector<8x160xf32>, vector<160x160xf32>, vector<8x160xf32> -> vector<8x160xf32>
    %38 = arith.addf %33, %37 : vector<8x160xf32>
    %c0_43 = arith.constant 0 : index
    %c0_44 = arith.constant 0 : index
    %39 = vector.load %arg5[%c0_43, %c0_44] : memref<1x160xf32, #tpu.memory_space<vmem>>, vector<1x160xf32>
    %40 = vector.broadcast %39 : vector<1x160xf32> to vector<8x160xf32>
    %41 = arith.addf %38, %40 : vector<8x160xf32>
    %c0_45 = arith.constant 0 : index
    %c1_46 = arith.constant 1 : index
    %c0_47 = arith.constant 0 : index
    %42 = vector.load %arg1[%c0_45, %c1_46, %c0_47] : memref<1x10x160xf32, #tpu.memory_space<vmem>>, vector<1x8x160xf32>
    %43 = vector.shape_cast %42 : vector<1x8x160xf32> to vector<8x160xf32>
    %44 = arith.addf %41, %43 : vector<8x160xf32>
    %cst_48 = arith.constant 0.000000e+00 : f32
    %45 = vector.broadcast %cst_48 : f32 to vector<1x10x160xf32>
    %c0_49 = arith.constant 0 : index
    %c0_50 = arith.constant 0 : index
    %c0_51 = arith.constant 0 : index
    %46 = vector.load %arg6[%c0_49, %c0_50, %c0_51] : memref<1x10x160xf32, #tpu.memory_space<vmem>>, vector<1x10x160xf32>
    tpu.vector_store %arg6[%c0_49, %c0_50, %c0_51], %45 {strides = array<i32>} : memref<1x10x160xf32, #tpu.memory_space<vmem>>, vector<1x10x160xf32>,
    %c0_52 = arith.constant 0 : index
    %c1_53 = arith.constant 1 : index
    %c0_54 = arith.constant 0 : index
    %47 = vector.load %arg6[%c0_52, %c1_53, %c0_54] : memref<1x10x160xf32, #tpu.memory_space<vmem>>, vector<1x8x160xf32>
    %48 = vector.shape_cast %47 : vector<1x8x160xf32> to vector<8x160xf32>
    %49 = vector.shape_cast %44 : vector<8x160xf32> to vector<1x8x160xf32>
    tpu.vector_store %arg6[%c0_52, %c1_53, %c0_54], %49 {strides = array<i32>} : memref<1x10x160xf32, #tpu.memory_space<vmem>>, vector<1x8x160xf32>,
    return
  }
  func.func @transform_0(%arg0: i32) -> (i32, i32, i32) {
    %c0_i32 = arith.constant 0 : i32
    %c0_i32_0 = arith.constant 0 : i32
    %c0_i32_1 = arith.constant 0 : i32
    return %arg0, %c0_i32, %c0_i32_0 : i32, i32, i32
  }
  func.func @transform_1(%arg0: i32) -> (i32, i32, i32) {
    %c0_i32 = arith.constant 0 : i32
    %c0_i32_0 = arith.constant 0 : i32
    %c0_i32_1 = arith.constant 0 : i32
    %c0_i32_2 = arith.constant 0 : i32
    return %c0_i32, %c0_i32_0, %c0_i32_1 : i32, i32, i32
  }
  func.func @transform_2(%arg0: i32) -> (i32, i32) {
    %c0_i32 = arith.constant 0 : i32
    %c0_i32_0 = arith.constant 0 : i32
    %c0_i32_1 = arith.constant 0 : i32
    return %c0_i32, %c0_i32_0 : i32, i32
  }
  func.func @transform_3(%arg0: i32) -> (i32, i32, i32) {
    %c0_i32 = arith.constant 0 : i32
    %c0_i32_0 = arith.constant 0 : i32
    %c0_i32_1 = arith.constant 0 : i32
    %c0_i32_2 = arith.constant 0 : i32
    return %c0_i32, %c0_i32_0, %c0_i32_1 : i32, i32, i32
  }
  func.func @transform_4(%arg0: i32) -> (i32, i32) {
    %c0_i32 = arith.constant 0 : i32
    %c0_i32_0 = arith.constant 0 : i32
    %c0_i32_1 = arith.constant 0 : i32
    return %c0_i32, %c0_i32_0 : i32, i32
  }
  func.func @transform_5(%arg0: i32) -> (i32, i32, i32) {
    %c0_i32 = arith.constant 0 : i32
    %c0_i32_0 = arith.constant 0 : i32
    %c0_i32_1 = arith.constant 0 : i32
    return %arg0, %c0_i32, %c0_i32_0 : i32, i32, i32
  }
}

module attributes {stable_mosaic.version = 11 : i64} {
  func.func @_resblock_kernel(%arg0: i32, %arg1: memref<1x10x160xf32, #tpu.memory_space<vmem>>, %arg2: memref<3x160x160xf32, #tpu.memory_space<vmem>>, %arg3: memref<1x160xf32, #tpu.memory_space<vmem>>, %arg4: memref<3x160x160xf32, #tpu.memory_space<vmem>>, %arg5: memref<1x160xf32, #tpu.memory_space<vmem>>, %arg6: memref<1x10x160xf32, #tpu.memory_space<vmem>>, %arg7: memref<1x10x160xf32, #tpu.memory_space<vmem>>, %arg8: memref<10x160xf32, #tpu.memory_space<vmem>>) attributes {dimension_semantics = [#tpu.dimension_semantics<parallel>], iteration_bounds = array<i64: 2>, scalar_prefetch = 0 : i64, scratch_operands = 1 : i64, tpu.core_type = #tpu.core_type<tc>, window_params = [{transform_indices = @transform_0, window_bounds = array<i64: 1, 10, 160>}, {pipeline_mode = #tpu.pipeline_mode<synchronous>, transform_indices = @transform_1, window_bounds = array<i64: 3, 160, 160>}, {pipeline_mode = #tpu.pipeline_mode<synchronous>, transform_indices = @transform_2, window_bounds = array<i64: 1, 160>}, {pipeline_mode = #tpu.pipeline_mode<synchronous>, transform_indices = @transform_3, window_bounds = array<i64: 3, 160, 160>}, {pipeline_mode = #tpu.pipeline_mode<synchronous>, transform_indices = @transform_4, window_bounds = array<i64: 1, 160>}, {transform_indices = @transform_5, window_bounds = array<i64: 1, 10, 160>}, {transform_indices = @transform_6, window_bounds = array<i64: 1, 10, 160>}]} {
    %c0 = arith.constant 0 : index
    %c0_0 = arith.constant 0 : index
    %c0_1 = arith.constant 0 : index
    %0 = vector.load %arg1[%c0, %c0_0, %c0_1] : memref<1x10x160xf32, #tpu.memory_space<vmem>>, vector<1x8x160xf32>
    %1 = vector.shape_cast %0 : vector<1x8x160xf32> to vector<8x160xf32>
    %c0_2 = arith.constant 0 : index
    %c0_3 = arith.constant 0 : index
    %c0_4 = arith.constant 0 : index
    %2 = vector.load %arg2[%c0_2, %c0_3, %c0_4] : memref<3x160x160xf32, #tpu.memory_space<vmem>>, vector<1x160x160xf32>
    %3 = vector.shape_cast %2 : vector<1x160x160xf32> to vector<160x160xf32>
    %cst = arith.constant dense<0.000000e+00> : vector<8x160xf32>
    %4 = tpu.matmul %1, %3, %cst {dimension_numbers = #tpu.dot_dimension_numbers<[1], [0], [0], [1], [0, 0, 1, 1], [], []>} : vector<8x160xf32>, vector<160x160xf32>, vector<8x160xf32> -> vector<8x160xf32>
    %c0_5 = arith.constant 0 : index
    %c1 = arith.constant 1 : index
    %c0_6 = arith.constant 0 : index
    %5 = vector.load %arg1[%c0_5, %c1, %c0_6] : memref<1x10x160xf32, #tpu.memory_space<vmem>>, vector<1x8x160xf32>
    %6 = vector.shape_cast %5 : vector<1x8x160xf32> to vector<8x160xf32>
    %c1_7 = arith.constant 1 : index
    %c0_8 = arith.constant 0 : index
    %c0_9 = arith.constant 0 : index
    %7 = vector.load %arg2[%c1_7, %c0_8, %c0_9] : memref<3x160x160xf32, #tpu.memory_space<vmem>>, vector<1x160x160xf32>
    %8 = vector.shape_cast %7 : vector<1x160x160xf32> to vector<160x160xf32>
    %cst_10 = arith.constant dense<0.000000e+00> : vector<8x160xf32>
    %9 = tpu.matmul %6, %8, %cst_10 {dimension_numbers = #tpu.dot_dimension_numbers<[1], [0], [0], [1], [0, 0, 1, 1], [], []>} : vector<8x160xf32>, vector<160x160xf32>, vector<8x160xf32> -> vector<8x160xf32>
    %10 = arith.addf %4, %9 : vector<8x160xf32>
    %c0_11 = arith.constant 0 : index
    %c2 = arith.constant 2 : index
    %c0_12 = arith.constant 0 : index
    %11 = vector.load %arg1[%c0_11, %c2, %c0_12] : memref<1x10x160xf32, #tpu.memory_space<vmem>>, vector<1x8x160xf32>
    %12 = vector.shape_cast %11 : vector<1x8x160xf32> to vector<8x160xf32>
    %c2_13 = arith.constant 2 : index
    %c0_14 = arith.constant 0 : index
    %c0_15 = arith.constant 0 : index
    %13 = vector.load %arg2[%c2_13, %c0_14, %c0_15] : memref<3x160x160xf32, #tpu.memory_space<vmem>>, vector<1x160x160xf32>
    %14 = vector.shape_cast %13 : vector<1x160x160xf32> to vector<160x160xf32>
    %cst_16 = arith.constant dense<0.000000e+00> : vector<8x160xf32>
    %15 = tpu.matmul %12, %14, %cst_16 {dimension_numbers = #tpu.dot_dimension_numbers<[1], [0], [0], [1], [0, 0, 1, 1], [], []>} : vector<8x160xf32>, vector<160x160xf32>, vector<8x160xf32> -> vector<8x160xf32>
    %16 = arith.addf %10, %15 : vector<8x160xf32>
    %c0_17 = arith.constant 0 : index
    %c0_18 = arith.constant 0 : index
    %17 = vector.load %arg3[%c0_17, %c0_18] : memref<1x160xf32, #tpu.memory_space<vmem>>, vector<1x160xf32>
    %18 = vector.broadcast %17 : vector<1x160xf32> to vector<8x160xf32>
    %19 = arith.addf %16, %18 : vector<8x160xf32>
    %cst_19 = arith.constant 0.000000e+00 : f32
    %20 = vector.broadcast %cst_19 : f32 to vector<8x160xf32>
    %21 = arith.maximumf %19, %20 : vector<8x160xf32>
    %cst_20 = arith.constant 0.000000e+00 : f32
    %22 = vector.broadcast %cst_20 : f32 to vector<10x160xf32>
    %c0_21 = arith.constant 0 : index
    %c0_22 = arith.constant 0 : index
    %23 = vector.load %arg8[%c0_21, %c0_22] : memref<10x160xf32, #tpu.memory_space<vmem>>, vector<10x160xf32>
    tpu.vector_store %arg8[%c0_21, %c0_22], %22 {strides = array<i32>} : memref<10x160xf32, #tpu.memory_space<vmem>>, vector<10x160xf32>,
    %c1_23 = arith.constant 1 : index
    %c0_24 = arith.constant 0 : index
    %24 = vector.load %arg8[%c1_23, %c0_24] : memref<10x160xf32, #tpu.memory_space<vmem>>, vector<8x160xf32>
    tpu.vector_store %arg8[%c1_23, %c0_24], %21 {strides = array<i32>} : memref<10x160xf32, #tpu.memory_space<vmem>>, vector<8x160xf32>,
    %c0_25 = arith.constant 0 : index
    %c0_26 = arith.constant 0 : index
    %25 = vector.load %arg8[%c0_25, %c0_26] : memref<10x160xf32, #tpu.memory_space<vmem>>, vector<8x160xf32>
    %c0_27 = arith.constant 0 : index
    %c0_28 = arith.constant 0 : index
    %c0_29 = arith.constant 0 : index
    %26 = vector.load %arg4[%c0_27, %c0_28, %c0_29] : memref<3x160x160xf32, #tpu.memory_space<vmem>>, vector<1x160x160xf32>
    %27 = vector.shape_cast %26 : vector<1x160x160xf32> to vector<160x160xf32>
    %cst_30 = arith.constant dense<0.000000e+00> : vector<8x160xf32>
    %28 = tpu.matmul %25, %27, %cst_30 {dimension_numbers = #tpu.dot_dimension_numbers<[1], [0], [0], [1], [0, 0, 1, 1], [], []>} : vector<8x160xf32>, vector<160x160xf32>, vector<8x160xf32> -> vector<8x160xf32>
    %c1_31 = arith.constant 1 : index
    %c0_32 = arith.constant 0 : index
    %29 = vector.load %arg8[%c1_31, %c0_32] : memref<10x160xf32, #tpu.memory_space<vmem>>, vector<8x160xf32>
    %c1_33 = arith.constant 1 : index
    %c0_34 = arith.constant 0 : index
    %c0_35 = arith.constant 0 : index
    %30 = vector.load %arg4[%c1_33, %c0_34, %c0_35] : memref<3x160x160xf32, #tpu.memory_space<vmem>>, vector<1x160x160xf32>
    %31 = vector.shape_cast %30 : vector<1x160x160xf32> to vector<160x160xf32>
    %cst_36 = arith.constant dense<0.000000e+00> : vector<8x160xf32>
    %32 = tpu.matmul %29, %31, %cst_36 {dimension_numbers = #tpu.dot_dimension_numbers<[1], [0], [0], [1], [0, 0, 1, 1], [], []>} : vector<8x160xf32>, vector<160x160xf32>, vector<8x160xf32> -> vector<8x160xf32>
    %33 = arith.addf %28, %32 : vector<8x160xf32>
    %c2_37 = arith.constant 2 : index
    %c0_38 = arith.constant 0 : index
    %34 = vector.load %arg8[%c2_37, %c0_38] : memref<10x160xf32, #tpu.memory_space<vmem>>, vector<8x160xf32>
    %c2_39 = arith.constant 2 : index
    %c0_40 = arith.constant 0 : index
    %c0_41 = arith.constant 0 : index
    %35 = vector.load %arg4[%c2_39, %c0_40, %c0_41] : memref<3x160x160xf32, #tpu.memory_space<vmem>>, vector<1x160x160xf32>
    %36 = vector.shape_cast %35 : vector<1x160x160xf32> to vector<160x160xf32>
    %cst_42 = arith.constant dense<0.000000e+00> : vector<8x160xf32>
    %37 = tpu.matmul %34, %36, %cst_42 {dimension_numbers = #tpu.dot_dimension_numbers<[1], [0], [0], [1], [0, 0, 1, 1], [], []>} : vector<8x160xf32>, vector<160x160xf32>, vector<8x160xf32> -> vector<8x160xf32>
    %38 = arith.addf %33, %37 : vector<8x160xf32>
    %c0_43 = arith.constant 0 : index
    %c0_44 = arith.constant 0 : index
    %39 = vector.load %arg5[%c0_43, %c0_44] : memref<1x160xf32, #tpu.memory_space<vmem>>, vector<1x160xf32>
    %40 = vector.broadcast %39 : vector<1x160xf32> to vector<8x160xf32>
    %41 = arith.addf %38, %40 : vector<8x160xf32>
    %c0_45 = arith.constant 0 : index
    %c1_46 = arith.constant 1 : index
    %c0_47 = arith.constant 0 : index
    %42 = vector.load %arg1[%c0_45, %c1_46, %c0_47] : memref<1x10x160xf32, #tpu.memory_space<vmem>>, vector<1x8x160xf32>
    %43 = vector.shape_cast %42 : vector<1x8x160xf32> to vector<8x160xf32>
    %44 = arith.addf %41, %43 : vector<8x160xf32>
    %c0_48 = arith.constant 0 : index
    %c1_49 = arith.constant 1 : index
    %c0_50 = arith.constant 0 : index
    %45 = vector.load %arg6[%c0_48, %c1_49, %c0_50] : memref<1x10x160xf32, #tpu.memory_space<vmem>>, vector<1x8x160xf32>
    %46 = vector.shape_cast %45 : vector<1x8x160xf32> to vector<8x160xf32>
    %47 = arith.addf %44, %46 : vector<8x160xf32>
    %cst_51 = arith.constant 0.000000e+00 : f32
    %48 = vector.broadcast %cst_51 : f32 to vector<1x10x160xf32>
    %c0_52 = arith.constant 0 : index
    %c0_53 = arith.constant 0 : index
    %c0_54 = arith.constant 0 : index
    %49 = vector.load %arg7[%c0_52, %c0_53, %c0_54] : memref<1x10x160xf32, #tpu.memory_space<vmem>>, vector<1x10x160xf32>
    tpu.vector_store %arg7[%c0_52, %c0_53, %c0_54], %48 {strides = array<i32>} : memref<1x10x160xf32, #tpu.memory_space<vmem>>, vector<1x10x160xf32>,
    %c0_55 = arith.constant 0 : index
    %c1_56 = arith.constant 1 : index
    %c0_57 = arith.constant 0 : index
    %50 = vector.load %arg7[%c0_55, %c1_56, %c0_57] : memref<1x10x160xf32, #tpu.memory_space<vmem>>, vector<1x8x160xf32>
    %51 = vector.shape_cast %50 : vector<1x8x160xf32> to vector<8x160xf32>
    %52 = vector.shape_cast %47 : vector<8x160xf32> to vector<1x8x160xf32>
    tpu.vector_store %arg7[%c0_55, %c1_56, %c0_57], %52 {strides = array<i32>} : memref<1x10x160xf32, #tpu.memory_space<vmem>>, vector<1x8x160xf32>,
    return
  }
  func.func @transform_0(%arg0: i32) -> (i32, i32, i32) {
    %c0_i32 = arith.constant 0 : i32
    %c0_i32_0 = arith.constant 0 : i32
    %c0_i32_1 = arith.constant 0 : i32
    return %arg0, %c0_i32, %c0_i32_0 : i32, i32, i32
  }
  func.func @transform_1(%arg0: i32) -> (i32, i32, i32) {
    %c0_i32 = arith.constant 0 : i32
    %c0_i32_0 = arith.constant 0 : i32
    %c0_i32_1 = arith.constant 0 : i32
    %c0_i32_2 = arith.constant 0 : i32
    return %c0_i32, %c0_i32_0, %c0_i32_1 : i32, i32, i32
  }
  func.func @transform_2(%arg0: i32) -> (i32, i32) {
    %c0_i32 = arith.constant 0 : i32
    %c0_i32_0 = arith.constant 0 : i32
    %c0_i32_1 = arith.constant 0 : i32
    return %c0_i32, %c0_i32_0 : i32, i32
  }
  func.func @transform_3(%arg0: i32) -> (i32, i32, i32) {
    %c0_i32 = arith.constant 0 : i32
    %c0_i32_0 = arith.constant 0 : i32
    %c0_i32_1 = arith.constant 0 : i32
    %c0_i32_2 = arith.constant 0 : i32
    return %c0_i32, %c0_i32_0, %c0_i32_1 : i32, i32, i32
  }
  func.func @transform_4(%arg0: i32) -> (i32, i32) {
    %c0_i32 = arith.constant 0 : i32
    %c0_i32_0 = arith.constant 0 : i32
    %c0_i32_1 = arith.constant 0 : i32
    return %c0_i32, %c0_i32_0 : i32, i32
  }
  func.func @transform_5(%arg0: i32) -> (i32, i32, i32) {
    %c0_i32 = arith.constant 0 : i32
    %c0_i32_0 = arith.constant 0 : i32
    %c0_i32_1 = arith.constant 0 : i32
    return %arg0, %c0_i32, %c0_i32_0 : i32, i32, i32
  }
  func.func @transform_6(%arg0: i32) -> (i32, i32, i32) {
    %c0_i32 = arith.constant 0 : i32
    %c0_i32_0 = arith.constant 0 : i32
    %c0_i32_1 = arith.constant 0 : i32
    return %arg0, %c0_i32, %c0_i32_0 : i32, i32, i32
  }
}

module attributes {stable_mosaic.version = 11 : i64} {
  func.func @_conv3x3_kernel(%arg0: i32, %arg1: memref<1x10x160xf32, #tpu.memory_space<vmem>>, %arg2: memref<3x160x512xf32, #tpu.memory_space<vmem>>, %arg3: memref<1x512xf32, #tpu.memory_space<vmem>>, %arg4: memref<1x8x512xf32, #tpu.memory_space<vmem>>) attributes {dimension_semantics = [#tpu.dimension_semantics<parallel>], iteration_bounds = array<i64: 2>, scalar_prefetch = 0 : i64, scratch_operands = 0 : i64, tpu.core_type = #tpu.core_type<tc>, window_params = [{transform_indices = @transform_0, window_bounds = array<i64: 1, 10, 160>}, {pipeline_mode = #tpu.pipeline_mode<synchronous>, transform_indices = @transform_1, window_bounds = array<i64: 3, 160, 512>}, {pipeline_mode = #tpu.pipeline_mode<synchronous>, transform_indices = @transform_2, window_bounds = array<i64: 1, 512>}, {transform_indices = @transform_3, window_bounds = array<i64: 1, 8, 512>}]} {
    %c0 = arith.constant 0 : index
    %c0_0 = arith.constant 0 : index
    %c0_1 = arith.constant 0 : index
    %0 = vector.load %arg1[%c0, %c0_0, %c0_1] : memref<1x10x160xf32, #tpu.memory_space<vmem>>, vector<1x8x160xf32>
    %1 = vector.shape_cast %0 : vector<1x8x160xf32> to vector<8x160xf32>
    %c0_2 = arith.constant 0 : index
    %c0_3 = arith.constant 0 : index
    %c0_4 = arith.constant 0 : index
    %2 = vector.load %arg2[%c0_2, %c0_3, %c0_4] : memref<3x160x512xf32, #tpu.memory_space<vmem>>, vector<1x160x512xf32>
    %3 = vector.shape_cast %2 : vector<1x160x512xf32> to vector<160x512xf32>
    %cst = arith.constant dense<0.000000e+00> : vector<8x512xf32>
    %4 = tpu.matmul %1, %3, %cst {dimension_numbers = #tpu.dot_dimension_numbers<[1], [0], [0], [1], [0, 0, 1, 1], [], []>} : vector<8x160xf32>, vector<160x512xf32>, vector<8x512xf32> -> vector<8x512xf32>
    %c0_5 = arith.constant 0 : index
    %c1 = arith.constant 1 : index
    %c0_6 = arith.constant 0 : index
    %5 = vector.load %arg1[%c0_5, %c1, %c0_6] : memref<1x10x160xf32, #tpu.memory_space<vmem>>, vector<1x8x160xf32>
    %6 = vector.shape_cast %5 : vector<1x8x160xf32> to vector<8x160xf32>
    %c1_7 = arith.constant 1 : index
    %c0_8 = arith.constant 0 : index
    %c0_9 = arith.constant 0 : index
    %7 = vector.load %arg2[%c1_7, %c0_8, %c0_9] : memref<3x160x512xf32, #tpu.memory_space<vmem>>, vector<1x160x512xf32>
    %8 = vector.shape_cast %7 : vector<1x160x512xf32> to vector<160x512xf32>
    %cst_10 = arith.constant dense<0.000000e+00> : vector<8x512xf32>
    %9 = tpu.matmul %6, %8, %cst_10 {dimension_numbers = #tpu.dot_dimension_numbers<[1], [0], [0], [1], [0, 0, 1, 1], [], []>} : vector<8x160xf32>, vector<160x512xf32>, vector<8x512xf32> -> vector<8x512xf32>
    %10 = arith.addf %4, %9 : vector<8x512xf32>
    %c0_11 = arith.constant 0 : index
    %c2 = arith.constant 2 : index
    %c0_12 = arith.constant 0 : index
    %11 = vector.load %arg1[%c0_11, %c2, %c0_12] : memref<1x10x160xf32, #tpu.memory_space<vmem>>, vector<1x8x160xf32>
    %12 = vector.shape_cast %11 : vector<1x8x160xf32> to vector<8x160xf32>
    %c2_13 = arith.constant 2 : index
    %c0_14 = arith.constant 0 : index
    %c0_15 = arith.constant 0 : index
    %13 = vector.load %arg2[%c2_13, %c0_14, %c0_15] : memref<3x160x512xf32, #tpu.memory_space<vmem>>, vector<1x160x512xf32>
    %14 = vector.shape_cast %13 : vector<1x160x512xf32> to vector<160x512xf32>
    %cst_16 = arith.constant dense<0.000000e+00> : vector<8x512xf32>
    %15 = tpu.matmul %12, %14, %cst_16 {dimension_numbers = #tpu.dot_dimension_numbers<[1], [0], [0], [1], [0, 0, 1, 1], [], []>} : vector<8x160xf32>, vector<160x512xf32>, vector<8x512xf32> -> vector<8x512xf32>
    %16 = arith.addf %10, %15 : vector<8x512xf32>
    %c0_17 = arith.constant 0 : index
    %c0_18 = arith.constant 0 : index
    %17 = vector.load %arg3[%c0_17, %c0_18] : memref<1x512xf32, #tpu.memory_space<vmem>>, vector<1x512xf32>
    %18 = vector.broadcast %17 : vector<1x512xf32> to vector<8x512xf32>
    %19 = arith.addf %16, %18 : vector<8x512xf32>
    %c0_19 = arith.constant 0 : index
    %c0_20 = arith.constant 0 : index
    %c0_21 = arith.constant 0 : index
    %20 = vector.load %arg4[%c0_19, %c0_20, %c0_21] : memref<1x8x512xf32, #tpu.memory_space<vmem>>, vector<1x8x512xf32>
    %21 = vector.shape_cast %20 : vector<1x8x512xf32> to vector<8x512xf32>
    %22 = vector.shape_cast %19 : vector<8x512xf32> to vector<1x8x512xf32>
    tpu.vector_store %arg4[%c0_19, %c0_20, %c0_21], %22 {strides = array<i32>} : memref<1x8x512xf32, #tpu.memory_space<vmem>>, vector<1x8x512xf32>,
    return
  }
  func.func @transform_0(%arg0: i32) -> (i32, i32, i32) {
    %c0_i32 = arith.constant 0 : i32
    %c0_i32_0 = arith.constant 0 : i32
    %c0_i32_1 = arith.constant 0 : i32
    return %arg0, %c0_i32, %c0_i32_0 : i32, i32, i32
  }
  func.func @transform_1(%arg0: i32) -> (i32, i32, i32) {
    %c0_i32 = arith.constant 0 : i32
    %c0_i32_0 = arith.constant 0 : i32
    %c0_i32_1 = arith.constant 0 : i32
    %c0_i32_2 = arith.constant 0 : i32
    return %c0_i32, %c0_i32_0, %c0_i32_1 : i32, i32, i32
  }
  func.func @transform_2(%arg0: i32) -> (i32, i32) {
    %c0_i32 = arith.constant 0 : i32
    %c0_i32_0 = arith.constant 0 : i32
    %c0_i32_1 = arith.constant 0 : i32
    return %c0_i32, %c0_i32_0 : i32, i32
  }
  func.func @transform_3(%arg0: i32) -> (i32, i32, i32) {
    %c0_i32 = arith.constant 0 : i32
    %c0_i32_0 = arith.constant 0 : i32
    %c0_i32_1 = arith.constant 0 : i32
    return %arg0, %c0_i32, %c0_i32_0 : i32, i32, i32
  }
}

module attributes {stable_mosaic.version = 11 : i64} {
  func.func @_conv3x3_kernel(%arg0: i32, %arg1: memref<1x18x288xf32, #tpu.memory_space<vmem>>, %arg2: memref<3x288x54xf32, #tpu.memory_space<vmem>>, %arg3: memref<1x54xf32, #tpu.memory_space<vmem>>, %arg4: memref<1x18x54xf32, #tpu.memory_space<vmem>>) attributes {dimension_semantics = [#tpu.dimension_semantics<parallel>], iteration_bounds = array<i64: 2>, scalar_prefetch = 0 : i64, scratch_operands = 0 : i64, tpu.core_type = #tpu.core_type<tc>, window_params = [{transform_indices = @transform_0, window_bounds = array<i64: 1, 18, 288>}, {pipeline_mode = #tpu.pipeline_mode<synchronous>, transform_indices = @transform_1, window_bounds = array<i64: 3, 288, 54>}, {pipeline_mode = #tpu.pipeline_mode<synchronous>, transform_indices = @transform_2, window_bounds = array<i64: 1, 54>}, {transform_indices = @transform_3, window_bounds = array<i64: 1, 18, 54>}]} {
    %c0 = arith.constant 0 : index
    %c0_0 = arith.constant 0 : index
    %c0_1 = arith.constant 0 : index
    %0 = vector.load %arg1[%c0, %c0_0, %c0_1] : memref<1x18x288xf32, #tpu.memory_space<vmem>>, vector<1x16x288xf32>
    %1 = vector.shape_cast %0 : vector<1x16x288xf32> to vector<16x288xf32>
    %c0_2 = arith.constant 0 : index
    %c0_3 = arith.constant 0 : index
    %c0_4 = arith.constant 0 : index
    %2 = vector.load %arg2[%c0_2, %c0_3, %c0_4] : memref<3x288x54xf32, #tpu.memory_space<vmem>>, vector<1x288x54xf32>
    %3 = vector.shape_cast %2 : vector<1x288x54xf32> to vector<288x54xf32>
    %cst = arith.constant dense<0.000000e+00> : vector<16x54xf32>
    %4 = tpu.matmul %1, %3, %cst {dimension_numbers = #tpu.dot_dimension_numbers<[1], [0], [0], [1], [0, 0, 1, 1], [], []>} : vector<16x288xf32>, vector<288x54xf32>, vector<16x54xf32> -> vector<16x54xf32>
    %c0_5 = arith.constant 0 : index
    %c1 = arith.constant 1 : index
    %c0_6 = arith.constant 0 : index
    %5 = vector.load %arg1[%c0_5, %c1, %c0_6] : memref<1x18x288xf32, #tpu.memory_space<vmem>>, vector<1x16x288xf32>
    %6 = vector.shape_cast %5 : vector<1x16x288xf32> to vector<16x288xf32>
    %c1_7 = arith.constant 1 : index
    %c0_8 = arith.constant 0 : index
    %c0_9 = arith.constant 0 : index
    %7 = vector.load %arg2[%c1_7, %c0_8, %c0_9] : memref<3x288x54xf32, #tpu.memory_space<vmem>>, vector<1x288x54xf32>
    %8 = vector.shape_cast %7 : vector<1x288x54xf32> to vector<288x54xf32>
    %cst_10 = arith.constant dense<0.000000e+00> : vector<16x54xf32>
    %9 = tpu.matmul %6, %8, %cst_10 {dimension_numbers = #tpu.dot_dimension_numbers<[1], [0], [0], [1], [0, 0, 1, 1], [], []>} : vector<16x288xf32>, vector<288x54xf32>, vector<16x54xf32> -> vector<16x54xf32>
    %10 = arith.addf %4, %9 : vector<16x54xf32>
    %c0_11 = arith.constant 0 : index
    %c2 = arith.constant 2 : index
    %c0_12 = arith.constant 0 : index
    %11 = vector.load %arg1[%c0_11, %c2, %c0_12] : memref<1x18x288xf32, #tpu.memory_space<vmem>>, vector<1x16x288xf32>
    %12 = vector.shape_cast %11 : vector<1x16x288xf32> to vector<16x288xf32>
    %c2_13 = arith.constant 2 : index
    %c0_14 = arith.constant 0 : index
    %c0_15 = arith.constant 0 : index
    %13 = vector.load %arg2[%c2_13, %c0_14, %c0_15] : memref<3x288x54xf32, #tpu.memory_space<vmem>>, vector<1x288x54xf32>
    %14 = vector.shape_cast %13 : vector<1x288x54xf32> to vector<288x54xf32>
    %cst_16 = arith.constant dense<0.000000e+00> : vector<16x54xf32>
    %15 = tpu.matmul %12, %14, %cst_16 {dimension_numbers = #tpu.dot_dimension_numbers<[1], [0], [0], [1], [0, 0, 1, 1], [], []>} : vector<16x288xf32>, vector<288x54xf32>, vector<16x54xf32> -> vector<16x54xf32>
    %16 = arith.addf %10, %15 : vector<16x54xf32>
    %c0_17 = arith.constant 0 : index
    %c0_18 = arith.constant 0 : index
    %17 = vector.load %arg3[%c0_17, %c0_18] : memref<1x54xf32, #tpu.memory_space<vmem>>, vector<1x54xf32>
    %18 = vector.broadcast %17 : vector<1x54xf32> to vector<16x54xf32>
    %19 = arith.addf %16, %18 : vector<16x54xf32>
    %cst_19 = arith.constant 0.000000e+00 : f32
    %20 = vector.broadcast %cst_19 : f32 to vector<1x18x54xf32>
    %c0_20 = arith.constant 0 : index
    %c0_21 = arith.constant 0 : index
    %c0_22 = arith.constant 0 : index
    %21 = vector.load %arg4[%c0_20, %c0_21, %c0_22] : memref<1x18x54xf32, #tpu.memory_space<vmem>>, vector<1x18x54xf32>
    tpu.vector_store %arg4[%c0_20, %c0_21, %c0_22], %20 {strides = array<i32>} : memref<1x18x54xf32, #tpu.memory_space<vmem>>, vector<1x18x54xf32>,
    %c0_23 = arith.constant 0 : index
    %c1_24 = arith.constant 1 : index
    %c0_25 = arith.constant 0 : index
    %22 = vector.load %arg4[%c0_23, %c1_24, %c0_25] : memref<1x18x54xf32, #tpu.memory_space<vmem>>, vector<1x16x54xf32>
    %23 = vector.shape_cast %22 : vector<1x16x54xf32> to vector<16x54xf32>
    %24 = vector.shape_cast %19 : vector<16x54xf32> to vector<1x16x54xf32>
    tpu.vector_store %arg4[%c0_23, %c1_24, %c0_25], %24 {strides = array<i32>} : memref<1x18x54xf32, #tpu.memory_space<vmem>>, vector<1x16x54xf32>,
    return
  }
  func.func @transform_0(%arg0: i32) -> (i32, i32, i32) {
    %c0_i32 = arith.constant 0 : i32
    %c0_i32_0 = arith.constant 0 : i32
    %c0_i32_1 = arith.constant 0 : i32
    return %arg0, %c0_i32, %c0_i32_0 : i32, i32, i32
  }
  func.func @transform_1(%arg0: i32) -> (i32, i32, i32) {
    %c0_i32 = arith.constant 0 : i32
    %c0_i32_0 = arith.constant 0 : i32
    %c0_i32_1 = arith.constant 0 : i32
    %c0_i32_2 = arith.constant 0 : i32
    return %c0_i32, %c0_i32_0, %c0_i32_1 : i32, i32, i32
  }
  func.func @transform_2(%arg0: i32) -> (i32, i32) {
    %c0_i32 = arith.constant 0 : i32
    %c0_i32_0 = arith.constant 0 : i32
    %c0_i32_1 = arith.constant 0 : i32
    return %c0_i32, %c0_i32_0 : i32, i32
  }
  func.func @transform_3(%arg0: i32) -> (i32, i32, i32) {
    %c0_i32 = arith.constant 0 : i32
    %c0_i32_0 = arith.constant 0 : i32
    %c0_i32_1 = arith.constant 0 : i32
    return %arg0, %c0_i32, %c0_i32_0 : i32, i32, i32
  }
}

module attributes {stable_mosaic.version = 11 : i64} {
  func.func @_conv3x3_kernel(%arg0: i32, %arg1: memref<1x18x54xf32, #tpu.memory_space<vmem>>, %arg2: memref<3x54x288xf32, #tpu.memory_space<vmem>>, %arg3: memref<1x288xf32, #tpu.memory_space<vmem>>, %arg4: memref<1x18x288xf32, #tpu.memory_space<vmem>>) attributes {dimension_semantics = [#tpu.dimension_semantics<parallel>], iteration_bounds = array<i64: 2>, scalar_prefetch = 0 : i64, scratch_operands = 0 : i64, tpu.core_type = #tpu.core_type<tc>, window_params = [{transform_indices = @transform_0, window_bounds = array<i64: 1, 18, 54>}, {pipeline_mode = #tpu.pipeline_mode<synchronous>, transform_indices = @transform_1, window_bounds = array<i64: 3, 54, 288>}, {pipeline_mode = #tpu.pipeline_mode<synchronous>, transform_indices = @transform_2, window_bounds = array<i64: 1, 288>}, {transform_indices = @transform_3, window_bounds = array<i64: 1, 18, 288>}]} {
    %c0 = arith.constant 0 : index
    %c0_0 = arith.constant 0 : index
    %c0_1 = arith.constant 0 : index
    %0 = vector.load %arg1[%c0, %c0_0, %c0_1] : memref<1x18x54xf32, #tpu.memory_space<vmem>>, vector<1x16x54xf32>
    %1 = vector.shape_cast %0 : vector<1x16x54xf32> to vector<16x54xf32>
    %c0_2 = arith.constant 0 : index
    %c0_3 = arith.constant 0 : index
    %c0_4 = arith.constant 0 : index
    %2 = vector.load %arg2[%c0_2, %c0_3, %c0_4] : memref<3x54x288xf32, #tpu.memory_space<vmem>>, vector<1x54x288xf32>
    %3 = vector.shape_cast %2 : vector<1x54x288xf32> to vector<54x288xf32>
    %cst = arith.constant dense<0.000000e+00> : vector<16x288xf32>
    %4 = tpu.matmul %1, %3, %cst {dimension_numbers = #tpu.dot_dimension_numbers<[1], [0], [0], [1], [0, 0, 1, 1], [], []>} : vector<16x54xf32>, vector<54x288xf32>, vector<16x288xf32> -> vector<16x288xf32>
    %c0_5 = arith.constant 0 : index
    %c1 = arith.constant 1 : index
    %c0_6 = arith.constant 0 : index
    %5 = vector.load %arg1[%c0_5, %c1, %c0_6] : memref<1x18x54xf32, #tpu.memory_space<vmem>>, vector<1x16x54xf32>
    %6 = vector.shape_cast %5 : vector<1x16x54xf32> to vector<16x54xf32>
    %c1_7 = arith.constant 1 : index
    %c0_8 = arith.constant 0 : index
    %c0_9 = arith.constant 0 : index
    %7 = vector.load %arg2[%c1_7, %c0_8, %c0_9] : memref<3x54x288xf32, #tpu.memory_space<vmem>>, vector<1x54x288xf32>
    %8 = vector.shape_cast %7 : vector<1x54x288xf32> to vector<54x288xf32>
    %cst_10 = arith.constant dense<0.000000e+00> : vector<16x288xf32>
    %9 = tpu.matmul %6, %8, %cst_10 {dimension_numbers = #tpu.dot_dimension_numbers<[1], [0], [0], [1], [0, 0, 1, 1], [], []>} : vector<16x54xf32>, vector<54x288xf32>, vector<16x288xf32> -> vector<16x288xf32>
    %10 = arith.addf %4, %9 : vector<16x288xf32>
    %c0_11 = arith.constant 0 : index
    %c2 = arith.constant 2 : index
    %c0_12 = arith.constant 0 : index
    %11 = vector.load %arg1[%c0_11, %c2, %c0_12] : memref<1x18x54xf32, #tpu.memory_space<vmem>>, vector<1x16x54xf32>
    %12 = vector.shape_cast %11 : vector<1x16x54xf32> to vector<16x54xf32>
    %c2_13 = arith.constant 2 : index
    %c0_14 = arith.constant 0 : index
    %c0_15 = arith.constant 0 : index
    %13 = vector.load %arg2[%c2_13, %c0_14, %c0_15] : memref<3x54x288xf32, #tpu.memory_space<vmem>>, vector<1x54x288xf32>
    %14 = vector.shape_cast %13 : vector<1x54x288xf32> to vector<54x288xf32>
    %cst_16 = arith.constant dense<0.000000e+00> : vector<16x288xf32>
    %15 = tpu.matmul %12, %14, %cst_16 {dimension_numbers = #tpu.dot_dimension_numbers<[1], [0], [0], [1], [0, 0, 1, 1], [], []>} : vector<16x54xf32>, vector<54x288xf32>, vector<16x288xf32> -> vector<16x288xf32>
    %16 = arith.addf %10, %15 : vector<16x288xf32>
    %c0_17 = arith.constant 0 : index
    %c0_18 = arith.constant 0 : index
    %17 = vector.load %arg3[%c0_17, %c0_18] : memref<1x288xf32, #tpu.memory_space<vmem>>, vector<1x288xf32>
    %18 = vector.broadcast %17 : vector<1x288xf32> to vector<16x288xf32>
    %19 = arith.addf %16, %18 : vector<16x288xf32>
    %cst_19 = arith.constant 0.000000e+00 : f32
    %20 = vector.broadcast %cst_19 : f32 to vector<1x18x288xf32>
    %c0_20 = arith.constant 0 : index
    %c0_21 = arith.constant 0 : index
    %c0_22 = arith.constant 0 : index
    %21 = vector.load %arg4[%c0_20, %c0_21, %c0_22] : memref<1x18x288xf32, #tpu.memory_space<vmem>>, vector<1x18x288xf32>
    tpu.vector_store %arg4[%c0_20, %c0_21, %c0_22], %20 {strides = array<i32>} : memref<1x18x288xf32, #tpu.memory_space<vmem>>, vector<1x18x288xf32>,
    %c0_23 = arith.constant 0 : index
    %c1_24 = arith.constant 1 : index
    %c0_25 = arith.constant 0 : index
    %22 = vector.load %arg4[%c0_23, %c1_24, %c0_25] : memref<1x18x288xf32, #tpu.memory_space<vmem>>, vector<1x16x288xf32>
    %23 = vector.shape_cast %22 : vector<1x16x288xf32> to vector<16x288xf32>
    %24 = vector.shape_cast %19 : vector<16x288xf32> to vector<1x16x288xf32>
    tpu.vector_store %arg4[%c0_23, %c1_24, %c0_25], %24 {strides = array<i32>} : memref<1x18x288xf32, #tpu.memory_space<vmem>>, vector<1x16x288xf32>,
    return
  }
  func.func @transform_0(%arg0: i32) -> (i32, i32, i32) {
    %c0_i32 = arith.constant 0 : i32
    %c0_i32_0 = arith.constant 0 : i32
    %c0_i32_1 = arith.constant 0 : i32
    return %arg0, %c0_i32, %c0_i32_0 : i32, i32, i32
  }
  func.func @transform_1(%arg0: i32) -> (i32, i32, i32) {
    %c0_i32 = arith.constant 0 : i32
    %c0_i32_0 = arith.constant 0 : i32
    %c0_i32_1 = arith.constant 0 : i32
    %c0_i32_2 = arith.constant 0 : i32
    return %c0_i32, %c0_i32_0, %c0_i32_1 : i32, i32, i32
  }
  func.func @transform_2(%arg0: i32) -> (i32, i32) {
    %c0_i32 = arith.constant 0 : i32
    %c0_i32_0 = arith.constant 0 : i32
    %c0_i32_1 = arith.constant 0 : i32
    return %c0_i32, %c0_i32_0 : i32, i32
  }
  func.func @transform_3(%arg0: i32) -> (i32, i32, i32) {
    %c0_i32 = arith.constant 0 : i32
    %c0_i32_0 = arith.constant 0 : i32
    %c0_i32_1 = arith.constant 0 : i32
    return %arg0, %c0_i32, %c0_i32_0 : i32, i32, i32
  }
}

module attributes {stable_mosaic.version = 11 : i64} {
  func.func @_resblock_kernel(%arg0: i32, %arg1: memref<1x18x288xf32, #tpu.memory_space<vmem>>, %arg2: memref<3x288x288xf32, #tpu.memory_space<vmem>>, %arg3: memref<1x288xf32, #tpu.memory_space<vmem>>, %arg4: memref<3x288x288xf32, #tpu.memory_space<vmem>>, %arg5: memref<1x288xf32, #tpu.memory_space<vmem>>, %arg6: memref<1x18x288xf32, #tpu.memory_space<vmem>>, %arg7: memref<18x288xf32, #tpu.memory_space<vmem>>) attributes {dimension_semantics = [#tpu.dimension_semantics<parallel>], iteration_bounds = array<i64: 2>, scalar_prefetch = 0 : i64, scratch_operands = 1 : i64, tpu.core_type = #tpu.core_type<tc>, window_params = [{transform_indices = @transform_0, window_bounds = array<i64: 1, 18, 288>}, {pipeline_mode = #tpu.pipeline_mode<synchronous>, transform_indices = @transform_1, window_bounds = array<i64: 3, 288, 288>}, {pipeline_mode = #tpu.pipeline_mode<synchronous>, transform_indices = @transform_2, window_bounds = array<i64: 1, 288>}, {pipeline_mode = #tpu.pipeline_mode<synchronous>, transform_indices = @transform_3, window_bounds = array<i64: 3, 288, 288>}, {pipeline_mode = #tpu.pipeline_mode<synchronous>, transform_indices = @transform_4, window_bounds = array<i64: 1, 288>}, {transform_indices = @transform_5, window_bounds = array<i64: 1, 18, 288>}]} {
    %c0 = arith.constant 0 : index
    %c0_0 = arith.constant 0 : index
    %c0_1 = arith.constant 0 : index
    %0 = vector.load %arg1[%c0, %c0_0, %c0_1] : memref<1x18x288xf32, #tpu.memory_space<vmem>>, vector<1x16x288xf32>
    %1 = vector.shape_cast %0 : vector<1x16x288xf32> to vector<16x288xf32>
    %c0_2 = arith.constant 0 : index
    %c0_3 = arith.constant 0 : index
    %c0_4 = arith.constant 0 : index
    %2 = vector.load %arg2[%c0_2, %c0_3, %c0_4] : memref<3x288x288xf32, #tpu.memory_space<vmem>>, vector<1x288x288xf32>
    %3 = vector.shape_cast %2 : vector<1x288x288xf32> to vector<288x288xf32>
    %cst = arith.constant dense<0.000000e+00> : vector<16x288xf32>
    %4 = tpu.matmul %1, %3, %cst {dimension_numbers = #tpu.dot_dimension_numbers<[1], [0], [0], [1], [0, 0, 1, 1], [], []>} : vector<16x288xf32>, vector<288x288xf32>, vector<16x288xf32> -> vector<16x288xf32>
    %c0_5 = arith.constant 0 : index
    %c1 = arith.constant 1 : index
    %c0_6 = arith.constant 0 : index
    %5 = vector.load %arg1[%c0_5, %c1, %c0_6] : memref<1x18x288xf32, #tpu.memory_space<vmem>>, vector<1x16x288xf32>
    %6 = vector.shape_cast %5 : vector<1x16x288xf32> to vector<16x288xf32>
    %c1_7 = arith.constant 1 : index
    %c0_8 = arith.constant 0 : index
    %c0_9 = arith.constant 0 : index
    %7 = vector.load %arg2[%c1_7, %c0_8, %c0_9] : memref<3x288x288xf32, #tpu.memory_space<vmem>>, vector<1x288x288xf32>
    %8 = vector.shape_cast %7 : vector<1x288x288xf32> to vector<288x288xf32>
    %cst_10 = arith.constant dense<0.000000e+00> : vector<16x288xf32>
    %9 = tpu.matmul %6, %8, %cst_10 {dimension_numbers = #tpu.dot_dimension_numbers<[1], [0], [0], [1], [0, 0, 1, 1], [], []>} : vector<16x288xf32>, vector<288x288xf32>, vector<16x288xf32> -> vector<16x288xf32>
    %10 = arith.addf %4, %9 : vector<16x288xf32>
    %c0_11 = arith.constant 0 : index
    %c2 = arith.constant 2 : index
    %c0_12 = arith.constant 0 : index
    %11 = vector.load %arg1[%c0_11, %c2, %c0_12] : memref<1x18x288xf32, #tpu.memory_space<vmem>>, vector<1x16x288xf32>
    %12 = vector.shape_cast %11 : vector<1x16x288xf32> to vector<16x288xf32>
    %c2_13 = arith.constant 2 : index
    %c0_14 = arith.constant 0 : index
    %c0_15 = arith.constant 0 : index
    %13 = vector.load %arg2[%c2_13, %c0_14, %c0_15] : memref<3x288x288xf32, #tpu.memory_space<vmem>>, vector<1x288x288xf32>
    %14 = vector.shape_cast %13 : vector<1x288x288xf32> to vector<288x288xf32>
    %cst_16 = arith.constant dense<0.000000e+00> : vector<16x288xf32>
    %15 = tpu.matmul %12, %14, %cst_16 {dimension_numbers = #tpu.dot_dimension_numbers<[1], [0], [0], [1], [0, 0, 1, 1], [], []>} : vector<16x288xf32>, vector<288x288xf32>, vector<16x288xf32> -> vector<16x288xf32>
    %16 = arith.addf %10, %15 : vector<16x288xf32>
    %c0_17 = arith.constant 0 : index
    %c0_18 = arith.constant 0 : index
    %17 = vector.load %arg3[%c0_17, %c0_18] : memref<1x288xf32, #tpu.memory_space<vmem>>, vector<1x288xf32>
    %18 = vector.broadcast %17 : vector<1x288xf32> to vector<16x288xf32>
    %19 = arith.addf %16, %18 : vector<16x288xf32>
    %cst_19 = arith.constant 0.000000e+00 : f32
    %20 = vector.broadcast %cst_19 : f32 to vector<16x288xf32>
    %21 = arith.maximumf %19, %20 : vector<16x288xf32>
    %cst_20 = arith.constant 0.000000e+00 : f32
    %22 = vector.broadcast %cst_20 : f32 to vector<18x288xf32>
    %c0_21 = arith.constant 0 : index
    %c0_22 = arith.constant 0 : index
    %23 = vector.load %arg7[%c0_21, %c0_22] : memref<18x288xf32, #tpu.memory_space<vmem>>, vector<18x288xf32>
    tpu.vector_store %arg7[%c0_21, %c0_22], %22 {strides = array<i32>} : memref<18x288xf32, #tpu.memory_space<vmem>>, vector<18x288xf32>,
    %c1_23 = arith.constant 1 : index
    %c0_24 = arith.constant 0 : index
    %24 = vector.load %arg7[%c1_23, %c0_24] : memref<18x288xf32, #tpu.memory_space<vmem>>, vector<16x288xf32>
    tpu.vector_store %arg7[%c1_23, %c0_24], %21 {strides = array<i32>} : memref<18x288xf32, #tpu.memory_space<vmem>>, vector<16x288xf32>,
    %c0_25 = arith.constant 0 : index
    %c0_26 = arith.constant 0 : index
    %25 = vector.load %arg7[%c0_25, %c0_26] : memref<18x288xf32, #tpu.memory_space<vmem>>, vector<16x288xf32>
    %c0_27 = arith.constant 0 : index
    %c0_28 = arith.constant 0 : index
    %c0_29 = arith.constant 0 : index
    %26 = vector.load %arg4[%c0_27, %c0_28, %c0_29] : memref<3x288x288xf32, #tpu.memory_space<vmem>>, vector<1x288x288xf32>
    %27 = vector.shape_cast %26 : vector<1x288x288xf32> to vector<288x288xf32>
    %cst_30 = arith.constant dense<0.000000e+00> : vector<16x288xf32>
    %28 = tpu.matmul %25, %27, %cst_30 {dimension_numbers = #tpu.dot_dimension_numbers<[1], [0], [0], [1], [0, 0, 1, 1], [], []>} : vector<16x288xf32>, vector<288x288xf32>, vector<16x288xf32> -> vector<16x288xf32>
    %c1_31 = arith.constant 1 : index
    %c0_32 = arith.constant 0 : index
    %29 = vector.load %arg7[%c1_31, %c0_32] : memref<18x288xf32, #tpu.memory_space<vmem>>, vector<16x288xf32>
    %c1_33 = arith.constant 1 : index
    %c0_34 = arith.constant 0 : index
    %c0_35 = arith.constant 0 : index
    %30 = vector.load %arg4[%c1_33, %c0_34, %c0_35] : memref<3x288x288xf32, #tpu.memory_space<vmem>>, vector<1x288x288xf32>
    %31 = vector.shape_cast %30 : vector<1x288x288xf32> to vector<288x288xf32>
    %cst_36 = arith.constant dense<0.000000e+00> : vector<16x288xf32>
    %32 = tpu.matmul %29, %31, %cst_36 {dimension_numbers = #tpu.dot_dimension_numbers<[1], [0], [0], [1], [0, 0, 1, 1], [], []>} : vector<16x288xf32>, vector<288x288xf32>, vector<16x288xf32> -> vector<16x288xf32>
    %33 = arith.addf %28, %32 : vector<16x288xf32>
    %c2_37 = arith.constant 2 : index
    %c0_38 = arith.constant 0 : index
    %34 = vector.load %arg7[%c2_37, %c0_38] : memref<18x288xf32, #tpu.memory_space<vmem>>, vector<16x288xf32>
    %c2_39 = arith.constant 2 : index
    %c0_40 = arith.constant 0 : index
    %c0_41 = arith.constant 0 : index
    %35 = vector.load %arg4[%c2_39, %c0_40, %c0_41] : memref<3x288x288xf32, #tpu.memory_space<vmem>>, vector<1x288x288xf32>
    %36 = vector.shape_cast %35 : vector<1x288x288xf32> to vector<288x288xf32>
    %cst_42 = arith.constant dense<0.000000e+00> : vector<16x288xf32>
    %37 = tpu.matmul %34, %36, %cst_42 {dimension_numbers = #tpu.dot_dimension_numbers<[1], [0], [0], [1], [0, 0, 1, 1], [], []>} : vector<16x288xf32>, vector<288x288xf32>, vector<16x288xf32> -> vector<16x288xf32>
    %38 = arith.addf %33, %37 : vector<16x288xf32>
    %c0_43 = arith.constant 0 : index
    %c0_44 = arith.constant 0 : index
    %39 = vector.load %arg5[%c0_43, %c0_44] : memref<1x288xf32, #tpu.memory_space<vmem>>, vector<1x288xf32>
    %40 = vector.broadcast %39 : vector<1x288xf32> to vector<16x288xf32>
    %41 = arith.addf %38, %40 : vector<16x288xf32>
    %c0_45 = arith.constant 0 : index
    %c1_46 = arith.constant 1 : index
    %c0_47 = arith.constant 0 : index
    %42 = vector.load %arg1[%c0_45, %c1_46, %c0_47] : memref<1x18x288xf32, #tpu.memory_space<vmem>>, vector<1x16x288xf32>
    %43 = vector.shape_cast %42 : vector<1x16x288xf32> to vector<16x288xf32>
    %44 = arith.addf %41, %43 : vector<16x288xf32>
    %cst_48 = arith.constant 0.000000e+00 : f32
    %45 = vector.broadcast %cst_48 : f32 to vector<1x18x288xf32>
    %c0_49 = arith.constant 0 : index
    %c0_50 = arith.constant 0 : index
    %c0_51 = arith.constant 0 : index
    %46 = vector.load %arg6[%c0_49, %c0_50, %c0_51] : memref<1x18x288xf32, #tpu.memory_space<vmem>>, vector<1x18x288xf32>
    tpu.vector_store %arg6[%c0_49, %c0_50, %c0_51], %45 {strides = array<i32>} : memref<1x18x288xf32, #tpu.memory_space<vmem>>, vector<1x18x288xf32>,
    %c0_52 = arith.constant 0 : index
    %c1_53 = arith.constant 1 : index
    %c0_54 = arith.constant 0 : index
    %47 = vector.load %arg6[%c0_52, %c1_53, %c0_54] : memref<1x18x288xf32, #tpu.memory_space<vmem>>, vector<1x16x288xf32>
    %48 = vector.shape_cast %47 : vector<1x16x288xf32> to vector<16x288xf32>
    %49 = vector.shape_cast %44 : vector<16x288xf32> to vector<1x16x288xf32>
    tpu.vector_store %arg6[%c0_52, %c1_53, %c0_54], %49 {strides = array<i32>} : memref<1x18x288xf32, #tpu.memory_space<vmem>>, vector<1x16x288xf32>,
    return
  }
  func.func @transform_0(%arg0: i32) -> (i32, i32, i32) {
    %c0_i32 = arith.constant 0 : i32
    %c0_i32_0 = arith.constant 0 : i32
    %c0_i32_1 = arith.constant 0 : i32
    return %arg0, %c0_i32, %c0_i32_0 : i32, i32, i32
  }
  func.func @transform_1(%arg0: i32) -> (i32, i32, i32) {
    %c0_i32 = arith.constant 0 : i32
    %c0_i32_0 = arith.constant 0 : i32
    %c0_i32_1 = arith.constant 0 : i32
    %c0_i32_2 = arith.constant 0 : i32
    return %c0_i32, %c0_i32_0, %c0_i32_1 : i32, i32, i32
  }
  func.func @transform_2(%arg0: i32) -> (i32, i32) {
    %c0_i32 = arith.constant 0 : i32
    %c0_i32_0 = arith.constant 0 : i32
    %c0_i32_1 = arith.constant 0 : i32
    return %c0_i32, %c0_i32_0 : i32, i32
  }
  func.func @transform_3(%arg0: i32) -> (i32, i32, i32) {
    %c0_i32 = arith.constant 0 : i32
    %c0_i32_0 = arith.constant 0 : i32
    %c0_i32_1 = arith.constant 0 : i32
    %c0_i32_2 = arith.constant 0 : i32
    return %c0_i32, %c0_i32_0, %c0_i32_1 : i32, i32, i32
  }
  func.func @transform_4(%arg0: i32) -> (i32, i32) {
    %c0_i32 = arith.constant 0 : i32
    %c0_i32_0 = arith.constant 0 : i32
    %c0_i32_1 = arith.constant 0 : i32
    return %c0_i32, %c0_i32_0 : i32, i32
  }
  func.func @transform_5(%arg0: i32) -> (i32, i32, i32) {
    %c0_i32 = arith.constant 0 : i32
    %c0_i32_0 = arith.constant 0 : i32
    %c0_i32_1 = arith.constant 0 : i32
    return %arg0, %c0_i32, %c0_i32_0 : i32, i32, i32
  }
}

module attributes {stable_mosaic.version = 11 : i64} {
  func.func @_conv3x3_kernel(%arg0: i32, %arg1: memref<1x18x288xf32, #tpu.memory_space<vmem>>, %arg2: memref<3x288x48xf32, #tpu.memory_space<vmem>>, %arg3: memref<1x48xf32, #tpu.memory_space<vmem>>, %arg4: memref<1x16x48xf32, #tpu.memory_space<vmem>>, %arg5: memref<1x16x48xf32, #tpu.memory_space<vmem>>) attributes {dimension_semantics = [#tpu.dimension_semantics<parallel>], iteration_bounds = array<i64: 2>, scalar_prefetch = 0 : i64, scratch_operands = 0 : i64, tpu.core_type = #tpu.core_type<tc>, window_params = [{transform_indices = @transform_0, window_bounds = array<i64: 1, 18, 288>}, {pipeline_mode = #tpu.pipeline_mode<synchronous>, transform_indices = @transform_1, window_bounds = array<i64: 3, 288, 48>}, {pipeline_mode = #tpu.pipeline_mode<synchronous>, transform_indices = @transform_2, window_bounds = array<i64: 1, 48>}, {transform_indices = @transform_3, window_bounds = array<i64: 1, 16, 48>}, {transform_indices = @transform_4, window_bounds = array<i64: 1, 16, 48>}]} {
    %c0 = arith.constant 0 : index
    %c0_0 = arith.constant 0 : index
    %c0_1 = arith.constant 0 : index
    %0 = vector.load %arg1[%c0, %c0_0, %c0_1] : memref<1x18x288xf32, #tpu.memory_space<vmem>>, vector<1x16x288xf32>
    %1 = vector.shape_cast %0 : vector<1x16x288xf32> to vector<16x288xf32>
    %c0_2 = arith.constant 0 : index
    %c0_3 = arith.constant 0 : index
    %c0_4 = arith.constant 0 : index
    %2 = vector.load %arg2[%c0_2, %c0_3, %c0_4] : memref<3x288x48xf32, #tpu.memory_space<vmem>>, vector<1x288x48xf32>
    %3 = vector.shape_cast %2 : vector<1x288x48xf32> to vector<288x48xf32>
    %cst = arith.constant dense<0.000000e+00> : vector<16x48xf32>
    %4 = tpu.matmul %1, %3, %cst {dimension_numbers = #tpu.dot_dimension_numbers<[1], [0], [0], [1], [0, 0, 1, 1], [], []>} : vector<16x288xf32>, vector<288x48xf32>, vector<16x48xf32> -> vector<16x48xf32>
    %c0_5 = arith.constant 0 : index
    %c1 = arith.constant 1 : index
    %c0_6 = arith.constant 0 : index
    %5 = vector.load %arg1[%c0_5, %c1, %c0_6] : memref<1x18x288xf32, #tpu.memory_space<vmem>>, vector<1x16x288xf32>
    %6 = vector.shape_cast %5 : vector<1x16x288xf32> to vector<16x288xf32>
    %c1_7 = arith.constant 1 : index
    %c0_8 = arith.constant 0 : index
    %c0_9 = arith.constant 0 : index
    %7 = vector.load %arg2[%c1_7, %c0_8, %c0_9] : memref<3x288x48xf32, #tpu.memory_space<vmem>>, vector<1x288x48xf32>
    %8 = vector.shape_cast %7 : vector<1x288x48xf32> to vector<288x48xf32>
    %cst_10 = arith.constant dense<0.000000e+00> : vector<16x48xf32>
    %9 = tpu.matmul %6, %8, %cst_10 {dimension_numbers = #tpu.dot_dimension_numbers<[1], [0], [0], [1], [0, 0, 1, 1], [], []>} : vector<16x288xf32>, vector<288x48xf32>, vector<16x48xf32> -> vector<16x48xf32>
    %10 = arith.addf %4, %9 : vector<16x48xf32>
    %c0_11 = arith.constant 0 : index
    %c2 = arith.constant 2 : index
    %c0_12 = arith.constant 0 : index
    %11 = vector.load %arg1[%c0_11, %c2, %c0_12] : memref<1x18x288xf32, #tpu.memory_space<vmem>>, vector<1x16x288xf32>
    %12 = vector.shape_cast %11 : vector<1x16x288xf32> to vector<16x288xf32>
    %c2_13 = arith.constant 2 : index
    %c0_14 = arith.constant 0 : index
    %c0_15 = arith.constant 0 : index
    %13 = vector.load %arg2[%c2_13, %c0_14, %c0_15] : memref<3x288x48xf32, #tpu.memory_space<vmem>>, vector<1x288x48xf32>
    %14 = vector.shape_cast %13 : vector<1x288x48xf32> to vector<288x48xf32>
    %cst_16 = arith.constant dense<0.000000e+00> : vector<16x48xf32>
    %15 = tpu.matmul %12, %14, %cst_16 {dimension_numbers = #tpu.dot_dimension_numbers<[1], [0], [0], [1], [0, 0, 1, 1], [], []>} : vector<16x288xf32>, vector<288x48xf32>, vector<16x48xf32> -> vector<16x48xf32>
    %16 = arith.addf %10, %15 : vector<16x48xf32>
    %c0_17 = arith.constant 0 : index
    %c0_18 = arith.constant 0 : index
    %17 = vector.load %arg3[%c0_17, %c0_18] : memref<1x48xf32, #tpu.memory_space<vmem>>, vector<1x48xf32>
    %18 = vector.broadcast %17 : vector<1x48xf32> to vector<16x48xf32>
    %19 = arith.addf %16, %18 : vector<16x48xf32>
    %c0_19 = arith.constant 0 : index
    %c0_20 = arith.constant 0 : index
    %c0_21 = arith.constant 0 : index
    %20 = vector.load %arg4[%c0_19, %c0_20, %c0_21] : memref<1x16x48xf32, #tpu.memory_space<vmem>>, vector<1x16x48xf32>
    %21 = vector.shape_cast %20 : vector<1x16x48xf32> to vector<16x48xf32>
    %22 = arith.addf %19, %21 : vector<16x48xf32>
    %c0_22 = arith.constant 0 : index
    %c0_23 = arith.constant 0 : index
    %c0_24 = arith.constant 0 : index
    %23 = vector.load %arg5[%c0_22, %c0_23, %c0_24] : memref<1x16x48xf32, #tpu.memory_space<vmem>>, vector<1x16x48xf32>
    %24 = vector.shape_cast %23 : vector<1x16x48xf32> to vector<16x48xf32>
    %25 = vector.shape_cast %22 : vector<16x48xf32> to vector<1x16x48xf32>
    tpu.vector_store %arg5[%c0_22, %c0_23, %c0_24], %25 {strides = array<i32>} : memref<1x16x48xf32, #tpu.memory_space<vmem>>, vector<1x16x48xf32>,
    return
  }
  func.func @transform_0(%arg0: i32) -> (i32, i32, i32) {
    %c0_i32 = arith.constant 0 : i32
    %c0_i32_0 = arith.constant 0 : i32
    %c0_i32_1 = arith.constant 0 : i32
    return %arg0, %c0_i32, %c0_i32_0 : i32, i32, i32
  }
  func.func @transform_1(%arg0: i32) -> (i32, i32, i32) {
    %c0_i32 = arith.constant 0 : i32
    %c0_i32_0 = arith.constant 0 : i32
    %c0_i32_1 = arith.constant 0 : i32
    %c0_i32_2 = arith.constant 0 : i32
    return %c0_i32, %c0_i32_0, %c0_i32_1 : i32, i32, i32
  }
  func.func @transform_2(%arg0: i32) -> (i32, i32) {
    %c0_i32 = arith.constant 0 : i32
    %c0_i32_0 = arith.constant 0 : i32
    %c0_i32_1 = arith.constant 0 : i32
    return %c0_i32, %c0_i32_0 : i32, i32
  }
  func.func @transform_3(%arg0: i32) -> (i32, i32, i32) {
    %c0_i32 = arith.constant 0 : i32
    %c0_i32_0 = arith.constant 0 : i32
    %c0_i32_1 = arith.constant 0 : i32
    return %arg0, %c0_i32, %c0_i32_0 : i32, i32, i32
  }
  func.func @transform_4(%arg0: i32) -> (i32, i32, i32) {
    %c0_i32 = arith.constant 0 : i32
    %c0_i32_0 = arith.constant 0 : i32
    %c0_i32_1 = arith.constant 0 : i32
    return %arg0, %c0_i32, %c0_i32_0 : i32, i32, i32
  }
}

</mosaic_0001>

<llo_original>
// kernel: tile.103
$region0: #{tile.103}
  #allocation2 [shape = 's32[1]{0}', space=sflag, size = 0x4, scoped, tag = 'scoped memory for tile.103']
  %s0 = inlined_call_operand.hbm [shape: f32[16], index: 0, kind: input, shape index: {}]
  %s1 = inlined_call_operand.vmem [shape: f32[8,16], index: 1, kind: output, shape index: {}]
  $region1: #{tile.103} parent=0
    #allocation0 [shape = 'u8[512]{0}', space=vmem, size = 0x400, scoped, tag = 'operand span for operand 0']
    #allocation1 [shape = 's32[1]{0}', space=sflag, size = 0x4, scoped, tag = 'scoped memory for tile.103']
    %2 = vsyncpa [#allocation1], 0
    // Predicated region
    $region2: #{tile.103} parent=1 // pred_check
      _
    $region3: #{tile.103} parent=1 // pred_check_branch
      %4 = sbr.rel (0) target = $region5
    $region4: #{tile.103} parent=1 // pred_region
      %6 = vsyncadd [#allocation1], 0
      %s8 = sshll.u32 %s0, 4
      %s9 = int_to_ptr.hbm [resolvable:$true] %s8
      %s10 = sshll.u32 [#allocation0], 4
      %s11 = int_to_ptr.vmem [resolvable:$true] %s10
      %13 = dma.hbm_to_vmem [thread:$0]  %s9, 16, %s11, [#allocation1]
    $region5: #{tile.103} parent=1 // pred_fallthru
      _
    // Predicated region
    $region6: #{tile.103} parent=1 // pred_check
      _
    $region7: #{tile.103} parent=1 // pred_check_branch
      %15 = sbr.rel (0) target = $region9
    $region8: #{tile.103} parent=1 // pred_region
      %17 = dma.done [#allocation1], 16
    $region9: #{tile.103} parent=1 // pred_fallthru
      _
    %v18 = vld [vmem:[#allocation0] ss:$0 sm:$0xff]
    %19 = vst [vmem:[%s1] sm:$0xff] %v18
    %20 = vsyncpa [#allocation1], 1

// kernel: tile.104
$region0: #{tile.104}
  %s0 = inlined_call_operand.vmem [shape: f32[8,16], index: 0, kind: input, shape index: {}]
  %s1 = inlined_call_operand.vmem [shape: f32[128], index: 1, kind: output, shape index: {}]
  $region1: #{tile.104} parent=0
    #allocation0 [shape = 'u8[4096]{0}', space=vmem, size = 0x1000, scoped, tag = 'scoped mem for output reshape']
    %v2 = vld [vmem:[%s0] sm:$0x1]
    %vm3 = vcmask 130048
    %4 = vst.msk [vmem:[#allocation0] sm:$0x1] %vm3, %v2
    %s5 = scalar_lea.vmem %s0, 7
    %v6 = vld [vmem:[%s5] sm:$0x1]
    %7 = vrot.lane.b32.xlu0 %v6, 112
    %v8 = vpop.permute.xlu0 %7
    %vm9 = vcmask 1048448
    %10 = vst.msk [vmem:[#allocation0] sm:$0x1] %vm9, %v8
    %s11 = scalar_lea.vmem %s0, 6
    %v12 = vld [vmem:[%s11] sm:$0x1]
    %13 = vrot.lane.b32.xlu0 %v12, 96
    %v14 = vpop.permute.xlu0 %13
    %vm15 = vcmask 917248
    %16 = vst.msk [vmem:[#allocation0] sm:$0x1] %vm15, %v14
    %s17 = scalar_lea.vmem %s0, 5
    %v18 = vld [vmem:[%s17] sm:$0x1]
    %19 = vrot.lane.b32.xlu0 %v18, 80
    %v20 = vpop.permute.xlu0 %19
    %vm21 = vcmask 786048
    %22 = vst.msk [vmem:[#allocation0] sm:$0x1] %vm21, %v20
    %s23 = scalar_lea.vmem %s0, 4
    %v24 = vld [vmem:[%s23] sm:$0x1]
    %25 = vrot.lane.b32.xlu0 %v24, 64
    %v26 = vpop.permute.xlu0 %25
    %vm27 = vcmask 654848
    %28 = vst.msk [vmem:[#allocation0] sm:$0x1] %vm27, %v26
    %s29 = scalar_lea.vmem %s0, 3
    %v30 = vld [vmem:[%s29] sm:$0x1]
    %31 = vrot.lane.b32.xlu0 %v30, 48
    %v32 = vpop.permute.xlu0 %31
    %vm33 = vcmask 523648
    %34 = vst.msk [vmem:[#allocation0] sm:$0x1] %vm33, %v32
    %s35 = scalar_lea.vmem %s0, 2
    %v36 = vld [vmem:[%s35] sm:$0x1]
    %37 = vrot.lane.b32.xlu0 %v36, 32
    %v38 = vpop.permute.xlu0 %37
    %vm39 = vcmask 392448
    %40 = vst.msk [vmem:[#allocation0] sm:$0x1] %vm39, %v38
    %s41 = scalar_lea.vmem %s0, 1
    %v42 = vld [vmem:[%s41] sm:$0x1]
    %43 = vrot.lane.b32.xlu0 %v42, 16
    %v44 = vpop.permute.xlu0 %43
    %vm45 = vcmask 261248
    %46 = vst.msk [vmem:[#allocation0] sm:$0x1] %vm45, %v44
    %s48 = ssub.s32 2, 1
    %v49 = vld [vmem:[#allocation0] sm:%s48]
    %s51 = ssub.s32 2, 1
    %52 = vst [vmem:[%s1] sm:%s51] %v49

// kernel: usr_forward.11
$region0: #{usr_forward.11}
  #allocation0 [shape = 'u32[]', space=smem, size = 0x4, offset = 0x4, fixed_abs, tag = 'smem constant byte address 0x4 - core index']
  #allocation1 [shape = 'u32[72,128]{1,0:T(1,128)}', space=vmem, size = 0x9000, scoped, tag = 'internal scratch']
  %s0 = inlined_call_operand.vmem [shape: f32[2,10,30], index: 0, kind: input, shape index: {}]
  %s1 = inlined_call_operand.vmem [shape: f32[3,30,160], index: 1, kind: input, shape index: {}]
  %s2 = inlined_call_operand.vmem [shape: f32[1,160], index: 2, kind: input, shape index: {}]
  %s3 = inlined_call_operand.vmem [shape: f32[2,10,160], index: 3, kind: output, shape index: {}]
  %s4 = sld [smem:[#allocation0]]
  $region45: #{usr_forward.11} parent=0
    _
  %s6 = ssub.s32 1, %s4
  %s7 = scalar_select 0, %s6, %s4
  loop: start=0, step=1, limit=4
  $region2: #{usr_forward.11} parent=0 // loop_pre_header
    _
  $region3: #{usr_forward.11} parent=0 // loop_header
    %s9 = sphi 0, %s13
    %p10 = scmp.ge.s32.totalorder %s9, 4
    %s19 = sphi 0, %s21
    %s22 = sphi 0, %s19
    %s23 = sphi 0, %s22
    %s39 = sphi 0, %s23
    %s43 = sphi 0, %s43
    %s45 = sphi 0, %s43
    %s46 = sphi 0, %s45
    %s60 = sphi 0, %s46
    %s64 = sphi 0, %s64
    %s66 = sphi 0, %s64
    %s67 = sphi 0, %s66
    %s81 = sphi 0, %s67
    %s87 = sphi 0, %s89
    %s90 = sphi 0, %s87
    %s91 = sphi 0, %s90
    %s107 = sphi 0, %s91
  $region4: #{usr_forward.11} parent=0 // loop_header_branch
    %12 = sbr.rel (%p10) target = $region8
  $region5: #{usr_forward.11} parent=0 // loop_body
    %s14 = ssub.s32 %s9, 1
    %s15 = ssub.s32 %s9, 2
    %s16 = sadd.s32 %s9, 1
    %s17 = ssub.s32 %s9, %s16
    %p18 = scmp.eq.s32.totalorder %s17, 0
    %s20 = sadd.s32 %s19, 1
    %s21 = scalar_select %p18, %s19, %s20
    %p24 = pneg %p18
    %p25 = scmp.eq.s32.totalorder %s9, 1
    %p26 = por %p24, %p25
    %p27 = scmp.ne.s32.totalorder %s19, %s22
    %p28 = scmp.eq.s32.totalorder %s9, 0
    %p29 = por %p27, %p28
    %p30 = scmp.ne.s32.totalorder %s19, %s22
    %p31 = scmp.eq.s32.totalorder %s14, 1
    %p32 = por %p30, %p31
    %p33 = scmp.ne.s32.totalorder %s22, %s23
    %p34 = scmp.eq.s32.totalorder %s14, 0
    %p35 = por %p33, %p34
    %p36 = scmp.ne.s32.totalorder %s22, %s23
    %p37 = scmp.eq.s32.totalorder %s15, 1
    %p38 = por %p36, %p37
    %p40 = scmp.ne.s32.totalorder %s23, %s39
    %p41 = scmp.eq.s32.totalorder %s15, 0
    %p42 = por %p40, %p41
    %s44 = sadd.s32 %s43, 1
    %p47 = scmp.eq.s32.totalorder %s9, 1
    %p48 = scmp.ne.s32.totalorder %s43, %s45
    %p49 = scmp.eq.s32.totalorder %s9, 0
    %p50 = por %p48, %p49
    %p51 = scmp.ne.s32.totalorder %s43, %s45
    %p52 = scmp.eq.s32.totalorder %s14, 1
    %p53 = por %p51, %p52
    %p54 = scmp.ne.s32.totalorder %s45, %s46
    %p55 = scmp.eq.s32.totalorder %s14, 0
    %p56 = por %p54, %p55
    %p57 = scmp.ne.s32.totalorder %s45, %s46
    %p58 = scmp.eq.s32.totalorder %s15, 1
    %p59 = por %p57, %p58
    %p61 = scmp.ne.s32.totalorder %s46, %s60
    %p62 = scmp.eq.s32.totalorder %s15, 0
    %p63 = por %p61, %p62
    %s65 = sadd.s32 %s64, 1
    %p68 = scmp.eq.s32.totalorder %s9, 1
    %p69 = scmp.ne.s32.totalorder %s64, %s66
    %p70 = scmp.eq.s32.totalorder %s9, 0
    %p71 = por %p69, %p70
    %p72 = scmp.ne.s32.totalorder %s64, %s66
    %p73 = scmp.eq.s32.totalorder %s14, 1
    %p74 = por %p72, %p73
    %p75 = scmp.ne.s32.totalorder %s66, %s67
    %p76 = scmp.eq.s32.totalorder %s14, 0
    %p77 = por %p75, %p76
    %p78 = scmp.ne.s32.totalorder %s66, %s67
    %p79 = scmp.eq.s32.totalorder %s15, 1
    %p80 = por %p78, %p79
    %p82 = scmp.ne.s32.totalorder %s67, %s81
    %p83 = scmp.eq.s32.totalorder %s15, 0
    %p84 = por %p82, %p83
    %s85 = ssub.s32 %s9, %s16
    %p86 = scmp.eq.s32.totalorder %s85, 0
    %s88 = sadd.s32 %s87, 1
    %s89 = scalar_select %p86, %s87, %s88
    %p92 = pneg %p86
    %p93 = scmp.eq.s32.totalorder %s9, 1
    %p94 = por %p92, %p93
    %p95 = scmp.ne.s32.totalorder %s87, %s90
    %p96 = scmp.eq.s32.totalorder %s9, 0
    %p97 = por %p95, %p96
    %p98 = scmp.ne.s32.totalorder %s87, %s90
    %p99 = scmp.eq.s32.totalorder %s14, 1
    %p100 = por %p98, %p99
    %p101 = scmp.ne.s32.totalorder %s90, %s91
    %p102 = scmp.eq.s32.totalorder %s14, 0
    %p103 = por %p101, %p102
    %p104 = scmp.ne.s32.totalorder %s90, %s91
    %p105 = scmp.eq.s32.totalorder %s15, 1
    %p106 = por %p104, %p105
    %p108 = scmp.ne.s32.totalorder %s91, %s107
    %p109 = scmp.eq.s32.totalorder %s15, 0
    %p110 = por %p108, %p109
    %p111 = scmp.le.s32.totalorder 1, %s9
    %p112 = scmp.lt.s32.totalorder %s9, 3
    %p113 = pnand %p111, %p112
    %p114 = pneg %p113
    // Predicated region
    $region9: #{usr_forward.11} parent=5 // pred_check
      _
    $region10: #{usr_forward.11} parent=5 // pred_check_branch
      %116 = sbr.rel (%p113) target = $region12
    $region11: #{usr_forward.11} parent=5 // pred_region
      %s117 = ssub.s32 %s9, 1
      // Predicated region
      $region13: #{usr_forward.11} parent=11 // pred_check
        %p118 = pneg %p56
      $region14: #{usr_forward.11} parent=11 // pred_check_branch
        %120 = sbr.rel (%p118) target = $region16
      $region15: #{usr_forward.11} parent=11 // pred_region
        _
      $region16: #{usr_forward.11} parent=11 // pred_fallthru
        _
      // Predicated region
      $region17: #{usr_forward.11} parent=11 // pred_check
        %p121 = pneg %p77
      $region18: #{usr_forward.11} parent=11 // pred_check_branch
        %123 = sbr.rel (%p121) target = $region20
      $region19: #{usr_forward.11} parent=11 // pred_region
        _
      $region20: #{usr_forward.11} parent=11 // pred_fallthru
        _
    $region12: #{usr_forward.11} parent=5 // pred_fallthru
      _
    %p124 = scmp.lt.s32.totalorder %s9, 2
    // Predicated region
    $region21: #{usr_forward.11} parent=5 // pred_check
      %p125 = pneg %p124
    $region22: #{usr_forward.11} parent=5 // pred_check_branch
      %127 = sbr.rel (%p125) target = $region24
    $region23: #{usr_forward.11} parent=5 // pred_region
      // Predicated region
      $region25: #{usr_forward.11} parent=23 // pred_check
        %p128 = pneg %p29
      $region26: #{usr_forward.11} parent=23 // pred_check_branch
        %130 = sbr.rel (%p128) target = $region28
      $region27: #{usr_forward.11} parent=23 // pred_region
        %p131 = scmp.lt.s32.totalorder %s9, 1
        %s132 = scalar_select %p131, %s9, 1
        %s133 = smul.addr %s132, 2
        %s134 = smul.addr %s133, 8
        %s135 = scalar_lea.vmem %s0, %s134
      $region28: #{usr_forward.11} parent=23 // pred_fallthru
        _
    $region24: #{usr_forward.11} parent=5 // pred_fallthru
      _
    %p136 = scmp.le.s32.totalorder 1, %s9
    %p137 = scmp.lt.s32.totalorder %s9, 3
    %p138 = pnand %p136, %p137
    %p139 = pneg %p138
    // Predicated region
    $region29: #{usr_forward.11} parent=5 // pred_check
      _
    $region30: #{usr_forward.11} parent=5 // pred_check_branch
      %141 = sbr.rel (%p138) target = $region32
    $region31: #{usr_forward.11} parent=5 // pred_region
      %s142 = ssub.s32 %s9, 1
      %p143 = scmp.lt.s32.totalorder %s14, 1
      %s144 = scalar_select %p143, %s14, 1
      %s145 = smul.addr %s144, 2
      %s146 = smul.addr %s145, 8
      %s147 = scalar_lea.vmem %s0, %s146
      %p148 = pneg %p35
      %p149 = pneg %p32
      %p150 = pneg %p56
      %p151 = pneg %p53
      %p152 = pneg %p77
      %p153 = pneg %p74
      %p154 = pneg %p103
      %p155 = pneg %p100
      %p156 = scmp.lt.s32.totalorder %s14, 1
      %s157 = scalar_select %p156, %s14, 1
      %s158 = smul.addr %s157, 4
      %s159 = smul.addr %s158, 8
      %s160 = scalar_lea.vmem %s3, %s159
      %p161 = scmp.lt.s32.totalorder %s14, 1
      %s162 = scalar_select %p161, %s14, 1
      %s163 = smul.addr %s162, 2
      %s164 = smul.addr %s163, 8
      %s165 = scalar_lea.vmem %s0, %s164
      %p166 = scmp.lt.s32.totalorder %s14, 1
      %s167 = scalar_select %p166, %s14, 1
      %s168 = smul.addr %s167, 4
      %s169 = smul.addr %s168, 8
      %s170 = scalar_lea.vmem %s3, %s169
      %v171 = vld [vmem:[%s165] sm:$0xff]
      %v172 = vld [vmem:[%s1] sm:$0xff]
      %v173 = vld [vmem:[%s1 + $0x8] sm:$0xff]
      %v174 = vld [vmem:[%s1 + $0x10] sm:$0xff]
      %v175 = vld [vmem:[%s1 + $0x18] sm:$0xff]
      %v176 = vld [vmem:[%s1 + $0x20] sm:$0xff]
      %v177 = vld [vmem:[%s1 + $0x28] sm:$0xff]
      %v178 = vld [vmem:[%s1 + $0x30] sm:$0x3f]
      %v179 = vld [vmem:[%s1 + $0x38] sm:$0x3f]
      %v180 = vld [vmem:[%s165 + $0x1] sm:$0xff]
      %s181 = scalar_lea.vmem %s1, 64
      %v182 = vld [vmem:[%s181] sm:$0xff]
      %v183 = vld [vmem:[%s181 + $0x8] sm:$0xff]
      %v184 = vld [vmem:[%s181 + $0x10] sm:$0xff]
      %v185 = vld [vmem:[%s181 + $0x18] sm:$0xff]
      %v186 = vld [vmem:[%s181 + $0x20] sm:$0xff]
      %v187 = vld [vmem:[%s181 + $0x28] sm:$0xff]
      %v188 = vld [vmem:[%s181 + $0x30] sm:$0x3f]
      %v189 = vld [vmem:[%s181 + $0x38] sm:$0x3f]
      %vm190 = vcmask 244736
      %v192 = vsel %vm190, %v180, 0
      %vm194 = vcmask 1045504
      %v196 = vsel %vm194, %v188, 0
      %v199 = vsel %vm194, %v189, 0
      %201 = vmatpush.msra.mxu0 0.0
      %202 = vmatpush.msra.mxu0 0.0
      %203 = vmatpush.msra.mxu0 0.0
      %204 = vmatpush.msra.mxu0 0.0
      %205 = vmatpush.msra.mxu0 0.0
      %206 = vmatpush.msra.mxu0 0.0
      %207 = vmatpush.msra.mxu0 0.0
      %208 = vmatpush.msra.mxu0 0.0
      %209 = vmatpush.msra.mxu0 0.0
      %210 = vmatpush.msra.mxu0 0.0
      %211 = vmatpush.msra.mxu0 0.0
      %212 = vmatpush.msra.mxu0 0.0
      %213 = vmatpush.msra.mxu0 %v196
      %214 = vmatpush.msra.mxu0 %v186
      %215 = vmatpush.msra.mxu0 %v184
      %216 = vmatpush.msra.mxu0 %v182
      %217 = vmatmul.f32.gmra.mxu0 %v192
      %v218 = vpop.f32.mrf.mxu0
      %v219 = vadd.f32 0.0, %v218
      %220 = vdwg.mxu0
      %221 = vmatpush.msra.mxu0 0.0
      %222 = vmatpush.msra.mxu0 0.0
      %223 = vmatpush.msra.mxu0 0.0
      %224 = vmatpush.msra.mxu0 0.0
      %225 = vmatpush.msra.mxu0 0.0
      %226 = vmatpush.msra.mxu0 0.0
      %227 = vmatpush.msra.mxu0 0.0
      %228 = vmatpush.msra.mxu0 0.0
      %229 = vmatpush.msra.mxu0 0.0
      %230 = vmatpush.msra.mxu0 0.0
      %231 = vmatpush.msra.mxu0 0.0
      %232 = vmatpush.msra.mxu0 0.0
      %233 = vmatpush.msra.mxu0 %v199
      %234 = vmatpush.msra.mxu0 %v187
      %235 = vmatpush.msra.mxu0 %v185
      %236 = vmatpush.msra.mxu0 %v183
      %237 = vmatmul.f32.gmra.mxu0 %v192
      %v238 = vpop.f32.mrf.mxu0
      %v239 = vadd.f32 0.0, %v238
      %240 = vdwg.mxu0
      %v242 = vsel %vm190, %v171, 0
      %v245 = vsel %vm194, %v178, 0
      %v248 = vsel %vm194, %v179, 0
      %250 = vmatpush.msra.mxu0 0.0
      %251 = vmatpush.msra.mxu0 0.0
      %252 = vmatpush.msra.mxu0 0.0
      %253 = vmatpush.msra.mxu0 0.0
      %254 = vmatpush.msra.mxu0 0.0
      %255 = vmatpush.msra.mxu0 0.0
      %256 = vmatpush.msra.mxu0 0.0
      %257 = vmatpush.msra.mxu0 0.0
      %258 = vmatpush.msra.mxu0 0.0
      %259 = vmatpush.msra.mxu0 0.0
      %260 = vmatpush.msra.mxu0 0.0
      %261 = vmatpush.msra.mxu0 0.0
      %262 = vmatpush.msra.mxu0 %v245
      %263 = vmatpush.msra.mxu0 %v176
      %264 = vmatpush.msra.mxu0 %v174
      %265 = vmatpush.msra.mxu0 %v172
      %266 = vmatmul.f32.gmra.mxu0 %v242
      %v267 = vpop.f32.mrf.mxu0
      %v268 = vadd.f32 %v219, %v267
      %269 = vdwg.mxu0
      %270 = vmatpush.msra.mxu0 0.0
      %271 = vmatpush.msra.mxu0 0.0
      %272 = vmatpush.msra.mxu0 0.0
      %273 = vmatpush.msra.mxu0 0.0
      %274 = vmatpush.msra.mxu0 0.0
      %275 = vmatpush.msra.mxu0 0.0
      %276 = vmatpush.msra.mxu0 0.0
      %277 = vmatpush.msra.mxu0 0.0
      %278 = vmatpush.msra.mxu0 0.0
      %279 = vmatpush.msra.mxu0 0.0
      %280 = vmatpush.msra.mxu0 0.0
      %281 = vmatpush.msra.mxu0 0.0
      %282 = vmatpush.msra.mxu0 %v248
      %283 = vmatpush.msra.mxu0 %v177
      %284 = vmatpush.msra.mxu0 %v175
      %285 = vmatpush.msra.mxu0 %v173
      %286 = vmatmul.f32.gmra.mxu0 %v242
      %v287 = vpop.f32.mrf.mxu0
      %v288 = vadd.f32 %v239, %v287
      %289 = vdwg.mxu0
      %v290 = vld [vmem:[%s165 + $0x2] sm:$0xff]
      %s291 = scalar_lea.vmem %s1, 128
      %v292 = vld [vmem:[%s291] sm:$0xff]
      %v293 = vld [vmem:[%s291 + $0x8] sm:$0xff]
      %v294 = vld [vmem:[%s291 + $0x10] sm:$0xff]
      %v295 = vld [vmem:[%s291 + $0x18] sm:$0xff]
      %v296 = vld [vmem:[%s291 + $0x20] sm:$0xff]
      %v297 = vld [vmem:[%s291 + $0x28] sm:$0xff]
      %v298 = vld [vmem:[%s291 + $0x30] sm:$0x3f]
      %v299 = vld [vmem:[%s291 + $0x38] sm:$0x3f]
      %v301 = vsel %vm190, %v290, 0
      %v304 = vsel %vm194, %v298, 0
      %v307 = vsel %vm194, %v299, 0
      %309 = vmatpush.msra.mxu0 0.0
      %310 = vmatpush.msra.mxu0 0.0
      %311 = vmatpush.msra.mxu0 0.0
      %312 = vmatpush.msra.mxu0 0.0
      %313 = vmatpush.msra.mxu0 0.0
      %314 = vmatpush.msra.mxu0 0.0
      %315 = vmatpush.msra.mxu0 0.0
      %316 = vmatpush.msra.mxu0 0.0
      %317 = vmatpush.msra.mxu0 0.0
      %318 = vmatpush.msra.mxu0 0.0
      %319 = vmatpush.msra.mxu0 0.0
      %320 = vmatpush.msra.mxu0 0.0
      %321 = vmatpush.msra.mxu0 %v304
      %322 = vmatpush.msra.mxu0 %v296
      %323 = vmatpush.msra.mxu0 %v294
      %324 = vmatpush.msra.mxu0 %v292
      %325 = vmatmul.f32.gmra.mxu0 %v301
      %v326 = vpop.f32.mrf.mxu0
      %v327 = vadd.f32 0.0, %v326
      %328 = vdwg.mxu0
      %329 = vmatpush.msra.mxu0 0.0
      %330 = vmatpush.msra.mxu0 0.0
      %331 = vmatpush.msra.mxu0 0.0
      %332 = vmatpush.msra.mxu0 0.0
      %333 = vmatpush.msra.mxu0 0.0
      %334 = vmatpush.msra.mxu0 0.0
      %335 = vmatpush.msra.mxu0 0.0
      %336 = vmatpush.msra.mxu0 0.0
      %337 = vmatpush.msra.mxu0 0.0
      %338 = vmatpush.msra.mxu0 0.0
      %339 = vmatpush.msra.mxu0 0.0
      %340 = vmatpush.msra.mxu0 0.0
      %341 = vmatpush.msra.mxu0 %v307
      %342 = vmatpush.msra.mxu0 %v297
      %343 = vmatpush.msra.mxu0 %v295
      %344 = vmatpush.msra.mxu0 %v293
      %345 = vmatmul.f32.gmra.mxu0 %v301
      %v346 = vpop.f32.mrf.mxu0
      %v347 = vadd.f32 0.0, %v346
      %348 = vdwg.mxu0
      %v349 = vadd.f32 %v268, %v327
      %v350 = vadd.f32 %v288, %v347
      %v351 = vld [vmem:[%s2] sm:$0x3]
      %v353 = vperm.slane %v351, 0
      %v354 = vperm.slane %v351, 1
      %v357 = vadd.f32 %v349, %v353
      %v358 = vadd.f32 %v350, %v354
      %359 = vst [vmem:[%s170] sm:$0xff] 0.0
      %vm360 = vcmask 261120
      %361 = vst.msk [vmem:[%s170 + $0x8] sm:$0xff] %vm360, 0.0
      %362 = vst [vmem:[%s170 + $0x10] sm:$0x3] 0.0
      %vm363 = vcmask 254976
      %364 = vst.msk [vmem:[%s170 + $0x18] sm:$0x3] %vm363, 0.0
      %v367 = vrot.slane %v357, 7
      %v368 = vrot.slane %v358, 7
      %371 = vst [vmem:[%s170] sm:$0xfe] %v367
      %vm372 = vcmask 261121
      %373 = vst.msk [vmem:[%s170 + $0x8] sm:$0xfe] %vm372, %v368
      %374 = vst [vmem:[%s170 + $0x10] sm:$0x1] %v367
      %vm375 = vcmask 253952
      %376 = vst.msk [vmem:[%s170 + $0x18] sm:$0x1] %vm375, %v368
      %p377 = scmp.lt.s32.totalorder %s14, 1
      %s378 = scalar_select %p377, %s14, 1
      %s379 = smul.addr %s378, 4
      %s380 = smul.addr %s379, 8
      %s381 = scalar_lea.vmem %s3, %s380
      // Predicated region
      $region33: #{usr_forward.11} parent=31 // pred_check
        %p382 = pneg %p100
      $region34: #{usr_forward.11} parent=31 // pred_check_branch
        %384 = sbr.rel (%p382) target = $region36
      $region35: #{usr_forward.11} parent=31 // pred_region
        _
      $region36: #{usr_forward.11} parent=31 // pred_fallthru
        _
    $region32: #{usr_forward.11} parent=5 // pred_fallthru
      _
    %p385 = scmp.le.s32.totalorder 2, %s9
    // Predicated region
    $region37: #{usr_forward.11} parent=5 // pred_check
      %p386 = pneg %p385
    $region38: #{usr_forward.11} parent=5 // pred_check_branch
      %388 = sbr.rel (%p386) target = $region40
    $region39: #{usr_forward.11} parent=5 // pred_region
      %s389 = ssub.s32 %s9, 2
      // Predicated region
      $region41: #{usr_forward.11} parent=39 // pred_check
        %p390 = pneg %p106
      $region42: #{usr_forward.11} parent=39 // pred_check_branch
        %392 = sbr.rel (%p390) target = $region44
      $region43: #{usr_forward.11} parent=39 // pred_region
        %p393 = scmp.lt.s32.totalorder %s15, 1
        %s394 = scalar_select %p393, %s15, 1
        %s395 = smul.addr %s394, 4
        %s396 = smul.addr %s395, 8
        %s397 = scalar_lea.vmem %s3, %s396
      $region44: #{usr_forward.11} parent=39 // pred_fallthru
        _
    $region40: #{usr_forward.11} parent=5 // pred_fallthru
      _
  $region6: #{usr_forward.11} parent=0 // loop_footer
    %s13 = sadd.s32 1, %s9
  $region7: #{usr_forward.11} parent=0 // loop_footer_branch
    %8 = sbr.rel target = $region3
  $region8: #{usr_forward.11} parent=0 // loop_exit
    _

// kernel: usr_forward.12
$region0: #{usr_forward.12}
  #allocation0 [shape = 'u32[]', space=smem, size = 0x4, offset = 0x4, fixed_abs, tag = 'smem constant byte address 0x4 - core index']
  #allocation1 [shape = 'u32[72,128]{1,0:T(1,128)}', space=vmem, size = 0x9000, scoped, tag = 'internal scratch']
  #allocation2 [shape = 'f32[10,160]{1,0:T(8,128)}', space=vmem, size = 0x4000, scoped, tag = 'scratch operand']
  %s0 = inlined_call_operand.vmem [shape: f32[2,10,160], index: 0, kind: input, shape index: {}]
  %s1 = inlined_call_operand.vmem [shape: f32[3,160,160], index: 1, kind: input, shape index: {}]
  %s2 = inlined_call_operand.vmem [shape: f32[1,160], index: 2, kind: input, shape index: {}]
  %s3 = inlined_call_operand.vmem [shape: f32[3,160,160], index: 3, kind: input, shape index: {}]
  %s4 = inlined_call_operand.vmem [shape: f32[1,160], index: 4, kind: input, shape index: {}]
  %s5 = inlined_call_operand.vmem [shape: f32[2,10,160], index: 5, kind: output, shape index: {}]
  %s6 = sld [smem:[#allocation0]]
  $region53: #{usr_forward.12} parent=0
    _
  %s8 = ssub.s32 1, %s6
  %s9 = scalar_select 0, %s8, %s6
  loop: start=0, step=1, limit=4
  $region2: #{usr_forward.12} parent=0 // loop_pre_header
    _
  $region3: #{usr_forward.12} parent=0 // loop_header
    %s11 = sphi 0, %s15
    %p12 = scmp.ge.s32.totalorder %s11, 4
    %s21 = sphi 0, %s23
    %s24 = sphi 0, %s21
    %s25 = sphi 0, %s24
    %s41 = sphi 0, %s25
    %s45 = sphi 0, %s45
    %s47 = sphi 0, %s45
    %s48 = sphi 0, %s47
    %s62 = sphi 0, %s48
    %s66 = sphi 0, %s66
    %s68 = sphi 0, %s66
    %s69 = sphi 0, %s68
    %s83 = sphi 0, %s69
    %s87 = sphi 0, %s87
    %s89 = sphi 0, %s87
    %s90 = sphi 0, %s89
    %s104 = sphi 0, %s90
    %s108 = sphi 0, %s108
    %s110 = sphi 0, %s108
    %s111 = sphi 0, %s110
    %s125 = sphi 0, %s111
    %s131 = sphi 0, %s133
    %s134 = sphi 0, %s131
    %s135 = sphi 0, %s134
    %s151 = sphi 0, %s135
  $region4: #{usr_forward.12} parent=0 // loop_header_branch
    %14 = sbr.rel (%p12) target = $region8
  $region5: #{usr_forward.12} parent=0 // loop_body
    %s16 = ssub.s32 %s11, 1
    %s17 = ssub.s32 %s11, 2
    %s18 = sadd.s32 %s11, 1
    %s19 = ssub.s32 %s11, %s18
    %p20 = scmp.eq.s32.totalorder %s19, 0
    %s22 = sadd.s32 %s21, 1
    %s23 = scalar_select %p20, %s21, %s22
    %p26 = pneg %p20
    %p27 = scmp.eq.s32.totalorder %s11, 1
    %p28 = por %p26, %p27
    %p29 = scmp.ne.s32.totalorder %s21, %s24
    %p30 = scmp.eq.s32.totalorder %s11, 0
    %p31 = por %p29, %p30
    %p32 = scmp.ne.s32.totalorder %s21, %s24
    %p33 = scmp.eq.s32.totalorder %s16, 1
    %p34 = por %p32, %p33
    %p35 = scmp.ne.s32.totalorder %s24, %s25
    %p36 = scmp.eq.s32.totalorder %s16, 0
    %p37 = por %p35, %p36
    %p38 = scmp.ne.s32.totalorder %s24, %s25
    %p39 = scmp.eq.s32.totalorder %s17, 1
    %p40 = por %p38, %p39
    %p42 = scmp.ne.s32.totalorder %s25, %s41
    %p43 = scmp.eq.s32.totalorder %s17, 0
    %p44 = por %p42, %p43
    %s46 = sadd.s32 %s45, 1
    %p49 = scmp.eq.s32.totalorder %s11, 1
    %p50 = scmp.ne.s32.totalorder %s45, %s47
    %p51 = scmp.eq.s32.totalorder %s11, 0
    %p52 = por %p50, %p51
    %p53 = scmp.ne.s32.totalorder %s45, %s47
    %p54 = scmp.eq.s32.totalorder %s16, 1
    %p55 = por %p53, %p54
    %p56 = scmp.ne.s32.totalorder %s47, %s48
    %p57 = scmp.eq.s32.totalorder %s16, 0
    %p58 = por %p56, %p57
    %p59 = scmp.ne.s32.totalorder %s47, %s48
    %p60 = scmp.eq.s32.totalorder %s17, 1
    %p61 = por %p59, %p60
    %p63 = scmp.ne.s32.totalorder %s48, %s62
    %p64 = scmp.eq.s32.totalorder %s17, 0
    %p65 = por %p63, %p64
    %s67 = sadd.s32 %s66, 1
    %p70 = scmp.eq.s32.totalorder %s11, 1
    %p71 = scmp.ne.s32.totalorder %s66, %s68
    %p72 = scmp.eq.s32.totalorder %s11, 0
    %p73 = por %p71, %p72
    %p74 = scmp.ne.s32.totalorder %s66, %s68
    %p75 = scmp.eq.s32.totalorder %s16, 1
    %p76 = por %p74, %p75
    %p77 = scmp.ne.s32.totalorder %s68, %s69
    %p78 = scmp.eq.s32.totalorder %s16, 0
    %p79 = por %p77, %p78
    %p80 = scmp.ne.s32.totalorder %s68, %s69
    %p81 = scmp.eq.s32.totalorder %s17, 1
    %p82 = por %p80, %p81
    %p84 = scmp.ne.s32.totalorder %s69, %s83
    %p85 = scmp.eq.s32.totalorder %s17, 0
    %p86 = por %p84, %p85
    %s88 = sadd.s32 %s87, 1
    %p91 = scmp.eq.s32.totalorder %s11, 1
    %p92 = scmp.ne.s32.totalorder %s87, %s89
    %p93 = scmp.eq.s32.totalorder %s11, 0
    %p94 = por %p92, %p93
    %p95 = scmp.ne.s32.totalorder %s87, %s89
    %p96 = scmp.eq.s32.totalorder %s16, 1
    %p97 = por %p95, %p96
    %p98 = scmp.ne.s32.totalorder %s89, %s90
    %p99 = scmp.eq.s32.totalorder %s16, 0
    %p100 = por %p98, %p99
    %p101 = scmp.ne.s32.totalorder %s89, %s90
    %p102 = scmp.eq.s32.totalorder %s17, 1
    %p103 = por %p101, %p102
    %p105 = scmp.ne.s32.totalorder %s90, %s104
    %p106 = scmp.eq.s32.totalorder %s17, 0
    %p107 = por %p105, %p106
    %s109 = sadd.s32 %s108, 1
    %p112 = scmp.eq.s32.totalorder %s11, 1
    %p113 = scmp.ne.s32.totalorder %s108, %s110
    %p114 = scmp.eq.s32.totalorder %s11, 0
    %p115 = por %p113, %p114
    %p116 = scmp.ne.s32.totalorder %s108, %s110
    %p117 = scmp.eq.s32.totalorder %s16, 1
    %p118 = por %p116, %p117
    %p119 = scmp.ne.s32.totalorder %s110, %s111
    %p120 = scmp.eq.s32.totalorder %s16, 0
    %p121 = por %p119, %p120
    %p122 = scmp.ne.s32.totalorder %s110, %s111
    %p123 = scmp.eq.s32.totalorder %s17, 1
    %p124 = por %p122, %p123
    %p126 = scmp.ne.s32.totalorder %s111, %s125
    %p127 = scmp.eq.s32.totalorder %s17, 0
    %p128 = por %p126, %p127
    %s129 = ssub.s32 %s11, %s18
    %p130 = scmp.eq.s32.totalorder %s129, 0
    %s132 = sadd.s32 %s131, 1
    %s133 = scalar_select %p130, %s131, %s132
    %p136 = pneg %p130
    %p137 = scmp.eq.s32.totalorder %s11, 1
    %p138 = por %p136, %p137
    %p139 = scmp.ne.s32.totalorder %s131, %s134
    %p140 = scmp.eq.s32.totalorder %s11, 0
    %p141 = por %p139, %p140
    %p142 = scmp.ne.s32.totalorder %s131, %s134
    %p143 = scmp.eq.s32.totalorder %s16, 1
    %p144 = por %p142, %p143
    %p145 = scmp.ne.s32.totalorder %s134, %s135
    %p146 = scmp.eq.s32.totalorder %s16, 0
    %p147 = por %p145, %p146
    %p148 = scmp.ne.s32.totalorder %s134, %s135
    %p149 = scmp.eq.s32.totalorder %s17, 1
    %p150 = por %p148, %p149
    %p152 = scmp.ne.s32.totalorder %s135, %s151
    %p153 = scmp.eq.s32.totalorder %s17, 0
    %p154 = por %p152, %p153
    %p155 = scmp.le.s32.totalorder 1, %s11
    %p156 = scmp.lt.s32.totalorder %s11, 3
    %p157 = pnand %p155, %p156
    %p158 = pneg %p157
    // Predicated region
    $region9: #{usr_forward.12} parent=5 // pred_check
      _
    $region10: #{usr_forward.12} parent=5 // pred_check_branch
      %160 = sbr.rel (%p157) target = $region12
    $region11: #{usr_forward.12} parent=5 // pred_region
      %s161 = ssub.s32 %s11, 1
      // Predicated region
      $region13: #{usr_forward.12} parent=11 // pred_check
        %p162 = pneg %p58
      $region14: #{usr_forward.12} parent=11 // pred_check_branch
        %164 = sbr.rel (%p162) target = $region16
      $region15: #{usr_forward.12} parent=11 // pred_region
        _
      $region16: #{usr_forward.12} parent=11 // pred_fallthru
        _
      // Predicated region
      $region17: #{usr_forward.12} parent=11 // pred_check
        %p165 = pneg %p79
      $region18: #{usr_forward.12} parent=11 // pred_check_branch
        %167 = sbr.rel (%p165) target = $region20
      $region19: #{usr_forward.12} parent=11 // pred_region
        _
      $region20: #{usr_forward.12} parent=11 // pred_fallthru
        _
      // Predicated region
      $region21: #{usr_forward.12} parent=11 // pred_check
        %p168 = pneg %p100
      $region22: #{usr_forward.12} parent=11 // pred_check_branch
        %170 = sbr.rel (%p168) target = $region24
      $region23: #{usr_forward.12} parent=11 // pred_region
        _
      $region24: #{usr_forward.12} parent=11 // pred_fallthru
        _
      // Predicated region
      $region25: #{usr_forward.12} parent=11 // pred_check
        %p171 = pneg %p121
      $region26: #{usr_forward.12} parent=11 // pred_check_branch
        %173 = sbr.rel (%p171) target = $region28
      $region27: #{usr_forward.12} parent=11 // pred_region
        _
      $region28: #{usr_forward.12} parent=11 // pred_fallthru
        _
    $region12: #{usr_forward.12} parent=5 // pred_fallthru
      _
    %p174 = scmp.lt.s32.totalorder %s11, 2
    // Predicated region
    $region29: #{usr_forward.12} parent=5 // pred_check
      %p175 = pneg %p174
    $region30: #{usr_forward.12} parent=5 // pred_check_branch
      %177 = sbr.rel (%p175) target = $region32
    $region31: #{usr_forward.12} parent=5 // pred_region
      // Predicated region
      $region33: #{usr_forward.12} parent=31 // pred_check
        %p178 = pneg %p31
      $region34: #{usr_forward.12} parent=31 // pred_check_branch
        %180 = sbr.rel (%p178) target = $region36
      $region35: #{usr_forward.12} parent=31 // pred_region
        %p181 = scmp.lt.s32.totalorder %s11, 1
        %s182 = scalar_select %p181, %s11, 1
        %s183 = smul.addr %s182, 4
        %s184 = smul.addr %s183, 8
        %s185 = scalar_lea.vmem %s0, %s184
      $region36: #{usr_forward.12} parent=31 // pred_fallthru
        _
    $region32: #{usr_forward.12} parent=5 // pred_fallthru
      _
    %p186 = scmp.le.s32.totalorder 1, %s11
    %p187 = scmp.lt.s32.totalorder %s11, 3
    %p188 = pnand %p186, %p187
    %p189 = pneg %p188
    // Predicated region
    $region37: #{usr_forward.12} parent=5 // pred_check
      _
    $region38: #{usr_forward.12} parent=5 // pred_check_branch
      %191 = sbr.rel (%p188) target = $region40
    $region39: #{usr_forward.12} parent=5 // pred_region
      %s192 = ssub.s32 %s11, 1
      %p193 = scmp.lt.s32.totalorder %s16, 1
      %s194 = scalar_select %p193, %s16, 1
      %s195 = smul.addr %s194, 4
      %s196 = smul.addr %s195, 8
      %s197 = scalar_lea.vmem %s0, %s196
      %p198 = pneg %p37
      %p199 = pneg %p34
      %p200 = pneg %p58
      %p201 = pneg %p55
      %p202 = pneg %p79
      %p203 = pneg %p76
      %p204 = pneg %p100
      %p205 = pneg %p97
      %p206 = pneg %p121
      %p207 = pneg %p118
      %p208 = pneg %p147
      %p209 = pneg %p144
      %p210 = scmp.lt.s32.totalorder %s16, 1
      %s211 = scalar_select %p210, %s16, 1
      %s212 = smul.addr %s211, 4
      %s213 = smul.addr %s212, 8
      %s214 = scalar_lea.vmem %s5, %s213
      %p215 = scmp.lt.s32.totalorder %s16, 1
      %s216 = scalar_select %p215, %s16, 1
      %s217 = smul.addr %s216, 4
      %s218 = smul.addr %s217, 8
      %s219 = scalar_lea.vmem %s0, %s218
      %p220 = scmp.lt.s32.totalorder %s16, 1
      %s221 = scalar_select %p220, %s16, 1
      %s222 = smul.addr %s221, 4
      %s223 = smul.addr %s222, 8
      %s224 = scalar_lea.vmem %s5, %s223
      %v225 = vld [vmem:[%s219] sm:$0xff]
      %v226 = vld [vmem:[%s219 + $0x8] sm:$0xff]
      %v227 = vld [vmem:[%s1] sm:$0xff]
      %v228 = vld [vmem:[%s1 + $0x8] sm:$0xff]
      %v229 = vld [vmem:[%s1 + $0x10] sm:$0xff]
      %v230 = vld [vmem:[%s1 + $0x18] sm:$0xff]
      %v231 = vld [vmem:[%s1 + $0x20] sm:$0xff]
      %v232 = vld [vmem:[%s1 + $0x28] sm:$0xff]
      %v233 = vld [vmem:[%s1 + $0x30] sm:$0xff]
      %v234 = vld [vmem:[%s1 + $0x38] sm:$0xff]
      %v235 = vld [vmem:[%s1 + $0x40] sm:$0xff]
      %v236 = vld [vmem:[%s1 + $0x48] sm:$0xff]
      %v237 = vld [vmem:[%s1 + $0x50] sm:$0xff]
      %v238 = vld [vmem:[%s1 + $0x58] sm:$0xff]
      %v239 = vld [vmem:[%s1 + $0x60] sm:$0xff]
      %v240 = vld [vmem:[%s1 + $0x68] sm:$0xff]
      %v241 = vld [vmem:[%s1 + $0x70] sm:$0xff]
      %v242 = vld [vmem:[%s1 + $0x78] sm:$0xff]
      %v243 = vld [vmem:[%s1 + $0x80] sm:$0xff]
      %v244 = vld [vmem:[%s1 + $0x88] sm:$0xff]
      %v245 = vld [vmem:[%s1 + $0x90] sm:$0xff]
      %v246 = vld [vmem:[%s1 + $0x98] sm:$0xff]
      %v247 = vld [vmem:[%s1 + $0xa0] sm:$0xff]
      %v248 = vld [vmem:[%s1 + $0xa8] sm:$0xff]
      %v249 = vld [vmem:[%s1 + $0xb0] sm:$0xff]
      %v250 = vld [vmem:[%s1 + $0xb8] sm:$0xff]
      %v251 = vld [vmem:[%s1 + $0xc0] sm:$0xff]
      %v252 = vld [vmem:[%s1 + $0xc8] sm:$0xff]
      %v253 = vld [vmem:[%s1 + $0xd0] sm:$0xff]
      %v254 = vld [vmem:[%s1 + $0xd8] sm:$0xff]
      %v255 = vld [vmem:[%s1 + $0xe0] sm:$0xff]
      %v256 = vld [vmem:[%s1 + $0xe8] sm:$0xff]
      %v257 = vld [vmem:[%s1 + $0xf0] sm:$0xff]
      %v258 = vld [vmem:[%s1 + $0xf8] sm:$0xff]
      %v259 = vld [vmem:[%s1 + $0x100] sm:$0xff]
      %v260 = vld [vmem:[%s1 + $0x108] sm:$0xff]
      %v261 = vld [vmem:[%s1 + $0x110] sm:$0xff]
      %v262 = vld [vmem:[%s1 + $0x118] sm:$0xff]
      %v263 = vld [vmem:[%s1 + $0x120] sm:$0xff]
      %v264 = vld [vmem:[%s1 + $0x128] sm:$0xff]
      %v265 = vld [vmem:[%s1 + $0x130] sm:$0xff]
      %v266 = vld [vmem:[%s1 + $0x138] sm:$0xff]
      %v267 = vld [vmem:[%s219] sm:$0xfe]
      %v268 = vld [vmem:[%s219 + $0x8] sm:$0xfe]
      %v269 = vld [vmem:[%s219 + $0x10] sm:$0x1]
      %v270 = vld [vmem:[%s219 + $0x18] sm:$0x1]
      %s271 = scalar_lea.vmem %s1, 320
      %v272 = vld [vmem:[%s271] sm:$0xff]
      %v273 = vld [vmem:[%s271 + $0x8] sm:$0xff]
      %v274 = vld [vmem:[%s271 + $0x10] sm:$0xff]
      %v275 = vld [vmem:[%s271 + $0x18] sm:$0xff]
      %v276 = vld [vmem:[%s271 + $0x20] sm:$0xff]
      %v277 = vld [vmem:[%s271 + $0x28] sm:$0xff]
      %v278 = vld [vmem:[%s271 + $0x30] sm:$0xff]
      %v279 = vld [vmem:[%s271 + $0x38] sm:$0xff]
      %v280 = vld [vmem:[%s271 + $0x40] sm:$0xff]
      %v281 = vld [vmem:[%s271 + $0x48] sm:$0xff]
      %v282 = vld [vmem:[%s271 + $0x50] sm:$0xff]
      %v283 = vld [vmem:[%s271 + $0x58] sm:$0xff]
      %v284 = vld [vmem:[%s271 + $0x60] sm:$0xff]
      %v285 = vld [vmem:[%s271 + $0x68] sm:$0xff]
      %v286 = vld [vmem:[%s271 + $0x70] sm:$0xff]
      %v287 = vld [vmem:[%s271 + $0x78] sm:$0xff]
      %v288 = vld [vmem:[%s271 + $0x80] sm:$0xff]
      %v289 = vld [vmem:[%s271 + $0x88] sm:$0xff]
      %v290 = vld [vmem:[%s271 + $0x90] sm:$0xff]
      %v291 = vld [vmem:[%s271 + $0x98] sm:$0xff]
      %v292 = vld [vmem:[%s271 + $0xa0] sm:$0xff]
      %v293 = vld [vmem:[%s271 + $0xa8] sm:$0xff]
      %v294 = vld [vmem:[%s271 + $0xb0] sm:$0xff]
      %v295 = vld [vmem:[%s271 + $0xb8] sm:$0xff]
      %v296 = vld [vmem:[%s271 + $0xc0] sm:$0xff]
      %v297 = vld [vmem:[%s271 + $0xc8] sm:$0xff]
      %v298 = vld [vmem:[%s271 + $0xd0] sm:$0xff]
      %v299 = vld [vmem:[%s271 + $0xd8] sm:$0xff]
      %v300 = vld [vmem:[%s271 + $0xe0] sm:$0xff]
      %v301 = vld [vmem:[%s271 + $0xe8] sm:$0xff]
      %v302 = vld [vmem:[%s271 + $0xf0] sm:$0xff]
      %v303 = vld [vmem:[%s271 + $0xf8] sm:$0xff]
      %v304 = vld [vmem:[%s271 + $0x100] sm:$0xff]
      %v305 = vld [vmem:[%s271 + $0x108] sm:$0xff]
      %v306 = vld [vmem:[%s271 + $0x110] sm:$0xff]
      %v307 = vld [vmem:[%s271 + $0x118] sm:$0xff]
      %v308 = vld [vmem:[%s271 + $0x120] sm:$0xff]
      %v309 = vld [vmem:[%s271 + $0x128] sm:$0xff]
      %v310 = vld [vmem:[%s271 + $0x130] sm:$0xff]
      %v311 = vld [vmem:[%s271 + $0x138] sm:$0xff]
      %vm316 = vcmask 1046528
      %v317 = vrot.slane %v267, 1
      %v318 = vrot.slane %v269, 1
      %v319 = vsel %vm316, %v317, %v318
      %v320 = vrot.slane %v268, 1
      %v321 = vrot.slane %v270, 1
      %v322 = vsel %vm316, %v320, %v321
      %vm324 = vcmask 261120
      %v325 = vsel %vm324, %v322, 0
      %327 = vmatpush.msra.mxu0 %v302
      %328 = vmatpush.msra.mxu0 %v300
      %329 = vmatpush.msra.mxu0 %v298
      %330 = vmatpush.msra.mxu0 %v296
      %331 = vmatpush.msra.mxu0 %v294
      %332 = vmatpush.msra.mxu0 %v292
      %333 = vmatpush.msra.mxu0 %v290
      %334 = vmatpush.msra.mxu0 %v288
      %335 = vmatpush.msra.mxu0 %v286
      %336 = vmatpush.msra.mxu0 %v284
      %337 = vmatpush.msra.mxu0 %v282
      %338 = vmatpush.msra.mxu0 %v280
      %339 = vmatpush.msra.mxu0 %v278
      %340 = vmatpush.msra.mxu0 %v276
      %341 = vmatpush.msra.mxu0 %v274
      %342 = vmatpush.msra.mxu0 %v272
      %343 = vmatmul.f32.gmra.mxu0 %v319
      %v344 = vpop.f32.mrf.mxu0
      %v345 = vadd.f32 0.0, %v344
      %346 = vdwg.mxu0
      %347 = vmatpush.msra.mxu0 0.0
      %348 = vmatpush.msra.mxu0 0.0
      %349 = vmatpush.msra.mxu0 0.0
      %350 = vmatpush.msra.mxu0 0.0
      %351 = vmatpush.msra.mxu0 0.0
      %352 = vmatpush.msra.mxu0 0.0
      %353 = vmatpush.msra.mxu0 0.0
      %354 = vmatpush.msra.mxu0 0.0
      %355 = vmatpush.msra.mxu0 0.0
      %356 = vmatpush.msra.mxu0 0.0
      %357 = vmatpush.msra.mxu0 0.0
      %358 = vmatpush.msra.mxu0 0.0
      %359 = vmatpush.msra.mxu0 %v310
      %360 = vmatpush.msra.mxu0 %v308
      %361 = vmatpush.msra.mxu0 %v306
      %362 = vmatpush.msra.mxu0 %v304
      %363 = vmatmul.f32.gmra.mxu0 %v325
      %v364 = vpop.f32.mrf.mxu0
      %v365 = vadd.f32 %v345, %v364
      %366 = vdwg.mxu0
      %367 = vmatpush.msra.mxu0 %v303
      %368 = vmatpush.msra.mxu0 %v301
      %369 = vmatpush.msra.mxu0 %v299
      %370 = vmatpush.msra.mxu0 %v297
      %371 = vmatpush.msra.mxu0 %v295
      %372 = vmatpush.msra.mxu0 %v293
      %373 = vmatpush.msra.mxu0 %v291
      %374 = vmatpush.msra.mxu0 %v289
      %375 = vmatpush.msra.mxu0 %v287
      %376 = vmatpush.msra.mxu0 %v285
      %377 = vmatpush.msra.mxu0 %v283
      %378 = vmatpush.msra.mxu0 %v281
      %379 = vmatpush.msra.mxu0 %v279
      %380 = vmatpush.msra.mxu0 %v277
      %381 = vmatpush.msra.mxu0 %v275
      %382 = vmatpush.msra.mxu0 %v273
      %383 = vmatmul.f32.gmra.mxu0 %v319
      %v384 = vpop.f32.mrf.mxu0
      %v385 = vadd.f32 0.0, %v384
      %386 = vdwg.mxu0
      %387 = vmatpush.msra.mxu0 0.0
      %388 = vmatpush.msra.mxu0 0.0
      %389 = vmatpush.msra.mxu0 0.0
      %390 = vmatpush.msra.mxu0 0.0
      %391 = vmatpush.msra.mxu0 0.0
      %392 = vmatpush.msra.mxu0 0.0
      %393 = vmatpush.msra.mxu0 0.0
      %394 = vmatpush.msra.mxu0 0.0
      %395 = vmatpush.msra.mxu0 0.0
      %396 = vmatpush.msra.mxu0 0.0
      %397 = vmatpush.msra.mxu0 0.0
      %398 = vmatpush.msra.mxu0 0.0
      %399 = vmatpush.msra.mxu0 %v311
      %400 = vmatpush.msra.mxu0 %v309
      %401 = vmatpush.msra.mxu0 %v307
      %402 = vmatpush.msra.mxu0 %v305
      %403 = vmatmul.f32.gmra.mxu0 %v325
      %v404 = vpop.f32.mrf.mxu0
      %v405 = vadd.f32 %v385, %v404
      %406 = vdwg.mxu0
      %v408 = vsel %vm324, %v226, 0
      %410 = vmatpush.msra.mxu0 %v257
      %411 = vmatpush.msra.mxu0 %v255
      %412 = vmatpush.msra.mxu0 %v253
      %413 = vmatpush.msra.mxu0 %v251
      %414 = vmatpush.msra.mxu0 %v249
      %415 = vmatpush.msra.mxu0 %v247
      %416 = vmatpush.msra.mxu0 %v245
      %417 = vmatpush.msra.mxu0 %v243
      %418 = vmatpush.msra.mxu0 %v241
      %419 = vmatpush.msra.mxu0 %v239
      %420 = vmatpush.msra.mxu0 %v237
      %421 = vmatpush.msra.mxu0 %v235
      %422 = vmatpush.msra.mxu0 %v233
      %423 = vmatpush.msra.mxu0 %v231
      %424 = vmatpush.msra.mxu0 %v229
      %425 = vmatpush.msra.mxu0 %v227
      %426 = vmatmul.f32.gmra.mxu0 %v225
      %v427 = vpop.f32.mrf.mxu0
      %v428 = vadd.f32 %v365, %v427
      %429 = vdwg.mxu0
      %430 = vmatpush.msra.mxu0 0.0
      %431 = vmatpush.msra.mxu0 0.0
      %432 = vmatpush.msra.mxu0 0.0
      %433 = vmatpush.msra.mxu0 0.0
      %434 = vmatpush.msra.mxu0 0.0
      %435 = vmatpush.msra.mxu0 0.0
      %436 = vmatpush.msra.mxu0 0.0
      %437 = vmatpush.msra.mxu0 0.0
      %438 = vmatpush.msra.mxu0 0.0
      %439 = vmatpush.msra.mxu0 0.0
      %440 = vmatpush.msra.mxu0 0.0
      %441 = vmatpush.msra.mxu0 0.0
      %442 = vmatpush.msra.mxu0 %v265
      %443 = vmatpush.msra.mxu0 %v263
      %444 = vmatpush.msra.mxu0 %v261
      %445 = vmatpush.msra.mxu0 %v259
      %446 = vmatmul.f32.gmra.mxu0 %v408
      %v447 = vpop.f32.mrf.mxu0
      %v448 = vadd.f32 %v428, %v447
      %449 = vdwg.mxu0
      %450 = vmatpush.msra.mxu0 %v258
      %451 = vmatpush.msra.mxu0 %v256
      %452 = vmatpush.msra.mxu0 %v254
      %453 = vmatpush.msra.mxu0 %v252
      %454 = vmatpush.msra.mxu0 %v250
      %455 = vmatpush.msra.mxu0 %v248
      %456 = vmatpush.msra.mxu0 %v246
      %457 = vmatpush.msra.mxu0 %v244
      %458 = vmatpush.msra.mxu0 %v242
      %459 = vmatpush.msra.mxu0 %v240
      %460 = vmatpush.msra.mxu0 %v238
      %461 = vmatpush.msra.mxu0 %v236
      %462 = vmatpush.msra.mxu0 %v234
      %463 = vmatpush.msra.mxu0 %v232
      %464 = vmatpush.msra.mxu0 %v230
      %465 = vmatpush.msra.mxu0 %v228
      %466 = vmatmul.f32.gmra.mxu0 %v225
      %v467 = vpop.f32.mrf.mxu0
      %v468 = vadd.f32 %v405, %v467
      %469 = vdwg.mxu0
      %470 = vmatpush.msra.mxu0 0.0
      %471 = vmatpush.msra.mxu0 0.0
      %472 = vmatpush.msra.mxu0 0.0
      %473 = vmatpush.msra.mxu0 0.0
      %474 = vmatpush.msra.mxu0 0.0
      %475 = vmatpush.msra.mxu0 0.0
      %476 = vmatpush.msra.mxu0 0.0
      %477 = vmatpush.msra.mxu0 0.0
      %478 = vmatpush.msra.mxu0 0.0
      %479 = vmatpush.msra.mxu0 0.0
      %480 = vmatpush.msra.mxu0 0.0
      %481 = vmatpush.msra.mxu0 0.0
      %482 = vmatpush.msra.mxu0 %v266
      %483 = vmatpush.msra.mxu0 %v264
      %484 = vmatpush.msra.mxu0 %v262
      %485 = vmatpush.msra.mxu0 %v260
      %486 = vmatmul.f32.gmra.mxu0 %v408
      %v487 = vpop.f32.mrf.mxu0
      %v488 = vadd.f32 %v468, %v487
      %489 = vdwg.mxu0
      %v490 = vld [vmem:[%s219] sm:$0xfc]
      %v491 = vld [vmem:[%s219 + $0x8] sm:$0xfc]
      %v492 = vld [vmem:[%s219 + $0x10] sm:$0x3]
      %v493 = vld [vmem:[%s219 + $0x18] sm:$0x3]
      %s494 = scalar_lea.vmem %s1, 640
      %v495 = vld [vmem:[%s494] sm:$0xff]
      %v496 = vld [vmem:[%s494 + $0x8] sm:$0xff]
      %v497 = vld [vmem:[%s494 + $0x10] sm:$0xff]
      %v498 = vld [vmem:[%s494 + $0x18] sm:$0xff]
      %v499 = vld [vmem:[%s494 + $0x20] sm:$0xff]
      %v500 = vld [vmem:[%s494 + $0x28] sm:$0xff]
      %v501 = vld [vmem:[%s494 + $0x30] sm:$0xff]
      %v502 = vld [vmem:[%s494 + $0x38] sm:$0xff]
      %v503 = vld [vmem:[%s494 + $0x40] sm:$0xff]
      %v504 = vld [vmem:[%s494 + $0x48] sm:$0xff]
      %v505 = vld [vmem:[%s494 + $0x50] sm:$0xff]
      %v506 = vld [vmem:[%s494 + $0x58] sm:$0xff]
      %v507 = vld [vmem:[%s494 + $0x60] sm:$0xff]
      %v508 = vld [vmem:[%s494 + $0x68] sm:$0xff]
      %v509 = vld [vmem:[%s494 + $0x70] sm:$0xff]
      %v510 = vld [vmem:[%s494 + $0x78] sm:$0xff]
      %v511 = vld [vmem:[%s494 + $0x80] sm:$0xff]
      %v512 = vld [vmem:[%s494 + $0x88] sm:$0xff]
      %v513 = vld [vmem:[%s494 + $0x90] sm:$0xff]
      %v514 = vld [vmem:[%s494 + $0x98] sm:$0xff]
      %v515 = vld [vmem:[%s494 + $0xa0] sm:$0xff]
      %v516 = vld [vmem:[%s494 + $0xa8] sm:$0xff]
      %v517 = vld [vmem:[%s494 + $0xb0] sm:$0xff]
      %v518 = vld [vmem:[%s494 + $0xb8] sm:$0xff]
      %v519 = vld [vmem:[%s494 + $0xc0] sm:$0xff]
      %v520 = vld [vmem:[%s494 + $0xc8] sm:$0xff]
      %v521 = vld [vmem:[%s494 + $0xd0] sm:$0xff]
      %v522 = vld [vmem:[%s494 + $0xd8] sm:$0xff]
      %v523 = vld [vmem:[%s494 + $0xe0] sm:$0xff]
      %v524 = vld [vmem:[%s494 + $0xe8] sm:$0xff]
      %v525 = vld [vmem:[%s494 + $0xf0] sm:$0xff]
      %v526 = vld [vmem:[%s494 + $0xf8] sm:$0xff]
      %v527 = vld [vmem:[%s494 + $0x100] sm:$0xff]
      %v528 = vld [vmem:[%s494 + $0x108] sm:$0xff]
      %v529 = vld [vmem:[%s494 + $0x110] sm:$0xff]
      %v530 = vld [vmem:[%s494 + $0x118] sm:$0xff]
      %v531 = vld [vmem:[%s494 + $0x120] sm:$0xff]
      %v532 = vld [vmem:[%s494 + $0x128] sm:$0xff]
      %v533 = vld [vmem:[%s494 + $0x130] sm:$0xff]
      %v534 = vld [vmem:[%s494 + $0x138] sm:$0xff]
      %vm539 = vcmask 1045504
      %v540 = vrot.slane %v490, 2
      %v541 = vrot.slane %v492, 2
      %v542 = vsel %vm539, %v540, %v541
      %v543 = vrot.slane %v491, 2
      %v544 = vrot.slane %v493, 2
      %v545 = vsel %vm539, %v543, %v544
      %v547 = vsel %vm324, %v545, 0
      %549 = vmatpush.msra.mxu0 %v525
      %550 = vmatpush.msra.mxu0 %v523
      %551 = vmatpush.msra.mxu0 %v521
      %552 = vmatpush.msra.mxu0 %v519
      %553 = vmatpush.msra.mxu0 %v517
      %554 = vmatpush.msra.mxu0 %v515
      %555 = vmatpush.msra.mxu0 %v513
      %556 = vmatpush.msra.mxu0 %v511
      %557 = vmatpush.msra.mxu0 %v509
      %558 = vmatpush.msra.mxu0 %v507
      %559 = vmatpush.msra.mxu0 %v505
      %560 = vmatpush.msra.mxu0 %v503
      %561 = vmatpush.msra.mxu0 %v501
      %562 = vmatpush.msra.mxu0 %v499
      %563 = vmatpush.msra.mxu0 %v497
      %564 = vmatpush.msra.mxu0 %v495
      %565 = vmatmul.f32.gmra.mxu0 %v542
      %v566 = vpop.f32.mrf.mxu0
      %v567 = vadd.f32 0.0, %v566
      %568 = vdwg.mxu0
      %569 = vmatpush.msra.mxu0 0.0
      %570 = vmatpush.msra.mxu0 0.0
      %571 = vmatpush.msra.mxu0 0.0
      %572 = vmatpush.msra.mxu0 0.0
      %573 = vmatpush.msra.mxu0 0.0
      %574 = vmatpush.msra.mxu0 0.0
      %575 = vmatpush.msra.mxu0 0.0
      %576 = vmatpush.msra.mxu0 0.0
      %577 = vmatpush.msra.mxu0 0.0
      %578 = vmatpush.msra.mxu0 0.0
      %579 = vmatpush.msra.mxu0 0.0
      %580 = vmatpush.msra.mxu0 0.0
      %581 = vmatpush.msra.mxu0 %v533
      %582 = vmatpush.msra.mxu0 %v531
      %583 = vmatpush.msra.mxu0 %v529
      %584 = vmatpush.msra.mxu0 %v527
      %585 = vmatmul.f32.gmra.mxu0 %v547
      %v586 = vpop.f32.mrf.mxu0
      %v587 = vadd.f32 %v567, %v586
      %588 = vdwg.mxu0
      %589 = vmatpush.msra.mxu0 %v526
      %590 = vmatpush.msra.mxu0 %v524
      %591 = vmatpush.msra.mxu0 %v522
      %592 = vmatpush.msra.mxu0 %v520
      %593 = vmatpush.msra.mxu0 %v518
      %594 = vmatpush.msra.mxu0 %v516
      %595 = vmatpush.msra.mxu0 %v514
      %596 = vmatpush.msra.mxu0 %v512
      %597 = vmatpush.msra.mxu0 %v510
      %598 = vmatpush.msra.mxu0 %v508
      %599 = vmatpush.msra.mxu0 %v506
      %600 = vmatpush.msra.mxu0 %v504
      %601 = vmatpush.msra.mxu0 %v502
      %602 = vmatpush.msra.mxu0 %v500
      %603 = vmatpush.msra.mxu0 %v498
      %604 = vmatpush.msra.mxu0 %v496
      %605 = vmatmul.f32.gmra.mxu0 %v542
      %v606 = vpop.f32.mrf.mxu0
      %v607 = vadd.f32 0.0, %v606
      %608 = vdwg.mxu0
      %609 = vmatpush.msra.mxu0 0.0
      %610 = vmatpush.msra.mxu0 0.0
      %611 = vmatpush.msra.mxu0 0.0
      %612 = vmatpush.msra.mxu0 0.0
      %613 = vmatpush.msra.mxu0 0.0
      %614 = vmatpush.msra.mxu0 0.0
      %615 = vmatpush.msra.mxu0 0.0
      %616 = vmatpush.msra.mxu0 0.0
      %617 = vmatpush.msra.mxu0 0.0
      %618 = vmatpush.msra.mxu0 0.0
      %619 = vmatpush.msra.mxu0 0.0
      %620 = vmatpush.msra.mxu0 0.0
      %621 = vmatpush.msra.mxu0 %v534
      %622 = vmatpush.msra.mxu0 %v532
      %623 = vmatpush.msra.mxu0 %v530
      %624 = vmatpush.msra.mxu0 %v528
      %625 = vmatmul.f32.gmra.mxu0 %v547
      %v626 = vpop.f32.mrf.mxu0
      %v627 = vadd.f32 %v607, %v626
      %628 = vdwg.mxu0
      %v629 = vadd.f32 %v448, %v587
      %v630 = vadd.f32 %v488, %v627
      %v631 = vld [vmem:[%s2] sm:$0x3]
      %v633 = vperm.slane %v631, 0
      %v634 = vperm.slane %v631, 1
      %v637 = vadd.f32 %v629, %v633
      %v638 = vadd.f32 %v630, %v634
      %v639 = vmax.f32 %v637, 0.0
      %v640 = vmax.f32 %v638, 0.0
      %641 = vst [vmem:[#allocation2] sm:$0xff] 0.0
      %642 = vst.msk [vmem:[#allocation2 + $0x8] sm:$0xff] %vm324, 0.0
      %643 = vst [vmem:[#allocation2 + $0x10] sm:$0x3] 0.0
      %vm644 = vcmask 254976
      %645 = vst.msk [vmem:[#allocation2 + $0x18] sm:$0x3] %vm644, 0.0
      %v648 = vrot.slane %v639, 7
      %v649 = vrot.slane %v640, 7
      %652 = vst [vmem:[#allocation2] sm:$0xfe] %v648
      %vm653 = vcmask 261121
      %654 = vst.msk [vmem:[#allocation2 + $0x8] sm:$0xfe] %vm653, %v649
      %655 = vst [vmem:[#allocation2 + $0x10] sm:$0x1] %v648
      %vm656 = vcmask 253952
      %657 = vst.msk [vmem:[#allocation2 + $0x18] sm:$0x1] %vm656, %v649
      %v658 = vld [vmem:[#allocation2] sm:$0xff]
      %v659 = vld [vmem:[#allocation2 + $0x8] sm:$0xff]
      %v660 = vld [vmem:[%s3] sm:$0xff]
      %v661 = vld [vmem:[%s3 + $0x8] sm:$0xff]
      %v662 = vld [vmem:[%s3 + $0x10] sm:$0xff]
      %v663 = vld [vmem:[%s3 + $0x18] sm:$0xff]
      %v664 = vld [vmem:[%s3 + $0x20] sm:$0xff]
      %v665 = vld [vmem:[%s3 + $0x28] sm:$0xff]
      %v666 = vld [vmem:[%s3 + $0x30] sm:$0xff]
      %v667 = vld [vmem:[%s3 + $0x38] sm:$0xff]
      %v668 = vld [vmem:[%s3 + $0x40] sm:$0xff]
      %v669 = vld [vmem:[%s3 + $0x48] sm:$0xff]
      %v670 = vld [vmem:[%s3 + $0x50] sm:$0xff]
      %v671 = vld [vmem:[%s3 + $0x58] sm:$0xff]
      %v672 = vld [vmem:[%s3 + $0x60] sm:$0xff]
      %v673 = vld [vmem:[%s3 + $0x68] sm:$0xff]
      %v674 = vld [vmem:[%s3 + $0x70] sm:$0xff]
      %v675 = vld [vmem:[%s3 + $0x78] sm:$0xff]
      %v676 = vld [vmem:[%s3 + $0x80] sm:$0xff]
      %v677 = vld [vmem:[%s3 + $0x88] sm:$0xff]
      %v678 = vld [vmem:[%s3 + $0x90] sm:$0xff]
      %v679 = vld [vmem:[%s3 + $0x98] sm:$0xff]
      %v680 = vld [vmem:[%s3 + $0xa0] sm:$0xff]
      %v681 = vld [vmem:[%s3 + $0xa8] sm:$0xff]
      %v682 = vld [vmem:[%s3 + $0xb0] sm:$0xff]
      %v683 = vld [vmem:[%s3 + $0xb8] sm:$0xff]
      %v684 = vld [vmem:[%s3 + $0xc0] sm:$0xff]
      %v685 = vld [vmem:[%s3 + $0xc8] sm:$0xff]
      %v686 = vld [vmem:[%s3 + $0xd0] sm:$0xff]
      %v687 = vld [vmem:[%s3 + $0xd8] sm:$0xff]
      %v688 = vld [vmem:[%s3 + $0xe0] sm:$0xff]
      %v689 = vld [vmem:[%s3 + $0xe8] sm:$0xff]
      %v690 = vld [vmem:[%s3 + $0xf0] sm:$0xff]
      %v691 = vld [vmem:[%s3 + $0xf8] sm:$0xff]
      %v692 = vld [vmem:[%s3 + $0x100] sm:$0xff]
      %v693 = vld [vmem:[%s3 + $0x108] sm:$0xff]
      %v694 = vld [vmem:[%s3 + $0x110] sm:$0xff]
      %v695 = vld [vmem:[%s3 + $0x118] sm:$0xff]
      %v696 = vld [vmem:[%s3 + $0x120] sm:$0xff]
      %v697 = vld [vmem:[%s3 + $0x128] sm:$0xff]
      %v698 = vld [vmem:[%s3 + $0x130] sm:$0xff]
      %v699 = vld [vmem:[%s3 + $0x138] sm:$0xff]
      %v700 = vld [vmem:[#allocation2] sm:$0xfe]
      %v701 = vld [vmem:[#allocation2 + $0x8] sm:$0xfe]
      %v702 = vld [vmem:[#allocation2 + $0x10] sm:$0x1]
      %v703 = vld [vmem:[#allocation2 + $0x18] sm:$0x1]
      %s704 = scalar_lea.vmem %s3, 320
      %v705 = vld [vmem:[%s704] sm:$0xff]
      %v706 = vld [vmem:[%s704 + $0x8] sm:$0xff]
      %v707 = vld [vmem:[%s704 + $0x10] sm:$0xff]
      %v708 = vld [vmem:[%s704 + $0x18] sm:$0xff]
      %v709 = vld [vmem:[%s704 + $0x20] sm:$0xff]
      %v710 = vld [vmem:[%s704 + $0x28] sm:$0xff]
      %v711 = vld [vmem:[%s704 + $0x30] sm:$0xff]
      %v712 = vld [vmem:[%s704 + $0x38] sm:$0xff]
      %v713 = vld [vmem:[%s704 + $0x40] sm:$0xff]
      %v714 = vld [vmem:[%s704 + $0x48] sm:$0xff]
      %v715 = vld [vmem:[%s704 + $0x50] sm:$0xff]
      %v716 = vld [vmem:[%s704 + $0x58] sm:$0xff]
      %v717 = vld [vmem:[%s704 + $0x60] sm:$0xff]
      %v718 = vld [vmem:[%s704 + $0x68] sm:$0xff]
      %v719 = vld [vmem:[%s704 + $0x70] sm:$0xff]
      %v720 = vld [vmem:[%s704 + $0x78] sm:$0xff]
      %v721 = vld [vmem:[%s704 + $0x80] sm:$0xff]
      %v722 = vld [vmem:[%s704 + $0x88] sm:$0xff]
      %v723 = vld [vmem:[%s704 + $0x90] sm:$0xff]
      %v724 = vld [vmem:[%s704 + $0x98] sm:$0xff]
      %v725 = vld [vmem:[%s704 + $0xa0] sm:$0xff]
      %v726 = vld [vmem:[%s704 + $0xa8] sm:$0xff]
      %v727 = vld [vmem:[%s704 + $0xb0] sm:$0xff]
      %v728 = vld [vmem:[%s704 + $0xb8] sm:$0xff]
      %v729 = vld [vmem:[%s704 + $0xc0] sm:$0xff]
      %v730 = vld [vmem:[%s704 + $0xc8] sm:$0xff]
      %v731 = vld [vmem:[%s704 + $0xd0] sm:$0xff]
      %v732 = vld [vmem:[%s704 + $0xd8] sm:$0xff]
      %v733 = vld [vmem:[%s704 + $0xe0] sm:$0xff]
      %v734 = vld [vmem:[%s704 + $0xe8] sm:$0xff]
      %v735 = vld [vmem:[%s704 + $0xf0] sm:$0xff]
      %v736 = vld [vmem:[%s704 + $0xf8] sm:$0xff]
      %v737 = vld [vmem:[%s704 + $0x100] sm:$0xff]
      %v738 = vld [vmem:[%s704 + $0x108] sm:$0xff]
      %v739 = vld [vmem:[%s704 + $0x110] sm:$0xff]
      %v740 = vld [vmem:[%s704 + $0x118] sm:$0xff]
      %v741 = vld [vmem:[%s704 + $0x120] sm:$0xff]
      %v742 = vld [vmem:[%s704 + $0x128] sm:$0xff]
      %v743 = vld [vmem:[%s704 + $0x130] sm:$0xff]
      %v744 = vld [vmem:[%s704 + $0x138] sm:$0xff]
      %v749 = vrot.slane %v700, 1
      %v750 = vrot.slane %v702, 1
      %v751 = vsel %vm316, %v749, %v750
      %v752 = vrot.slane %v701, 1
      %v753 = vrot.slane %v703, 1
      %v754 = vsel %vm316, %v752, %v753
      %v756 = vsel %vm324, %v754, 0
      %758 = vmatpush.msra.mxu0 %v735
      %759 = vmatpush.msra.mxu0 %v733
      %760 = vmatpush.msra.mxu0 %v731
      %761 = vmatpush.msra.mxu0 %v729
      %762 = vmatpush.msra.mxu0 %v727
      %763 = vmatpush.msra.mxu0 %v725
      %764 = vmatpush.msra.mxu0 %v723
      %765 = vmatpush.msra.mxu0 %v721
      %766 = vmatpush.msra.mxu0 %v719
      %767 = vmatpush.msra.mxu0 %v717
      %768 = vmatpush.msra.mxu0 %v715
      %769 = vmatpush.msra.mxu0 %v713
      %770 = vmatpush.msra.mxu0 %v711
      %771 = vmatpush.msra.mxu0 %v709
      %772 = vmatpush.msra.mxu0 %v707
      %773 = vmatpush.msra.mxu0 %v705
      %774 = vmatmul.f32.gmra.mxu0 %v751
      %v775 = vpop.f32.mrf.mxu0
      %v776 = vadd.f32 0.0, %v775
      %777 = vdwg.mxu0
      %778 = vmatpush.msra.mxu0 0.0
      %779 = vmatpush.msra.mxu0 0.0
      %780 = vmatpush.msra.mxu0 0.0
      %781 = vmatpush.msra.mxu0 0.0
      %782 = vmatpush.msra.mxu0 0.0
      %783 = vmatpush.msra.mxu0 0.0
      %784 = vmatpush.msra.mxu0 0.0
      %785 = vmatpush.msra.mxu0 0.0
      %786 = vmatpush.msra.mxu0 0.0
      %787 = vmatpush.msra.mxu0 0.0
      %788 = vmatpush.msra.mxu0 0.0
      %789 = vmatpush.msra.mxu0 0.0
      %790 = vmatpush.msra.mxu0 %v743
      %791 = vmatpush.msra.mxu0 %v741
      %792 = vmatpush.msra.mxu0 %v739
      %793 = vmatpush.msra.mxu0 %v737
      %794 = vmatmul.f32.gmra.mxu0 %v756
      %v795 = vpop.f32.mrf.mxu0
      %v796 = vadd.f32 %v776, %v795
      %797 = vdwg.mxu0
      %798 = vmatpush.msra.mxu0 %v736
      %799 = vmatpush.msra.mxu0 %v734
      %800 = vmatpush.msra.mxu0 %v732
      %801 = vmatpush.msra.mxu0 %v730
      %802 = vmatpush.msra.mxu0 %v728
      %803 = vmatpush.msra.mxu0 %v726
      %804 = vmatpush.msra.mxu0 %v724
      %805 = vmatpush.msra.mxu0 %v722
      %806 = vmatpush.msra.mxu0 %v720
      %807 = vmatpush.msra.mxu0 %v718
      %808 = vmatpush.msra.mxu0 %v716
      %809 = vmatpush.msra.mxu0 %v714
      %810 = vmatpush.msra.mxu0 %v712
      %811 = vmatpush.msra.mxu0 %v710
      %812 = vmatpush.msra.mxu0 %v708
      %813 = vmatpush.msra.mxu0 %v706
      %814 = vmatmul.f32.gmra.mxu0 %v751
      %v815 = vpop.f32.mrf.mxu0
      %v816 = vadd.f32 0.0, %v815
      %817 = vdwg.mxu0
      %818 = vmatpush.msra.mxu0 0.0
      %819 = vmatpush.msra.mxu0 0.0
      %820 = vmatpush.msra.mxu0 0.0
      %821 = vmatpush.msra.mxu0 0.0
      %822 = vmatpush.msra.mxu0 0.0
      %823 = vmatpush.msra.mxu0 0.0
      %824 = vmatpush.msra.mxu0 0.0
      %825 = vmatpush.msra.mxu0 0.0
      %826 = vmatpush.msra.mxu0 0.0
      %827 = vmatpush.msra.mxu0 0.0
      %828 = vmatpush.msra.mxu0 0.0
      %829 = vmatpush.msra.mxu0 0.0
      %830 = vmatpush.msra.mxu0 %v744
      %831 = vmatpush.msra.mxu0 %v742
      %832 = vmatpush.msra.mxu0 %v740
      %833 = vmatpush.msra.mxu0 %v738
      %834 = vmatmul.f32.gmra.mxu0 %v756
      %v835 = vpop.f32.mrf.mxu0
      %v836 = vadd.f32 %v816, %v835
      %837 = vdwg.mxu0
      %v839 = vsel %vm324, %v659, 0
      %841 = vmatpush.msra.mxu0 %v690
      %842 = vmatpush.msra.mxu0 %v688
      %843 = vmatpush.msra.mxu0 %v686
      %844 = vmatpush.msra.mxu0 %v684
      %845 = vmatpush.msra.mxu0 %v682
      %846 = vmatpush.msra.mxu0 %v680
      %847 = vmatpush.msra.mxu0 %v678
      %848 = vmatpush.msra.mxu0 %v676
      %849 = vmatpush.msra.mxu0 %v674
      %850 = vmatpush.msra.mxu0 %v672
      %851 = vmatpush.msra.mxu0 %v670
      %852 = vmatpush.msra.mxu0 %v668
      %853 = vmatpush.msra.mxu0 %v666
      %854 = vmatpush.msra.mxu0 %v664
      %855 = vmatpush.msra.mxu0 %v662
      %856 = vmatpush.msra.mxu0 %v660
      %857 = vmatmul.f32.gmra.mxu0 %v658
      %v858 = vpop.f32.mrf.mxu0
      %v859 = vadd.f32 %v796, %v858
      %860 = vdwg.mxu0
      %861 = vmatpush.msra.mxu0 0.0
      %862 = vmatpush.msra.mxu0 0.0
      %863 = vmatpush.msra.mxu0 0.0
      %864 = vmatpush.msra.mxu0 0.0
      %865 = vmatpush.msra.mxu0 0.0
      %866 = vmatpush.msra.mxu0 0.0
      %867 = vmatpush.msra.mxu0 0.0
      %868 = vmatpush.msra.mxu0 0.0
      %869 = vmatpush.msra.mxu0 0.0
      %870 = vmatpush.msra.mxu0 0.0
      %871 = vmatpush.msra.mxu0 0.0
      %872 = vmatpush.msra.mxu0 0.0
      %873 = vmatpush.msra.mxu0 %v698
      %874 = vmatpush.msra.mxu0 %v696
      %875 = vmatpush.msra.mxu0 %v694
      %876 = vmatpush.msra.mxu0 %v692
      %877 = vmatmul.f32.gmra.mxu0 %v839
      %v878 = vpop.f32.mrf.mxu0
      %v879 = vadd.f32 %v859, %v878
      %880 = vdwg.mxu0
      %881 = vmatpush.msra.mxu0 %v691
      %882 = vmatpush.msra.mxu0 %v689
      %883 = vmatpush.msra.mxu0 %v687
      %884 = vmatpush.msra.mxu0 %v685
      %885 = vmatpush.msra.mxu0 %v683
      %886 = vmatpush.msra.mxu0 %v681
      %887 = vmatpush.msra.mxu0 %v679
      %888 = vmatpush.msra.mxu0 %v677
      %889 = vmatpush.msra.mxu0 %v675
      %890 = vmatpush.msra.mxu0 %v673
      %891 = vmatpush.msra.mxu0 %v671
      %892 = vmatpush.msra.mxu0 %v669
      %893 = vmatpush.msra.mxu0 %v667
      %894 = vmatpush.msra.mxu0 %v665
      %895 = vmatpush.msra.mxu0 %v663
      %896 = vmatpush.msra.mxu0 %v661
      %897 = vmatmul.f32.gmra.mxu0 %v658
      %v898 = vpop.f32.mrf.mxu0
      %v899 = vadd.f32 %v836, %v898
      %900 = vdwg.mxu0
      %901 = vmatpush.msra.mxu0 0.0
      %902 = vmatpush.msra.mxu0 0.0
      %903 = vmatpush.msra.mxu0 0.0
      %904 = vmatpush.msra.mxu0 0.0
      %905 = vmatpush.msra.mxu0 0.0
      %906 = vmatpush.msra.mxu0 0.0
      %907 = vmatpush.msra.mxu0 0.0
      %908 = vmatpush.msra.mxu0 0.0
      %909 = vmatpush.msra.mxu0 0.0
      %910 = vmatpush.msra.mxu0 0.0
      %911 = vmatpush.msra.mxu0 0.0
      %912 = vmatpush.msra.mxu0 0.0
      %913 = vmatpush.msra.mxu0 %v699
      %914 = vmatpush.msra.mxu0 %v697
      %915 = vmatpush.msra.mxu0 %v695
      %916 = vmatpush.msra.mxu0 %v693
      %917 = vmatmul.f32.gmra.mxu0 %v839
      %v918 = vpop.f32.mrf.mxu0
      %v919 = vadd.f32 %v899, %v918
      %920 = vdwg.mxu0
      %v921 = vld [vmem:[#allocation2] sm:$0xfc]
      %v922 = vld [vmem:[#allocation2 + $0x8] sm:$0xfc]
      %v923 = vld [vmem:[#allocation2 + $0x10] sm:$0x3]
      %v924 = vld [vmem:[#allocation2 + $0x18] sm:$0x3]
      %s925 = scalar_lea.vmem %s3, 640
      %v926 = vld [vmem:[%s925] sm:$0xff]
      %v927 = vld [vmem:[%s925 + $0x8] sm:$0xff]
      %v928 = vld [vmem:[%s925 + $0x10] sm:$0xff]
      %v929 = vld [vmem:[%s925 + $0x18] sm:$0xff]
      %v930 = vld [vmem:[%s925 + $0x20] sm:$0xff]
      %v931 = vld [vmem:[%s925 + $0x28] sm:$0xff]
      %v932 = vld [vmem:[%s925 + $0x30] sm:$0xff]
      %v933 = vld [vmem:[%s925 + $0x38] sm:$0xff]
      %v934 = vld [vmem:[%s925 + $0x40] sm:$0xff]
      %v935 = vld [vmem:[%s925 + $0x48] sm:$0xff]
      %v936 = vld [vmem:[%s925 + $0x50] sm:$0xff]
      %v937 = vld [vmem:[%s925 + $0x58] sm:$0xff]
      %v938 = vld [vmem:[%s925 + $0x60] sm:$0xff]
      %v939 = vld [vmem:[%s925 + $0x68] sm:$0xff]
      %v940 = vld [vmem:[%s925 + $0x70] sm:$0xff]
      %v941 = vld [vmem:[%s925 + $0x78] sm:$0xff]
      %v942 = vld [vmem:[%s925 + $0x80] sm:$0xff]
      %v943 = vld [vmem:[%s925 + $0x88] sm:$0xff]
      %v944 = vld [vmem:[%s925 + $0x90] sm:$0xff]
      %v945 = vld [vmem:[%s925 + $0x98] sm:$0xff]
      %v946 = vld [vmem:[%s925 + $0xa0] sm:$0xff]
      %v947 = vld [vmem:[%s925 + $0xa8] sm:$0xff]
      %v948 = vld [vmem:[%s925 + $0xb0] sm:$0xff]
      %v949 = vld [vmem:[%s925 + $0xb8] sm:$0xff]
      %v950 = vld [vmem:[%s925 + $0xc0] sm:$0xff]
      %v951 = vld [vmem:[%s925 + $0xc8] sm:$0xff]
      %v952 = vld [vmem:[%s925 + $0xd0] sm:$0xff]
      %v953 = vld [vmem:[%s925 + $0xd8] sm:$0xff]
      %v954 = vld [vmem:[%s925 + $0xe0] sm:$0xff]
      %v955 = vld [vmem:[%s925 + $0xe8] sm:$0xff]
      %v956 = vld [vmem:[%s925 + $0xf0] sm:$0xff]
      %v957 = vld [vmem:[%s925 + $0xf8] sm:$0xff]
      %v958 = vld [vmem:[%s925 + $0x100] sm:$0xff]
      %v959 = vld [vmem:[%s925 + $0x108] sm:$0xff]
      %v960 = vld [vmem:[%s925 + $0x110] sm:$0xff]
      %v961 = vld [vmem:[%s925 + $0x118] sm:$0xff]
      %v962 = vld [vmem:[%s925 + $0x120] sm:$0xff]
      %v963 = vld [vmem:[%s925 + $0x128] sm:$0xff]
      %v964 = vld [vmem:[%s925 + $0x130] sm:$0xff]
      %v965 = vld [vmem:[%s925 + $0x138] sm:$0xff]
      %v970 = vrot.slane %v921, 2
      %v971 = vrot.slane %v923, 2
      %v972 = vsel %vm539, %v970, %v971
      %v973 = vrot.slane %v922, 2
      %v974 = vrot.slane %v924, 2
      %v975 = vsel %vm539, %v973, %v974
      %v977 = vsel %vm324, %v975, 0
      %979 = vmatpush.msra.mxu0 %v956
      %980 = vmatpush.msra.mxu0 %v954
      %981 = vmatpush.msra.mxu0 %v952
      %982 = vmatpush.msra.mxu0 %v950
      %983 = vmatpush.msra.mxu0 %v948
      %984 = vmatpush.msra.mxu0 %v946
      %985 = vmatpush.msra.mxu0 %v944
      %986 = vmatpush.msra.mxu0 %v942
      %987 = vmatpush.msra.mxu0 %v940
      %988 = vmatpush.msra.mxu0 %v938
      %989 = vmatpush.msra.mxu0 %v936
      %990 = vmatpush.msra.mxu0 %v934
      %991 = vmatpush.msra.mxu0 %v932
      %992 = vmatpush.msra.mxu0 %v930
      %993 = vmatpush.msra.mxu0 %v928
      %994 = vmatpush.msra.mxu0 %v926
      %995 = vmatmul.f32.gmra.mxu0 %v972
      %v996 = vpop.f32.mrf.mxu0
      %v997 = vadd.f32 0.0, %v996
      %998 = vdwg.mxu0
      %999 = vmatpush.msra.mxu0 0.0
      %1000 = vmatpush.msra.mxu0 0.0
      %1001 = vmatpush.msra.mxu0 0.0
      %1002 = vmatpush.msra.mxu0 0.0
      %1003 = vmatpush.msra.mxu0 0.0
      %1004 = vmatpush.msra.mxu0 0.0
      %1005 = vmatpush.msra.mxu0 0.0
      %1006 = vmatpush.msra.mxu0 0.0
      %1007 = vmatpush.msra.mxu0 0.0
      %1008 = vmatpush.msra.mxu0 0.0
      %1009 = vmatpush.msra.mxu0 0.0
      %1010 = vmatpush.msra.mxu0 0.0
      %1011 = vmatpush.msra.mxu0 %v964
      %1012 = vmatpush.msra.mxu0 %v962
      %1013 = vmatpush.msra.mxu0 %v960
      %1014 = vmatpush.msra.mxu0 %v958
      %1015 = vmatmul.f32.gmra.mxu0 %v977
      %v1016 = vpop.f32.mrf.mxu0
      %v1017 = vadd.f32 %v997, %v1016
      %1018 = vdwg.mxu0
      %1019 = vmatpush.msra.mxu0 %v957
      %1020 = vmatpush.msra.mxu0 %v955
      %1021 = vmatpush.msra.mxu0 %v953
      %1022 = vmatpush.msra.mxu0 %v951
      %1023 = vmatpush.msra.mxu0 %v949
      %1024 = vmatpush.msra.mxu0 %v947
      %1025 = vmatpush.msra.mxu0 %v945
      %1026 = vmatpush.msra.mxu0 %v943
      %1027 = vmatpush.msra.mxu0 %v941
      %1028 = vmatpush.msra.mxu0 %v939
      %1029 = vmatpush.msra.mxu0 %v937
      %1030 = vmatpush.msra.mxu0 %v935
      %1031 = vmatpush.msra.mxu0 %v933
      %1032 = vmatpush.msra.mxu0 %v931
      %1033 = vmatpush.msra.mxu0 %v929
      %1034 = vmatpush.msra.mxu0 %v927
      %1035 = vmatmul.f32.gmra.mxu0 %v972
      %v1036 = vpop.f32.mrf.mxu0
      %v1037 = vadd.f32 0.0, %v1036
      %1038 = vdwg.mxu0
      %1039 = vmatpush.msra.mxu0 0.0
      %1040 = vmatpush.msra.mxu0 0.0
      %1041 = vmatpush.msra.mxu0 0.0
      %1042 = vmatpush.msra.mxu0 0.0
      %1043 = vmatpush.msra.mxu0 0.0
      %1044 = vmatpush.msra.mxu0 0.0
      %1045 = vmatpush.msra.mxu0 0.0
      %1046 = vmatpush.msra.mxu0 0.0
      %1047 = vmatpush.msra.mxu0 0.0
      %1048 = vmatpush.msra.mxu0 0.0
      %1049 = vmatpush.msra.mxu0 0.0
      %1050 = vmatpush.msra.mxu0 0.0
      %1051 = vmatpush.msra.mxu0 %v965
      %1052 = vmatpush.msra.mxu0 %v963
      %1053 = vmatpush.msra.mxu0 %v961
      %1054 = vmatpush.msra.mxu0 %v959
      %1055 = vmatmul.f32.gmra.mxu0 %v977
      %v1056 = vpop.f32.mrf.mxu0
      %v1057 = vadd.f32 %v1037, %v1056
      %1058 = vdwg.mxu0
      %v1059 = vadd.f32 %v879, %v1017
      %v1060 = vadd.f32 %v919, %v1057
      %v1061 = vld [vmem:[%s4] sm:$0x3]
      %v1063 = vperm.slane %v1061, 0
      %v1064 = vperm.slane %v1061, 1
      %v1067 = vadd.f32 %v1059, %v1063
      %v1068 = vadd.f32 %v1060, %v1064
      %v1069 = vld [vmem:[%s219] sm:$0xfe]
      %v1070 = vld [vmem:[%s219 + $0x8] sm:$0xfe]
      %v1071 = vld [vmem:[%s219 + $0x10] sm:$0x1]
      %v1072 = vld [vmem:[%s219 + $0x18] sm:$0x1]
      %v1077 = vrot.slane %v1069, 1
      %v1078 = vrot.slane %v1071, 1
      %v1079 = vsel %vm316, %v1077, %v1078
      %v1080 = vrot.slane %v1070, 1
      %v1081 = vrot.slane %v1072, 1
      %v1082 = vsel %vm316, %v1080, %v1081
      %v1085 = vadd.f32 %v1067, %v1079
      %v1086 = vadd.f32 %v1068, %v1082
      %1087 = vst [vmem:[%s224] sm:$0xff] 0.0
      %1088 = vst.msk [vmem:[%s224 + $0x8] sm:$0xff] %vm324, 0.0
      %1089 = vst [vmem:[%s224 + $0x10] sm:$0x3] 0.0
      %1090 = vst.msk [vmem:[%s224 + $0x18] sm:$0x3] %vm644, 0.0
      %v1093 = vrot.slane %v1085, 7
      %v1094 = vrot.slane %v1086, 7
      %1097 = vst [vmem:[%s224] sm:$0xfe] %v1093
      %1098 = vst.msk [vmem:[%s224 + $0x8] sm:$0xfe] %vm653, %v1094
      %1099 = vst [vmem:[%s224 + $0x10] sm:$0x1] %v1093
      %1100 = vst.msk [vmem:[%s224 + $0x18] sm:$0x1] %vm656, %v1094
      %p1101 = scmp.lt.s32.totalorder %s16, 1
      %s1102 = scalar_select %p1101, %s16, 1
      %s1103 = smul.addr %s1102, 4
      %s1104 = smul.addr %s1103, 8
      %s1105 = scalar_lea.vmem %s5, %s1104
      // Predicated region
      $region41: #{usr_forward.12} parent=39 // pred_check
        %p1106 = pneg %p144
      $region42: #{usr_forward.12} parent=39 // pred_check_branch
        %1108 = sbr.rel (%p1106) target = $region44
      $region43: #{usr_forward.12} parent=39 // pred_region
        _
      $region44: #{usr_forward.12} parent=39 // pred_fallthru
        _
    $region40: #{usr_forward.12} parent=5 // pred_fallthru
      _
    %p1109 = scmp.le.s32.totalorder 2, %s11
    // Predicated region
    $region45: #{usr_forward.12} parent=5 // pred_check
      %p1110 = pneg %p1109
    $region46: #{usr_forward.12} parent=5 // pred_check_branch
      %1112 = sbr.rel (%p1110) target = $region48
    $region47: #{usr_forward.12} parent=5 // pred_region
      %s1113 = ssub.s32 %s11, 2
      // Predicated region
      $region49: #{usr_forward.12} parent=47 // pred_check
        %p1114 = pneg %p150
      $region50: #{usr_forward.12} parent=47 // pred_check_branch
        %1116 = sbr.rel (%p1114) target = $region52
      $region51: #{usr_forward.12} parent=47 // pred_region
        %p1117 = scmp.lt.s32.totalorder %s17, 1
        %s1118 = scalar_select %p1117, %s17, 1
        %s1119 = smul.addr %s1118, 4
        %s1120 = smul.addr %s1119, 8
        %s1121 = scalar_lea.vmem %s5, %s1120
      $region52: #{usr_forward.12} parent=47 // pred_fallthru
        _
    $region48: #{usr_forward.12} parent=5 // pred_fallthru
      _
  $region6: #{usr_forward.12} parent=0 // loop_footer
    %s15 = sadd.s32 1, %s11
  $region7: #{usr_forward.12} parent=0 // loop_footer_branch
    %10 = sbr.rel target = $region3
  $region8: #{usr_forward.12} parent=0 // loop_exit
    _

// kernel: usr_forward.13
$region0: #{usr_forward.13}
  #allocation0 [shape = 'u32[]', space=smem, size = 0x4, offset = 0x4, fixed_abs, tag = 'smem constant byte address 0x4 - core index']
  #allocation1 [shape = 'u32[72,128]{1,0:T(1,128)}', space=vmem, size = 0x9000, scoped, tag = 'internal scratch']
  #allocation2 [shape = 'f32[10,160]{1,0:T(8,128)}', space=vmem, size = 0x4000, scoped, tag = 'scratch operand']
  %s0 = inlined_call_operand.vmem [shape: f32[2,10,160], index: 0, kind: input, shape index: {}]
  %s1 = inlined_call_operand.vmem [shape: f32[3,160,160], index: 1, kind: input, shape index: {}]
  %s2 = inlined_call_operand.vmem [shape: f32[1,160], index: 2, kind: input, shape index: {}]
  %s3 = inlined_call_operand.vmem [shape: f32[3,160,160], index: 3, kind: input, shape index: {}]
  %s4 = inlined_call_operand.vmem [shape: f32[1,160], index: 4, kind: input, shape index: {}]
  %s5 = inlined_call_operand.vmem [shape: f32[2,10,160], index: 5, kind: input, shape index: {}]
  %s6 = inlined_call_operand.vmem [shape: f32[2,10,160], index: 6, kind: output, shape index: {}]
  %s7 = sld [smem:[#allocation0]]
  $region57: #{usr_forward.13} parent=0
    _
  %s9 = ssub.s32 1, %s7
  %s10 = scalar_select 0, %s9, %s7
  loop: start=0, step=1, limit=4
  $region2: #{usr_forward.13} parent=0 // loop_pre_header
    _
  $region3: #{usr_forward.13} parent=0 // loop_header
    %s12 = sphi 0, %s16
    %p13 = scmp.ge.s32.totalorder %s12, 4
    %s22 = sphi 0, %s24
    %s25 = sphi 0, %s22
    %s26 = sphi 0, %s25
    %s42 = sphi 0, %s26
    %s46 = sphi 0, %s46
    %s48 = sphi 0, %s46
    %s49 = sphi 0, %s48
    %s63 = sphi 0, %s49
    %s67 = sphi 0, %s67
    %s69 = sphi 0, %s67
    %s70 = sphi 0, %s69
    %s84 = sphi 0, %s70
    %s88 = sphi 0, %s88
    %s90 = sphi 0, %s88
    %s91 = sphi 0, %s90
    %s105 = sphi 0, %s91
    %s109 = sphi 0, %s109
    %s111 = sphi 0, %s109
    %s112 = sphi 0, %s111
    %s126 = sphi 0, %s112
    %s132 = sphi 0, %s134
    %s135 = sphi 0, %s132
    %s136 = sphi 0, %s135
    %s152 = sphi 0, %s136
    %s158 = sphi 0, %s160
    %s161 = sphi 0, %s158
    %s162 = sphi 0, %s161
    %s178 = sphi 0, %s162
  $region4: #{usr_forward.13} parent=0 // loop_header_branch
    %15 = sbr.rel (%p13) target = $region8
  $region5: #{usr_forward.13} parent=0 // loop_body
    %s17 = ssub.s32 %s12, 1
    %s18 = ssub.s32 %s12, 2
    %s19 = sadd.s32 %s12, 1
    %s20 = ssub.s32 %s12, %s19
    %p21 = scmp.eq.s32.totalorder %s20, 0
    %s23 = sadd.s32 %s22, 1
    %s24 = scalar_select %p21, %s22, %s23
    %p27 = pneg %p21
    %p28 = scmp.eq.s32.totalorder %s12, 1
    %p29 = por %p27, %p28
    %p30 = scmp.ne.s32.totalorder %s22, %s25
    %p31 = scmp.eq.s32.totalorder %s12, 0
    %p32 = por %p30, %p31
    %p33 = scmp.ne.s32.totalorder %s22, %s25
    %p34 = scmp.eq.s32.totalorder %s17, 1
    %p35 = por %p33, %p34
    %p36 = scmp.ne.s32.totalorder %s25, %s26
    %p37 = scmp.eq.s32.totalorder %s17, 0
    %p38 = por %p36, %p37
    %p39 = scmp.ne.s32.totalorder %s25, %s26
    %p40 = scmp.eq.s32.totalorder %s18, 1
    %p41 = por %p39, %p40
    %p43 = scmp.ne.s32.totalorder %s26, %s42
    %p44 = scmp.eq.s32.totalorder %s18, 0
    %p45 = por %p43, %p44
    %s47 = sadd.s32 %s46, 1
    %p50 = scmp.eq.s32.totalorder %s12, 1
    %p51 = scmp.ne.s32.totalorder %s46, %s48
    %p52 = scmp.eq.s32.totalorder %s12, 0
    %p53 = por %p51, %p52
    %p54 = scmp.ne.s32.totalorder %s46, %s48
    %p55 = scmp.eq.s32.totalorder %s17, 1
    %p56 = por %p54, %p55
    %p57 = scmp.ne.s32.totalorder %s48, %s49
    %p58 = scmp.eq.s32.totalorder %s17, 0
    %p59 = por %p57, %p58
    %p60 = scmp.ne.s32.totalorder %s48, %s49
    %p61 = scmp.eq.s32.totalorder %s18, 1
    %p62 = por %p60, %p61
    %p64 = scmp.ne.s32.totalorder %s49, %s63
    %p65 = scmp.eq.s32.totalorder %s18, 0
    %p66 = por %p64, %p65
    %s68 = sadd.s32 %s67, 1
    %p71 = scmp.eq.s32.totalorder %s12, 1
    %p72 = scmp.ne.s32.totalorder %s67, %s69
    %p73 = scmp.eq.s32.totalorder %s12, 0
    %p74 = por %p72, %p73
    %p75 = scmp.ne.s32.totalorder %s67, %s69
    %p76 = scmp.eq.s32.totalorder %s17, 1
    %p77 = por %p75, %p76
    %p78 = scmp.ne.s32.totalorder %s69, %s70
    %p79 = scmp.eq.s32.totalorder %s17, 0
    %p80 = por %p78, %p79
    %p81 = scmp.ne.s32.totalorder %s69, %s70
    %p82 = scmp.eq.s32.totalorder %s18, 1
    %p83 = por %p81, %p82
    %p85 = scmp.ne.s32.totalorder %s70, %s84
    %p86 = scmp.eq.s32.totalorder %s18, 0
    %p87 = por %p85, %p86
    %s89 = sadd.s32 %s88, 1
    %p92 = scmp.eq.s32.totalorder %s12, 1
    %p93 = scmp.ne.s32.totalorder %s88, %s90
    %p94 = scmp.eq.s32.totalorder %s12, 0
    %p95 = por %p93, %p94
    %p96 = scmp.ne.s32.totalorder %s88, %s90
    %p97 = scmp.eq.s32.totalorder %s17, 1
    %p98 = por %p96, %p97
    %p99 = scmp.ne.s32.totalorder %s90, %s91
    %p100 = scmp.eq.s32.totalorder %s17, 0
    %p101 = por %p99, %p100
    %p102 = scmp.ne.s32.totalorder %s90, %s91
    %p103 = scmp.eq.s32.totalorder %s18, 1
    %p104 = por %p102, %p103
    %p106 = scmp.ne.s32.totalorder %s91, %s105
    %p107 = scmp.eq.s32.totalorder %s18, 0
    %p108 = por %p106, %p107
    %s110 = sadd.s32 %s109, 1
    %p113 = scmp.eq.s32.totalorder %s12, 1
    %p114 = scmp.ne.s32.totalorder %s109, %s111
    %p115 = scmp.eq.s32.totalorder %s12, 0
    %p116 = por %p114, %p115
    %p117 = scmp.ne.s32.totalorder %s109, %s111
    %p118 = scmp.eq.s32.totalorder %s17, 1
    %p119 = por %p117, %p118
    %p120 = scmp.ne.s32.totalorder %s111, %s112
    %p121 = scmp.eq.s32.totalorder %s17, 0
    %p122 = por %p120, %p121
    %p123 = scmp.ne.s32.totalorder %s111, %s112
    %p124 = scmp.eq.s32.totalorder %s18, 1
    %p125 = por %p123, %p124
    %p127 = scmp.ne.s32.totalorder %s112, %s126
    %p128 = scmp.eq.s32.totalorder %s18, 0
    %p129 = por %p127, %p128
    %s130 = ssub.s32 %s12, %s19
    %p131 = scmp.eq.s32.totalorder %s130, 0
    %s133 = sadd.s32 %s132, 1
    %s134 = scalar_select %p131, %s132, %s133
    %p137 = pneg %p131
    %p138 = scmp.eq.s32.totalorder %s12, 1
    %p139 = por %p137, %p138
    %p140 = scmp.ne.s32.totalorder %s132, %s135
    %p141 = scmp.eq.s32.totalorder %s12, 0
    %p142 = por %p140, %p141
    %p143 = scmp.ne.s32.totalorder %s132, %s135
    %p144 = scmp.eq.s32.totalorder %s17, 1
    %p145 = por %p143, %p144
    %p146 = scmp.ne.s32.totalorder %s135, %s136
    %p147 = scmp.eq.s32.totalorder %s17, 0
    %p148 = por %p146, %p147
    %p149 = scmp.ne.s32.totalorder %s135, %s136
    %p150 = scmp.eq.s32.totalorder %s18, 1
    %p151 = por %p149, %p150
    %p153 = scmp.ne.s32.totalorder %s136, %s152
    %p154 = scmp.eq.s32.totalorder %s18, 0
    %p155 = por %p153, %p154
    %s156 = ssub.s32 %s12, %s19
    %p157 = scmp.eq.s32.totalorder %s156, 0
    %s159 = sadd.s32 %s158, 1
    %s160 = scalar_select %p157, %s158, %s159
    %p163 = pneg %p157
    %p164 = scmp.eq.s32.totalorder %s12, 1
    %p165 = por %p163, %p164
    %p166 = scmp.ne.s32.totalorder %s158, %s161
    %p167 = scmp.eq.s32.totalorder %s12, 0
    %p168 = por %p166, %p167
    %p169 = scmp.ne.s32.totalorder %s158, %s161
    %p170 = scmp.eq.s32.totalorder %s17, 1
    %p171 = por %p169, %p170
    %p172 = scmp.ne.s32.totalorder %s161, %s162
    %p173 = scmp.eq.s32.totalorder %s17, 0
    %p174 = por %p172, %p173
    %p175 = scmp.ne.s32.totalorder %s161, %s162
    %p176 = scmp.eq.s32.totalorder %s18, 1
    %p177 = por %p175, %p176
    %p179 = scmp.ne.s32.totalorder %s162, %s178
    %p180 = scmp.eq.s32.totalorder %s18, 0
    %p181 = por %p179, %p180
    %p182 = scmp.le.s32.totalorder 1, %s12
    %p183 = scmp.lt.s32.totalorder %s12, 3
    %p184 = pnand %p182, %p183
    %p185 = pneg %p184
    // Predicated region
    $region9: #{usr_forward.13} parent=5 // pred_check
      _
    $region10: #{usr_forward.13} parent=5 // pred_check_branch
      %187 = sbr.rel (%p184) target = $region12
    $region11: #{usr_forward.13} parent=5 // pred_region
      %s188 = ssub.s32 %s12, 1
      // Predicated region
      $region13: #{usr_forward.13} parent=11 // pred_check
        %p189 = pneg %p59
      $region14: #{usr_forward.13} parent=11 // pred_check_branch
        %191 = sbr.rel (%p189) target = $region16
      $region15: #{usr_forward.13} parent=11 // pred_region
        _
      $region16: #{usr_forward.13} parent=11 // pred_fallthru
        _
      // Predicated region
      $region17: #{usr_forward.13} parent=11 // pred_check
        %p192 = pneg %p80
      $region18: #{usr_forward.13} parent=11 // pred_check_branch
        %194 = sbr.rel (%p192) target = $region20
      $region19: #{usr_forward.13} parent=11 // pred_region
        _
      $region20: #{usr_forward.13} parent=11 // pred_fallthru
        _
      // Predicated region
      $region21: #{usr_forward.13} parent=11 // pred_check
        %p195 = pneg %p101
      $region22: #{usr_forward.13} parent=11 // pred_check_branch
        %197 = sbr.rel (%p195) target = $region24
      $region23: #{usr_forward.13} parent=11 // pred_region
        _
      $region24: #{usr_forward.13} parent=11 // pred_fallthru
        _
      // Predicated region
      $region25: #{usr_forward.13} parent=11 // pred_check
        %p198 = pneg %p122
      $region26: #{usr_forward.13} parent=11 // pred_check_branch
        %200 = sbr.rel (%p198) target = $region28
      $region27: #{usr_forward.13} parent=11 // pred_region
        _
      $region28: #{usr_forward.13} parent=11 // pred_fallthru
        _
    $region12: #{usr_forward.13} parent=5 // pred_fallthru
      _
    %p201 = scmp.lt.s32.totalorder %s12, 2
    // Predicated region
    $region29: #{usr_forward.13} parent=5 // pred_check
      %p202 = pneg %p201
    $region30: #{usr_forward.13} parent=5 // pred_check_branch
      %204 = sbr.rel (%p202) target = $region32
    $region31: #{usr_forward.13} parent=5 // pred_region
      // Predicated region
      $region33: #{usr_forward.13} parent=31 // pred_check
        %p205 = pneg %p32
      $region34: #{usr_forward.13} parent=31 // pred_check_branch
        %207 = sbr.rel (%p205) target = $region36
      $region35: #{usr_forward.13} parent=31 // pred_region
        %p208 = scmp.lt.s32.totalorder %s12, 1
        %s209 = scalar_select %p208, %s12, 1
        %s210 = smul.addr %s209, 4
        %s211 = smul.addr %s210, 8
        %s212 = scalar_lea.vmem %s0, %s211
      $region36: #{usr_forward.13} parent=31 // pred_fallthru
        _
      // Predicated region
      $region37: #{usr_forward.13} parent=31 // pred_check
        %p213 = pneg %p142
      $region38: #{usr_forward.13} parent=31 // pred_check_branch
        %215 = sbr.rel (%p213) target = $region40
      $region39: #{usr_forward.13} parent=31 // pred_region
        %p216 = scmp.lt.s32.totalorder %s12, 1
        %s217 = scalar_select %p216, %s12, 1
        %s218 = smul.addr %s217, 4
        %s219 = smul.addr %s218, 8
        %s220 = scalar_lea.vmem %s5, %s219
      $region40: #{usr_forward.13} parent=31 // pred_fallthru
        _
    $region32: #{usr_forward.13} parent=5 // pred_fallthru
      _
    %p221 = scmp.le.s32.totalorder 1, %s12
    %p222 = scmp.lt.s32.totalorder %s12, 3
    %p223 = pnand %p221, %p222
    %p224 = pneg %p223
    // Predicated region
    $region41: #{usr_forward.13} parent=5 // pred_check
      _
    $region42: #{usr_forward.13} parent=5 // pred_check_branch
      %226 = sbr.rel (%p223) target = $region44
    $region43: #{usr_forward.13} parent=5 // pred_region
      %s227 = ssub.s32 %s12, 1
      %p228 = scmp.lt.s32.totalorder %s17, 1
      %s229 = scalar_select %p228, %s17, 1
      %s230 = smul.addr %s229, 4
      %s231 = smul.addr %s230, 8
      %s232 = scalar_lea.vmem %s0, %s231
      %p233 = pneg %p38
      %p234 = pneg %p35
      %p235 = pneg %p59
      %p236 = pneg %p56
      %p237 = pneg %p80
      %p238 = pneg %p77
      %p239 = pneg %p101
      %p240 = pneg %p98
      %p241 = pneg %p122
      %p242 = pneg %p119
      %p243 = scmp.lt.s32.totalorder %s17, 1
      %s244 = scalar_select %p243, %s17, 1
      %s245 = smul.addr %s244, 4
      %s246 = smul.addr %s245, 8
      %s247 = scalar_lea.vmem %s5, %s246
      %p248 = pneg %p148
      %p249 = pneg %p145
      %p250 = pneg %p174
      %p251 = pneg %p171
      %p252 = scmp.lt.s32.totalorder %s17, 1
      %s253 = scalar_select %p252, %s17, 1
      %s254 = smul.addr %s253, 4
      %s255 = smul.addr %s254, 8
      %s256 = scalar_lea.vmem %s6, %s255
      %p257 = scmp.lt.s32.totalorder %s17, 1
      %s258 = scalar_select %p257, %s17, 1
      %s259 = smul.addr %s258, 4
      %s260 = smul.addr %s259, 8
      %s261 = scalar_lea.vmem %s0, %s260
      %p262 = scmp.lt.s32.totalorder %s17, 1
      %s263 = scalar_select %p262, %s17, 1
      %s264 = smul.addr %s263, 4
      %s265 = smul.addr %s264, 8
      %s266 = scalar_lea.vmem %s5, %s265
      %p267 = scmp.lt.s32.totalorder %s17, 1
      %s268 = scalar_select %p267, %s17, 1
      %s269 = smul.addr %s268, 4
      %s270 = smul.addr %s269, 8
      %s271 = scalar_lea.vmem %s6, %s270
      %v272 = vld [vmem:[%s261] sm:$0xff]
      %v273 = vld [vmem:[%s261 + $0x8] sm:$0xff]
      %v274 = vld [vmem:[%s1] sm:$0xff]
      %v275 = vld [vmem:[%s1 + $0x8] sm:$0xff]
      %v276 = vld [vmem:[%s1 + $0x10] sm:$0xff]
      %v277 = vld [vmem:[%s1 + $0x18] sm:$0xff]
      %v278 = vld [vmem:[%s1 + $0x20] sm:$0xff]
      %v279 = vld [vmem:[%s1 + $0x28] sm:$0xff]
      %v280 = vld [vmem:[%s1 + $0x30] sm:$0xff]
      %v281 = vld [vmem:[%s1 + $0x38] sm:$0xff]
      %v282 = vld [vmem:[%s1 + $0x40] sm:$0xff]
      %v283 = vld [vmem:[%s1 + $0x48] sm:$0xff]
      %v284 = vld [vmem:[%s1 + $0x50] sm:$0xff]
      %v285 = vld [vmem:[%s1 + $0x58] sm:$0xff]
      %v286 = vld [vmem:[%s1 + $0x60] sm:$0xff]
      %v287 = vld [vmem:[%s1 + $0x68] sm:$0xff]
      %v288 = vld [vmem:[%s1 + $0x70] sm:$0xff]
      %v289 = vld [vmem:[%s1 + $0x78] sm:$0xff]
      %v290 = vld [vmem:[%s1 + $0x80] sm:$0xff]
      %v291 = vld [vmem:[%s1 + $0x88] sm:$0xff]
      %v292 = vld [vmem:[%s1 + $0x90] sm:$0xff]
      %v293 = vld [vmem:[%s1 + $0x98] sm:$0xff]
      %v294 = vld [vmem:[%s1 + $0xa0] sm:$0xff]
      %v295 = vld [vmem:[%s1 + $0xa8] sm:$0xff]
      %v296 = vld [vmem:[%s1 + $0xb0] sm:$0xff]
      %v297 = vld [vmem:[%s1 + $0xb8] sm:$0xff]
      %v298 = vld [vmem:[%s1 + $0xc0] sm:$0xff]
      %v299 = vld [vmem:[%s1 + $0xc8] sm:$0xff]
      %v300 = vld [vmem:[%s1 + $0xd0] sm:$0xff]
      %v301 = vld [vmem:[%s1 + $0xd8] sm:$0xff]
      %v302 = vld [vmem:[%s1 + $0xe0] sm:$0xff]
      %v303 = vld [vmem:[%s1 + $0xe8] sm:$0xff]
      %v304 = vld [vmem:[%s1 + $0xf0] sm:$0xff]
      %v305 = vld [vmem:[%s1 + $0xf8] sm:$0xff]
      %v306 = vld [vmem:[%s1 + $0x100] sm:$0xff]
      %v307 = vld [vmem:[%s1 + $0x108] sm:$0xff]
      %v308 = vld [vmem:[%s1 + $0x110] sm:$0xff]
      %v309 = vld [vmem:[%s1 + $0x118] sm:$0xff]
      %v310 = vld [vmem:[%s1 + $0x120] sm:$0xff]
      %v311 = vld [vmem:[%s1 + $0x128] sm:$0xff]
      %v312 = vld [vmem:[%s1 + $0x130] sm:$0xff]
      %v313 = vld [vmem:[%s1 + $0x138] sm:$0xff]
      %v314 = vld [vmem:[%s261] sm:$0xfe]
      %v315 = vld [vmem:[%s261 + $0x8] sm:$0xfe]
      %v316 = vld [vmem:[%s261 + $0x10] sm:$0x1]
      %v317 = vld [vmem:[%s261 + $0x18] sm:$0x1]
      %s318 = scalar_lea.vmem %s1, 320
      %v319 = vld [vmem:[%s318] sm:$0xff]
      %v320 = vld [vmem:[%s318 + $0x8] sm:$0xff]
      %v321 = vld [vmem:[%s318 + $0x10] sm:$0xff]
      %v322 = vld [vmem:[%s318 + $0x18] sm:$0xff]
      %v323 = vld [vmem:[%s318 + $0x20] sm:$0xff]
      %v324 = vld [vmem:[%s318 + $0x28] sm:$0xff]
      %v325 = vld [vmem:[%s318 + $0x30] sm:$0xff]
      %v326 = vld [vmem:[%s318 + $0x38] sm:$0xff]
      %v327 = vld [vmem:[%s318 + $0x40] sm:$0xff]
      %v328 = vld [vmem:[%s318 + $0x48] sm:$0xff]
      %v329 = vld [vmem:[%s318 + $0x50] sm:$0xff]
      %v330 = vld [vmem:[%s318 + $0x58] sm:$0xff]
      %v331 = vld [vmem:[%s318 + $0x60] sm:$0xff]
      %v332 = vld [vmem:[%s318 + $0x68] sm:$0xff]
      %v333 = vld [vmem:[%s318 + $0x70] sm:$0xff]
      %v334 = vld [vmem:[%s318 + $0x78] sm:$0xff]
      %v335 = vld [vmem:[%s318 + $0x80] sm:$0xff]
      %v336 = vld [vmem:[%s318 + $0x88] sm:$0xff]
      %v337 = vld [vmem:[%s318 + $0x90] sm:$0xff]
      %v338 = vld [vmem:[%s318 + $0x98] sm:$0xff]
      %v339 = vld [vmem:[%s318 + $0xa0] sm:$0xff]
      %v340 = vld [vmem:[%s318 + $0xa8] sm:$0xff]
      %v341 = vld [vmem:[%s318 + $0xb0] sm:$0xff]
      %v342 = vld [vmem:[%s318 + $0xb8] sm:$0xff]
      %v343 = vld [vmem:[%s318 + $0xc0] sm:$0xff]
      %v344 = vld [vmem:[%s318 + $0xc8] sm:$0xff]
      %v345 = vld [vmem:[%s318 + $0xd0] sm:$0xff]
      %v346 = vld [vmem:[%s318 + $0xd8] sm:$0xff]
      %v347 = vld [vmem:[%s318 + $0xe0] sm:$0xff]
      %v348 = vld [vmem:[%s318 + $0xe8] sm:$0xff]
      %v349 = vld [vmem:[%s318 + $0xf0] sm:$0xff]
      %v350 = vld [vmem:[%s318 + $0xf8] sm:$0xff]
      %v351 = vld [vmem:[%s318 + $0x100] sm:$0xff]
      %v352 = vld [vmem:[%s318 + $0x108] sm:$0xff]
      %v353 = vld [vmem:[%s318 + $0x110] sm:$0xff]
      %v354 = vld [vmem:[%s318 + $0x118] sm:$0xff]
      %v355 = vld [vmem:[%s318 + $0x120] sm:$0xff]
      %v356 = vld [vmem:[%s318 + $0x128] sm:$0xff]
      %v357 = vld [vmem:[%s318 + $0x130] sm:$0xff]
      %v358 = vld [vmem:[%s318 + $0x138] sm:$0xff]
      %vm363 = vcmask 1046528
      %v364 = vrot.slane %v314, 1
      %v365 = vrot.slane %v316, 1
      %v366 = vsel %vm363, %v364, %v365
      %v367 = vrot.slane %v315, 1
      %v368 = vrot.slane %v317, 1
      %v369 = vsel %vm363, %v367, %v368
      %vm371 = vcmask 261120
      %v372 = vsel %vm371, %v369, 0
      %374 = vmatpush.msra.mxu0 %v349
      %375 = vmatpush.msra.mxu0 %v347
      %376 = vmatpush.msra.mxu0 %v345
      %377 = vmatpush.msra.mxu0 %v343
      %378 = vmatpush.msra.mxu0 %v341
      %379 = vmatpush.msra.mxu0 %v339
      %380 = vmatpush.msra.mxu0 %v337
      %381 = vmatpush.msra.mxu0 %v335
      %382 = vmatpush.msra.mxu0 %v333
      %383 = vmatpush.msra.mxu0 %v331
      %384 = vmatpush.msra.mxu0 %v329
      %385 = vmatpush.msra.mxu0 %v327
      %386 = vmatpush.msra.mxu0 %v325
      %387 = vmatpush.msra.mxu0 %v323
      %388 = vmatpush.msra.mxu0 %v321
      %389 = vmatpush.msra.mxu0 %v319
      %390 = vmatmul.f32.gmra.mxu0 %v366
      %v391 = vpop.f32.mrf.mxu0
      %v392 = vadd.f32 0.0, %v391
      %393 = vdwg.mxu0
      %394 = vmatpush.msra.mxu0 0.0
      %395 = vmatpush.msra.mxu0 0.0
      %396 = vmatpush.msra.mxu0 0.0
      %397 = vmatpush.msra.mxu0 0.0
      %398 = vmatpush.msra.mxu0 0.0
      %399 = vmatpush.msra.mxu0 0.0
      %400 = vmatpush.msra.mxu0 0.0
      %401 = vmatpush.msra.mxu0 0.0
      %402 = vmatpush.msra.mxu0 0.0
      %403 = vmatpush.msra.mxu0 0.0
      %404 = vmatpush.msra.mxu0 0.0
      %405 = vmatpush.msra.mxu0 0.0
      %406 = vmatpush.msra.mxu0 %v357
      %407 = vmatpush.msra.mxu0 %v355
      %408 = vmatpush.msra.mxu0 %v353
      %409 = vmatpush.msra.mxu0 %v351
      %410 = vmatmul.f32.gmra.mxu0 %v372
      %v411 = vpop.f32.mrf.mxu0
      %v412 = vadd.f32 %v392, %v411
      %413 = vdwg.mxu0
      %414 = vmatpush.msra.mxu0 %v350
      %415 = vmatpush.msra.mxu0 %v348
      %416 = vmatpush.msra.mxu0 %v346
      %417 = vmatpush.msra.mxu0 %v344
      %418 = vmatpush.msra.mxu0 %v342
      %419 = vmatpush.msra.mxu0 %v340
      %420 = vmatpush.msra.mxu0 %v338
      %421 = vmatpush.msra.mxu0 %v336
      %422 = vmatpush.msra.mxu0 %v334
      %423 = vmatpush.msra.mxu0 %v332
      %424 = vmatpush.msra.mxu0 %v330
      %425 = vmatpush.msra.mxu0 %v328
      %426 = vmatpush.msra.mxu0 %v326
      %427 = vmatpush.msra.mxu0 %v324
      %428 = vmatpush.msra.mxu0 %v322
      %429 = vmatpush.msra.mxu0 %v320
      %430 = vmatmul.f32.gmra.mxu0 %v366
      %v431 = vpop.f32.mrf.mxu0
      %v432 = vadd.f32 0.0, %v431
      %433 = vdwg.mxu0
      %434 = vmatpush.msra.mxu0 0.0
      %435 = vmatpush.msra.mxu0 0.0
      %436 = vmatpush.msra.mxu0 0.0
      %437 = vmatpush.msra.mxu0 0.0
      %438 = vmatpush.msra.mxu0 0.0
      %439 = vmatpush.msra.mxu0 0.0
      %440 = vmatpush.msra.mxu0 0.0
      %441 = vmatpush.msra.mxu0 0.0
      %442 = vmatpush.msra.mxu0 0.0
      %443 = vmatpush.msra.mxu0 0.0
      %444 = vmatpush.msra.mxu0 0.0
      %445 = vmatpush.msra.mxu0 0.0
      %446 = vmatpush.msra.mxu0 %v358
      %447 = vmatpush.msra.mxu0 %v356
      %448 = vmatpush.msra.mxu0 %v354
      %449 = vmatpush.msra.mxu0 %v352
      %450 = vmatmul.f32.gmra.mxu0 %v372
      %v451 = vpop.f32.mrf.mxu0
      %v452 = vadd.f32 %v432, %v451
      %453 = vdwg.mxu0
      %v455 = vsel %vm371, %v273, 0
      %457 = vmatpush.msra.mxu0 %v304
      %458 = vmatpush.msra.mxu0 %v302
      %459 = vmatpush.msra.mxu0 %v300
      %460 = vmatpush.msra.mxu0 %v298
      %461 = vmatpush.msra.mxu0 %v296
      %462 = vmatpush.msra.mxu0 %v294
      %463 = vmatpush.msra.mxu0 %v292
      %464 = vmatpush.msra.mxu0 %v290
      %465 = vmatpush.msra.mxu0 %v288
      %466 = vmatpush.msra.mxu0 %v286
      %467 = vmatpush.msra.mxu0 %v284
      %468 = vmatpush.msra.mxu0 %v282
      %469 = vmatpush.msra.mxu0 %v280
      %470 = vmatpush.msra.mxu0 %v278
      %471 = vmatpush.msra.mxu0 %v276
      %472 = vmatpush.msra.mxu0 %v274
      %473 = vmatmul.f32.gmra.mxu0 %v272
      %v474 = vpop.f32.mrf.mxu0
      %v475 = vadd.f32 %v412, %v474
      %476 = vdwg.mxu0
      %477 = vmatpush.msra.mxu0 0.0
      %478 = vmatpush.msra.mxu0 0.0
      %479 = vmatpush.msra.mxu0 0.0
      %480 = vmatpush.msra.mxu0 0.0
      %481 = vmatpush.msra.mxu0 0.0
      %482 = vmatpush.msra.mxu0 0.0
      %483 = vmatpush.msra.mxu0 0.0
      %484 = vmatpush.msra.mxu0 0.0
      %485 = vmatpush.msra.mxu0 0.0
      %486 = vmatpush.msra.mxu0 0.0
      %487 = vmatpush.msra.mxu0 0.0
      %488 = vmatpush.msra.mxu0 0.0
      %489 = vmatpush.msra.mxu0 %v312
      %490 = vmatpush.msra.mxu0 %v310
      %491 = vmatpush.msra.mxu0 %v308
      %492 = vmatpush.msra.mxu0 %v306
      %493 = vmatmul.f32.gmra.mxu0 %v455
      %v494 = vpop.f32.mrf.mxu0
      %v495 = vadd.f32 %v475, %v494
      %496 = vdwg.mxu0
      %497 = vmatpush.msra.mxu0 %v305
      %498 = vmatpush.msra.mxu0 %v303
      %499 = vmatpush.msra.mxu0 %v301
      %500 = vmatpush.msra.mxu0 %v299
      %501 = vmatpush.msra.mxu0 %v297
      %502 = vmatpush.msra.mxu0 %v295
      %503 = vmatpush.msra.mxu0 %v293
      %504 = vmatpush.msra.mxu0 %v291
      %505 = vmatpush.msra.mxu0 %v289
      %506 = vmatpush.msra.mxu0 %v287
      %507 = vmatpush.msra.mxu0 %v285
      %508 = vmatpush.msra.mxu0 %v283
      %509 = vmatpush.msra.mxu0 %v281
      %510 = vmatpush.msra.mxu0 %v279
      %511 = vmatpush.msra.mxu0 %v277
      %512 = vmatpush.msra.mxu0 %v275
      %513 = vmatmul.f32.gmra.mxu0 %v272
      %v514 = vpop.f32.mrf.mxu0
      %v515 = vadd.f32 %v452, %v514
      %516 = vdwg.mxu0
      %517 = vmatpush.msra.mxu0 0.0
      %518 = vmatpush.msra.mxu0 0.0
      %519 = vmatpush.msra.mxu0 0.0
      %520 = vmatpush.msra.mxu0 0.0
      %521 = vmatpush.msra.mxu0 0.0
      %522 = vmatpush.msra.mxu0 0.0
      %523 = vmatpush.msra.mxu0 0.0
      %524 = vmatpush.msra.mxu0 0.0
      %525 = vmatpush.msra.mxu0 0.0
      %526 = vmatpush.msra.mxu0 0.0
      %527 = vmatpush.msra.mxu0 0.0
      %528 = vmatpush.msra.mxu0 0.0
      %529 = vmatpush.msra.mxu0 %v313
      %530 = vmatpush.msra.mxu0 %v311
      %531 = vmatpush.msra.mxu0 %v309
      %532 = vmatpush.msra.mxu0 %v307
      %533 = vmatmul.f32.gmra.mxu0 %v455
      %v534 = vpop.f32.mrf.mxu0
      %v535 = vadd.f32 %v515, %v534
      %536 = vdwg.mxu0
      %v537 = vld [vmem:[%s261] sm:$0xfc]
      %v538 = vld [vmem:[%s261 + $0x8] sm:$0xfc]
      %v539 = vld [vmem:[%s261 + $0x10] sm:$0x3]
      %v540 = vld [vmem:[%s261 + $0x18] sm:$0x3]
      %s541 = scalar_lea.vmem %s1, 640
      %v542 = vld [vmem:[%s541] sm:$0xff]
      %v543 = vld [vmem:[%s541 + $0x8] sm:$0xff]
      %v544 = vld [vmem:[%s541 + $0x10] sm:$0xff]
      %v545 = vld [vmem:[%s541 + $0x18] sm:$0xff]
      %v546 = vld [vmem:[%s541 + $0x20] sm:$0xff]
      %v547 = vld [vmem:[%s541 + $0x28] sm:$0xff]
      %v548 = vld [vmem:[%s541 + $0x30] sm:$0xff]
      %v549 = vld [vmem:[%s541 + $0x38] sm:$0xff]
      %v550 = vld [vmem:[%s541 + $0x40] sm:$0xff]
      %v551 = vld [vmem:[%s541 + $0x48] sm:$0xff]
      %v552 = vld [vmem:[%s541 + $0x50] sm:$0xff]
      %v553 = vld [vmem:[%s541 + $0x58] sm:$0xff]
      %v554 = vld [vmem:[%s541 + $0x60] sm:$0xff]
      %v555 = vld [vmem:[%s541 + $0x68] sm:$0xff]
      %v556 = vld [vmem:[%s541 + $0x70] sm:$0xff]
      %v557 = vld [vmem:[%s541 + $0x78] sm:$0xff]
      %v558 = vld [vmem:[%s541 + $0x80] sm:$0xff]
      %v559 = vld [vmem:[%s541 + $0x88] sm:$0xff]
      %v560 = vld [vmem:[%s541 + $0x90] sm:$0xff]
      %v561 = vld [vmem:[%s541 + $0x98] sm:$0xff]
      %v562 = vld [vmem:[%s541 + $0xa0] sm:$0xff]
      %v563 = vld [vmem:[%s541 + $0xa8] sm:$0xff]
      %v564 = vld [vmem:[%s541 + $0xb0] sm:$0xff]
      %v565 = vld [vmem:[%s541 + $0xb8] sm:$0xff]
      %v566 = vld [vmem:[%s541 + $0xc0] sm:$0xff]
      %v567 = vld [vmem:[%s541 + $0xc8] sm:$0xff]
      %v568 = vld [vmem:[%s541 + $0xd0] sm:$0xff]
      %v569 = vld [vmem:[%s541 + $0xd8] sm:$0xff]
      %v570 = vld [vmem:[%s541 + $0xe0] sm:$0xff]
      %v571 = vld [vmem:[%s541 + $0xe8] sm:$0xff]
      %v572 = vld [vmem:[%s541 + $0xf0] sm:$0xff]
      %v573 = vld [vmem:[%s541 + $0xf8] sm:$0xff]
      %v574 = vld [vmem:[%s541 + $0x100] sm:$0xff]
      %v575 = vld [vmem:[%s541 + $0x108] sm:$0xff]
      %v576 = vld [vmem:[%s541 + $0x110] sm:$0xff]
      %v577 = vld [vmem:[%s541 + $0x118] sm:$0xff]
      %v578 = vld [vmem:[%s541 + $0x120] sm:$0xff]
      %v579 = vld [vmem:[%s541 + $0x128] sm:$0xff]
      %v580 = vld [vmem:[%s541 + $0x130] sm:$0xff]
      %v581 = vld [vmem:[%s541 + $0x138] sm:$0xff]
      %vm586 = vcmask 1045504
      %v587 = vrot.slane %v537, 2
      %v588 = vrot.slane %v539, 2
      %v589 = vsel %vm586, %v587, %v588
      %v590 = vrot.slane %v538, 2
      %v591 = vrot.slane %v540, 2
      %v592 = vsel %vm586, %v590, %v591
      %v594 = vsel %vm371, %v592, 0
      %596 = vmatpush.msra.mxu0 %v572
      %597 = vmatpush.msra.mxu0 %v570
      %598 = vmatpush.msra.mxu0 %v568
      %599 = vmatpush.msra.mxu0 %v566
      %600 = vmatpush.msra.mxu0 %v564
      %601 = vmatpush.msra.mxu0 %v562
      %602 = vmatpush.msra.mxu0 %v560
      %603 = vmatpush.msra.mxu0 %v558
      %604 = vmatpush.msra.mxu0 %v556
      %605 = vmatpush.msra.mxu0 %v554
      %606 = vmatpush.msra.mxu0 %v552
      %607 = vmatpush.msra.mxu0 %v550
      %608 = vmatpush.msra.mxu0 %v548
      %609 = vmatpush.msra.mxu0 %v546
      %610 = vmatpush.msra.mxu0 %v544
      %611 = vmatpush.msra.mxu0 %v542
      %612 = vmatmul.f32.gmra.mxu0 %v589
      %v613 = vpop.f32.mrf.mxu0
      %v614 = vadd.f32 0.0, %v613
      %615 = vdwg.mxu0
      %616 = vmatpush.msra.mxu0 0.0
      %617 = vmatpush.msra.mxu0 0.0
      %618 = vmatpush.msra.mxu0 0.0
      %619 = vmatpush.msra.mxu0 0.0
      %620 = vmatpush.msra.mxu0 0.0
      %621 = vmatpush.msra.mxu0 0.0
      %622 = vmatpush.msra.mxu0 0.0
      %623 = vmatpush.msra.mxu0 0.0
      %624 = vmatpush.msra.mxu0 0.0
      %625 = vmatpush.msra.mxu0 0.0
      %626 = vmatpush.msra.mxu0 0.0
      %627 = vmatpush.msra.mxu0 0.0
      %628 = vmatpush.msra.mxu0 %v580
      %629 = vmatpush.msra.mxu0 %v578
      %630 = vmatpush.msra.mxu0 %v576
      %631 = vmatpush.msra.mxu0 %v574
      %632 = vmatmul.f32.gmra.mxu0 %v594
      %v633 = vpop.f32.mrf.mxu0
      %v634 = vadd.f32 %v614, %v633
      %635 = vdwg.mxu0
      %636 = vmatpush.msra.mxu0 %v573
      %637 = vmatpush.msra.mxu0 %v571
      %638 = vmatpush.msra.mxu0 %v569
      %639 = vmatpush.msra.mxu0 %v567
      %640 = vmatpush.msra.mxu0 %v565
      %641 = vmatpush.msra.mxu0 %v563
      %642 = vmatpush.msra.mxu0 %v561
      %643 = vmatpush.msra.mxu0 %v559
      %644 = vmatpush.msra.mxu0 %v557
      %645 = vmatpush.msra.mxu0 %v555
      %646 = vmatpush.msra.mxu0 %v553
      %647 = vmatpush.msra.mxu0 %v551
      %648 = vmatpush.msra.mxu0 %v549
      %649 = vmatpush.msra.mxu0 %v547
      %650 = vmatpush.msra.mxu0 %v545
      %651 = vmatpush.msra.mxu0 %v543
      %652 = vmatmul.f32.gmra.mxu0 %v589
      %v653 = vpop.f32.mrf.mxu0
      %v654 = vadd.f32 0.0, %v653
      %655 = vdwg.mxu0
      %656 = vmatpush.msra.mxu0 0.0
      %657 = vmatpush.msra.mxu0 0.0
      %658 = vmatpush.msra.mxu0 0.0
      %659 = vmatpush.msra.mxu0 0.0
      %660 = vmatpush.msra.mxu0 0.0
      %661 = vmatpush.msra.mxu0 0.0
      %662 = vmatpush.msra.mxu0 0.0
      %663 = vmatpush.msra.mxu0 0.0
      %664 = vmatpush.msra.mxu0 0.0
      %665 = vmatpush.msra.mxu0 0.0
      %666 = vmatpush.msra.mxu0 0.0
      %667 = vmatpush.msra.mxu0 0.0
      %668 = vmatpush.msra.mxu0 %v581
      %669 = vmatpush.msra.mxu0 %v579
      %670 = vmatpush.msra.mxu0 %v577
      %671 = vmatpush.msra.mxu0 %v575
      %672 = vmatmul.f32.gmra.mxu0 %v594
      %v673 = vpop.f32.mrf.mxu0
      %v674 = vadd.f32 %v654, %v673
      %675 = vdwg.mxu0
      %v676 = vadd.f32 %v495, %v634
      %v677 = vadd.f32 %v535, %v674
      %v678 = vld [vmem:[%s2] sm:$0x3]
      %v680 = vperm.slane %v678, 0
      %v681 = vperm.slane %v678, 1
      %v684 = vadd.f32 %v676, %v680
      %v685 = vadd.f32 %v677, %v681
      %v686 = vmax.f32 %v684, 0.0
      %v687 = vmax.f32 %v685, 0.0
      %688 = vst [vmem:[#allocation2] sm:$0xff] 0.0
      %689 = vst.msk [vmem:[#allocation2 + $0x8] sm:$0xff] %vm371, 0.0
      %690 = vst [vmem:[#allocation2 + $0x10] sm:$0x3] 0.0
      %vm691 = vcmask 254976
      %692 = vst.msk [vmem:[#allocation2 + $0x18] sm:$0x3] %vm691, 0.0
      %v695 = vrot.slane %v686, 7
      %v696 = vrot.slane %v687, 7
      %699 = vst [vmem:[#allocation2] sm:$0xfe] %v695
      %vm700 = vcmask 261121
      %701 = vst.msk [vmem:[#allocation2 + $0x8] sm:$0xfe] %vm700, %v696
      %702 = vst [vmem:[#allocation2 + $0x10] sm:$0x1] %v695
      %vm703 = vcmask 253952
      %704 = vst.msk [vmem:[#allocation2 + $0x18] sm:$0x1] %vm703, %v696
      %v705 = vld [vmem:[#allocation2] sm:$0xff]
      %v706 = vld [vmem:[#allocation2 + $0x8] sm:$0xff]
      %v707 = vld [vmem:[%s3] sm:$0xff]
      %v708 = vld [vmem:[%s3 + $0x8] sm:$0xff]
      %v709 = vld [vmem:[%s3 + $0x10] sm:$0xff]
      %v710 = vld [vmem:[%s3 + $0x18] sm:$0xff]
      %v711 = vld [vmem:[%s3 + $0x20] sm:$0xff]
      %v712 = vld [vmem:[%s3 + $0x28] sm:$0xff]
      %v713 = vld [vmem:[%s3 + $0x30] sm:$0xff]
      %v714 = vld [vmem:[%s3 + $0x38] sm:$0xff]
      %v715 = vld [vmem:[%s3 + $0x40] sm:$0xff]
      %v716 = vld [vmem:[%s3 + $0x48] sm:$0xff]
      %v717 = vld [vmem:[%s3 + $0x50] sm:$0xff]
      %v718 = vld [vmem:[%s3 + $0x58] sm:$0xff]
      %v719 = vld [vmem:[%s3 + $0x60] sm:$0xff]
      %v720 = vld [vmem:[%s3 + $0x68] sm:$0xff]
      %v721 = vld [vmem:[%s3 + $0x70] sm:$0xff]
      %v722 = vld [vmem:[%s3 + $0x78] sm:$0xff]
      %v723 = vld [vmem:[%s3 + $0x80] sm:$0xff]
      %v724 = vld [vmem:[%s3 + $0x88] sm:$0xff]
      %v725 = vld [vmem:[%s3 + $0x90] sm:$0xff]
      %v726 = vld [vmem:[%s3 + $0x98] sm:$0xff]
      %v727 = vld [vmem:[%s3 + $0xa0] sm:$0xff]
      %v728 = vld [vmem:[%s3 + $0xa8] sm:$0xff]
      %v729 = vld [vmem:[%s3 + $0xb0] sm:$0xff]
      %v730 = vld [vmem:[%s3 + $0xb8] sm:$0xff]
      %v731 = vld [vmem:[%s3 + $0xc0] sm:$0xff]
      %v732 = vld [vmem:[%s3 + $0xc8] sm:$0xff]
      %v733 = vld [vmem:[%s3 + $0xd0] sm:$0xff]
      %v734 = vld [vmem:[%s3 + $0xd8] sm:$0xff]
      %v735 = vld [vmem:[%s3 + $0xe0] sm:$0xff]
      %v736 = vld [vmem:[%s3 + $0xe8] sm:$0xff]
      %v737 = vld [vmem:[%s3 + $0xf0] sm:$0xff]
      %v738 = vld [vmem:[%s3 + $0xf8] sm:$0xff]
      %v739 = vld [vmem:[%s3 + $0x100] sm:$0xff]
      %v740 = vld [vmem:[%s3 + $0x108] sm:$0xff]
      %v741 = vld [vmem:[%s3 + $0x110] sm:$0xff]
      %v742 = vld [vmem:[%s3 + $0x118] sm:$0xff]
      %v743 = vld [vmem:[%s3 + $0x120] sm:$0xff]
      %v744 = vld [vmem:[%s3 + $0x128] sm:$0xff]
      %v745 = vld [vmem:[%s3 + $0x130] sm:$0xff]
      %v746 = vld [vmem:[%s3 + $0x138] sm:$0xff]
      %v747 = vld [vmem:[#allocation2] sm:$0xfe]
      %v748 = vld [vmem:[#allocation2 + $0x8] sm:$0xfe]
      %v749 = vld [vmem:[#allocation2 + $0x10] sm:$0x1]
      %v750 = vld [vmem:[#allocation2 + $0x18] sm:$0x1]
      %s751 = scalar_lea.vmem %s3, 320
      %v752 = vld [vmem:[%s751] sm:$0xff]
      %v753 = vld [vmem:[%s751 + $0x8] sm:$0xff]
      %v754 = vld [vmem:[%s751 + $0x10] sm:$0xff]
      %v755 = vld [vmem:[%s751 + $0x18] sm:$0xff]
      %v756 = vld [vmem:[%s751 + $0x20] sm:$0xff]
      %v757 = vld [vmem:[%s751 + $0x28] sm:$0xff]
      %v758 = vld [vmem:[%s751 + $0x30] sm:$0xff]
      %v759 = vld [vmem:[%s751 + $0x38] sm:$0xff]
      %v760 = vld [vmem:[%s751 + $0x40] sm:$0xff]
      %v761 = vld [vmem:[%s751 + $0x48] sm:$0xff]
      %v762 = vld [vmem:[%s751 + $0x50] sm:$0xff]
      %v763 = vld [vmem:[%s751 + $0x58] sm:$0xff]
      %v764 = vld [vmem:[%s751 + $0x60] sm:$0xff]
      %v765 = vld [vmem:[%s751 + $0x68] sm:$0xff]
      %v766 = vld [vmem:[%s751 + $0x70] sm:$0xff]
      %v767 = vld [vmem:[%s751 + $0x78] sm:$0xff]
      %v768 = vld [vmem:[%s751 + $0x80] sm:$0xff]
      %v769 = vld [vmem:[%s751 + $0x88] sm:$0xff]
      %v770 = vld [vmem:[%s751 + $0x90] sm:$0xff]
      %v771 = vld [vmem:[%s751 + $0x98] sm:$0xff]
      %v772 = vld [vmem:[%s751 + $0xa0] sm:$0xff]
      %v773 = vld [vmem:[%s751 + $0xa8] sm:$0xff]
      %v774 = vld [vmem:[%s751 + $0xb0] sm:$0xff]
      %v775 = vld [vmem:[%s751 + $0xb8] sm:$0xff]
      %v776 = vld [vmem:[%s751 + $0xc0] sm:$0xff]
      %v777 = vld [vmem:[%s751 + $0xc8] sm:$0xff]
      %v778 = vld [vmem:[%s751 + $0xd0] sm:$0xff]
      %v779 = vld [vmem:[%s751 + $0xd8] sm:$0xff]
      %v780 = vld [vmem:[%s751 + $0xe0] sm:$0xff]
      %v781 = vld [vmem:[%s751 + $0xe8] sm:$0xff]
      %v782 = vld [vmem:[%s751 + $0xf0] sm:$0xff]
      %v783 = vld [vmem:[%s751 + $0xf8] sm:$0xff]
      %v784 = vld [vmem:[%s751 + $0x100] sm:$0xff]
      %v785 = vld [vmem:[%s751 + $0x108] sm:$0xff]
      %v786 = vld [vmem:[%s751 + $0x110] sm:$0xff]
      %v787 = vld [vmem:[%s751 + $0x118] sm:$0xff]
      %v788 = vld [vmem:[%s751 + $0x120] sm:$0xff]
      %v789 = vld [vmem:[%s751 + $0x128] sm:$0xff]
      %v790 = vld [vmem:[%s751 + $0x130] sm:$0xff]
      %v791 = vld [vmem:[%s751 + $0x138] sm:$0xff]
      %v796 = vrot.slane %v747, 1
      %v797 = vrot.slane %v749, 1
      %v798 = vsel %vm363, %v796, %v797
      %v799 = vrot.slane %v748, 1
      %v800 = vrot.slane %v750, 1
      %v801 = vsel %vm363, %v799, %v800
      %v803 = vsel %vm371, %v801, 0
      %805 = vmatpush.msra.mxu0 %v782
      %806 = vmatpush.msra.mxu0 %v780
      %807 = vmatpush.msra.mxu0 %v778
      %808 = vmatpush.msra.mxu0 %v776
      %809 = vmatpush.msra.mxu0 %v774
      %810 = vmatpush.msra.mxu0 %v772
      %811 = vmatpush.msra.mxu0 %v770
      %812 = vmatpush.msra.mxu0 %v768
      %813 = vmatpush.msra.mxu0 %v766
      %814 = vmatpush.msra.mxu0 %v764
      %815 = vmatpush.msra.mxu0 %v762
      %816 = vmatpush.msra.mxu0 %v760
      %817 = vmatpush.msra.mxu0 %v758
      %818 = vmatpush.msra.mxu0 %v756
      %819 = vmatpush.msra.mxu0 %v754
      %820 = vmatpush.msra.mxu0 %v752
      %821 = vmatmul.f32.gmra.mxu0 %v798
      %v822 = vpop.f32.mrf.mxu0
      %v823 = vadd.f32 0.0, %v822
      %824 = vdwg.mxu0
      %825 = vmatpush.msra.mxu0 0.0
      %826 = vmatpush.msra.mxu0 0.0
      %827 = vmatpush.msra.mxu0 0.0
      %828 = vmatpush.msra.mxu0 0.0
      %829 = vmatpush.msra.mxu0 0.0
      %830 = vmatpush.msra.mxu0 0.0
      %831 = vmatpush.msra.mxu0 0.0
      %832 = vmatpush.msra.mxu0 0.0
      %833 = vmatpush.msra.mxu0 0.0
      %834 = vmatpush.msra.mxu0 0.0
      %835 = vmatpush.msra.mxu0 0.0
      %836 = vmatpush.msra.mxu0 0.0
      %837 = vmatpush.msra.mxu0 %v790
      %838 = vmatpush.msra.mxu0 %v788
      %839 = vmatpush.msra.mxu0 %v786
      %840 = vmatpush.msra.mxu0 %v784
      %841 = vmatmul.f32.gmra.mxu0 %v803
      %v842 = vpop.f32.mrf.mxu0
      %v843 = vadd.f32 %v823, %v842
      %844 = vdwg.mxu0
      %845 = vmatpush.msra.mxu0 %v783
      %846 = vmatpush.msra.mxu0 %v781
      %847 = vmatpush.msra.mxu0 %v779
      %848 = vmatpush.msra.mxu0 %v777
      %849 = vmatpush.msra.mxu0 %v775
      %850 = vmatpush.msra.mxu0 %v773
      %851 = vmatpush.msra.mxu0 %v771
      %852 = vmatpush.msra.mxu0 %v769
      %853 = vmatpush.msra.mxu0 %v767
      %854 = vmatpush.msra.mxu0 %v765
      %855 = vmatpush.msra.mxu0 %v763
      %856 = vmatpush.msra.mxu0 %v761
      %857 = vmatpush.msra.mxu0 %v759
      %858 = vmatpush.msra.mxu0 %v757
      %859 = vmatpush.msra.mxu0 %v755
      %860 = vmatpush.msra.mxu0 %v753
      %861 = vmatmul.f32.gmra.mxu0 %v798
      %v862 = vpop.f32.mrf.mxu0
      %v863 = vadd.f32 0.0, %v862
      %864 = vdwg.mxu0
      %865 = vmatpush.msra.mxu0 0.0
      %866 = vmatpush.msra.mxu0 0.0
      %867 = vmatpush.msra.mxu0 0.0
      %868 = vmatpush.msra.mxu0 0.0
      %869 = vmatpush.msra.mxu0 0.0
      %870 = vmatpush.msra.mxu0 0.0
      %871 = vmatpush.msra.mxu0 0.0
      %872 = vmatpush.msra.mxu0 0.0
      %873 = vmatpush.msra.mxu0 0.0
      %874 = vmatpush.msra.mxu0 0.0
      %875 = vmatpush.msra.mxu0 0.0
      %876 = vmatpush.msra.mxu0 0.0
      %877 = vmatpush.msra.mxu0 %v791
      %878 = vmatpush.msra.mxu0 %v789
      %879 = vmatpush.msra.mxu0 %v787
      %880 = vmatpush.msra.mxu0 %v785
      %881 = vmatmul.f32.gmra.mxu0 %v803
      %v882 = vpop.f32.mrf.mxu0
      %v883 = vadd.f32 %v863, %v882
      %884 = vdwg.mxu0
      %v886 = vsel %vm371, %v706, 0
      %888 = vmatpush.msra.mxu0 %v737
      %889 = vmatpush.msra.mxu0 %v735
      %890 = vmatpush.msra.mxu0 %v733
      %891 = vmatpush.msra.mxu0 %v731
      %892 = vmatpush.msra.mxu0 %v729
      %893 = vmatpush.msra.mxu0 %v727
      %894 = vmatpush.msra.mxu0 %v725
      %895 = vmatpush.msra.mxu0 %v723
      %896 = vmatpush.msra.mxu0 %v721
      %897 = vmatpush.msra.mxu0 %v719
      %898 = vmatpush.msra.mxu0 %v717
      %899 = vmatpush.msra.mxu0 %v715
      %900 = vmatpush.msra.mxu0 %v713
      %901 = vmatpush.msra.mxu0 %v711
      %902 = vmatpush.msra.mxu0 %v709
      %903 = vmatpush.msra.mxu0 %v707
      %904 = vmatmul.f32.gmra.mxu0 %v705
      %v905 = vpop.f32.mrf.mxu0
      %v906 = vadd.f32 %v843, %v905
      %907 = vdwg.mxu0
      %908 = vmatpush.msra.mxu0 0.0
      %909 = vmatpush.msra.mxu0 0.0
      %910 = vmatpush.msra.mxu0 0.0
      %911 = vmatpush.msra.mxu0 0.0
      %912 = vmatpush.msra.mxu0 0.0
      %913 = vmatpush.msra.mxu0 0.0
      %914 = vmatpush.msra.mxu0 0.0
      %915 = vmatpush.msra.mxu0 0.0
      %916 = vmatpush.msra.mxu0 0.0
      %917 = vmatpush.msra.mxu0 0.0
      %918 = vmatpush.msra.mxu0 0.0
      %919 = vmatpush.msra.mxu0 0.0
      %920 = vmatpush.msra.mxu0 %v745
      %921 = vmatpush.msra.mxu0 %v743
      %922 = vmatpush.msra.mxu0 %v741
      %923 = vmatpush.msra.mxu0 %v739
      %924 = vmatmul.f32.gmra.mxu0 %v886
      %v925 = vpop.f32.mrf.mxu0
      %v926 = vadd.f32 %v906, %v925
      %927 = vdwg.mxu0
      %928 = vmatpush.msra.mxu0 %v738
      %929 = vmatpush.msra.mxu0 %v736
      %930 = vmatpush.msra.mxu0 %v734
      %931 = vmatpush.msra.mxu0 %v732
      %932 = vmatpush.msra.mxu0 %v730
      %933 = vmatpush.msra.mxu0 %v728
      %934 = vmatpush.msra.mxu0 %v726
      %935 = vmatpush.msra.mxu0 %v724
      %936 = vmatpush.msra.mxu0 %v722
      %937 = vmatpush.msra.mxu0 %v720
      %938 = vmatpush.msra.mxu0 %v718
      %939 = vmatpush.msra.mxu0 %v716
      %940 = vmatpush.msra.mxu0 %v714
      %941 = vmatpush.msra.mxu0 %v712
      %942 = vmatpush.msra.mxu0 %v710
      %943 = vmatpush.msra.mxu0 %v708
      %944 = vmatmul.f32.gmra.mxu0 %v705
      %v945 = vpop.f32.mrf.mxu0
      %v946 = vadd.f32 %v883, %v945
      %947 = vdwg.mxu0
      %948 = vmatpush.msra.mxu0 0.0
      %949 = vmatpush.msra.mxu0 0.0
      %950 = vmatpush.msra.mxu0 0.0
      %951 = vmatpush.msra.mxu0 0.0
      %952 = vmatpush.msra.mxu0 0.0
      %953 = vmatpush.msra.mxu0 0.0
      %954 = vmatpush.msra.mxu0 0.0
      %955 = vmatpush.msra.mxu0 0.0
      %956 = vmatpush.msra.mxu0 0.0
      %957 = vmatpush.msra.mxu0 0.0
      %958 = vmatpush.msra.mxu0 0.0
      %959 = vmatpush.msra.mxu0 0.0
      %960 = vmatpush.msra.mxu0 %v746
      %961 = vmatpush.msra.mxu0 %v744
      %962 = vmatpush.msra.mxu0 %v742
      %963 = vmatpush.msra.mxu0 %v740
      %964 = vmatmul.f32.gmra.mxu0 %v886
      %v965 = vpop.f32.mrf.mxu0
      %v966 = vadd.f32 %v946, %v965
      %967 = vdwg.mxu0
      %v968 = vld [vmem:[#allocation2] sm:$0xfc]
      %v969 = vld [vmem:[#allocation2 + $0x8] sm:$0xfc]
      %v970 = vld [vmem:[#allocation2 + $0x10] sm:$0x3]
      %v971 = vld [vmem:[#allocation2 + $0x18] sm:$0x3]
      %s972 = scalar_lea.vmem %s3, 640
      %v973 = vld [vmem:[%s972] sm:$0xff]
      %v974 = vld [vmem:[%s972 + $0x8] sm:$0xff]
      %v975 = vld [vmem:[%s972 + $0x10] sm:$0xff]
      %v976 = vld [vmem:[%s972 + $0x18] sm:$0xff]
      %v977 = vld [vmem:[%s972 + $0x20] sm:$0xff]
      %v978 = vld [vmem:[%s972 + $0x28] sm:$0xff]
      %v979 = vld [vmem:[%s972 + $0x30] sm:$0xff]
      %v980 = vld [vmem:[%s972 + $0x38] sm:$0xff]
      %v981 = vld [vmem:[%s972 + $0x40] sm:$0xff]
      %v982 = vld [vmem:[%s972 + $0x48] sm:$0xff]
      %v983 = vld [vmem:[%s972 + $0x50] sm:$0xff]
      %v984 = vld [vmem:[%s972 + $0x58] sm:$0xff]
      %v985 = vld [vmem:[%s972 + $0x60] sm:$0xff]
      %v986 = vld [vmem:[%s972 + $0x68] sm:$0xff]
      %v987 = vld [vmem:[%s972 + $0x70] sm:$0xff]
      %v988 = vld [vmem:[%s972 + $0x78] sm:$0xff]
      %v989 = vld [vmem:[%s972 + $0x80] sm:$0xff]
      %v990 = vld [vmem:[%s972 + $0x88] sm:$0xff]
      %v991 = vld [vmem:[%s972 + $0x90] sm:$0xff]
      %v992 = vld [vmem:[%s972 + $0x98] sm:$0xff]
      %v993 = vld [vmem:[%s972 + $0xa0] sm:$0xff]
      %v994 = vld [vmem:[%s972 + $0xa8] sm:$0xff]
      %v995 = vld [vmem:[%s972 + $0xb0] sm:$0xff]
      %v996 = vld [vmem:[%s972 + $0xb8] sm:$0xff]
      %v997 = vld [vmem:[%s972 + $0xc0] sm:$0xff]
      %v998 = vld [vmem:[%s972 + $0xc8] sm:$0xff]
      %v999 = vld [vmem:[%s972 + $0xd0] sm:$0xff]
      %v1000 = vld [vmem:[%s972 + $0xd8] sm:$0xff]
      %v1001 = vld [vmem:[%s972 + $0xe0] sm:$0xff]
      %v1002 = vld [vmem:[%s972 + $0xe8] sm:$0xff]
      %v1003 = vld [vmem:[%s972 + $0xf0] sm:$0xff]
      %v1004 = vld [vmem:[%s972 + $0xf8] sm:$0xff]
      %v1005 = vld [vmem:[%s972 + $0x100] sm:$0xff]
      %v1006 = vld [vmem:[%s972 + $0x108] sm:$0xff]
      %v1007 = vld [vmem:[%s972 + $0x110] sm:$0xff]
      %v1008 = vld [vmem:[%s972 + $0x118] sm:$0xff]
      %v1009 = vld [vmem:[%s972 + $0x120] sm:$0xff]
      %v1010 = vld [vmem:[%s972 + $0x128] sm:$0xff]
      %v1011 = vld [vmem:[%s972 + $0x130] sm:$0xff]
      %v1012 = vld [vmem:[%s972 + $0x138] sm:$0xff]
      %v1017 = vrot.slane %v968, 2
      %v1018 = vrot.slane %v970, 2
      %v1019 = vsel %vm586, %v1017, %v1018
      %v1020 = vrot.slane %v969, 2
      %v1021 = vrot.slane %v971, 2
      %v1022 = vsel %vm586, %v1020, %v1021
      %v1024 = vsel %vm371, %v1022, 0
      %1026 = vmatpush.msra.mxu0 %v1003
      %1027 = vmatpush.msra.mxu0 %v1001
      %1028 = vmatpush.msra.mxu0 %v999
      %1029 = vmatpush.msra.mxu0 %v997
      %1030 = vmatpush.msra.mxu0 %v995
      %1031 = vmatpush.msra.mxu0 %v993
      %1032 = vmatpush.msra.mxu0 %v991
      %1033 = vmatpush.msra.mxu0 %v989
      %1034 = vmatpush.msra.mxu0 %v987
      %1035 = vmatpush.msra.mxu0 %v985
      %1036 = vmatpush.msra.mxu0 %v983
      %1037 = vmatpush.msra.mxu0 %v981
      %1038 = vmatpush.msra.mxu0 %v979
      %1039 = vmatpush.msra.mxu0 %v977
      %1040 = vmatpush.msra.mxu0 %v975
      %1041 = vmatpush.msra.mxu0 %v973
      %1042 = vmatmul.f32.gmra.mxu0 %v1019
      %v1043 = vpop.f32.mrf.mxu0
      %v1044 = vadd.f32 0.0, %v1043
      %1045 = vdwg.mxu0
      %1046 = vmatpush.msra.mxu0 0.0
      %1047 = vmatpush.msra.mxu0 0.0
      %1048 = vmatpush.msra.mxu0 0.0
      %1049 = vmatpush.msra.mxu0 0.0
      %1050 = vmatpush.msra.mxu0 0.0
      %1051 = vmatpush.msra.mxu0 0.0
      %1052 = vmatpush.msra.mxu0 0.0
      %1053 = vmatpush.msra.mxu0 0.0
      %1054 = vmatpush.msra.mxu0 0.0
      %1055 = vmatpush.msra.mxu0 0.0
      %1056 = vmatpush.msra.mxu0 0.0
      %1057 = vmatpush.msra.mxu0 0.0
      %1058 = vmatpush.msra.mxu0 %v1011
      %1059 = vmatpush.msra.mxu0 %v1009
      %1060 = vmatpush.msra.mxu0 %v1007
      %1061 = vmatpush.msra.mxu0 %v1005
      %1062 = vmatmul.f32.gmra.mxu0 %v1024
      %v1063 = vpop.f32.mrf.mxu0
      %v1064 = vadd.f32 %v1044, %v1063
      %1065 = vdwg.mxu0
      %1066 = vmatpush.msra.mxu0 %v1004
      %1067 = vmatpush.msra.mxu0 %v1002
      %1068 = vmatpush.msra.mxu0 %v1000
      %1069 = vmatpush.msra.mxu0 %v998
      %1070 = vmatpush.msra.mxu0 %v996
      %1071 = vmatpush.msra.mxu0 %v994
      %1072 = vmatpush.msra.mxu0 %v992
      %1073 = vmatpush.msra.mxu0 %v990
      %1074 = vmatpush.msra.mxu0 %v988
      %1075 = vmatpush.msra.mxu0 %v986
      %1076 = vmatpush.msra.mxu0 %v984
      %1077 = vmatpush.msra.mxu0 %v982
      %1078 = vmatpush.msra.mxu0 %v980
      %1079 = vmatpush.msra.mxu0 %v978
      %1080 = vmatpush.msra.mxu0 %v976
      %1081 = vmatpush.msra.mxu0 %v974
      %1082 = vmatmul.f32.gmra.mxu0 %v1019
      %v1083 = vpop.f32.mrf.mxu0
      %v1084 = vadd.f32 0.0, %v1083
      %1085 = vdwg.mxu0
      %1086 = vmatpush.msra.mxu0 0.0
      %1087 = vmatpush.msra.mxu0 0.0
      %1088 = vmatpush.msra.mxu0 0.0
      %1089 = vmatpush.msra.mxu0 0.0
      %1090 = vmatpush.msra.mxu0 0.0
      %1091 = vmatpush.msra.mxu0 0.0
      %1092 = vmatpush.msra.mxu0 0.0
      %1093 = vmatpush.msra.mxu0 0.0
      %1094 = vmatpush.msra.mxu0 0.0
      %1095 = vmatpush.msra.mxu0 0.0
      %1096 = vmatpush.msra.mxu0 0.0
      %1097 = vmatpush.msra.mxu0 0.0
      %1098 = vmatpush.msra.mxu0 %v1012
      %1099 = vmatpush.msra.mxu0 %v1010
      %1100 = vmatpush.msra.mxu0 %v1008
      %1101 = vmatpush.msra.mxu0 %v1006
      %1102 = vmatmul.f32.gmra.mxu0 %v1024
      %v1103 = vpop.f32.mrf.mxu0
      %v1104 = vadd.f32 %v1084, %v1103
      %1105 = vdwg.mxu0
      %v1106 = vadd.f32 %v926, %v1064
      %v1107 = vadd.f32 %v966, %v1104
      %v1108 = vld [vmem:[%s4] sm:$0x3]
      %v1110 = vperm.slane %v1108, 0
      %v1111 = vperm.slane %v1108, 1
      %v1114 = vadd.f32 %v1106, %v1110
      %v1115 = vadd.f32 %v1107, %v1111
      %v1116 = vld [vmem:[%s261] sm:$0xfe]
      %v1117 = vld [vmem:[%s261 + $0x8] sm:$0xfe]
      %v1118 = vld [vmem:[%s261 + $0x10] sm:$0x1]
      %v1119 = vld [vmem:[%s261 + $0x18] sm:$0x1]
      %v1124 = vrot.slane %v1116, 1
      %v1125 = vrot.slane %v1118, 1
      %v1126 = vsel %vm363, %v1124, %v1125
      %v1127 = vrot.slane %v1117, 1
      %v1128 = vrot.slane %v1119, 1
      %v1129 = vsel %vm363, %v1127, %v1128
      %v1132 = vadd.f32 %v1114, %v1126
      %v1133 = vadd.f32 %v1115, %v1129
      %v1134 = vld [vmem:[%s266] sm:$0xfe]
      %v1135 = vld [vmem:[%s266 + $0x8] sm:$0xfe]
      %v1136 = vld [vmem:[%s266 + $0x10] sm:$0x1]
      %v1137 = vld [vmem:[%s266 + $0x18] sm:$0x1]
      %v1142 = vrot.slane %v1134, 1
      %v1143 = vrot.slane %v1136, 1
      %v1144 = vsel %vm363, %v1142, %v1143
      %v1145 = vrot.slane %v1135, 1
      %v1146 = vrot.slane %v1137, 1
      %v1147 = vsel %vm363, %v1145, %v1146
      %v1150 = vadd.f32 %v1132, %v1144
      %v1151 = vadd.f32 %v1133, %v1147
      %1152 = vst [vmem:[%s271] sm:$0xff] 0.0
      %1153 = vst.msk [vmem:[%s271 + $0x8] sm:$0xff] %vm371, 0.0
      %1154 = vst [vmem:[%s271 + $0x10] sm:$0x3] 0.0
      %1155 = vst.msk [vmem:[%s271 + $0x18] sm:$0x3] %vm691, 0.0
      %v1158 = vrot.slane %v1150, 7
      %v1159 = vrot.slane %v1151, 7
      %1162 = vst [vmem:[%s271] sm:$0xfe] %v1158
      %1163 = vst.msk [vmem:[%s271 + $0x8] sm:$0xfe] %vm700, %v1159
      %1164 = vst [vmem:[%s271 + $0x10] sm:$0x1] %v1158
      %1165 = vst.msk [vmem:[%s271 + $0x18] sm:$0x1] %vm703, %v1159
      %p1166 = scmp.lt.s32.totalorder %s17, 1
      %s1167 = scalar_select %p1166, %s17, 1
      %s1168 = smul.addr %s1167, 4
      %s1169 = smul.addr %s1168, 8
      %s1170 = scalar_lea.vmem %s6, %s1169
      // Predicated region
      $region45: #{usr_forward.13} parent=43 // pred_check
        %p1171 = pneg %p171
      $region46: #{usr_forward.13} parent=43 // pred_check_branch
        %1173 = sbr.rel (%p1171) target = $region48
      $region47: #{usr_forward.13} parent=43 // pred_region
        _
      $region48: #{usr_forward.13} parent=43 // pred_fallthru
        _
    $region44: #{usr_forward.13} parent=5 // pred_fallthru
      _
    %p1174 = scmp.le.s32.totalorder 2, %s12
    // Predicated region
    $region49: #{usr_forward.13} parent=5 // pred_check
      %p1175 = pneg %p1174
    $region50: #{usr_forward.13} parent=5 // pred_check_branch
      %1177 = sbr.rel (%p1175) target = $region52
    $region51: #{usr_forward.13} parent=5 // pred_region
      %s1178 = ssub.s32 %s12, 2
      // Predicated region
      $region53: #{usr_forward.13} parent=51 // pred_check
        %p1179 = pneg %p177
      $region54: #{usr_forward.13} parent=51 // pred_check_branch
        %1181 = sbr.rel (%p1179) target = $region56
      $region55: #{usr_forward.13} parent=51 // pred_region
        %p1182 = scmp.lt.s32.totalorder %s18, 1
        %s1183 = scalar_select %p1182, %s18, 1
        %s1184 = smul.addr %s1183, 4
        %s1185 = smul.addr %s1184, 8
        %s1186 = scalar_lea.vmem %s6, %s1185
      $region56: #{usr_forward.13} parent=51 // pred_fallthru
        _
    $region52: #{usr_forward.13} parent=5 // pred_fallthru
      _
  $region6: #{usr_forward.13} parent=0 // loop_footer
    %s16 = sadd.s32 1, %s12
  $region7: #{usr_forward.13} parent=0 // loop_footer_branch
    %11 = sbr.rel target = $region3
  $region8: #{usr_forward.13} parent=0 // loop_exit
    _

// kernel: tile.113
$region0: #{tile.113}
  #allocation0 [shape = 's32[1]{0}', space=sflag, size = 0x4, scoped, tag = 'scoped memory for tile.113']
  %s0 = inlined_call_operand.vmem [shape: f32[64], index: 0, kind: input, shape index: {}]
  %s1 = inlined_call_operand.vmem [shape: f32[8,64], index: 1, kind: output, shape index: {}]
  // Predicated region
  $region2: #{tile.113} parent=0 // pred_check
    _
  $region3: #{tile.113} parent=0 // pred_check_branch
    %3 = sbr.rel (0) target = $region5
  $region4: #{tile.113} parent=0 // pred_region
    _
  $region5: #{tile.113} parent=0 // pred_fallthru
    _
  %v4 = vld [vmem:[%s0] ss:$0 sm:$0xff]
  %5 = vst [vmem:[%s1] sm:$0xff] %v4

// kernel: tile.114
$region0: #{tile.114}
  %s0 = inlined_call_operand.vmem [shape: f32[8,64], index: 0, kind: input, shape index: {}]
  %s1 = inlined_call_operand.vmem [shape: f32[1,512], index: 1, kind: output, shape index: {}]
  $region1: #{tile.114} parent=0
    #allocation0 [shape = 'u8[16384]{0}', space=vmem, size = 0x4000, scoped, tag = 'scoped mem for output reshape']
    %v2 = vld [vmem:[%s0] ss:$2 sm:$0xf]
    %vm3 = vcmask 523264
    %4 = vst.msk [vmem:[#allocation0] ss:$8 sm:$0xf] %vm3, %v2
    %s5 = scalar_lea.vmem %s0, 1
    %v6 = vld [vmem:[%s5] ss:$2 sm:$0xf]
    %7 = vrot.lane.b32.xlu0 %v6, 64
    %v8 = vpop.permute.xlu0 %7
    %vm9 = vcmask 1048064
    %10 = vst.msk [vmem:[#allocation0] ss:$8 sm:$0xf] %vm9, %v8
    %s12 = ssub.s32 2, 1
    %v13 = vld [vmem:[#allocation0] sm:%s12]
    %s15 = ssub.s32 2, 1
    %16 = vst [vmem:[%s1] sm:%s15] %v13
    %s17 = scalar_lea.vmem [#allocation0], 8
    %v18 = vld [vmem:[%s17] sm:%s12]
    %s20 = ssub.s32 2, 1
    %s21 = scalar_lea.vmem %s1, 1
    %22 = vst [vmem:[%s21] sm:%s20] %v18
    %s23 = scalar_lea.vmem [#allocation0], 16
    %v24 = vld [vmem:[%s23] sm:%s12]
    %s26 = ssub.s32 2, 1
    %s27 = scalar_lea.vmem %s1, 2
    %28 = vst [vmem:[%s27] sm:%s26] %v24
    %s29 = scalar_lea.vmem [#allocation0], 24
    %v30 = vld [vmem:[%s29] sm:%s12]
    %s32 = ssub.s32 2, 1
    %s33 = scalar_lea.vmem %s1, 3
    %34 = vst [vmem:[%s33] sm:%s32] %v30

// kernel: usr_forward.14
$region0: #{usr_forward.14}
  #allocation0 [shape = 'u32[]', space=smem, size = 0x4, offset = 0x4, fixed_abs, tag = 'smem constant byte address 0x4 - core index']
  #allocation1 [shape = 'u32[72,128]{1,0:T(1,128)}', space=vmem, size = 0x9000, scoped, tag = 'internal scratch']
  %s0 = inlined_call_operand.vmem [shape: f32[2,10,160], index: 0, kind: input, shape index: {}]
  %s1 = inlined_call_operand.vmem [shape: f32[3,160,512], index: 1, kind: input, shape index: {}]
  %s2 = inlined_call_operand.vmem [shape: f32[1,512], index: 2, kind: input, shape index: {}]
  %s3 = inlined_call_operand.vmem [shape: f32[2,8,512], index: 3, kind: output, shape index: {}]
  %s4 = sld [smem:[#allocation0]]
  $region45: #{usr_forward.14} parent=0
    _
  %s6 = ssub.s32 1, %s4
  %s7 = scalar_select 0, %s6, %s4
  loop: start=0, step=1, limit=4
  $region2: #{usr_forward.14} parent=0 // loop_pre_header
    _
  $region3: #{usr_forward.14} parent=0 // loop_header
    %s9 = sphi 0, %s13
    %p10 = scmp.ge.s32.totalorder %s9, 4
    %s19 = sphi 0, %s21
    %s22 = sphi 0, %s19
    %s23 = sphi 0, %s22
    %s39 = sphi 0, %s23
    %s43 = sphi 0, %s43
    %s45 = sphi 0, %s43
    %s46 = sphi 0, %s45
    %s60 = sphi 0, %s46
    %s64 = sphi 0, %s64
    %s66 = sphi 0, %s64
    %s67 = sphi 0, %s66
    %s81 = sphi 0, %s67
    %s87 = sphi 0, %s89
    %s90 = sphi 0, %s87
    %s91 = sphi 0, %s90
    %s107 = sphi 0, %s91
  $region4: #{usr_forward.14} parent=0 // loop_header_branch
    %12 = sbr.rel (%p10) target = $region8
  $region5: #{usr_forward.14} parent=0 // loop_body
    %s14 = ssub.s32 %s9, 1
    %s15 = ssub.s32 %s9, 2
    %s16 = sadd.s32 %s9, 1
    %s17 = ssub.s32 %s9, %s16
    %p18 = scmp.eq.s32.totalorder %s17, 0
    %s20 = sadd.s32 %s19, 1
    %s21 = scalar_select %p18, %s19, %s20
    %p24 = pneg %p18
    %p25 = scmp.eq.s32.totalorder %s9, 1
    %p26 = por %p24, %p25
    %p27 = scmp.ne.s32.totalorder %s19, %s22
    %p28 = scmp.eq.s32.totalorder %s9, 0
    %p29 = por %p27, %p28
    %p30 = scmp.ne.s32.totalorder %s19, %s22
    %p31 = scmp.eq.s32.totalorder %s14, 1
    %p32 = por %p30, %p31
    %p33 = scmp.ne.s32.totalorder %s22, %s23
    %p34 = scmp.eq.s32.totalorder %s14, 0
    %p35 = por %p33, %p34
    %p36 = scmp.ne.s32.totalorder %s22, %s23
    %p37 = scmp.eq.s32.totalorder %s15, 1
    %p38 = por %p36, %p37
    %p40 = scmp.ne.s32.totalorder %s23, %s39
    %p41 = scmp.eq.s32.totalorder %s15, 0
    %p42 = por %p40, %p41
    %s44 = sadd.s32 %s43, 1
    %p47 = scmp.eq.s32.totalorder %s9, 1
    %p48 = scmp.ne.s32.totalorder %s43, %s45
    %p49 = scmp.eq.s32.totalorder %s9, 0
    %p50 = por %p48, %p49
    %p51 = scmp.ne.s32.totalorder %s43, %s45
    %p52 = scmp.eq.s32.totalorder %s14, 1
    %p53 = por %p51, %p52
    %p54 = scmp.ne.s32.totalorder %s45, %s46
    %p55 = scmp.eq.s32.totalorder %s14, 0
    %p56 = por %p54, %p55
    %p57 = scmp.ne.s32.totalorder %s45, %s46
    %p58 = scmp.eq.s32.totalorder %s15, 1
    %p59 = por %p57, %p58
    %p61 = scmp.ne.s32.totalorder %s46, %s60
    %p62 = scmp.eq.s32.totalorder %s15, 0
    %p63 = por %p61, %p62
    %s65 = sadd.s32 %s64, 1
    %p68 = scmp.eq.s32.totalorder %s9, 1
    %p69 = scmp.ne.s32.totalorder %s64, %s66
    %p70 = scmp.eq.s32.totalorder %s9, 0
    %p71 = por %p69, %p70
    %p72 = scmp.ne.s32.totalorder %s64, %s66
    %p73 = scmp.eq.s32.totalorder %s14, 1
    %p74 = por %p72, %p73
    %p75 = scmp.ne.s32.totalorder %s66, %s67
    %p76 = scmp.eq.s32.totalorder %s14, 0
    %p77 = por %p75, %p76
    %p78 = scmp.ne.s32.totalorder %s66, %s67
    %p79 = scmp.eq.s32.totalorder %s15, 1
    %p80 = por %p78, %p79
    %p82 = scmp.ne.s32.totalorder %s67, %s81
    %p83 = scmp.eq.s32.totalorder %s15, 0
    %p84 = por %p82, %p83
    %s85 = ssub.s32 %s9, %s16
    %p86 = scmp.eq.s32.totalorder %s85, 0
    %s88 = sadd.s32 %s87, 1
    %s89 = scalar_select %p86, %s87, %s88
    %p92 = pneg %p86
    %p93 = scmp.eq.s32.totalorder %s9, 1
    %p94 = por %p92, %p93
    %p95 = scmp.ne.s32.totalorder %s87, %s90
    %p96 = scmp.eq.s32.totalorder %s9, 0
    %p97 = por %p95, %p96
    %p98 = scmp.ne.s32.totalorder %s87, %s90
    %p99 = scmp.eq.s32.totalorder %s14, 1
    %p100 = por %p98, %p99
    %p101 = scmp.ne.s32.totalorder %s90, %s91
    %p102 = scmp.eq.s32.totalorder %s14, 0
    %p103 = por %p101, %p102
    %p104 = scmp.ne.s32.totalorder %s90, %s91
    %p105 = scmp.eq.s32.totalorder %s15, 1
    %p106 = por %p104, %p105
    %p108 = scmp.ne.s32.totalorder %s91, %s107
    %p109 = scmp.eq.s32.totalorder %s15, 0
    %p110 = por %p108, %p109
    %p111 = scmp.le.s32.totalorder 1, %s9
    %p112 = scmp.lt.s32.totalorder %s9, 3
    %p113 = pnand %p111, %p112
    %p114 = pneg %p113
    // Predicated region
    $region9: #{usr_forward.14} parent=5 // pred_check
      _
    $region10: #{usr_forward.14} parent=5 // pred_check_branch
      %116 = sbr.rel (%p113) target = $region12
    $region11: #{usr_forward.14} parent=5 // pred_region
      %s117 = ssub.s32 %s9, 1
      // Predicated region
      $region13: #{usr_forward.14} parent=11 // pred_check
        %p118 = pneg %p56
      $region14: #{usr_forward.14} parent=11 // pred_check_branch
        %120 = sbr.rel (%p118) target = $region16
      $region15: #{usr_forward.14} parent=11 // pred_region
        _
      $region16: #{usr_forward.14} parent=11 // pred_fallthru
        _
      // Predicated region
      $region17: #{usr_forward.14} parent=11 // pred_check
        %p121 = pneg %p77
      $region18: #{usr_forward.14} parent=11 // pred_check_branch
        %123 = sbr.rel (%p121) target = $region20
      $region19: #{usr_forward.14} parent=11 // pred_region
        _
      $region20: #{usr_forward.14} parent=11 // pred_fallthru
        _
    $region12: #{usr_forward.14} parent=5 // pred_fallthru
      _
    %p124 = scmp.lt.s32.totalorder %s9, 2
    // Predicated region
    $region21: #{usr_forward.14} parent=5 // pred_check
      %p125 = pneg %p124
    $region22: #{usr_forward.14} parent=5 // pred_check_branch
      %127 = sbr.rel (%p125) target = $region24
    $region23: #{usr_forward.14} parent=5 // pred_region
      // Predicated region
      $region25: #{usr_forward.14} parent=23 // pred_check
        %p128 = pneg %p29
      $region26: #{usr_forward.14} parent=23 // pred_check_branch
        %130 = sbr.rel (%p128) target = $region28
      $region27: #{usr_forward.14} parent=23 // pred_region
        %p131 = scmp.lt.s32.totalorder %s9, 1
        %s132 = scalar_select %p131, %s9, 1
        %s133 = smul.addr %s132, 4
        %s134 = smul.addr %s133, 8
        %s135 = scalar_lea.vmem %s0, %s134
      $region28: #{usr_forward.14} parent=23 // pred_fallthru
        _
    $region24: #{usr_forward.14} parent=5 // pred_fallthru
      _
    %p136 = scmp.le.s32.totalorder 1, %s9
    %p137 = scmp.lt.s32.totalorder %s9, 3
    %p138 = pnand %p136, %p137
    %p139 = pneg %p138
    // Predicated region
    $region29: #{usr_forward.14} parent=5 // pred_check
      _
    $region30: #{usr_forward.14} parent=5 // pred_check_branch
      %141 = sbr.rel (%p138) target = $region32
    $region31: #{usr_forward.14} parent=5 // pred_region
      %s142 = ssub.s32 %s9, 1
      %p143 = scmp.lt.s32.totalorder %s14, 1
      %s144 = scalar_select %p143, %s14, 1
      %s145 = smul.addr %s144, 4
      %s146 = smul.addr %s145, 8
      %s147 = scalar_lea.vmem %s0, %s146
      %p148 = pneg %p35
      %p149 = pneg %p32
      %p150 = pneg %p56
      %p151 = pneg %p53
      %p152 = pneg %p77
      %p153 = pneg %p74
      %p154 = pneg %p103
      %p155 = pneg %p100
      %p156 = scmp.lt.s32.totalorder %s14, 1
      %s157 = scalar_select %p156, %s14, 1
      %s158 = smul.addr %s157, 4
      %s159 = smul.addr %s158, 8
      %s160 = scalar_lea.vmem %s3, %s159
      %p161 = scmp.lt.s32.totalorder %s14, 1
      %s162 = scalar_select %p161, %s14, 1
      %s163 = smul.addr %s162, 4
      %s164 = smul.addr %s163, 8
      %s165 = scalar_lea.vmem %s0, %s164
      %p166 = scmp.lt.s32.totalorder %s14, 1
      %s167 = scalar_select %p166, %s14, 1
      %s168 = smul.addr %s167, 4
      %s169 = smul.addr %s168, 8
      %s170 = scalar_lea.vmem %s3, %s169
      %v171 = vld [vmem:[%s165] sm:$0xff]
      %v172 = vld [vmem:[%s165 + $0x8] sm:$0xff]
      %v173 = vld [vmem:[%s1] sm:$0xff]
      %v174 = vld [vmem:[%s1 + $0x8] sm:$0xff]
      %v175 = vld [vmem:[%s1 + $0x10] sm:$0xff]
      %v176 = vld [vmem:[%s1 + $0x18] sm:$0xff]
      %v177 = vld [vmem:[%s1 + $0x20] sm:$0xff]
      %v178 = vld [vmem:[%s1 + $0x28] sm:$0xff]
      %v179 = vld [vmem:[%s1 + $0x30] sm:$0xff]
      %v180 = vld [vmem:[%s1 + $0x38] sm:$0xff]
      %v181 = vld [vmem:[%s1 + $0x40] sm:$0xff]
      %v182 = vld [vmem:[%s1 + $0x48] sm:$0xff]
      %v183 = vld [vmem:[%s1 + $0x50] sm:$0xff]
      %v184 = vld [vmem:[%s1 + $0x58] sm:$0xff]
      %v185 = vld [vmem:[%s1 + $0x60] sm:$0xff]
      %v186 = vld [vmem:[%s1 + $0x68] sm:$0xff]
      %v187 = vld [vmem:[%s1 + $0x70] sm:$0xff]
      %v188 = vld [vmem:[%s1 + $0x78] sm:$0xff]
      %v189 = vld [vmem:[%s1 + $0x80] sm:$0xff]
      %v190 = vld [vmem:[%s1 + $0x88] sm:$0xff]
      %v191 = vld [vmem:[%s1 + $0x90] sm:$0xff]
      %v192 = vld [vmem:[%s1 + $0x98] sm:$0xff]
      %v193 = vld [vmem:[%s1 + $0xa0] sm:$0xff]
      %v194 = vld [vmem:[%s1 + $0xa8] sm:$0xff]
      %v195 = vld [vmem:[%s1 + $0xb0] sm:$0xff]
      %v196 = vld [vmem:[%s1 + $0xb8] sm:$0xff]
      %v197 = vld [vmem:[%s1 + $0xc0] sm:$0xff]
      %v198 = vld [vmem:[%s1 + $0xc8] sm:$0xff]
      %v199 = vld [vmem:[%s1 + $0xd0] sm:$0xff]
      %v200 = vld [vmem:[%s1 + $0xd8] sm:$0xff]
      %v201 = vld [vmem:[%s1 + $0xe0] sm:$0xff]
      %v202 = vld [vmem:[%s1 + $0xe8] sm:$0xff]
      %v203 = vld [vmem:[%s1 + $0xf0] sm:$0xff]
      %v204 = vld [vmem:[%s1 + $0xf8] sm:$0xff]
      %v205 = vld [vmem:[%s1 + $0x100] sm:$0xff]
      %v206 = vld [vmem:[%s1 + $0x108] sm:$0xff]
      %v207 = vld [vmem:[%s1 + $0x110] sm:$0xff]
      %v208 = vld [vmem:[%s1 + $0x118] sm:$0xff]
      %v209 = vld [vmem:[%s1 + $0x120] sm:$0xff]
      %v210 = vld [vmem:[%s1 + $0x128] sm:$0xff]
      %v211 = vld [vmem:[%s1 + $0x130] sm:$0xff]
      %v212 = vld [vmem:[%s1 + $0x138] sm:$0xff]
      %v213 = vld [vmem:[%s1 + $0x140] sm:$0xff]
      %v214 = vld [vmem:[%s1 + $0x148] sm:$0xff]
      %v215 = vld [vmem:[%s1 + $0x150] sm:$0xff]
      %v216 = vld [vmem:[%s1 + $0x158] sm:$0xff]
      %v217 = vld [vmem:[%s1 + $0x160] sm:$0xff]
      %v218 = vld [vmem:[%s1 + $0x168] sm:$0xff]
      %v219 = vld [vmem:[%s1 + $0x170] sm:$0xff]
      %v220 = vld [vmem:[%s1 + $0x178] sm:$0xff]
      %v221 = vld [vmem:[%s1 + $0x180] sm:$0xff]
      %v222 = vld [vmem:[%s1 + $0x188] sm:$0xff]
      %v223 = vld [vmem:[%s1 + $0x190] sm:$0xff]
      %v224 = vld [vmem:[%s1 + $0x198] sm:$0xff]
      %v225 = vld [vmem:[%s1 + $0x1a0] sm:$0xff]
      %v226 = vld [vmem:[%s1 + $0x1a8] sm:$0xff]
      %v227 = vld [vmem:[%s1 + $0x1b0] sm:$0xff]
      %v228 = vld [vmem:[%s1 + $0x1b8] sm:$0xff]
      %v229 = vld [vmem:[%s1 + $0x1c0] sm:$0xff]
      %v230 = vld [vmem:[%s1 + $0x1c8] sm:$0xff]
      %v231 = vld [vmem:[%s1 + $0x1d0] sm:$0xff]
      %v232 = vld [vmem:[%s1 + $0x1d8] sm:$0xff]
      %v233 = vld [vmem:[%s1 + $0x1e0] sm:$0xff]
      %v234 = vld [vmem:[%s1 + $0x1e8] sm:$0xff]
      %v235 = vld [vmem:[%s1 + $0x1f0] sm:$0xff]
      %v236 = vld [vmem:[%s1 + $0x1f8] sm:$0xff]
      %v237 = vld [vmem:[%s1 + $0x200] sm:$0xff]
      %v238 = vld [vmem:[%s1 + $0x208] sm:$0xff]
      %v239 = vld [vmem:[%s1 + $0x210] sm:$0xff]
      %v240 = vld [vmem:[%s1 + $0x218] sm:$0xff]
      %v241 = vld [vmem:[%s1 + $0x220] sm:$0xff]
      %v242 = vld [vmem:[%s1 + $0x228] sm:$0xff]
      %v243 = vld [vmem:[%s1 + $0x230] sm:$0xff]
      %v244 = vld [vmem:[%s1 + $0x238] sm:$0xff]
      %v245 = vld [vmem:[%s1 + $0x240] sm:$0xff]
      %v246 = vld [vmem:[%s1 + $0x248] sm:$0xff]
      %v247 = vld [vmem:[%s1 + $0x250] sm:$0xff]
      %v248 = vld [vmem:[%s1 + $0x258] sm:$0xff]
      %v249 = vld [vmem:[%s1 + $0x260] sm:$0xff]
      %v250 = vld [vmem:[%s1 + $0x268] sm:$0xff]
      %v251 = vld [vmem:[%s1 + $0x270] sm:$0xff]
      %v252 = vld [vmem:[%s1 + $0x278] sm:$0xff]
      %v253 = vld [vmem:[%s165] sm:$0xfe]
      %v254 = vld [vmem:[%s165 + $0x8] sm:$0xfe]
      %v255 = vld [vmem:[%s165 + $0x10] sm:$0x1]
      %v256 = vld [vmem:[%s165 + $0x18] sm:$0x1]
      %s257 = scalar_lea.vmem %s1, 640
      %v258 = vld [vmem:[%s257] sm:$0xff]
      %v259 = vld [vmem:[%s257 + $0x8] sm:$0xff]
      %v260 = vld [vmem:[%s257 + $0x10] sm:$0xff]
      %v261 = vld [vmem:[%s257 + $0x18] sm:$0xff]
      %v262 = vld [vmem:[%s257 + $0x20] sm:$0xff]
      %v263 = vld [vmem:[%s257 + $0x28] sm:$0xff]
      %v264 = vld [vmem:[%s257 + $0x30] sm:$0xff]
      %v265 = vld [vmem:[%s257 + $0x38] sm:$0xff]
      %v266 = vld [vmem:[%s257 + $0x40] sm:$0xff]
      %v267 = vld [vmem:[%s257 + $0x48] sm:$0xff]
      %v268 = vld [vmem:[%s257 + $0x50] sm:$0xff]
      %v269 = vld [vmem:[%s257 + $0x58] sm:$0xff]
      %v270 = vld [vmem:[%s257 + $0x60] sm:$0xff]
      %v271 = vld [vmem:[%s257 + $0x68] sm:$0xff]
      %v272 = vld [vmem:[%s257 + $0x70] sm:$0xff]
      %v273 = vld [vmem:[%s257 + $0x78] sm:$0xff]
      %v274 = vld [vmem:[%s257 + $0x80] sm:$0xff]
      %v275 = vld [vmem:[%s257 + $0x88] sm:$0xff]
      %v276 = vld [vmem:[%s257 + $0x90] sm:$0xff]
      %v277 = vld [vmem:[%s257 + $0x98] sm:$0xff]
      %v278 = vld [vmem:[%s257 + $0xa0] sm:$0xff]
      %v279 = vld [vmem:[%s257 + $0xa8] sm:$0xff]
      %v280 = vld [vmem:[%s257 + $0xb0] sm:$0xff]
      %v281 = vld [vmem:[%s257 + $0xb8] sm:$0xff]
      %v282 = vld [vmem:[%s257 + $0xc0] sm:$0xff]
      %v283 = vld [vmem:[%s257 + $0xc8] sm:$0xff]
      %v284 = vld [vmem:[%s257 + $0xd0] sm:$0xff]
      %v285 = vld [vmem:[%s257 + $0xd8] sm:$0xff]
      %v286 = vld [vmem:[%s257 + $0xe0] sm:$0xff]
      %v287 = vld [vmem:[%s257 + $0xe8] sm:$0xff]
      %v288 = vld [vmem:[%s257 + $0xf0] sm:$0xff]
      %v289 = vld [vmem:[%s257 + $0xf8] sm:$0xff]
      %v290 = vld [vmem:[%s257 + $0x100] sm:$0xff]
      %v291 = vld [vmem:[%s257 + $0x108] sm:$0xff]
      %v292 = vld [vmem:[%s257 + $0x110] sm:$0xff]
      %v293 = vld [vmem:[%s257 + $0x118] sm:$0xff]
      %v294 = vld [vmem:[%s257 + $0x120] sm:$0xff]
      %v295 = vld [vmem:[%s257 + $0x128] sm:$0xff]
      %v296 = vld [vmem:[%s257 + $0x130] sm:$0xff]
      %v297 = vld [vmem:[%s257 + $0x138] sm:$0xff]
      %v298 = vld [vmem:[%s257 + $0x140] sm:$0xff]
      %v299 = vld [vmem:[%s257 + $0x148] sm:$0xff]
      %v300 = vld [vmem:[%s257 + $0x150] sm:$0xff]
      %v301 = vld [vmem:[%s257 + $0x158] sm:$0xff]
      %v302 = vld [vmem:[%s257 + $0x160] sm:$0xff]
      %v303 = vld [vmem:[%s257 + $0x168] sm:$0xff]
      %v304 = vld [vmem:[%s257 + $0x170] sm:$0xff]
      %v305 = vld [vmem:[%s257 + $0x178] sm:$0xff]
      %v306 = vld [vmem:[%s257 + $0x180] sm:$0xff]
      %v307 = vld [vmem:[%s257 + $0x188] sm:$0xff]
      %v308 = vld [vmem:[%s257 + $0x190] sm:$0xff]
      %v309 = vld [vmem:[%s257 + $0x198] sm:$0xff]
      %v310 = vld [vmem:[%s257 + $0x1a0] sm:$0xff]
      %v311 = vld [vmem:[%s257 + $0x1a8] sm:$0xff]
      %v312 = vld [vmem:[%s257 + $0x1b0] sm:$0xff]
      %v313 = vld [vmem:[%s257 + $0x1b8] sm:$0xff]
      %v314 = vld [vmem:[%s257 + $0x1c0] sm:$0xff]
      %v315 = vld [vmem:[%s257 + $0x1c8] sm:$0xff]
      %v316 = vld [vmem:[%s257 + $0x1d0] sm:$0xff]
      %v317 = vld [vmem:[%s257 + $0x1d8] sm:$0xff]
      %v318 = vld [vmem:[%s257 + $0x1e0] sm:$0xff]
      %v319 = vld [vmem:[%s257 + $0x1e8] sm:$0xff]
      %v320 = vld [vmem:[%s257 + $0x1f0] sm:$0xff]
      %v321 = vld [vmem:[%s257 + $0x1f8] sm:$0xff]
      %v322 = vld [vmem:[%s257 + $0x200] sm:$0xff]
      %v323 = vld [vmem:[%s257 + $0x208] sm:$0xff]
      %v324 = vld [vmem:[%s257 + $0x210] sm:$0xff]
      %v325 = vld [vmem:[%s257 + $0x218] sm:$0xff]
      %v326 = vld [vmem:[%s257 + $0x220] sm:$0xff]
      %v327 = vld [vmem:[%s257 + $0x228] sm:$0xff]
      %v328 = vld [vmem:[%s257 + $0x230] sm:$0xff]
      %v329 = vld [vmem:[%s257 + $0x238] sm:$0xff]
      %v330 = vld [vmem:[%s257 + $0x240] sm:$0xff]
      %v331 = vld [vmem:[%s257 + $0x248] sm:$0xff]
      %v332 = vld [vmem:[%s257 + $0x250] sm:$0xff]
      %v333 = vld [vmem:[%s257 + $0x258] sm:$0xff]
      %v334 = vld [vmem:[%s257 + $0x260] sm:$0xff]
      %v335 = vld [vmem:[%s257 + $0x268] sm:$0xff]
      %v336 = vld [vmem:[%s257 + $0x270] sm:$0xff]
      %v337 = vld [vmem:[%s257 + $0x278] sm:$0xff]
      %vm342 = vcmask 1046528
      %v343 = vrot.slane %v253, 1
      %v344 = vrot.slane %v255, 1
      %v345 = vsel %vm342, %v343, %v344
      %v346 = vrot.slane %v254, 1
      %v347 = vrot.slane %v256, 1
      %v348 = vsel %vm342, %v346, %v347
      %vm350 = vcmask 261120
      %v351 = vsel %vm350, %v348, 0
      %353 = vmatpush.msra.mxu0 %v318
      %354 = vmatpush.msra.mxu0 %v314
      %355 = vmatpush.msra.mxu0 %v310
      %356 = vmatpush.msra.mxu0 %v306
      %357 = vmatpush.msra.mxu0 %v302
      %358 = vmatpush.msra.mxu0 %v298
      %359 = vmatpush.msra.mxu0 %v294
      %360 = vmatpush.msra.mxu0 %v290
      %361 = vmatpush.msra.mxu0 %v286
      %362 = vmatpush.msra.mxu0 %v282
      %363 = vmatpush.msra.mxu0 %v278
      %364 = vmatpush.msra.mxu0 %v274
      %365 = vmatpush.msra.mxu0 %v270
      %366 = vmatpush.msra.mxu0 %v266
      %367 = vmatpush.msra.mxu0 %v262
      %368 = vmatpush.msra.mxu0 %v258
      %369 = vmatmul.f32.gmra.mxu0 %v345
      %v370 = vpop.f32.mrf.mxu0
      %v371 = vadd.f32 0.0, %v370
      %372 = vdwg.mxu0
      %373 = vmatpush.msra.mxu0 0.0
      %374 = vmatpush.msra.mxu0 0.0
      %375 = vmatpush.msra.mxu0 0.0
      %376 = vmatpush.msra.mxu0 0.0
      %377 = vmatpush.msra.mxu0 0.0
      %378 = vmatpush.msra.mxu0 0.0
      %379 = vmatpush.msra.mxu0 0.0
      %380 = vmatpush.msra.mxu0 0.0
      %381 = vmatpush.msra.mxu0 0.0
      %382 = vmatpush.msra.mxu0 0.0
      %383 = vmatpush.msra.mxu0 0.0
      %384 = vmatpush.msra.mxu0 0.0
      %385 = vmatpush.msra.mxu0 %v334
      %386 = vmatpush.msra.mxu0 %v330
      %387 = vmatpush.msra.mxu0 %v326
      %388 = vmatpush.msra.mxu0 %v322
      %389 = vmatmul.f32.gmra.mxu0 %v351
      %v390 = vpop.f32.mrf.mxu0
      %v391 = vadd.f32 %v371, %v390
      %392 = vdwg.mxu0
      %393 = vmatpush.msra.mxu0 %v319
      %394 = vmatpush.msra.mxu0 %v315
      %395 = vmatpush.msra.mxu0 %v311
      %396 = vmatpush.msra.mxu0 %v307
      %397 = vmatpush.msra.mxu0 %v303
      %398 = vmatpush.msra.mxu0 %v299
      %399 = vmatpush.msra.mxu0 %v295
      %400 = vmatpush.msra.mxu0 %v291
      %401 = vmatpush.msra.mxu0 %v287
      %402 = vmatpush.msra.mxu0 %v283
      %403 = vmatpush.msra.mxu0 %v279
      %404 = vmatpush.msra.mxu0 %v275
      %405 = vmatpush.msra.mxu0 %v271
      %406 = vmatpush.msra.mxu0 %v267
      %407 = vmatpush.msra.mxu0 %v263
      %408 = vmatpush.msra.mxu0 %v259
      %409 = vmatmul.f32.gmra.mxu0 %v345
      %v410 = vpop.f32.mrf.mxu0
      %v411 = vadd.f32 0.0, %v410
      %412 = vdwg.mxu0
      %413 = vmatpush.msra.mxu0 0.0
      %414 = vmatpush.msra.mxu0 0.0
      %415 = vmatpush.msra.mxu0 0.0
      %416 = vmatpush.msra.mxu0 0.0
      %417 = vmatpush.msra.mxu0 0.0
      %418 = vmatpush.msra.mxu0 0.0
      %419 = vmatpush.msra.mxu0 0.0
      %420 = vmatpush.msra.mxu0 0.0
      %421 = vmatpush.msra.mxu0 0.0
      %422 = vmatpush.msra.mxu0 0.0
      %423 = vmatpush.msra.mxu0 0.0
      %424 = vmatpush.msra.mxu0 0.0
      %425 = vmatpush.msra.mxu0 %v335
      %426 = vmatpush.msra.mxu0 %v331
      %427 = vmatpush.msra.mxu0 %v327
      %428 = vmatpush.msra.mxu0 %v323
      %429 = vmatmul.f32.gmra.mxu0 %v351
      %v430 = vpop.f32.mrf.mxu0
      %v431 = vadd.f32 %v411, %v430
      %432 = vdwg.mxu0
      %433 = vmatpush.msra.mxu0 %v320
      %434 = vmatpush.msra.mxu0 %v316
      %435 = vmatpush.msra.mxu0 %v312
      %436 = vmatpush.msra.mxu0 %v308
      %437 = vmatpush.msra.mxu0 %v304
      %438 = vmatpush.msra.mxu0 %v300
      %439 = vmatpush.msra.mxu0 %v296
      %440 = vmatpush.msra.mxu0 %v292
      %441 = vmatpush.msra.mxu0 %v288
      %442 = vmatpush.msra.mxu0 %v284
      %443 = vmatpush.msra.mxu0 %v280
      %444 = vmatpush.msra.mxu0 %v276
      %445 = vmatpush.msra.mxu0 %v272
      %446 = vmatpush.msra.mxu0 %v268
      %447 = vmatpush.msra.mxu0 %v264
      %448 = vmatpush.msra.mxu0 %v260
      %449 = vmatmul.f32.gmra.mxu0 %v345
      %v450 = vpop.f32.mrf.mxu0
      %v451 = vadd.f32 0.0, %v450
      %452 = vdwg.mxu0
      %453 = vmatpush.msra.mxu0 0.0
      %454 = vmatpush.msra.mxu0 0.0
      %455 = vmatpush.msra.mxu0 0.0
      %456 = vmatpush.msra.mxu0 0.0
      %457 = vmatpush.msra.mxu0 0.0
      %458 = vmatpush.msra.mxu0 0.0
      %459 = vmatpush.msra.mxu0 0.0
      %460 = vmatpush.msra.mxu0 0.0
      %461 = vmatpush.msra.mxu0 0.0
      %462 = vmatpush.msra.mxu0 0.0
      %463 = vmatpush.msra.mxu0 0.0
      %464 = vmatpush.msra.mxu0 0.0
      %465 = vmatpush.msra.mxu0 %v336
      %466 = vmatpush.msra.mxu0 %v332
      %467 = vmatpush.msra.mxu0 %v328
      %468 = vmatpush.msra.mxu0 %v324
      %469 = vmatmul.f32.gmra.mxu0 %v351
      %v470 = vpop.f32.mrf.mxu0
      %v471 = vadd.f32 %v451, %v470
      %472 = vdwg.mxu0
      %473 = vmatpush.msra.mxu0 %v321
      %474 = vmatpush.msra.mxu0 %v317
      %475 = vmatpush.msra.mxu0 %v313
      %476 = vmatpush.msra.mxu0 %v309
      %477 = vmatpush.msra.mxu0 %v305
      %478 = vmatpush.msra.mxu0 %v301
      %479 = vmatpush.msra.mxu0 %v297
      %480 = vmatpush.msra.mxu0 %v293
      %481 = vmatpush.msra.mxu0 %v289
      %482 = vmatpush.msra.mxu0 %v285
      %483 = vmatpush.msra.mxu0 %v281
      %484 = vmatpush.msra.mxu0 %v277
      %485 = vmatpush.msra.mxu0 %v273
      %486 = vmatpush.msra.mxu0 %v269
      %487 = vmatpush.msra.mxu0 %v265
      %488 = vmatpush.msra.mxu0 %v261
      %489 = vmatmul.f32.gmra.mxu0 %v345
      %v490 = vpop.f32.mrf.mxu0
      %v491 = vadd.f32 0.0, %v490
      %492 = vdwg.mxu0
      %493 = vmatpush.msra.mxu0 0.0
      %494 = vmatpush.msra.mxu0 0.0
      %495 = vmatpush.msra.mxu0 0.0
      %496 = vmatpush.msra.mxu0 0.0
      %497 = vmatpush.msra.mxu0 0.0
      %498 = vmatpush.msra.mxu0 0.0
      %499 = vmatpush.msra.mxu0 0.0
      %500 = vmatpush.msra.mxu0 0.0
      %501 = vmatpush.msra.mxu0 0.0
      %502 = vmatpush.msra.mxu0 0.0
      %503 = vmatpush.msra.mxu0 0.0
      %504 = vmatpush.msra.mxu0 0.0
      %505 = vmatpush.msra.mxu0 %v337
      %506 = vmatpush.msra.mxu0 %v333
      %507 = vmatpush.msra.mxu0 %v329
      %508 = vmatpush.msra.mxu0 %v325
      %509 = vmatmul.f32.gmra.mxu0 %v351
      %v510 = vpop.f32.mrf.mxu0
      %v511 = vadd.f32 %v491, %v510
      %512 = vdwg.mxu0
      %v514 = vsel %vm350, %v172, 0
      %516 = vmatpush.msra.mxu0 %v233
      %517 = vmatpush.msra.mxu0 %v229
      %518 = vmatpush.msra.mxu0 %v225
      %519 = vmatpush.msra.mxu0 %v221
      %520 = vmatpush.msra.mxu0 %v217
      %521 = vmatpush.msra.mxu0 %v213
      %522 = vmatpush.msra.mxu0 %v209
      %523 = vmatpush.msra.mxu0 %v205
      %524 = vmatpush.msra.mxu0 %v201
      %525 = vmatpush.msra.mxu0 %v197
      %526 = vmatpush.msra.mxu0 %v193
      %527 = vmatpush.msra.mxu0 %v189
      %528 = vmatpush.msra.mxu0 %v185
      %529 = vmatpush.msra.mxu0 %v181
      %530 = vmatpush.msra.mxu0 %v177
      %531 = vmatpush.msra.mxu0 %v173
      %532 = vmatmul.f32.gmra.mxu0 %v171
      %v533 = vpop.f32.mrf.mxu0
      %v534 = vadd.f32 %v391, %v533
      %535 = vdwg.mxu0
      %536 = vmatpush.msra.mxu0 0.0
      %537 = vmatpush.msra.mxu0 0.0
      %538 = vmatpush.msra.mxu0 0.0
      %539 = vmatpush.msra.mxu0 0.0
      %540 = vmatpush.msra.mxu0 0.0
      %541 = vmatpush.msra.mxu0 0.0
      %542 = vmatpush.msra.mxu0 0.0
      %543 = vmatpush.msra.mxu0 0.0
      %544 = vmatpush.msra.mxu0 0.0
      %545 = vmatpush.msra.mxu0 0.0
      %546 = vmatpush.msra.mxu0 0.0
      %547 = vmatpush.msra.mxu0 0.0
      %548 = vmatpush.msra.mxu0 %v249
      %549 = vmatpush.msra.mxu0 %v245
      %550 = vmatpush.msra.mxu0 %v241
      %551 = vmatpush.msra.mxu0 %v237
      %552 = vmatmul.f32.gmra.mxu0 %v514
      %v553 = vpop.f32.mrf.mxu0
      %v554 = vadd.f32 %v534, %v553
      %555 = vdwg.mxu0
      %556 = vmatpush.msra.mxu0 %v234
      %557 = vmatpush.msra.mxu0 %v230
      %558 = vmatpush.msra.mxu0 %v226
      %559 = vmatpush.msra.mxu0 %v222
      %560 = vmatpush.msra.mxu0 %v218
      %561 = vmatpush.msra.mxu0 %v214
      %562 = vmatpush.msra.mxu0 %v210
      %563 = vmatpush.msra.mxu0 %v206
      %564 = vmatpush.msra.mxu0 %v202
      %565 = vmatpush.msra.mxu0 %v198
      %566 = vmatpush.msra.mxu0 %v194
      %567 = vmatpush.msra.mxu0 %v190
      %568 = vmatpush.msra.mxu0 %v186
      %569 = vmatpush.msra.mxu0 %v182
      %570 = vmatpush.msra.mxu0 %v178
      %571 = vmatpush.msra.mxu0 %v174
      %572 = vmatmul.f32.gmra.mxu0 %v171
      %v573 = vpop.f32.mrf.mxu0
      %v574 = vadd.f32 %v431, %v573
      %575 = vdwg.mxu0
      %576 = vmatpush.msra.mxu0 0.0
      %577 = vmatpush.msra.mxu0 0.0
      %578 = vmatpush.msra.mxu0 0.0
      %579 = vmatpush.msra.mxu0 0.0
      %580 = vmatpush.msra.mxu0 0.0
      %581 = vmatpush.msra.mxu0 0.0
      %582 = vmatpush.msra.mxu0 0.0
      %583 = vmatpush.msra.mxu0 0.0
      %584 = vmatpush.msra.mxu0 0.0
      %585 = vmatpush.msra.mxu0 0.0
      %586 = vmatpush.msra.mxu0 0.0
      %587 = vmatpush.msra.mxu0 0.0
      %588 = vmatpush.msra.mxu0 %v250
      %589 = vmatpush.msra.mxu0 %v246
      %590 = vmatpush.msra.mxu0 %v242
      %591 = vmatpush.msra.mxu0 %v238
      %592 = vmatmul.f32.gmra.mxu0 %v514
      %v593 = vpop.f32.mrf.mxu0
      %v594 = vadd.f32 %v574, %v593
      %595 = vdwg.mxu0
      %596 = vmatpush.msra.mxu0 %v235
      %597 = vmatpush.msra.mxu0 %v231
      %598 = vmatpush.msra.mxu0 %v227
      %599 = vmatpush.msra.mxu0 %v223
      %600 = vmatpush.msra.mxu0 %v219
      %601 = vmatpush.msra.mxu0 %v215
      %602 = vmatpush.msra.mxu0 %v211
      %603 = vmatpush.msra.mxu0 %v207
      %604 = vmatpush.msra.mxu0 %v203
      %605 = vmatpush.msra.mxu0 %v199
      %606 = vmatpush.msra.mxu0 %v195
      %607 = vmatpush.msra.mxu0 %v191
      %608 = vmatpush.msra.mxu0 %v187
      %609 = vmatpush.msra.mxu0 %v183
      %610 = vmatpush.msra.mxu0 %v179
      %611 = vmatpush.msra.mxu0 %v175
      %612 = vmatmul.f32.gmra.mxu0 %v171
      %v613 = vpop.f32.mrf.mxu0
      %v614 = vadd.f32 %v471, %v613
      %615 = vdwg.mxu0
      %616 = vmatpush.msra.mxu0 0.0
      %617 = vmatpush.msra.mxu0 0.0
      %618 = vmatpush.msra.mxu0 0.0
      %619 = vmatpush.msra.mxu0 0.0
      %620 = vmatpush.msra.mxu0 0.0
      %621 = vmatpush.msra.mxu0 0.0
      %622 = vmatpush.msra.mxu0 0.0
      %623 = vmatpush.msra.mxu0 0.0
      %624 = vmatpush.msra.mxu0 0.0
      %625 = vmatpush.msra.mxu0 0.0
      %626 = vmatpush.msra.mxu0 0.0
      %627 = vmatpush.msra.mxu0 0.0
      %628 = vmatpush.msra.mxu0 %v251
      %629 = vmatpush.msra.mxu0 %v247
      %630 = vmatpush.msra.mxu0 %v243
      %631 = vmatpush.msra.mxu0 %v239
      %632 = vmatmul.f32.gmra.mxu0 %v514
      %v633 = vpop.f32.mrf.mxu0
      %v634 = vadd.f32 %v614, %v633
      %635 = vdwg.mxu0
      %636 = vmatpush.msra.mxu0 %v236
      %637 = vmatpush.msra.mxu0 %v232
      %638 = vmatpush.msra.mxu0 %v228
      %639 = vmatpush.msra.mxu0 %v224
      %640 = vmatpush.msra.mxu0 %v220
      %641 = vmatpush.msra.mxu0 %v216
      %642 = vmatpush.msra.mxu0 %v212
      %643 = vmatpush.msra.mxu0 %v208
      %644 = vmatpush.msra.mxu0 %v204
      %645 = vmatpush.msra.mxu0 %v200
      %646 = vmatpush.msra.mxu0 %v196
      %647 = vmatpush.msra.mxu0 %v192
      %648 = vmatpush.msra.mxu0 %v188
      %649 = vmatpush.msra.mxu0 %v184
      %650 = vmatpush.msra.mxu0 %v180
      %651 = vmatpush.msra.mxu0 %v176
      %652 = vmatmul.f32.gmra.mxu0 %v171
      %v653 = vpop.f32.mrf.mxu0
      %v654 = vadd.f32 %v511, %v653
      %655 = vdwg.mxu0
      %656 = vmatpush.msra.mxu0 0.0
      %657 = vmatpush.msra.mxu0 0.0
      %658 = vmatpush.msra.mxu0 0.0
      %659 = vmatpush.msra.mxu0 0.0
      %660 = vmatpush.msra.mxu0 0.0
      %661 = vmatpush.msra.mxu0 0.0
      %662 = vmatpush.msra.mxu0 0.0
      %663 = vmatpush.msra.mxu0 0.0
      %664 = vmatpush.msra.mxu0 0.0
      %665 = vmatpush.msra.mxu0 0.0
      %666 = vmatpush.msra.mxu0 0.0
      %667 = vmatpush.msra.mxu0 0.0
      %668 = vmatpush.msra.mxu0 %v252
      %669 = vmatpush.msra.mxu0 %v248
      %670 = vmatpush.msra.mxu0 %v244
      %671 = vmatpush.msra.mxu0 %v240
      %672 = vmatmul.f32.gmra.mxu0 %v514
      %v673 = vpop.f32.mrf.mxu0
      %v674 = vadd.f32 %v654, %v673
      %675 = vdwg.mxu0
      %v676 = vld [vmem:[%s165] sm:$0xfc]
      %v677 = vld [vmem:[%s165 + $0x8] sm:$0xfc]
      %v678 = vld [vmem:[%s165 + $0x10] sm:$0x3]
      %v679 = vld [vmem:[%s165 + $0x18] sm:$0x3]
      %s680 = scalar_lea.vmem %s1, 1280
      %v681 = vld [vmem:[%s680] sm:$0xff]
      %v682 = vld [vmem:[%s680 + $0x8] sm:$0xff]
      %v683 = vld [vmem:[%s680 + $0x10] sm:$0xff]
      %v684 = vld [vmem:[%s680 + $0x18] sm:$0xff]
      %v685 = vld [vmem:[%s680 + $0x20] sm:$0xff]
      %v686 = vld [vmem:[%s680 + $0x28] sm:$0xff]
      %v687 = vld [vmem:[%s680 + $0x30] sm:$0xff]
      %v688 = vld [vmem:[%s680 + $0x38] sm:$0xff]
      %v689 = vld [vmem:[%s680 + $0x40] sm:$0xff]
      %v690 = vld [vmem:[%s680 + $0x48] sm:$0xff]
      %v691 = vld [vmem:[%s680 + $0x50] sm:$0xff]
      %v692 = vld [vmem:[%s680 + $0x58] sm:$0xff]
      %v693 = vld [vmem:[%s680 + $0x60] sm:$0xff]
      %v694 = vld [vmem:[%s680 + $0x68] sm:$0xff]
      %v695 = vld [vmem:[%s680 + $0x70] sm:$0xff]
      %v696 = vld [vmem:[%s680 + $0x78] sm:$0xff]
      %v697 = vld [vmem:[%s680 + $0x80] sm:$0xff]
      %v698 = vld [vmem:[%s680 + $0x88] sm:$0xff]
      %v699 = vld [vmem:[%s680 + $0x90] sm:$0xff]
      %v700 = vld [vmem:[%s680 + $0x98] sm:$0xff]
      %v701 = vld [vmem:[%s680 + $0xa0] sm:$0xff]
      %v702 = vld [vmem:[%s680 + $0xa8] sm:$0xff]
      %v703 = vld [vmem:[%s680 + $0xb0] sm:$0xff]
      %v704 = vld [vmem:[%s680 + $0xb8] sm:$0xff]
      %v705 = vld [vmem:[%s680 + $0xc0] sm:$0xff]
      %v706 = vld [vmem:[%s680 + $0xc8] sm:$0xff]
      %v707 = vld [vmem:[%s680 + $0xd0] sm:$0xff]
      %v708 = vld [vmem:[%s680 + $0xd8] sm:$0xff]
      %v709 = vld [vmem:[%s680 + $0xe0] sm:$0xff]
      %v710 = vld [vmem:[%s680 + $0xe8] sm:$0xff]
      %v711 = vld [vmem:[%s680 + $0xf0] sm:$0xff]
      %v712 = vld [vmem:[%s680 + $0xf8] sm:$0xff]
      %v713 = vld [vmem:[%s680 + $0x100] sm:$0xff]
      %v714 = vld [vmem:[%s680 + $0x108] sm:$0xff]
      %v715 = vld [vmem:[%s680 + $0x110] sm:$0xff]
      %v716 = vld [vmem:[%s680 + $0x118] sm:$0xff]
      %v717 = vld [vmem:[%s680 + $0x120] sm:$0xff]
      %v718 = vld [vmem:[%s680 + $0x128] sm:$0xff]
      %v719 = vld [vmem:[%s680 + $0x130] sm:$0xff]
      %v720 = vld [vmem:[%s680 + $0x138] sm:$0xff]
      %v721 = vld [vmem:[%s680 + $0x140] sm:$0xff]
      %v722 = vld [vmem:[%s680 + $0x148] sm:$0xff]
      %v723 = vld [vmem:[%s680 + $0x150] sm:$0xff]
      %v724 = vld [vmem:[%s680 + $0x158] sm:$0xff]
      %v725 = vld [vmem:[%s680 + $0x160] sm:$0xff]
      %v726 = vld [vmem:[%s680 + $0x168] sm:$0xff]
      %v727 = vld [vmem:[%s680 + $0x170] sm:$0xff]
      %v728 = vld [vmem:[%s680 + $0x178] sm:$0xff]
      %v729 = vld [vmem:[%s680 + $0x180] sm:$0xff]
      %v730 = vld [vmem:[%s680 + $0x188] sm:$0xff]
      %v731 = vld [vmem:[%s680 + $0x190] sm:$0xff]
      %v732 = vld [vmem:[%s680 + $0x198] sm:$0xff]
      %v733 = vld [vmem:[%s680 + $0x1a0] sm:$0xff]
      %v734 = vld [vmem:[%s680 + $0x1a8] sm:$0xff]
      %v735 = vld [vmem:[%s680 + $0x1b0] sm:$0xff]
      %v736 = vld [vmem:[%s680 + $0x1b8] sm:$0xff]
      %v737 = vld [vmem:[%s680 + $0x1c0] sm:$0xff]
      %v738 = vld [vmem:[%s680 + $0x1c8] sm:$0xff]
      %v739 = vld [vmem:[%s680 + $0x1d0] sm:$0xff]
      %v740 = vld [vmem:[%s680 + $0x1d8] sm:$0xff]
      %v741 = vld [vmem:[%s680 + $0x1e0] sm:$0xff]
      %v742 = vld [vmem:[%s680 + $0x1e8] sm:$0xff]
      %v743 = vld [vmem:[%s680 + $0x1f0] sm:$0xff]
      %v744 = vld [vmem:[%s680 + $0x1f8] sm:$0xff]
      %v745 = vld [vmem:[%s680 + $0x200] sm:$0xff]
      %v746 = vld [vmem:[%s680 + $0x208] sm:$0xff]
      %v747 = vld [vmem:[%s680 + $0x210] sm:$0xff]
      %v748 = vld [vmem:[%s680 + $0x218] sm:$0xff]
      %v749 = vld [vmem:[%s680 + $0x220] sm:$0xff]
      %v750 = vld [vmem:[%s680 + $0x228] sm:$0xff]
      %v751 = vld [vmem:[%s680 + $0x230] sm:$0xff]
      %v752 = vld [vmem:[%s680 + $0x238] sm:$0xff]
      %v753 = vld [vmem:[%s680 + $0x240] sm:$0xff]
      %v754 = vld [vmem:[%s680 + $0x248] sm:$0xff]
      %v755 = vld [vmem:[%s680 + $0x250] sm:$0xff]
      %v756 = vld [vmem:[%s680 + $0x258] sm:$0xff]
      %v757 = vld [vmem:[%s680 + $0x260] sm:$0xff]
      %v758 = vld [vmem:[%s680 + $0x268] sm:$0xff]
      %v759 = vld [vmem:[%s680 + $0x270] sm:$0xff]
      %v760 = vld [vmem:[%s680 + $0x278] sm:$0xff]
      %vm765 = vcmask 1045504
      %v766 = vrot.slane %v676, 2
      %v767 = vrot.slane %v678, 2
      %v768 = vsel %vm765, %v766, %v767
      %v769 = vrot.slane %v677, 2
      %v770 = vrot.slane %v679, 2
      %v771 = vsel %vm765, %v769, %v770
      %v773 = vsel %vm350, %v771, 0
      %775 = vmatpush.msra.mxu0 %v741
      %776 = vmatpush.msra.mxu0 %v737
      %777 = vmatpush.msra.mxu0 %v733
      %778 = vmatpush.msra.mxu0 %v729
      %779 = vmatpush.msra.mxu0 %v725
      %780 = vmatpush.msra.mxu0 %v721
      %781 = vmatpush.msra.mxu0 %v717
      %782 = vmatpush.msra.mxu0 %v713
      %783 = vmatpush.msra.mxu0 %v709
      %784 = vmatpush.msra.mxu0 %v705
      %785 = vmatpush.msra.mxu0 %v701
      %786 = vmatpush.msra.mxu0 %v697
      %787 = vmatpush.msra.mxu0 %v693
      %788 = vmatpush.msra.mxu0 %v689
      %789 = vmatpush.msra.mxu0 %v685
      %790 = vmatpush.msra.mxu0 %v681
      %791 = vmatmul.f32.gmra.mxu0 %v768
      %v792 = vpop.f32.mrf.mxu0
      %v793 = vadd.f32 0.0, %v792
      %794 = vdwg.mxu0
      %795 = vmatpush.msra.mxu0 0.0
      %796 = vmatpush.msra.mxu0 0.0
      %797 = vmatpush.msra.mxu0 0.0
      %798 = vmatpush.msra.mxu0 0.0
      %799 = vmatpush.msra.mxu0 0.0
      %800 = vmatpush.msra.mxu0 0.0
      %801 = vmatpush.msra.mxu0 0.0
      %802 = vmatpush.msra.mxu0 0.0
      %803 = vmatpush.msra.mxu0 0.0
      %804 = vmatpush.msra.mxu0 0.0
      %805 = vmatpush.msra.mxu0 0.0
      %806 = vmatpush.msra.mxu0 0.0
      %807 = vmatpush.msra.mxu0 %v757
      %808 = vmatpush.msra.mxu0 %v753
      %809 = vmatpush.msra.mxu0 %v749
      %810 = vmatpush.msra.mxu0 %v745
      %811 = vmatmul.f32.gmra.mxu0 %v773
      %v812 = vpop.f32.mrf.mxu0
      %v813 = vadd.f32 %v793, %v812
      %814 = vdwg.mxu0
      %815 = vmatpush.msra.mxu0 %v742
      %816 = vmatpush.msra.mxu0 %v738
      %817 = vmatpush.msra.mxu0 %v734
      %818 = vmatpush.msra.mxu0 %v730
      %819 = vmatpush.msra.mxu0 %v726
      %820 = vmatpush.msra.mxu0 %v722
      %821 = vmatpush.msra.mxu0 %v718
      %822 = vmatpush.msra.mxu0 %v714
      %823 = vmatpush.msra.mxu0 %v710
      %824 = vmatpush.msra.mxu0 %v706
      %825 = vmatpush.msra.mxu0 %v702
      %826 = vmatpush.msra.mxu0 %v698
      %827 = vmatpush.msra.mxu0 %v694
      %828 = vmatpush.msra.mxu0 %v690
      %829 = vmatpush.msra.mxu0 %v686
      %830 = vmatpush.msra.mxu0 %v682
      %831 = vmatmul.f32.gmra.mxu0 %v768
      %v832 = vpop.f32.mrf.mxu0
      %v833 = vadd.f32 0.0, %v832
      %834 = vdwg.mxu0
      %835 = vmatpush.msra.mxu0 0.0
      %836 = vmatpush.msra.mxu0 0.0
      %837 = vmatpush.msra.mxu0 0.0
      %838 = vmatpush.msra.mxu0 0.0
      %839 = vmatpush.msra.mxu0 0.0
      %840 = vmatpush.msra.mxu0 0.0
      %841 = vmatpush.msra.mxu0 0.0
      %842 = vmatpush.msra.mxu0 0.0
      %843 = vmatpush.msra.mxu0 0.0
      %844 = vmatpush.msra.mxu0 0.0
      %845 = vmatpush.msra.mxu0 0.0
      %846 = vmatpush.msra.mxu0 0.0
      %847 = vmatpush.msra.mxu0 %v758
      %848 = vmatpush.msra.mxu0 %v754
      %849 = vmatpush.msra.mxu0 %v750
      %850 = vmatpush.msra.mxu0 %v746
      %851 = vmatmul.f32.gmra.mxu0 %v773
      %v852 = vpop.f32.mrf.mxu0
      %v853 = vadd.f32 %v833, %v852
      %854 = vdwg.mxu0
      %855 = vmatpush.msra.mxu0 %v743
      %856 = vmatpush.msra.mxu0 %v739
      %857 = vmatpush.msra.mxu0 %v735
      %858 = vmatpush.msra.mxu0 %v731
      %859 = vmatpush.msra.mxu0 %v727
      %860 = vmatpush.msra.mxu0 %v723
      %861 = vmatpush.msra.mxu0 %v719
      %862 = vmatpush.msra.mxu0 %v715
      %863 = vmatpush.msra.mxu0 %v711
      %864 = vmatpush.msra.mxu0 %v707
      %865 = vmatpush.msra.mxu0 %v703
      %866 = vmatpush.msra.mxu0 %v699
      %867 = vmatpush.msra.mxu0 %v695
      %868 = vmatpush.msra.mxu0 %v691
      %869 = vmatpush.msra.mxu0 %v687
      %870 = vmatpush.msra.mxu0 %v683
      %871 = vmatmul.f32.gmra.mxu0 %v768
      %v872 = vpop.f32.mrf.mxu0
      %v873 = vadd.f32 0.0, %v872
      %874 = vdwg.mxu0
      %875 = vmatpush.msra.mxu0 0.0
      %876 = vmatpush.msra.mxu0 0.0
      %877 = vmatpush.msra.mxu0 0.0
      %878 = vmatpush.msra.mxu0 0.0
      %879 = vmatpush.msra.mxu0 0.0
      %880 = vmatpush.msra.mxu0 0.0
      %881 = vmatpush.msra.mxu0 0.0
      %882 = vmatpush.msra.mxu0 0.0
      %883 = vmatpush.msra.mxu0 0.0
      %884 = vmatpush.msra.mxu0 0.0
      %885 = vmatpush.msra.mxu0 0.0
      %886 = vmatpush.msra.mxu0 0.0
      %887 = vmatpush.msra.mxu0 %v759
      %888 = vmatpush.msra.mxu0 %v755
      %889 = vmatpush.msra.mxu0 %v751
      %890 = vmatpush.msra.mxu0 %v747
      %891 = vmatmul.f32.gmra.mxu0 %v773
      %v892 = vpop.f32.mrf.mxu0
      %v893 = vadd.f32 %v873, %v892
      %894 = vdwg.mxu0
      %895 = vmatpush.msra.mxu0 %v744
      %896 = vmatpush.msra.mxu0 %v740
      %897 = vmatpush.msra.mxu0 %v736
      %898 = vmatpush.msra.mxu0 %v732
      %899 = vmatpush.msra.mxu0 %v728
      %900 = vmatpush.msra.mxu0 %v724
      %901 = vmatpush.msra.mxu0 %v720
      %902 = vmatpush.msra.mxu0 %v716
      %903 = vmatpush.msra.mxu0 %v712
      %904 = vmatpush.msra.mxu0 %v708
      %905 = vmatpush.msra.mxu0 %v704
      %906 = vmatpush.msra.mxu0 %v700
      %907 = vmatpush.msra.mxu0 %v696
      %908 = vmatpush.msra.mxu0 %v692
      %909 = vmatpush.msra.mxu0 %v688
      %910 = vmatpush.msra.mxu0 %v684
      %911 = vmatmul.f32.gmra.mxu0 %v768
      %v912 = vpop.f32.mrf.mxu0
      %v913 = vadd.f32 0.0, %v912
      %914 = vdwg.mxu0
      %915 = vmatpush.msra.mxu0 0.0
      %916 = vmatpush.msra.mxu0 0.0
      %917 = vmatpush.msra.mxu0 0.0
      %918 = vmatpush.msra.mxu0 0.0
      %919 = vmatpush.msra.mxu0 0.0
      %920 = vmatpush.msra.mxu0 0.0
      %921 = vmatpush.msra.mxu0 0.0
      %922 = vmatpush.msra.mxu0 0.0
      %923 = vmatpush.msra.mxu0 0.0
      %924 = vmatpush.msra.mxu0 0.0
      %925 = vmatpush.msra.mxu0 0.0
      %926 = vmatpush.msra.mxu0 0.0
      %927 = vmatpush.msra.mxu0 %v760
      %928 = vmatpush.msra.mxu0 %v756
      %929 = vmatpush.msra.mxu0 %v752
      %930 = vmatpush.msra.mxu0 %v748
      %931 = vmatmul.f32.gmra.mxu0 %v773
      %v932 = vpop.f32.mrf.mxu0
      %v933 = vadd.f32 %v913, %v932
      %934 = vdwg.mxu0
      %v935 = vadd.f32 %v554, %v813
      %v936 = vadd.f32 %v594, %v853
      %v937 = vadd.f32 %v634, %v893
      %v938 = vadd.f32 %v674, %v933
      %v939 = vld [vmem:[%s2] sm:$0xf]
      %v941 = vperm.slane %v939, 0
      %v942 = vperm.slane %v939, 1
      %v943 = vperm.slane %v939, 2
      %v944 = vperm.slane %v939, 3
      %v949 = vadd.f32 %v935, %v941
      %v950 = vadd.f32 %v936, %v942
      %v951 = vadd.f32 %v937, %v943
      %v952 = vadd.f32 %v938, %v944
      %953 = vst [vmem:[%s170] sm:$0xff] %v949
      %954 = vst [vmem:[%s170 + $0x8] sm:$0xff] %v950
      %955 = vst [vmem:[%s170 + $0x10] sm:$0xff] %v951
      %956 = vst [vmem:[%s170 + $0x18] sm:$0xff] %v952
      %p957 = scmp.lt.s32.totalorder %s14, 1
      %s958 = scalar_select %p957, %s14, 1
      %s959 = smul.addr %s958, 4
      %s960 = smul.addr %s959, 8
      %s961 = scalar_lea.vmem %s3, %s960
      // Predicated region
      $region33: #{usr_forward.14} parent=31 // pred_check
        %p962 = pneg %p100
      $region34: #{usr_forward.14} parent=31 // pred_check_branch
        %964 = sbr.rel (%p962) target = $region36
      $region35: #{usr_forward.14} parent=31 // pred_region
        _
      $region36: #{usr_forward.14} parent=31 // pred_fallthru
        _
    $region32: #{usr_forward.14} parent=5 // pred_fallthru
      _
    %p965 = scmp.le.s32.totalorder 2, %s9
    // Predicated region
    $region37: #{usr_forward.14} parent=5 // pred_check
      %p966 = pneg %p965
    $region38: #{usr_forward.14} parent=5 // pred_check_branch
      %968 = sbr.rel (%p966) target = $region40
    $region39: #{usr_forward.14} parent=5 // pred_region
      %s969 = ssub.s32 %s9, 2
      // Predicated region
      $region41: #{usr_forward.14} parent=39 // pred_check
        %p970 = pneg %p106
      $region42: #{usr_forward.14} parent=39 // pred_check_branch
        %972 = sbr.rel (%p970) target = $region44
      $region43: #{usr_forward.14} parent=39 // pred_region
        %p973 = scmp.lt.s32.totalorder %s15, 1
        %s974 = scalar_select %p973, %s15, 1
        %s975 = smul.addr %s974, 4
        %s976 = smul.addr %s975, 8
        %s977 = scalar_lea.vmem %s3, %s976
      $region44: #{usr_forward.14} parent=39 // pred_fallthru
        _
    $region40: #{usr_forward.14} parent=5 // pred_fallthru
      _
  $region6: #{usr_forward.14} parent=0 // loop_footer
    %s13 = sadd.s32 1, %s9
  $region7: #{usr_forward.14} parent=0 // loop_footer_branch
    %8 = sbr.rel target = $region3
  $region8: #{usr_forward.14} parent=0 // loop_exit
    _

// kernel: tile.118
$region0: #{tile.118}
  #allocation0 [shape = 's32[1]{0}', space=sflag, size = 0x4, scoped, tag = 'scoped memory for tile.118']
  %s0 = inlined_call_operand.vmem [shape: f32[3], index: 0, kind: input, shape index: {}]
  %s1 = inlined_call_operand.vmem [shape: f32[16,3], index: 1, kind: output, shape index: {}]
  // Predicated region
  $region2: #{tile.118} parent=0 // pred_check
    _
  $region3: #{tile.118} parent=0 // pred_check_branch
    %3 = sbr.rel (0) target = $region5
  $region4: #{tile.118} parent=0 // pred_region
    _
  $region5: #{tile.118} parent=0 // pred_fallthru
    _
  %v4 = vld [vmem:[%s0] ss:$0 sm:$0xff]
  %5 = vst [vmem:[%s1] sm:$0xff] %v4
  %s6 = scalar_lea.vmem %s1, 8
  %7 = vst [vmem:[%s6] sm:$0xff] %v4

// kernel: tile.119
$region0: #{tile.119}
  %s0 = inlined_call_operand.vmem [shape: f32[16,3], index: 0, kind: input, shape index: {}]
  %s1 = inlined_call_operand.vmem [shape: f32[48], index: 1, kind: output, shape index: {}]
  $region1: #{tile.119} parent=0
    #allocation0 [shape = 'u8[4096]{0}', space=vmem, size = 0x1000, scoped, tag = 'scoped mem for output reshape']
    %v2 = vld [vmem:[%s0] sm:$0x1]
    %vm3 = vcmask 23552
    %4 = vst.msk [vmem:[#allocation0] sm:$0x1] %vm3, %v2
    %s5 = scalar_lea.vmem %s0, 15
    %v6 = vld [vmem:[%s5] sm:$0x1]
    %7 = vrot.lane.b32.xlu0 %v6, 45
    %v8 = vpop.permute.xlu0 %7
    %vm9 = vcmask 392552
    %10 = vst.msk [vmem:[#allocation0] sm:$0x1] %vm9, %v8
    %s11 = scalar_lea.vmem %s0, 14
    %v12 = vld [vmem:[%s11] sm:$0x1]
    %13 = vrot.lane.b32.xlu0 %v12, 42
    %v14 = vpop.permute.xlu0 %13
    %vm15 = vcmask 367952
    %16 = vst.msk [vmem:[#allocation0] sm:$0x1] %vm15, %v14
    %s17 = scalar_lea.vmem %s0, 13
    %v18 = vld [vmem:[%s17] sm:$0x1]
    %19 = vrot.lane.b32.xlu0 %v18, 39
    %v20 = vpop.permute.xlu0 %19
    %vm21 = vcmask 343352
    %22 = vst.msk [vmem:[#allocation0] sm:$0x1] %vm21, %v20
    %s23 = scalar_lea.vmem %s0, 12
    %v24 = vld [vmem:[%s23] sm:$0x1]
    %25 = vrot.lane.b32.xlu0 %v24, 36
    %v26 = vpop.permute.xlu0 %25
    %vm27 = vcmask 318752
    %28 = vst.msk [vmem:[#allocation0] sm:$0x1] %vm27, %v26
    %s29 = scalar_lea.vmem %s0, 11
    %v30 = vld [vmem:[%s29] sm:$0x1]
    %31 = vrot.lane.b32.xlu0 %v30, 33
    %v32 = vpop.permute.xlu0 %31
    %vm33 = vcmask 294152
    %34 = vst.msk [vmem:[#allocation0] sm:$0x1] %vm33, %v32
    %s35 = scalar_lea.vmem %s0, 10
    %v36 = vld [vmem:[%s35] sm:$0x1]
    %37 = vrot.lane.b32.xlu0 %v36, 30
    %v38 = vpop.permute.xlu0 %37
    %vm39 = vcmask 269552
    %40 = vst.msk [vmem:[#allocation0] sm:$0x1] %vm39, %v38
    %s41 = scalar_lea.vmem %s0, 9
    %v42 = vld [vmem:[%s41] sm:$0x1]
    %43 = vrot.lane.b32.xlu0 %v42, 27
    %v44 = vpop.permute.xlu0 %43
    %vm45 = vcmask 244952
    %46 = vst.msk [vmem:[#allocation0] sm:$0x1] %vm45, %v44
    %s47 = scalar_lea.vmem %s0, 8
    %v48 = vld [vmem:[%s47] sm:$0x1]
    %49 = vrot.lane.b32.xlu0 %v48, 24
    %v50 = vpop.permute.xlu0 %49
    %vm51 = vcmask 220352
    %52 = vst.msk [vmem:[#allocation0] sm:$0x1] %vm51, %v50
    %s53 = scalar_lea.vmem %s0, 7
    %v54 = vld [vmem:[%s53] sm:$0x1]
    %55 = vrot.lane.b32.xlu0 %v54, 21
    %v56 = vpop.permute.xlu0 %55
    %vm57 = vcmask 195752
    %58 = vst.msk [vmem:[#allocation0] sm:$0x1] %vm57, %v56
    %s59 = scalar_lea.vmem %s0, 6
    %v60 = vld [vmem:[%s59] sm:$0x1]
    %61 = vrot.lane.b32.xlu0 %v60, 18
    %v62 = vpop.permute.xlu0 %61
    %vm63 = vcmask 171152
    %64 = vst.msk [vmem:[#allocation0] sm:$0x1] %vm63, %v62
    %s65 = scalar_lea.vmem %s0, 5
    %v66 = vld [vmem:[%s65] sm:$0x1]
    %67 = vrot.lane.b32.xlu0 %v66, 15
    %v68 = vpop.permute.xlu0 %67
    %vm69 = vcmask 146552
    %70 = vst.msk [vmem:[#allocation0] sm:$0x1] %vm69, %v68
    %s71 = scalar_lea.vmem %s0, 4
    %v72 = vld [vmem:[%s71] sm:$0x1]
    %73 = vrot.lane.b32.xlu0 %v72, 12
    %v74 = vpop.permute.xlu0 %73
    %vm75 = vcmask 121952
    %76 = vst.msk [vmem:[#allocation0] sm:$0x1] %vm75, %v74
    %s77 = scalar_lea.vmem %s0, 3
    %v78 = vld [vmem:[%s77] sm:$0x1]
    %79 = vrot.lane.b32.xlu0 %v78, 9
    %v80 = vpop.permute.xlu0 %79
    %vm81 = vcmask 97352
    %82 = vst.msk [vmem:[#allocation0] sm:$0x1] %vm81, %v80
    %s83 = scalar_lea.vmem %s0, 2
    %v84 = vld [vmem:[%s83] sm:$0x1]
    %85 = vrot.lane.b32.xlu0 %v84, 6
    %v86 = vpop.permute.xlu0 %85
    %vm87 = vcmask 72752
    %88 = vst.msk [vmem:[#allocation0] sm:$0x1] %vm87, %v86
    %s89 = scalar_lea.vmem %s0, 1
    %v90 = vld [vmem:[%s89] sm:$0x1]
    %91 = vrot.lane.b32.xlu0 %v90, 3
    %v92 = vpop.permute.xlu0 %91
    %vm93 = vcmask 48152
    %94 = vst.msk [vmem:[#allocation0] sm:$0x1] %vm93, %v92
    %s96 = ssub.s32 2, 1
    %v97 = vld [vmem:[#allocation0] sm:%s96]
    %s99 = ssub.s32 2, 1
    %100 = vst [vmem:[%s1] sm:%s99] %v97

// kernel: usr_forward.15
$region0: #{usr_forward.15}
  #allocation0 [shape = 'u32[]', space=smem, size = 0x4, offset = 0x4, fixed_abs, tag = 'smem constant byte address 0x4 - core index']
  #allocation1 [shape = 'u32[72,128]{1,0:T(1,128)}', space=vmem, size = 0x9000, scoped, tag = 'internal scratch']
  %s0 = inlined_call_operand.vmem [shape: f32[2,18,288], index: 0, kind: input, shape index: {}]
  %s1 = inlined_call_operand.vmem [shape: f32[3,288,54], index: 1, kind: input, shape index: {}]
  %s2 = inlined_call_operand.vmem [shape: f32[1,54], index: 2, kind: input, shape index: {}]
  %s3 = inlined_call_operand.vmem [shape: f32[2,18,54], index: 3, kind: output, shape index: {}]
  %s4 = sld [smem:[#allocation0]]
  $region45: #{usr_forward.15} parent=0
    _
  %s6 = ssub.s32 1, %s4
  %s7 = scalar_select 0, %s6, %s4
  loop: start=0, step=1, limit=4
  $region2: #{usr_forward.15} parent=0 // loop_pre_header
    _
  $region3: #{usr_forward.15} parent=0 // loop_header
    %s9 = sphi 0, %s13
    %p10 = scmp.ge.s32.totalorder %s9, 4
    %s19 = sphi 0, %s21
    %s22 = sphi 0, %s19
    %s23 = sphi 0, %s22
    %s39 = sphi 0, %s23
    %s43 = sphi 0, %s43
    %s45 = sphi 0, %s43
    %s46 = sphi 0, %s45
    %s60 = sphi 0, %s46
    %s64 = sphi 0, %s64
    %s66 = sphi 0, %s64
    %s67 = sphi 0, %s66
    %s81 = sphi 0, %s67
    %s87 = sphi 0, %s89
    %s90 = sphi 0, %s87
    %s91 = sphi 0, %s90
    %s107 = sphi 0, %s91
  $region4: #{usr_forward.15} parent=0 // loop_header_branch
    %12 = sbr.rel (%p10) target = $region8
  $region5: #{usr_forward.15} parent=0 // loop_body
    %s14 = ssub.s32 %s9, 1
    %s15 = ssub.s32 %s9, 2
    %s16 = sadd.s32 %s9, 1
    %s17 = ssub.s32 %s9, %s16
    %p18 = scmp.eq.s32.totalorder %s17, 0
    %s20 = sadd.s32 %s19, 1
    %s21 = scalar_select %p18, %s19, %s20
    %p24 = pneg %p18
    %p25 = scmp.eq.s32.totalorder %s9, 1
    %p26 = por %p24, %p25
    %p27 = scmp.ne.s32.totalorder %s19, %s22
    %p28 = scmp.eq.s32.totalorder %s9, 0
    %p29 = por %p27, %p28
    %p30 = scmp.ne.s32.totalorder %s19, %s22
    %p31 = scmp.eq.s32.totalorder %s14, 1
    %p32 = por %p30, %p31
    %p33 = scmp.ne.s32.totalorder %s22, %s23
    %p34 = scmp.eq.s32.totalorder %s14, 0
    %p35 = por %p33, %p34
    %p36 = scmp.ne.s32.totalorder %s22, %s23
    %p37 = scmp.eq.s32.totalorder %s15, 1
    %p38 = por %p36, %p37
    %p40 = scmp.ne.s32.totalorder %s23, %s39
    %p41 = scmp.eq.s32.totalorder %s15, 0
    %p42 = por %p40, %p41
    %s44 = sadd.s32 %s43, 1
    %p47 = scmp.eq.s32.totalorder %s9, 1
    %p48 = scmp.ne.s32.totalorder %s43, %s45
    %p49 = scmp.eq.s32.totalorder %s9, 0
    %p50 = por %p48, %p49
    %p51 = scmp.ne.s32.totalorder %s43, %s45
    %p52 = scmp.eq.s32.totalorder %s14, 1
    %p53 = por %p51, %p52
    %p54 = scmp.ne.s32.totalorder %s45, %s46
    %p55 = scmp.eq.s32.totalorder %s14, 0
    %p56 = por %p54, %p55
    %p57 = scmp.ne.s32.totalorder %s45, %s46
    %p58 = scmp.eq.s32.totalorder %s15, 1
    %p59 = por %p57, %p58
    %p61 = scmp.ne.s32.totalorder %s46, %s60
    %p62 = scmp.eq.s32.totalorder %s15, 0
    %p63 = por %p61, %p62
    %s65 = sadd.s32 %s64, 1
    %p68 = scmp.eq.s32.totalorder %s9, 1
    %p69 = scmp.ne.s32.totalorder %s64, %s66
    %p70 = scmp.eq.s32.totalorder %s9, 0
    %p71 = por %p69, %p70
    %p72 = scmp.ne.s32.totalorder %s64, %s66
    %p73 = scmp.eq.s32.totalorder %s14, 1
    %p74 = por %p72, %p73
    %p75 = scmp.ne.s32.totalorder %s66, %s67
    %p76 = scmp.eq.s32.totalorder %s14, 0
    %p77 = por %p75, %p76
    %p78 = scmp.ne.s32.totalorder %s66, %s67
    %p79 = scmp.eq.s32.totalorder %s15, 1
    %p80 = por %p78, %p79
    %p82 = scmp.ne.s32.totalorder %s67, %s81
    %p83 = scmp.eq.s32.totalorder %s15, 0
    %p84 = por %p82, %p83
    %s85 = ssub.s32 %s9, %s16
    %p86 = scmp.eq.s32.totalorder %s85, 0
    %s88 = sadd.s32 %s87, 1
    %s89 = scalar_select %p86, %s87, %s88
    %p92 = pneg %p86
    %p93 = scmp.eq.s32.totalorder %s9, 1
    %p94 = por %p92, %p93
    %p95 = scmp.ne.s32.totalorder %s87, %s90
    %p96 = scmp.eq.s32.totalorder %s9, 0
    %p97 = por %p95, %p96
    %p98 = scmp.ne.s32.totalorder %s87, %s90
    %p99 = scmp.eq.s32.totalorder %s14, 1
    %p100 = por %p98, %p99
    %p101 = scmp.ne.s32.totalorder %s90, %s91
    %p102 = scmp.eq.s32.totalorder %s14, 0
    %p103 = por %p101, %p102
    %p104 = scmp.ne.s32.totalorder %s90, %s91
    %p105 = scmp.eq.s32.totalorder %s15, 1
    %p106 = por %p104, %p105
    %p108 = scmp.ne.s32.totalorder %s91, %s107
    %p109 = scmp.eq.s32.totalorder %s15, 0
    %p110 = por %p108, %p109
    %p111 = scmp.le.s32.totalorder 1, %s9
    %p112 = scmp.lt.s32.totalorder %s9, 3
    %p113 = pnand %p111, %p112
    %p114 = pneg %p113
    // Predicated region
    $region9: #{usr_forward.15} parent=5 // pred_check
      _
    $region10: #{usr_forward.15} parent=5 // pred_check_branch
      %116 = sbr.rel (%p113) target = $region12
    $region11: #{usr_forward.15} parent=5 // pred_region
      %s117 = ssub.s32 %s9, 1
      // Predicated region
      $region13: #{usr_forward.15} parent=11 // pred_check
        %p118 = pneg %p56
      $region14: #{usr_forward.15} parent=11 // pred_check_branch
        %120 = sbr.rel (%p118) target = $region16
      $region15: #{usr_forward.15} parent=11 // pred_region
        _
      $region16: #{usr_forward.15} parent=11 // pred_fallthru
        _
      // Predicated region
      $region17: #{usr_forward.15} parent=11 // pred_check
        %p121 = pneg %p77
      $region18: #{usr_forward.15} parent=11 // pred_check_branch
        %123 = sbr.rel (%p121) target = $region20
      $region19: #{usr_forward.15} parent=11 // pred_region
        _
      $region20: #{usr_forward.15} parent=11 // pred_fallthru
        _
    $region12: #{usr_forward.15} parent=5 // pred_fallthru
      _
    %p124 = scmp.lt.s32.totalorder %s9, 2
    // Predicated region
    $region21: #{usr_forward.15} parent=5 // pred_check
      %p125 = pneg %p124
    $region22: #{usr_forward.15} parent=5 // pred_check_branch
      %127 = sbr.rel (%p125) target = $region24
    $region23: #{usr_forward.15} parent=5 // pred_region
      // Predicated region
      $region25: #{usr_forward.15} parent=23 // pred_check
        %p128 = pneg %p29
      $region26: #{usr_forward.15} parent=23 // pred_check_branch
        %130 = sbr.rel (%p128) target = $region28
      $region27: #{usr_forward.15} parent=23 // pred_region
        %p131 = scmp.lt.s32.totalorder %s9, 1
        %s132 = scalar_select %p131, %s9, 1
        %s133 = smul.addr %s132, 9
        %s134 = smul.addr %s133, 8
        %s135 = scalar_lea.vmem %s0, %s134
      $region28: #{usr_forward.15} parent=23 // pred_fallthru
        _
    $region24: #{usr_forward.15} parent=5 // pred_fallthru
      _
    %p136 = scmp.le.s32.totalorder 1, %s9
    %p137 = scmp.lt.s32.totalorder %s9, 3
    %p138 = pnand %p136, %p137
    %p139 = pneg %p138
    // Predicated region
    $region29: #{usr_forward.15} parent=5 // pred_check
      _
    $region30: #{usr_forward.15} parent=5 // pred_check_branch
      %141 = sbr.rel (%p138) target = $region32
    $region31: #{usr_forward.15} parent=5 // pred_region
      %s142 = ssub.s32 %s9, 1
      %p143 = scmp.lt.s32.totalorder %s14, 1
      %s144 = scalar_select %p143, %s14, 1
      %s145 = smul.addr %s144, 9
      %s146 = smul.addr %s145, 8
      %s147 = scalar_lea.vmem %s0, %s146
      %p148 = pneg %p35
      %p149 = pneg %p32
      %p150 = pneg %p56
      %p151 = pneg %p53
      %p152 = pneg %p77
      %p153 = pneg %p74
      %p154 = pneg %p103
      %p155 = pneg %p100
      %p156 = scmp.lt.s32.totalorder %s14, 1
      %s157 = scalar_select %p156, %s14, 1
      %s158 = smul.addr %s157, 3
      %s159 = smul.addr %s158, 8
      %s160 = scalar_lea.vmem %s3, %s159
      %p161 = scmp.lt.s32.totalorder %s14, 1
      %s162 = scalar_select %p161, %s14, 1
      %s163 = smul.addr %s162, 9
      %s164 = smul.addr %s163, 8
      %s165 = scalar_lea.vmem %s0, %s164
      %p166 = scmp.lt.s32.totalorder %s14, 1
      %s167 = scalar_select %p166, %s14, 1
      %s168 = smul.addr %s167, 3
      %s169 = smul.addr %s168, 8
      %s170 = scalar_lea.vmem %s3, %s169
      %v171 = vld [vmem:[%s165] sm:$0xff]
      %v172 = vld [vmem:[%s165 + $0x8] sm:$0xff]
      %v173 = vld [vmem:[%s165 + $0x10] sm:$0xff]
      %v174 = vld [vmem:[%s165 + $0x18] sm:$0xff]
      %v175 = vld [vmem:[%s165 + $0x20] sm:$0xff]
      %v176 = vld [vmem:[%s165 + $0x28] sm:$0xff]
      %v177 = vld [vmem:[%s1] sm:$0xff]
      %v178 = vld [vmem:[%s1 + $0x8] sm:$0xff]
      %v179 = vld [vmem:[%s1 + $0x10] sm:$0xff]
      %v180 = vld [vmem:[%s1 + $0x18] sm:$0xff]
      %v181 = vld [vmem:[%s1 + $0x20] sm:$0xff]
      %v182 = vld [vmem:[%s1 + $0x28] sm:$0xff]
      %v183 = vld [vmem:[%s1 + $0x30] sm:$0xff]
      %v184 = vld [vmem:[%s1 + $0x38] sm:$0xff]
      %v185 = vld [vmem:[%s1 + $0x40] sm:$0xff]
      %v186 = vld [vmem:[%s1 + $0x48] sm:$0xff]
      %v187 = vld [vmem:[%s1 + $0x50] sm:$0xff]
      %v188 = vld [vmem:[%s1 + $0x58] sm:$0xff]
      %v189 = vld [vmem:[%s1 + $0x60] sm:$0xff]
      %v190 = vld [vmem:[%s1 + $0x68] sm:$0xff]
      %v191 = vld [vmem:[%s1 + $0x70] sm:$0xff]
      %v192 = vld [vmem:[%s1 + $0x78] sm:$0xff]
      %v193 = vld [vmem:[%s1 + $0x80] sm:$0xff]
      %v194 = vld [vmem:[%s1 + $0x88] sm:$0xff]
      %v195 = vld [vmem:[%s1 + $0x90] sm:$0xff]
      %v196 = vld [vmem:[%s1 + $0x98] sm:$0xff]
      %v197 = vld [vmem:[%s1 + $0xa0] sm:$0xff]
      %v198 = vld [vmem:[%s1 + $0xa8] sm:$0xff]
      %v199 = vld [vmem:[%s1 + $0xb0] sm:$0xff]
      %v200 = vld [vmem:[%s1 + $0xb8] sm:$0xff]
      %v201 = vld [vmem:[%s1 + $0xc0] sm:$0xff]
      %v202 = vld [vmem:[%s1 + $0xc8] sm:$0xff]
      %v203 = vld [vmem:[%s1 + $0xd0] sm:$0xff]
      %v204 = vld [vmem:[%s1 + $0xd8] sm:$0xff]
      %v205 = vld [vmem:[%s1 + $0xe0] sm:$0xff]
      %v206 = vld [vmem:[%s1 + $0xe8] sm:$0xff]
      %v207 = vld [vmem:[%s1 + $0xf0] sm:$0xff]
      %v208 = vld [vmem:[%s1 + $0xf8] sm:$0xff]
      %v209 = vld [vmem:[%s1 + $0x100] sm:$0xff]
      %v210 = vld [vmem:[%s1 + $0x108] sm:$0xff]
      %v211 = vld [vmem:[%s1 + $0x110] sm:$0xff]
      %v212 = vld [vmem:[%s1 + $0x118] sm:$0xff]
      %v213 = vld [vmem:[%s165] sm:$0xfe]
      %v214 = vld [vmem:[%s165 + $0x8] sm:$0xfe]
      %v215 = vld [vmem:[%s165 + $0x10] sm:$0xfe]
      %v216 = vld [vmem:[%s165 + $0x30] sm:$0x1]
      %v217 = vld [vmem:[%s165 + $0x38] sm:$0x1]
      %v218 = vld [vmem:[%s165 + $0x40] sm:$0x1]
      %s219 = scalar_lea.vmem %s1, 288
      %v220 = vld [vmem:[%s219] sm:$0xff]
      %v221 = vld [vmem:[%s219 + $0x8] sm:$0xff]
      %v222 = vld [vmem:[%s219 + $0x10] sm:$0xff]
      %v223 = vld [vmem:[%s219 + $0x18] sm:$0xff]
      %v224 = vld [vmem:[%s219 + $0x20] sm:$0xff]
      %v225 = vld [vmem:[%s219 + $0x28] sm:$0xff]
      %v226 = vld [vmem:[%s219 + $0x30] sm:$0xff]
      %v227 = vld [vmem:[%s219 + $0x38] sm:$0xff]
      %v228 = vld [vmem:[%s219 + $0x40] sm:$0xff]
      %v229 = vld [vmem:[%s219 + $0x48] sm:$0xff]
      %v230 = vld [vmem:[%s219 + $0x50] sm:$0xff]
      %v231 = vld [vmem:[%s219 + $0x58] sm:$0xff]
      %v232 = vld [vmem:[%s219 + $0x60] sm:$0xff]
      %v233 = vld [vmem:[%s219 + $0x68] sm:$0xff]
      %v234 = vld [vmem:[%s219 + $0x70] sm:$0xff]
      %v235 = vld [vmem:[%s219 + $0x78] sm:$0xff]
      %v236 = vld [vmem:[%s219 + $0x80] sm:$0xff]
      %v237 = vld [vmem:[%s219 + $0x88] sm:$0xff]
      %v238 = vld [vmem:[%s219 + $0x90] sm:$0xff]
      %v239 = vld [vmem:[%s219 + $0x98] sm:$0xff]
      %v240 = vld [vmem:[%s219 + $0xa0] sm:$0xff]
      %v241 = vld [vmem:[%s219 + $0xa8] sm:$0xff]
      %v242 = vld [vmem:[%s219 + $0xb0] sm:$0xff]
      %v243 = vld [vmem:[%s219 + $0xb8] sm:$0xff]
      %v244 = vld [vmem:[%s219 + $0xc0] sm:$0xff]
      %v245 = vld [vmem:[%s219 + $0xc8] sm:$0xff]
      %v246 = vld [vmem:[%s219 + $0xd0] sm:$0xff]
      %v247 = vld [vmem:[%s219 + $0xd8] sm:$0xff]
      %v248 = vld [vmem:[%s219 + $0xe0] sm:$0xff]
      %v249 = vld [vmem:[%s219 + $0xe8] sm:$0xff]
      %v250 = vld [vmem:[%s219 + $0xf0] sm:$0xff]
      %v251 = vld [vmem:[%s219 + $0xf8] sm:$0xff]
      %v252 = vld [vmem:[%s219 + $0x100] sm:$0xff]
      %v253 = vld [vmem:[%s219 + $0x108] sm:$0xff]
      %v254 = vld [vmem:[%s219 + $0x110] sm:$0xff]
      %v255 = vld [vmem:[%s219 + $0x118] sm:$0xff]
      %vm265 = vcmask 1046528
      %v266 = vrot.slane %v213, 1
      %v267 = vrot.slane %v174, 1
      %v268 = vsel %vm265, %v266, %v267
      %v269 = vrot.slane %v214, 1
      %v270 = vrot.slane %v175, 1
      %v271 = vsel %vm265, %v269, %v270
      %v272 = vrot.slane %v215, 1
      %v273 = vrot.slane %v176, 1
      %v274 = vsel %vm265, %v272, %v273
      %v275 = vrot.slane %v216, 1
      %v276 = vsel %vm265, %v267, %v275
      %v277 = vrot.slane %v217, 1
      %v278 = vsel %vm265, %v270, %v277
      %v279 = vrot.slane %v218, 1
      %v280 = vsel %vm265, %v273, %v279
      %vm285 = vcmask 261120
      %v286 = vsel %vm285, %v274, 0
      %v288 = vsel %vm285, %v280, 0
      %290 = vmatpush.msra.mxu0 %v235
      %291 = vmatpush.msra.mxu0 %v234
      %292 = vmatpush.msra.mxu0 %v233
      %293 = vmatpush.msra.mxu0 %v232
      %294 = vmatpush.msra.mxu0 %v231
      %295 = vmatpush.msra.mxu0 %v230
      %296 = vmatpush.msra.mxu0 %v229
      %297 = vmatpush.msra.mxu0 %v228
      %298 = vmatpush.msra.mxu0 %v227
      %299 = vmatpush.msra.mxu0 %v226
      %300 = vmatpush.msra.mxu0 %v225
      %301 = vmatpush.msra.mxu0 %v224
      %302 = vmatpush.msra.mxu0 %v223
      %303 = vmatpush.msra.mxu0 %v222
      %304 = vmatpush.msra.mxu0 %v221
      %305 = vmatpush.msra.mxu0 %v220
      %306 = vmatmul.f32.gmra.mxu0 %v268
      %v307 = vpop.f32.mrf.mxu0
      %v308 = vadd.f32 0.0, %v307
      %309 = vmatmul.f32.gmra.mxu0 %v276
      %v310 = vpop.f32.mrf.mxu0
      %v311 = vadd.f32 0.0, %v310
      %312 = vdwg.mxu0
      %313 = vmatpush.msra.mxu0 %v251
      %314 = vmatpush.msra.mxu0 %v250
      %315 = vmatpush.msra.mxu0 %v249
      %316 = vmatpush.msra.mxu0 %v248
      %317 = vmatpush.msra.mxu0 %v247
      %318 = vmatpush.msra.mxu0 %v246
      %319 = vmatpush.msra.mxu0 %v245
      %320 = vmatpush.msra.mxu0 %v244
      %321 = vmatpush.msra.mxu0 %v243
      %322 = vmatpush.msra.mxu0 %v242
      %323 = vmatpush.msra.mxu0 %v241
      %324 = vmatpush.msra.mxu0 %v240
      %325 = vmatpush.msra.mxu0 %v239
      %326 = vmatpush.msra.mxu0 %v238
      %327 = vmatpush.msra.mxu0 %v237
      %328 = vmatpush.msra.mxu0 %v236
      %329 = vmatmul.f32.gmra.mxu0 %v271
      %v330 = vpop.f32.mrf.mxu0
      %v331 = vadd.f32 %v308, %v330
      %332 = vmatmul.f32.gmra.mxu0 %v278
      %v333 = vpop.f32.mrf.mxu0
      %v334 = vadd.f32 %v311, %v333
      %335 = vdwg.mxu0
      %336 = vmatpush.msra.mxu0 0.0
      %337 = vmatpush.msra.mxu0 0.0
      %338 = vmatpush.msra.mxu0 0.0
      %339 = vmatpush.msra.mxu0 0.0
      %340 = vmatpush.msra.mxu0 0.0
      %341 = vmatpush.msra.mxu0 0.0
      %342 = vmatpush.msra.mxu0 0.0
      %343 = vmatpush.msra.mxu0 0.0
      %344 = vmatpush.msra.mxu0 0.0
      %345 = vmatpush.msra.mxu0 0.0
      %346 = vmatpush.msra.mxu0 0.0
      %347 = vmatpush.msra.mxu0 0.0
      %348 = vmatpush.msra.mxu0 %v255
      %349 = vmatpush.msra.mxu0 %v254
      %350 = vmatpush.msra.mxu0 %v253
      %351 = vmatpush.msra.mxu0 %v252
      %352 = vmatmul.f32.gmra.mxu0 %v286
      %v353 = vpop.f32.mrf.mxu0
      %v354 = vadd.f32 %v331, %v353
      %355 = vmatmul.f32.gmra.mxu0 %v288
      %v356 = vpop.f32.mrf.mxu0
      %v357 = vadd.f32 %v334, %v356
      %358 = vdwg.mxu0
      %v360 = vsel %vm285, %v173, 0
      %v362 = vsel %vm285, %v176, 0
      %364 = vmatpush.msra.mxu0 %v192
      %365 = vmatpush.msra.mxu0 %v191
      %366 = vmatpush.msra.mxu0 %v190
      %367 = vmatpush.msra.mxu0 %v189
      %368 = vmatpush.msra.mxu0 %v188
      %369 = vmatpush.msra.mxu0 %v187
      %370 = vmatpush.msra.mxu0 %v186
      %371 = vmatpush.msra.mxu0 %v185
      %372 = vmatpush.msra.mxu0 %v184
      %373 = vmatpush.msra.mxu0 %v183
      %374 = vmatpush.msra.mxu0 %v182
      %375 = vmatpush.msra.mxu0 %v181
      %376 = vmatpush.msra.mxu0 %v180
      %377 = vmatpush.msra.mxu0 %v179
      %378 = vmatpush.msra.mxu0 %v178
      %379 = vmatpush.msra.mxu0 %v177
      %380 = vmatmul.f32.gmra.mxu0 %v171
      %v381 = vpop.f32.mrf.mxu0
      %v382 = vadd.f32 %v354, %v381
      %383 = vmatmul.f32.gmra.mxu0 %v174
      %v384 = vpop.f32.mrf.mxu0
      %v385 = vadd.f32 %v357, %v384
      %386 = vdwg.mxu0
      %387 = vmatpush.msra.mxu0 %v208
      %388 = vmatpush.msra.mxu0 %v207
      %389 = vmatpush.msra.mxu0 %v206
      %390 = vmatpush.msra.mxu0 %v205
      %391 = vmatpush.msra.mxu0 %v204
      %392 = vmatpush.msra.mxu0 %v203
      %393 = vmatpush.msra.mxu0 %v202
      %394 = vmatpush.msra.mxu0 %v201
      %395 = vmatpush.msra.mxu0 %v200
      %396 = vmatpush.msra.mxu0 %v199
      %397 = vmatpush.msra.mxu0 %v198
      %398 = vmatpush.msra.mxu0 %v197
      %399 = vmatpush.msra.mxu0 %v196
      %400 = vmatpush.msra.mxu0 %v195
      %401 = vmatpush.msra.mxu0 %v194
      %402 = vmatpush.msra.mxu0 %v193
      %403 = vmatmul.f32.gmra.mxu0 %v172
      %v404 = vpop.f32.mrf.mxu0
      %v405 = vadd.f32 %v382, %v404
      %406 = vmatmul.f32.gmra.mxu0 %v175
      %v407 = vpop.f32.mrf.mxu0
      %v408 = vadd.f32 %v385, %v407
      %409 = vdwg.mxu0
      %410 = vmatpush.msra.mxu0 0.0
      %411 = vmatpush.msra.mxu0 0.0
      %412 = vmatpush.msra.mxu0 0.0
      %413 = vmatpush.msra.mxu0 0.0
      %414 = vmatpush.msra.mxu0 0.0
      %415 = vmatpush.msra.mxu0 0.0
      %416 = vmatpush.msra.mxu0 0.0
      %417 = vmatpush.msra.mxu0 0.0
      %418 = vmatpush.msra.mxu0 0.0
      %419 = vmatpush.msra.mxu0 0.0
      %420 = vmatpush.msra.mxu0 0.0
      %421 = vmatpush.msra.mxu0 0.0
      %422 = vmatpush.msra.mxu0 %v212
      %423 = vmatpush.msra.mxu0 %v211
      %424 = vmatpush.msra.mxu0 %v210
      %425 = vmatpush.msra.mxu0 %v209
      %426 = vmatmul.f32.gmra.mxu0 %v360
      %v427 = vpop.f32.mrf.mxu0
      %v428 = vadd.f32 %v405, %v427
      %429 = vmatmul.f32.gmra.mxu0 %v362
      %v430 = vpop.f32.mrf.mxu0
      %v431 = vadd.f32 %v408, %v430
      %432 = vdwg.mxu0
      %v433 = vld [vmem:[%s165] sm:$0xfc]
      %v434 = vld [vmem:[%s165 + $0x8] sm:$0xfc]
      %v435 = vld [vmem:[%s165 + $0x10] sm:$0xfc]
      %v436 = vld [vmem:[%s165 + $0x30] sm:$0x3]
      %v437 = vld [vmem:[%s165 + $0x38] sm:$0x3]
      %v438 = vld [vmem:[%s165 + $0x40] sm:$0x3]
      %s439 = scalar_lea.vmem %s1, 576
      %v440 = vld [vmem:[%s439] sm:$0xff]
      %v441 = vld [vmem:[%s439 + $0x8] sm:$0xff]
      %v442 = vld [vmem:[%s439 + $0x10] sm:$0xff]
      %v443 = vld [vmem:[%s439 + $0x18] sm:$0xff]
      %v444 = vld [vmem:[%s439 + $0x20] sm:$0xff]
      %v445 = vld [vmem:[%s439 + $0x28] sm:$0xff]
      %v446 = vld [vmem:[%s439 + $0x30] sm:$0xff]
      %v447 = vld [vmem:[%s439 + $0x38] sm:$0xff]
      %v448 = vld [vmem:[%s439 + $0x40] sm:$0xff]
      %v449 = vld [vmem:[%s439 + $0x48] sm:$0xff]
      %v450 = vld [vmem:[%s439 + $0x50] sm:$0xff]
      %v451 = vld [vmem:[%s439 + $0x58] sm:$0xff]
      %v452 = vld [vmem:[%s439 + $0x60] sm:$0xff]
      %v453 = vld [vmem:[%s439 + $0x68] sm:$0xff]
      %v454 = vld [vmem:[%s439 + $0x70] sm:$0xff]
      %v455 = vld [vmem:[%s439 + $0x78] sm:$0xff]
      %v456 = vld [vmem:[%s439 + $0x80] sm:$0xff]
      %v457 = vld [vmem:[%s439 + $0x88] sm:$0xff]
      %v458 = vld [vmem:[%s439 + $0x90] sm:$0xff]
      %v459 = vld [vmem:[%s439 + $0x98] sm:$0xff]
      %v460 = vld [vmem:[%s439 + $0xa0] sm:$0xff]
      %v461 = vld [vmem:[%s439 + $0xa8] sm:$0xff]
      %v462 = vld [vmem:[%s439 + $0xb0] sm:$0xff]
      %v463 = vld [vmem:[%s439 + $0xb8] sm:$0xff]
      %v464 = vld [vmem:[%s439 + $0xc0] sm:$0xff]
      %v465 = vld [vmem:[%s439 + $0xc8] sm:$0xff]
      %v466 = vld [vmem:[%s439 + $0xd0] sm:$0xff]
      %v467 = vld [vmem:[%s439 + $0xd8] sm:$0xff]
      %v468 = vld [vmem:[%s439 + $0xe0] sm:$0xff]
      %v469 = vld [vmem:[%s439 + $0xe8] sm:$0xff]
      %v470 = vld [vmem:[%s439 + $0xf0] sm:$0xff]
      %v471 = vld [vmem:[%s439 + $0xf8] sm:$0xff]
      %v472 = vld [vmem:[%s439 + $0x100] sm:$0xff]
      %v473 = vld [vmem:[%s439 + $0x108] sm:$0xff]
      %v474 = vld [vmem:[%s439 + $0x110] sm:$0xff]
      %v475 = vld [vmem:[%s439 + $0x118] sm:$0xff]
      %vm482 = vcmask 1045504
      %v483 = vrot.slane %v433, 2
      %v484 = vrot.slane %v174, 2
      %v485 = vsel %vm482, %v483, %v484
      %v486 = vrot.slane %v434, 2
      %v487 = vrot.slane %v175, 2
      %v488 = vsel %vm482, %v486, %v487
      %v489 = vrot.slane %v435, 2
      %v490 = vrot.slane %v176, 2
      %v491 = vsel %vm482, %v489, %v490
      %v492 = vrot.slane %v436, 2
      %v493 = vsel %vm482, %v484, %v492
      %v494 = vrot.slane %v437, 2
      %v495 = vsel %vm482, %v487, %v494
      %v496 = vrot.slane %v438, 2
      %v497 = vsel %vm482, %v490, %v496
      %v502 = vsel %vm285, %v491, 0
      %v504 = vsel %vm285, %v497, 0
      %506 = vmatpush.msra.mxu0 %v455
      %507 = vmatpush.msra.mxu0 %v454
      %508 = vmatpush.msra.mxu0 %v453
      %509 = vmatpush.msra.mxu0 %v452
      %510 = vmatpush.msra.mxu0 %v451
      %511 = vmatpush.msra.mxu0 %v450
      %512 = vmatpush.msra.mxu0 %v449
      %513 = vmatpush.msra.mxu0 %v448
      %514 = vmatpush.msra.mxu0 %v447
      %515 = vmatpush.msra.mxu0 %v446
      %516 = vmatpush.msra.mxu0 %v445
      %517 = vmatpush.msra.mxu0 %v444
      %518 = vmatpush.msra.mxu0 %v443
      %519 = vmatpush.msra.mxu0 %v442
      %520 = vmatpush.msra.mxu0 %v441
      %521 = vmatpush.msra.mxu0 %v440
      %522 = vmatmul.f32.gmra.mxu0 %v485
      %v523 = vpop.f32.mrf.mxu0
      %v524 = vadd.f32 0.0, %v523
      %525 = vmatmul.f32.gmra.mxu0 %v493
      %v526 = vpop.f32.mrf.mxu0
      %v527 = vadd.f32 0.0, %v526
      %528 = vdwg.mxu0
      %529 = vmatpush.msra.mxu0 %v471
      %530 = vmatpush.msra.mxu0 %v470
      %531 = vmatpush.msra.mxu0 %v469
      %532 = vmatpush.msra.mxu0 %v468
      %533 = vmatpush.msra.mxu0 %v467
      %534 = vmatpush.msra.mxu0 %v466
      %535 = vmatpush.msra.mxu0 %v465
      %536 = vmatpush.msra.mxu0 %v464
      %537 = vmatpush.msra.mxu0 %v463
      %538 = vmatpush.msra.mxu0 %v462
      %539 = vmatpush.msra.mxu0 %v461
      %540 = vmatpush.msra.mxu0 %v460
      %541 = vmatpush.msra.mxu0 %v459
      %542 = vmatpush.msra.mxu0 %v458
      %543 = vmatpush.msra.mxu0 %v457
      %544 = vmatpush.msra.mxu0 %v456
      %545 = vmatmul.f32.gmra.mxu0 %v488
      %v546 = vpop.f32.mrf.mxu0
      %v547 = vadd.f32 %v524, %v546
      %548 = vmatmul.f32.gmra.mxu0 %v495
      %v549 = vpop.f32.mrf.mxu0
      %v550 = vadd.f32 %v527, %v549
      %551 = vdwg.mxu0
      %552 = vmatpush.msra.mxu0 0.0
      %553 = vmatpush.msra.mxu0 0.0
      %554 = vmatpush.msra.mxu0 0.0
      %555 = vmatpush.msra.mxu0 0.0
      %556 = vmatpush.msra.mxu0 0.0
      %557 = vmatpush.msra.mxu0 0.0
      %558 = vmatpush.msra.mxu0 0.0
      %559 = vmatpush.msra.mxu0 0.0
      %560 = vmatpush.msra.mxu0 0.0
      %561 = vmatpush.msra.mxu0 0.0
      %562 = vmatpush.msra.mxu0 0.0
      %563 = vmatpush.msra.mxu0 0.0
      %564 = vmatpush.msra.mxu0 %v475
      %565 = vmatpush.msra.mxu0 %v474
      %566 = vmatpush.msra.mxu0 %v473
      %567 = vmatpush.msra.mxu0 %v472
      %568 = vmatmul.f32.gmra.mxu0 %v502
      %v569 = vpop.f32.mrf.mxu0
      %v570 = vadd.f32 %v547, %v569
      %571 = vmatmul.f32.gmra.mxu0 %v504
      %v572 = vpop.f32.mrf.mxu0
      %v573 = vadd.f32 %v550, %v572
      %574 = vdwg.mxu0
      %v575 = vadd.f32 %v428, %v570
      %v576 = vadd.f32 %v431, %v573
      %v577 = vld [vmem:[%s2] sm:$0x1]
      %v579 = vperm.slane %v577, 0
      %v581 = vadd.f32 %v575, %v579
      %v582 = vadd.f32 %v576, %v579
      %vm583 = vcmask 441344
      %584 = vst.msk [vmem:[%s170] sm:$0xff] %vm583, 0.0
      %585 = vst.msk [vmem:[%s170 + $0x8] sm:$0xff] %vm583, 0.0
      %vm586 = vcmask 435200
      %587 = vst.msk [vmem:[%s170 + $0x10] sm:$0x3] %vm586, 0.0
      %588 = vst.msk [vmem:[%s170 + $0x1] sm:$0xff] %vm583, %v581
      %589 = vst.msk [vmem:[%s170 + $0x9] sm:$0xff] %vm583, %v582
      %p590 = scmp.lt.s32.totalorder %s14, 1
      %s591 = scalar_select %p590, %s14, 1
      %s592 = smul.addr %s591, 3
      %s593 = smul.addr %s592, 8
      %s594 = scalar_lea.vmem %s3, %s593
      // Predicated region
      $region33: #{usr_forward.15} parent=31 // pred_check
        %p595 = pneg %p100
      $region34: #{usr_forward.15} parent=31 // pred_check_branch
        %597 = sbr.rel (%p595) target = $region36
      $region35: #{usr_forward.15} parent=31 // pred_region
        _
      $region36: #{usr_forward.15} parent=31 // pred_fallthru
        _
    $region32: #{usr_forward.15} parent=5 // pred_fallthru
      _
    %p598 = scmp.le.s32.totalorder 2, %s9
    // Predicated region
    $region37: #{usr_forward.15} parent=5 // pred_check
      %p599 = pneg %p598
    $region38: #{usr_forward.15} parent=5 // pred_check_branch
      %601 = sbr.rel (%p599) target = $region40
    $region39: #{usr_forward.15} parent=5 // pred_region
      %s602 = ssub.s32 %s9, 2
      // Predicated region
      $region41: #{usr_forward.15} parent=39 // pred_check
        %p603 = pneg %p106
      $region42: #{usr_forward.15} parent=39 // pred_check_branch
        %605 = sbr.rel (%p603) target = $region44
      $region43: #{usr_forward.15} parent=39 // pred_region
        %p606 = scmp.lt.s32.totalorder %s15, 1
        %s607 = scalar_select %p606, %s15, 1
        %s608 = smul.addr %s607, 3
        %s609 = smul.addr %s608, 8
        %s610 = scalar_lea.vmem %s3, %s609
      $region44: #{usr_forward.15} parent=39 // pred_fallthru
        _
    $region40: #{usr_forward.15} parent=5 // pred_fallthru
      _
  $region6: #{usr_forward.15} parent=0 // loop_footer
    %s13 = sadd.s32 1, %s9
  $region7: #{usr_forward.15} parent=0 // loop_footer_branch
    %8 = sbr.rel target = $region3
  $region8: #{usr_forward.15} parent=0 // loop_exit
    _

// kernel: tile.123
$region0: #{tile.123}
  #allocation0 [shape = 's32[1]{0}', space=sflag, size = 0x4, scoped, tag = 'scoped memory for tile.123']
  %s0 = inlined_call_operand.vmem [shape: f32[16], index: 0, kind: input, shape index: {}]
  %s1 = inlined_call_operand.vmem [shape: f32[16,16], index: 1, kind: output, shape index: {}]
  // Predicated region
  $region2: #{tile.123} parent=0 // pred_check
    _
  $region3: #{tile.123} parent=0 // pred_check_branch
    %3 = sbr.rel (0) target = $region5
  $region4: #{tile.123} parent=0 // pred_region
    _
  $region5: #{tile.123} parent=0 // pred_fallthru
    _
  %v4 = vld [vmem:[%s0] ss:$0 sm:$0xff]
  %5 = vst [vmem:[%s1] sm:$0xff] %v4
  %s6 = scalar_lea.vmem %s1, 8
  %7 = vst [vmem:[%s6] sm:$0xff] %v4

// kernel: tile.124
$region0: #{tile.124}
  %s0 = inlined_call_operand.vmem [shape: f32[16,16], index: 0, kind: input, shape index: {}]
  %s1 = inlined_call_operand.vmem [shape: f32[256], index: 1, kind: output, shape index: {}]
  $region1: #{tile.124} parent=0
    #allocation0 [shape = 'u8[4096]{0}', space=vmem, size = 0x1000, scoped, tag = 'scoped mem for output reshape']
    %s2 = smov 3
    %v3 = vld [vmem:[%s0] ss:$8 sm:%s2]
    %vm4 = vcmask 130048
    %5 = vst.msk [vmem:[#allocation0] sm:$0x3] %vm4, %v3
    %s6 = scalar_lea.vmem %s0, 7
    %s7 = smov 3
    %v8 = vld [vmem:[%s6] ss:$8 sm:%s7]
    %9 = vrot.lane.b32.xlu0 %v8, 112
    %v10 = vpop.permute.xlu0 %9
    %vm11 = vcmask 1048448
    %12 = vst.msk [vmem:[#allocation0] sm:$0x3] %vm11, %v10
    %s13 = scalar_lea.vmem %s0, 6
    %s14 = smov 3
    %v15 = vld [vmem:[%s13] ss:$8 sm:%s14]
    %16 = vrot.lane.b32.xlu0 %v15, 96
    %v17 = vpop.permute.xlu0 %16
    %vm18 = vcmask 917248
    %19 = vst.msk [vmem:[#allocation0] sm:$0x3] %vm18, %v17
    %s20 = scalar_lea.vmem %s0, 5
    %s21 = smov 3
    %v22 = vld [vmem:[%s20] ss:$8 sm:%s21]
    %23 = vrot.lane.b32.xlu0 %v22, 80
    %v24 = vpop.permute.xlu0 %23
    %vm25 = vcmask 786048
    %26 = vst.msk [vmem:[#allocation0] sm:$0x3] %vm25, %v24
    %s27 = scalar_lea.vmem %s0, 4
    %s28 = smov 3
    %v29 = vld [vmem:[%s27] ss:$8 sm:%s28]
    %30 = vrot.lane.b32.xlu0 %v29, 64
    %v31 = vpop.permute.xlu0 %30
    %vm32 = vcmask 654848
    %33 = vst.msk [vmem:[#allocation0] sm:$0x3] %vm32, %v31
    %s34 = scalar_lea.vmem %s0, 3
    %s35 = smov 3
    %v36 = vld [vmem:[%s34] ss:$8 sm:%s35]
    %37 = vrot.lane.b32.xlu0 %v36, 48
    %v38 = vpop.permute.xlu0 %37
    %vm39 = vcmask 523648
    %40 = vst.msk [vmem:[#allocation0] sm:$0x3] %vm39, %v38
    %s41 = scalar_lea.vmem %s0, 2
    %s42 = smov 3
    %v43 = vld [vmem:[%s41] ss:$8 sm:%s42]
    %44 = vrot.lane.b32.xlu0 %v43, 32
    %v45 = vpop.permute.xlu0 %44
    %vm46 = vcmask 392448
    %47 = vst.msk [vmem:[#allocation0] sm:$0x3] %vm46, %v45
    %s48 = scalar_lea.vmem %s0, 1
    %s49 = smov 3
    %v50 = vld [vmem:[%s48] ss:$8 sm:%s49]
    %51 = vrot.lane.b32.xlu0 %v50, 16
    %v52 = vpop.permute.xlu0 %51
    %vm53 = vcmask 261248
    %54 = vst.msk [vmem:[#allocation0] sm:$0x3] %vm53, %v52
    %s56 = ssub.s32 4, 1
    %v57 = vld [vmem:[#allocation0] sm:%s56]
    %s59 = ssub.s32 4, 1
    %60 = vst [vmem:[%s1] sm:%s59] %v57

// kernel: usr_forward.16
$region0: #{usr_forward.16}
  #allocation0 [shape = 'u32[]', space=smem, size = 0x4, offset = 0x4, fixed_abs, tag = 'smem constant byte address 0x4 - core index']
  #allocation1 [shape = 'u32[72,128]{1,0:T(1,128)}', space=vmem, size = 0x9000, scoped, tag = 'internal scratch']
  %s0 = inlined_call_operand.vmem [shape: f32[2,18,54], index: 0, kind: input, shape index: {}]
  %s1 = inlined_call_operand.vmem [shape: f32[3,54,288], index: 1, kind: input, shape index: {}]
  %s2 = inlined_call_operand.vmem [shape: f32[1,288], index: 2, kind: input, shape index: {}]
  %s3 = inlined_call_operand.vmem [shape: f32[2,18,288], index: 3, kind: output, shape index: {}]
  %s4 = sld [smem:[#allocation0]]
  $region45: #{usr_forward.16} parent=0
    _
  %s6 = ssub.s32 1, %s4
  %s7 = scalar_select 0, %s6, %s4
  loop: start=0, step=1, limit=4
  $region2: #{usr_forward.16} parent=0 // loop_pre_header
    _
  $region3: #{usr_forward.16} parent=0 // loop_header
    %s9 = sphi 0, %s13
    %p10 = scmp.ge.s32.totalorder %s9, 4
    %s19 = sphi 0, %s21
    %s22 = sphi 0, %s19
    %s23 = sphi 0, %s22
    %s39 = sphi 0, %s23
    %s43 = sphi 0, %s43
    %s45 = sphi 0, %s43
    %s46 = sphi 0, %s45
    %s60 = sphi 0, %s46
    %s64 = sphi 0, %s64
    %s66 = sphi 0, %s64
    %s67 = sphi 0, %s66
    %s81 = sphi 0, %s67
    %s87 = sphi 0, %s89
    %s90 = sphi 0, %s87
    %s91 = sphi 0, %s90
    %s107 = sphi 0, %s91
  $region4: #{usr_forward.16} parent=0 // loop_header_branch
    %12 = sbr.rel (%p10) target = $region8
  $region5: #{usr_forward.16} parent=0 // loop_body
    %s14 = ssub.s32 %s9, 1
    %s15 = ssub.s32 %s9, 2
    %s16 = sadd.s32 %s9, 1
    %s17 = ssub.s32 %s9, %s16
    %p18 = scmp.eq.s32.totalorder %s17, 0
    %s20 = sadd.s32 %s19, 1
    %s21 = scalar_select %p18, %s19, %s20
    %p24 = pneg %p18
    %p25 = scmp.eq.s32.totalorder %s9, 1
    %p26 = por %p24, %p25
    %p27 = scmp.ne.s32.totalorder %s19, %s22
    %p28 = scmp.eq.s32.totalorder %s9, 0
    %p29 = por %p27, %p28
    %p30 = scmp.ne.s32.totalorder %s19, %s22
    %p31 = scmp.eq.s32.totalorder %s14, 1
    %p32 = por %p30, %p31
    %p33 = scmp.ne.s32.totalorder %s22, %s23
    %p34 = scmp.eq.s32.totalorder %s14, 0
    %p35 = por %p33, %p34
    %p36 = scmp.ne.s32.totalorder %s22, %s23
    %p37 = scmp.eq.s32.totalorder %s15, 1
    %p38 = por %p36, %p37
    %p40 = scmp.ne.s32.totalorder %s23, %s39
    %p41 = scmp.eq.s32.totalorder %s15, 0
    %p42 = por %p40, %p41
    %s44 = sadd.s32 %s43, 1
    %p47 = scmp.eq.s32.totalorder %s9, 1
    %p48 = scmp.ne.s32.totalorder %s43, %s45
    %p49 = scmp.eq.s32.totalorder %s9, 0
    %p50 = por %p48, %p49
    %p51 = scmp.ne.s32.totalorder %s43, %s45
    %p52 = scmp.eq.s32.totalorder %s14, 1
    %p53 = por %p51, %p52
    %p54 = scmp.ne.s32.totalorder %s45, %s46
    %p55 = scmp.eq.s32.totalorder %s14, 0
    %p56 = por %p54, %p55
    %p57 = scmp.ne.s32.totalorder %s45, %s46
    %p58 = scmp.eq.s32.totalorder %s15, 1
    %p59 = por %p57, %p58
    %p61 = scmp.ne.s32.totalorder %s46, %s60
    %p62 = scmp.eq.s32.totalorder %s15, 0
    %p63 = por %p61, %p62
    %s65 = sadd.s32 %s64, 1
    %p68 = scmp.eq.s32.totalorder %s9, 1
    %p69 = scmp.ne.s32.totalorder %s64, %s66
    %p70 = scmp.eq.s32.totalorder %s9, 0
    %p71 = por %p69, %p70
    %p72 = scmp.ne.s32.totalorder %s64, %s66
    %p73 = scmp.eq.s32.totalorder %s14, 1
    %p74 = por %p72, %p73
    %p75 = scmp.ne.s32.totalorder %s66, %s67
    %p76 = scmp.eq.s32.totalorder %s14, 0
    %p77 = por %p75, %p76
    %p78 = scmp.ne.s32.totalorder %s66, %s67
    %p79 = scmp.eq.s32.totalorder %s15, 1
    %p80 = por %p78, %p79
    %p82 = scmp.ne.s32.totalorder %s67, %s81
    %p83 = scmp.eq.s32.totalorder %s15, 0
    %p84 = por %p82, %p83
    %s85 = ssub.s32 %s9, %s16
    %p86 = scmp.eq.s32.totalorder %s85, 0
    %s88 = sadd.s32 %s87, 1
    %s89 = scalar_select %p86, %s87, %s88
    %p92 = pneg %p86
    %p93 = scmp.eq.s32.totalorder %s9, 1
    %p94 = por %p92, %p93
    %p95 = scmp.ne.s32.totalorder %s87, %s90
    %p96 = scmp.eq.s32.totalorder %s9, 0
    %p97 = por %p95, %p96
    %p98 = scmp.ne.s32.totalorder %s87, %s90
    %p99 = scmp.eq.s32.totalorder %s14, 1
    %p100 = por %p98, %p99
    %p101 = scmp.ne.s32.totalorder %s90, %s91
    %p102 = scmp.eq.s32.totalorder %s14, 0
    %p103 = por %p101, %p102
    %p104 = scmp.ne.s32.totalorder %s90, %s91
    %p105 = scmp.eq.s32.totalorder %s15, 1
    %p106 = por %p104, %p105
    %p108 = scmp.ne.s32.totalorder %s91, %s107
    %p109 = scmp.eq.s32.totalorder %s15, 0
    %p110 = por %p108, %p109
    %p111 = scmp.le.s32.totalorder 1, %s9
    %p112 = scmp.lt.s32.totalorder %s9, 3
    %p113 = pnand %p111, %p112
    %p114 = pneg %p113
    // Predicated region
    $region9: #{usr_forward.16} parent=5 // pred_check
      _
    $region10: #{usr_forward.16} parent=5 // pred_check_branch
      %116 = sbr.rel (%p113) target = $region12
    $region11: #{usr_forward.16} parent=5 // pred_region
      %s117 = ssub.s32 %s9, 1
      // Predicated region
      $region13: #{usr_forward.16} parent=11 // pred_check
        %p118 = pneg %p56
      $region14: #{usr_forward.16} parent=11 // pred_check_branch
        %120 = sbr.rel (%p118) target = $region16
      $region15: #{usr_forward.16} parent=11 // pred_region
        _
      $region16: #{usr_forward.16} parent=11 // pred_fallthru
        _
      // Predicated region
      $region17: #{usr_forward.16} parent=11 // pred_check
        %p121 = pneg %p77
      $region18: #{usr_forward.16} parent=11 // pred_check_branch
        %123 = sbr.rel (%p121) target = $region20
      $region19: #{usr_forward.16} parent=11 // pred_region
        _
      $region20: #{usr_forward.16} parent=11 // pred_fallthru
        _
    $region12: #{usr_forward.16} parent=5 // pred_fallthru
      _
    %p124 = scmp.lt.s32.totalorder %s9, 2
    // Predicated region
    $region21: #{usr_forward.16} parent=5 // pred_check
      %p125 = pneg %p124
    $region22: #{usr_forward.16} parent=5 // pred_check_branch
      %127 = sbr.rel (%p125) target = $region24
    $region23: #{usr_forward.16} parent=5 // pred_region
      // Predicated region
      $region25: #{usr_forward.16} parent=23 // pred_check
        %p128 = pneg %p29
      $region26: #{usr_forward.16} parent=23 // pred_check_branch
        %130 = sbr.rel (%p128) target = $region28
      $region27: #{usr_forward.16} parent=23 // pred_region
        %p131 = scmp.lt.s32.totalorder %s9, 1
        %s132 = scalar_select %p131, %s9, 1
        %s133 = smul.addr %s132, 3
        %s134 = smul.addr %s133, 8
        %s135 = scalar_lea.vmem %s0, %s134
      $region28: #{usr_forward.16} parent=23 // pred_fallthru
        _
    $region24: #{usr_forward.16} parent=5 // pred_fallthru
      _
    %p136 = scmp.le.s32.totalorder 1, %s9
    %p137 = scmp.lt.s32.totalorder %s9, 3
    %p138 = pnand %p136, %p137
    %p139 = pneg %p138
    // Predicated region
    $region29: #{usr_forward.16} parent=5 // pred_check
      _
    $region30: #{usr_forward.16} parent=5 // pred_check_branch
      %141 = sbr.rel (%p138) target = $region32
    $region31: #{usr_forward.16} parent=5 // pred_region
      %s142 = ssub.s32 %s9, 1
      %p143 = scmp.lt.s32.totalorder %s14, 1
      %s144 = scalar_select %p143, %s14, 1
      %s145 = smul.addr %s144, 3
      %s146 = smul.addr %s145, 8
      %s147 = scalar_lea.vmem %s0, %s146
      %p148 = pneg %p35
      %p149 = pneg %p32
      %p150 = pneg %p56
      %p151 = pneg %p53
      %p152 = pneg %p77
      %p153 = pneg %p74
      %p154 = pneg %p103
      %p155 = pneg %p100
      %p156 = scmp.lt.s32.totalorder %s14, 1
      %s157 = scalar_select %p156, %s14, 1
      %s158 = smul.addr %s157, 9
      %s159 = smul.addr %s158, 8
      %s160 = scalar_lea.vmem %s3, %s159
      %p161 = scmp.lt.s32.totalorder %s14, 1
      %s162 = scalar_select %p161, %s14, 1
      %s163 = smul.addr %s162, 3
      %s164 = smul.addr %s163, 8
      %s165 = scalar_lea.vmem %s0, %s164
      %p166 = scmp.lt.s32.totalorder %s14, 1
      %s167 = scalar_select %p166, %s14, 1
      %s168 = smul.addr %s167, 9
      %s169 = smul.addr %s168, 8
      %s170 = scalar_lea.vmem %s3, %s169
      %v171 = vld [vmem:[%s165] sm:$0xff]
      %v172 = vld [vmem:[%s165 + $0x8] sm:$0xff]
      %v173 = vld [vmem:[%s1] sm:$0xff]
      %v174 = vld [vmem:[%s1 + $0x8] sm:$0xff]
      %v175 = vld [vmem:[%s1 + $0x10] sm:$0xff]
      %v176 = vld [vmem:[%s1 + $0x18] sm:$0xff]
      %v177 = vld [vmem:[%s1 + $0x20] sm:$0xff]
      %v178 = vld [vmem:[%s1 + $0x28] sm:$0xff]
      %v179 = vld [vmem:[%s1 + $0x30] sm:$0xff]
      %v180 = vld [vmem:[%s1 + $0x38] sm:$0xff]
      %v181 = vld [vmem:[%s1 + $0x40] sm:$0xff]
      %v182 = vld [vmem:[%s1 + $0x48] sm:$0xff]
      %v183 = vld [vmem:[%s1 + $0x50] sm:$0xff]
      %v184 = vld [vmem:[%s1 + $0x58] sm:$0xff]
      %v185 = vld [vmem:[%s1 + $0x60] sm:$0xff]
      %v186 = vld [vmem:[%s1 + $0x68] sm:$0xff]
      %v187 = vld [vmem:[%s1 + $0x70] sm:$0xff]
      %v188 = vld [vmem:[%s1 + $0x78] sm:$0xff]
      %v189 = vld [vmem:[%s1 + $0x80] sm:$0xff]
      %v190 = vld [vmem:[%s1 + $0x88] sm:$0xff]
      %v191 = vld [vmem:[%s1 + $0x90] sm:$0x3f]
      %v192 = vld [vmem:[%s1 + $0x98] sm:$0x3f]
      %v193 = vld [vmem:[%s1 + $0xa0] sm:$0x3f]
      %v194 = vld [vmem:[%s165 + $0x1] sm:$0xff]
      %v195 = vld [vmem:[%s165 + $0x9] sm:$0xff]
      %s196 = scalar_lea.vmem %s1, 168
      %v197 = vld [vmem:[%s196] sm:$0xff]
      %v198 = vld [vmem:[%s196 + $0x8] sm:$0xff]
      %v199 = vld [vmem:[%s196 + $0x10] sm:$0xff]
      %v200 = vld [vmem:[%s196 + $0x18] sm:$0xff]
      %v201 = vld [vmem:[%s196 + $0x20] sm:$0xff]
      %v202 = vld [vmem:[%s196 + $0x28] sm:$0xff]
      %v203 = vld [vmem:[%s196 + $0x30] sm:$0xff]
      %v204 = vld [vmem:[%s196 + $0x38] sm:$0xff]
      %v205 = vld [vmem:[%s196 + $0x40] sm:$0xff]
      %v206 = vld [vmem:[%s196 + $0x48] sm:$0xff]
      %v207 = vld [vmem:[%s196 + $0x50] sm:$0xff]
      %v208 = vld [vmem:[%s196 + $0x58] sm:$0xff]
      %v209 = vld [vmem:[%s196 + $0x60] sm:$0xff]
      %v210 = vld [vmem:[%s196 + $0x68] sm:$0xff]
      %v211 = vld [vmem:[%s196 + $0x70] sm:$0xff]
      %v212 = vld [vmem:[%s196 + $0x78] sm:$0xff]
      %v213 = vld [vmem:[%s196 + $0x80] sm:$0xff]
      %v214 = vld [vmem:[%s196 + $0x88] sm:$0xff]
      %v215 = vld [vmem:[%s196 + $0x90] sm:$0x3f]
      %v216 = vld [vmem:[%s196 + $0x98] sm:$0x3f]
      %v217 = vld [vmem:[%s196 + $0xa0] sm:$0x3f]
      %vm218 = vcmask 441344
      %v220 = vsel %vm218, %v194, 0
      %v223 = vsel %vm218, %v195, 0
      %vm225 = vcmask 1045504
      %v227 = vsel %vm225, %v215, 0
      %v230 = vsel %vm225, %v216, 0
      %v233 = vsel %vm225, %v217, 0
      %235 = vmatpush.msra.mxu0 0.0
      %236 = vmatpush.msra.mxu0 0.0
      %237 = vmatpush.msra.mxu0 0.0
      %238 = vmatpush.msra.mxu0 0.0
      %239 = vmatpush.msra.mxu0 0.0
      %240 = vmatpush.msra.mxu0 0.0
      %241 = vmatpush.msra.mxu0 0.0
      %242 = vmatpush.msra.mxu0 0.0
      %243 = vmatpush.msra.mxu0 0.0
      %244 = vmatpush.msra.mxu0 %v227
      %245 = vmatpush.msra.mxu0 %v212
      %246 = vmatpush.msra.mxu0 %v209
      %247 = vmatpush.msra.mxu0 %v206
      %248 = vmatpush.msra.mxu0 %v203
      %249 = vmatpush.msra.mxu0 %v200
      %250 = vmatpush.msra.mxu0 %v197
      %251 = vmatmul.f32.gmra.mxu0 %v220
      %v252 = vpop.f32.mrf.mxu0
      %v253 = vadd.f32 0.0, %v252
      %254 = vmatmul.f32.gmra.mxu0 %v223
      %v255 = vpop.f32.mrf.mxu0
      %v256 = vadd.f32 0.0, %v255
      %257 = vdwg.mxu0
      %258 = vmatpush.msra.mxu0 0.0
      %259 = vmatpush.msra.mxu0 0.0
      %260 = vmatpush.msra.mxu0 0.0
      %261 = vmatpush.msra.mxu0 0.0
      %262 = vmatpush.msra.mxu0 0.0
      %263 = vmatpush.msra.mxu0 0.0
      %264 = vmatpush.msra.mxu0 0.0
      %265 = vmatpush.msra.mxu0 0.0
      %266 = vmatpush.msra.mxu0 0.0
      %267 = vmatpush.msra.mxu0 %v230
      %268 = vmatpush.msra.mxu0 %v213
      %269 = vmatpush.msra.mxu0 %v210
      %270 = vmatpush.msra.mxu0 %v207
      %271 = vmatpush.msra.mxu0 %v204
      %272 = vmatpush.msra.mxu0 %v201
      %273 = vmatpush.msra.mxu0 %v198
      %274 = vmatmul.f32.gmra.mxu0 %v220
      %v275 = vpop.f32.mrf.mxu0
      %v276 = vadd.f32 0.0, %v275
      %277 = vmatmul.f32.gmra.mxu0 %v223
      %v278 = vpop.f32.mrf.mxu0
      %v279 = vadd.f32 0.0, %v278
      %280 = vdwg.mxu0
      %281 = vmatpush.msra.mxu0 0.0
      %282 = vmatpush.msra.mxu0 0.0
      %283 = vmatpush.msra.mxu0 0.0
      %284 = vmatpush.msra.mxu0 0.0
      %285 = vmatpush.msra.mxu0 0.0
      %286 = vmatpush.msra.mxu0 0.0
      %287 = vmatpush.msra.mxu0 0.0
      %288 = vmatpush.msra.mxu0 0.0
      %289 = vmatpush.msra.mxu0 0.0
      %290 = vmatpush.msra.mxu0 %v233
      %291 = vmatpush.msra.mxu0 %v214
      %292 = vmatpush.msra.mxu0 %v211
      %293 = vmatpush.msra.mxu0 %v208
      %294 = vmatpush.msra.mxu0 %v205
      %295 = vmatpush.msra.mxu0 %v202
      %296 = vmatpush.msra.mxu0 %v199
      %297 = vmatmul.f32.gmra.mxu0 %v220
      %v298 = vpop.f32.mrf.mxu0
      %v299 = vadd.f32 0.0, %v298
      %300 = vmatmul.f32.gmra.mxu0 %v223
      %v301 = vpop.f32.mrf.mxu0
      %v302 = vadd.f32 0.0, %v301
      %303 = vdwg.mxu0
      %v305 = vsel %vm218, %v171, 0
      %v308 = vsel %vm218, %v172, 0
      %v311 = vsel %vm225, %v191, 0
      %v314 = vsel %vm225, %v192, 0
      %v317 = vsel %vm225, %v193, 0
      %319 = vmatpush.msra.mxu0 0.0
      %320 = vmatpush.msra.mxu0 0.0
      %321 = vmatpush.msra.mxu0 0.0
      %322 = vmatpush.msra.mxu0 0.0
      %323 = vmatpush.msra.mxu0 0.0
      %324 = vmatpush.msra.mxu0 0.0
      %325 = vmatpush.msra.mxu0 0.0
      %326 = vmatpush.msra.mxu0 0.0
      %327 = vmatpush.msra.mxu0 0.0
      %328 = vmatpush.msra.mxu0 %v311
      %329 = vmatpush.msra.mxu0 %v188
      %330 = vmatpush.msra.mxu0 %v185
      %331 = vmatpush.msra.mxu0 %v182
      %332 = vmatpush.msra.mxu0 %v179
      %333 = vmatpush.msra.mxu0 %v176
      %334 = vmatpush.msra.mxu0 %v173
      %335 = vmatmul.f32.gmra.mxu0 %v305
      %v336 = vpop.f32.mrf.mxu0
      %v337 = vadd.f32 %v253, %v336
      %338 = vmatmul.f32.gmra.mxu0 %v308
      %v339 = vpop.f32.mrf.mxu0
      %v340 = vadd.f32 %v256, %v339
      %341 = vdwg.mxu0
      %342 = vmatpush.msra.mxu0 0.0
      %343 = vmatpush.msra.mxu0 0.0
      %344 = vmatpush.msra.mxu0 0.0
      %345 = vmatpush.msra.mxu0 0.0
      %346 = vmatpush.msra.mxu0 0.0
      %347 = vmatpush.msra.mxu0 0.0
      %348 = vmatpush.msra.mxu0 0.0
      %349 = vmatpush.msra.mxu0 0.0
      %350 = vmatpush.msra.mxu0 0.0
      %351 = vmatpush.msra.mxu0 %v314
      %352 = vmatpush.msra.mxu0 %v189
      %353 = vmatpush.msra.mxu0 %v186
      %354 = vmatpush.msra.mxu0 %v183
      %355 = vmatpush.msra.mxu0 %v180
      %356 = vmatpush.msra.mxu0 %v177
      %357 = vmatpush.msra.mxu0 %v174
      %358 = vmatmul.f32.gmra.mxu0 %v305
      %v359 = vpop.f32.mrf.mxu0
      %v360 = vadd.f32 %v276, %v359
      %361 = vmatmul.f32.gmra.mxu0 %v308
      %v362 = vpop.f32.mrf.mxu0
      %v363 = vadd.f32 %v279, %v362
      %364 = vdwg.mxu0
      %365 = vmatpush.msra.mxu0 0.0
      %366 = vmatpush.msra.mxu0 0.0
      %367 = vmatpush.msra.mxu0 0.0
      %368 = vmatpush.msra.mxu0 0.0
      %369 = vmatpush.msra.mxu0 0.0
      %370 = vmatpush.msra.mxu0 0.0
      %371 = vmatpush.msra.mxu0 0.0
      %372 = vmatpush.msra.mxu0 0.0
      %373 = vmatpush.msra.mxu0 0.0
      %374 = vmatpush.msra.mxu0 %v317
      %375 = vmatpush.msra.mxu0 %v190
      %376 = vmatpush.msra.mxu0 %v187
      %377 = vmatpush.msra.mxu0 %v184
      %378 = vmatpush.msra.mxu0 %v181
      %379 = vmatpush.msra.mxu0 %v178
      %380 = vmatpush.msra.mxu0 %v175
      %381 = vmatmul.f32.gmra.mxu0 %v305
      %v382 = vpop.f32.mrf.mxu0
      %v383 = vadd.f32 %v299, %v382
      %384 = vmatmul.f32.gmra.mxu0 %v308
      %v385 = vpop.f32.mrf.mxu0
      %v386 = vadd.f32 %v302, %v385
      %387 = vdwg.mxu0
      %v388 = vld [vmem:[%s165 + $0x2] sm:$0xff]
      %v389 = vld [vmem:[%s165 + $0xa] sm:$0xff]
      %s390 = scalar_lea.vmem %s1, 336
      %v391 = vld [vmem:[%s390] sm:$0xff]
      %v392 = vld [vmem:[%s390 + $0x8] sm:$0xff]
      %v393 = vld [vmem:[%s390 + $0x10] sm:$0xff]
      %v394 = vld [vmem:[%s390 + $0x18] sm:$0xff]
      %v395 = vld [vmem:[%s390 + $0x20] sm:$0xff]
      %v396 = vld [vmem:[%s390 + $0x28] sm:$0xff]
      %v397 = vld [vmem:[%s390 + $0x30] sm:$0xff]
      %v398 = vld [vmem:[%s390 + $0x38] sm:$0xff]
      %v399 = vld [vmem:[%s390 + $0x40] sm:$0xff]
      %v400 = vld [vmem:[%s390 + $0x48] sm:$0xff]
      %v401 = vld [vmem:[%s390 + $0x50] sm:$0xff]
      %v402 = vld [vmem:[%s390 + $0x58] sm:$0xff]
      %v403 = vld [vmem:[%s390 + $0x60] sm:$0xff]
      %v404 = vld [vmem:[%s390 + $0x68] sm:$0xff]
      %v405 = vld [vmem:[%s390 + $0x70] sm:$0xff]
      %v406 = vld [vmem:[%s390 + $0x78] sm:$0xff]
      %v407 = vld [vmem:[%s390 + $0x80] sm:$0xff]
      %v408 = vld [vmem:[%s390 + $0x88] sm:$0xff]
      %v409 = vld [vmem:[%s390 + $0x90] sm:$0x3f]
      %v410 = vld [vmem:[%s390 + $0x98] sm:$0x3f]
      %v411 = vld [vmem:[%s390 + $0xa0] sm:$0x3f]
      %v413 = vsel %vm218, %v388, 0
      %v416 = vsel %vm218, %v389, 0
      %v419 = vsel %vm225, %v409, 0
      %v422 = vsel %vm225, %v410, 0
      %v425 = vsel %vm225, %v411, 0
      %427 = vmatpush.msra.mxu0 0.0
      %428 = vmatpush.msra.mxu0 0.0
      %429 = vmatpush.msra.mxu0 0.0
      %430 = vmatpush.msra.mxu0 0.0
      %431 = vmatpush.msra.mxu0 0.0
      %432 = vmatpush.msra.mxu0 0.0
      %433 = vmatpush.msra.mxu0 0.0
      %434 = vmatpush.msra.mxu0 0.0
      %435 = vmatpush.msra.mxu0 0.0
      %436 = vmatpush.msra.mxu0 %v419
      %437 = vmatpush.msra.mxu0 %v406
      %438 = vmatpush.msra.mxu0 %v403
      %439 = vmatpush.msra.mxu0 %v400
      %440 = vmatpush.msra.mxu0 %v397
      %441 = vmatpush.msra.mxu0 %v394
      %442 = vmatpush.msra.mxu0 %v391
      %443 = vmatmul.f32.gmra.mxu0 %v413
      %v444 = vpop.f32.mrf.mxu0
      %v445 = vadd.f32 0.0, %v444
      %446 = vmatmul.f32.gmra.mxu0 %v416
      %v447 = vpop.f32.mrf.mxu0
      %v448 = vadd.f32 0.0, %v447
      %449 = vdwg.mxu0
      %450 = vmatpush.msra.mxu0 0.0
      %451 = vmatpush.msra.mxu0 0.0
      %452 = vmatpush.msra.mxu0 0.0
      %453 = vmatpush.msra.mxu0 0.0
      %454 = vmatpush.msra.mxu0 0.0
      %455 = vmatpush.msra.mxu0 0.0
      %456 = vmatpush.msra.mxu0 0.0
      %457 = vmatpush.msra.mxu0 0.0
      %458 = vmatpush.msra.mxu0 0.0
      %459 = vmatpush.msra.mxu0 %v422
      %460 = vmatpush.msra.mxu0 %v407
      %461 = vmatpush.msra.mxu0 %v404
      %462 = vmatpush.msra.mxu0 %v401
      %463 = vmatpush.msra.mxu0 %v398
      %464 = vmatpush.msra.mxu0 %v395
      %465 = vmatpush.msra.mxu0 %v392
      %466 = vmatmul.f32.gmra.mxu0 %v413
      %v467 = vpop.f32.mrf.mxu0
      %v468 = vadd.f32 0.0, %v467
      %469 = vmatmul.f32.gmra.mxu0 %v416
      %v470 = vpop.f32.mrf.mxu0
      %v471 = vadd.f32 0.0, %v470
      %472 = vdwg.mxu0
      %473 = vmatpush.msra.mxu0 0.0
      %474 = vmatpush.msra.mxu0 0.0
      %475 = vmatpush.msra.mxu0 0.0
      %476 = vmatpush.msra.mxu0 0.0
      %477 = vmatpush.msra.mxu0 0.0
      %478 = vmatpush.msra.mxu0 0.0
      %479 = vmatpush.msra.mxu0 0.0
      %480 = vmatpush.msra.mxu0 0.0
      %481 = vmatpush.msra.mxu0 0.0
      %482 = vmatpush.msra.mxu0 %v425
      %483 = vmatpush.msra.mxu0 %v408
      %484 = vmatpush.msra.mxu0 %v405
      %485 = vmatpush.msra.mxu0 %v402
      %486 = vmatpush.msra.mxu0 %v399
      %487 = vmatpush.msra.mxu0 %v396
      %488 = vmatpush.msra.mxu0 %v393
      %489 = vmatmul.f32.gmra.mxu0 %v413
      %v490 = vpop.f32.mrf.mxu0
      %v491 = vadd.f32 0.0, %v490
      %492 = vmatmul.f32.gmra.mxu0 %v416
      %v493 = vpop.f32.mrf.mxu0
      %v494 = vadd.f32 0.0, %v493
      %495 = vdwg.mxu0
      %v496 = vadd.f32 %v337, %v445
      %v497 = vadd.f32 %v360, %v468
      %v498 = vadd.f32 %v383, %v491
      %v499 = vadd.f32 %v340, %v448
      %v500 = vadd.f32 %v363, %v471
      %v501 = vadd.f32 %v386, %v494
      %v502 = vld [vmem:[%s2] sm:$0x7]
      %v504 = vperm.slane %v502, 0
      %v505 = vperm.slane %v502, 1
      %v506 = vperm.slane %v502, 2
      %v510 = vadd.f32 %v496, %v504
      %v511 = vadd.f32 %v497, %v505
      %v512 = vadd.f32 %v498, %v506
      %v513 = vadd.f32 %v499, %v504
      %v514 = vadd.f32 %v500, %v505
      %v515 = vadd.f32 %v501, %v506
      %516 = vst [vmem:[%s170] sm:$0xff] 0.0
      %517 = vst [vmem:[%s170 + $0x8] sm:$0xff] 0.0
      %vm518 = vcmask 261120
      %519 = vst.msk [vmem:[%s170 + $0x10] sm:$0xff] %vm518, 0.0
      %520 = vst [vmem:[%s170 + $0x18] sm:$0xff] 0.0
      %521 = vst [vmem:[%s170 + $0x20] sm:$0xff] 0.0
      %522 = vst.msk [vmem:[%s170 + $0x28] sm:$0xff] %vm518, 0.0
      %523 = vst [vmem:[%s170 + $0x30] sm:$0x3] 0.0
      %524 = vst [vmem:[%s170 + $0x38] sm:$0x3] 0.0
      %vm525 = vcmask 254976
      %526 = vst.msk [vmem:[%s170 + $0x40] sm:$0x3] %vm525, 0.0
      %vm533 = vcmask 1040384
      %v534 = vrot.slane %v510, 7
      %v535 = vrot.slane %v511, 7
      %v536 = vrot.slane %v512, 7
      %v537 = vrot.slane %v513, 7
      %v538 = vsel %vm533, %v534, %v537
      %v539 = vrot.slane %v514, 7
      %v540 = vsel %vm533, %v535, %v539
      %v541 = vrot.slane %v515, 7
      %v542 = vsel %vm533, %v536, %v541
      %552 = vst [vmem:[%s170] sm:$0xfe] %v534
      %553 = vst [vmem:[%s170 + $0x8] sm:$0xfe] %v535
      %vm554 = vcmask 261121
      %555 = vst.msk [vmem:[%s170 + $0x10] sm:$0xfe] %vm554, %v536
      %556 = vst [vmem:[%s170 + $0x18] sm:$0xff] %v538
      %557 = vst [vmem:[%s170 + $0x20] sm:$0xff] %v540
      %558 = vst.msk [vmem:[%s170 + $0x28] sm:$0xff] %vm518, %v542
      %559 = vst [vmem:[%s170 + $0x30] sm:$0x1] %v537
      %560 = vst [vmem:[%s170 + $0x38] sm:$0x1] %v539
      %vm561 = vcmask 253952
      %562 = vst.msk [vmem:[%s170 + $0x40] sm:$0x1] %vm561, %v541
      %p563 = scmp.lt.s32.totalorder %s14, 1
      %s564 = scalar_select %p563, %s14, 1
      %s565 = smul.addr %s564, 9
      %s566 = smul.addr %s565, 8
      %s567 = scalar_lea.vmem %s3, %s566
      // Predicated region
      $region33: #{usr_forward.16} parent=31 // pred_check
        %p568 = pneg %p100
      $region34: #{usr_forward.16} parent=31 // pred_check_branch
        %570 = sbr.rel (%p568) target = $region36
      $region35: #{usr_forward.16} parent=31 // pred_region
        _
      $region36: #{usr_forward.16} parent=31 // pred_fallthru
        _
    $region32: #{usr_forward.16} parent=5 // pred_fallthru
      _
    %p571 = scmp.le.s32.totalorder 2, %s9
    // Predicated region
    $region37: #{usr_forward.16} parent=5 // pred_check
      %p572 = pneg %p571
    $region38: #{usr_forward.16} parent=5 // pred_check_branch
      %574 = sbr.rel (%p572) target = $region40
    $region39: #{usr_forward.16} parent=5 // pred_region
      %s575 = ssub.s32 %s9, 2
      // Predicated region
      $region41: #{usr_forward.16} parent=39 // pred_check
        %p576 = pneg %p106
      $region42: #{usr_forward.16} parent=39 // pred_check_branch
        %578 = sbr.rel (%p576) target = $region44
      $region43: #{usr_forward.16} parent=39 // pred_region
        %p579 = scmp.lt.s32.totalorder %s15, 1
        %s580 = scalar_select %p579, %s15, 1
        %s581 = smul.addr %s580, 9
        %s582 = smul.addr %s581, 8
        %s583 = scalar_lea.vmem %s3, %s582
      $region44: #{usr_forward.16} parent=39 // pred_fallthru
        _
    $region40: #{usr_forward.16} parent=5 // pred_fallthru
      _
  $region6: #{usr_forward.16} parent=0 // loop_footer
    %s13 = sadd.s32 1, %s9
  $region7: #{usr_forward.16} parent=0 // loop_footer_branch
    %8 = sbr.rel target = $region3
  $region8: #{usr_forward.16} parent=0 // loop_exit
    _

// kernel: usr_forward.17
$region0: #{usr_forward.17}
  #allocation0 [shape = 'u32[]', space=smem, size = 0x4, offset = 0x4, fixed_abs, tag = 'smem constant byte address 0x4 - core index']
  #allocation1 [shape = 'u32[72,128]{1,0:T(1,128)}', space=vmem, size = 0x9000, scoped, tag = 'internal scratch']
  #allocation2 [shape = 'f32[18,288]{1,0:T(8,128)}', space=vmem, size = 0x9000, scoped, tag = 'scratch operand']
  %s0 = inlined_call_operand.vmem [shape: f32[2,18,288], index: 0, kind: input, shape index: {}]
  %s1 = inlined_call_operand.vmem [shape: f32[3,288,288], index: 1, kind: input, shape index: {}]
  %s2 = inlined_call_operand.vmem [shape: f32[1,288], index: 2, kind: input, shape index: {}]
  %s3 = inlined_call_operand.vmem [shape: f32[3,288,288], index: 3, kind: input, shape index: {}]
  %s4 = inlined_call_operand.vmem [shape: f32[1,288], index: 4, kind: input, shape index: {}]
  %s5 = inlined_call_operand.vmem [shape: f32[2,18,288], index: 5, kind: output, shape index: {}]
  %s6 = sld [smem:[#allocation0]]
  $region53: #{usr_forward.17} parent=0
    _
  %s8 = ssub.s32 1, %s6
  %s9 = scalar_select 0, %s8, %s6
  loop: start=0, step=1, limit=4
  $region2: #{usr_forward.17} parent=0 // loop_pre_header
    _
  $region3: #{usr_forward.17} parent=0 // loop_header
    %s11 = sphi 0, %s15
    %p12 = scmp.ge.s32.totalorder %s11, 4
    %s21 = sphi 0, %s23
    %s24 = sphi 0, %s21
    %s25 = sphi 0, %s24
    %s41 = sphi 0, %s25
    %s45 = sphi 0, %s45
    %s47 = sphi 0, %s45
    %s48 = sphi 0, %s47
    %s62 = sphi 0, %s48
    %s66 = sphi 0, %s66
    %s68 = sphi 0, %s66
    %s69 = sphi 0, %s68
    %s83 = sphi 0, %s69
    %s87 = sphi 0, %s87
    %s89 = sphi 0, %s87
    %s90 = sphi 0, %s89
    %s104 = sphi 0, %s90
    %s108 = sphi 0, %s108
    %s110 = sphi 0, %s108
    %s111 = sphi 0, %s110
    %s125 = sphi 0, %s111
    %s131 = sphi 0, %s133
    %s134 = sphi 0, %s131
    %s135 = sphi 0, %s134
    %s151 = sphi 0, %s135
  $region4: #{usr_forward.17} parent=0 // loop_header_branch
    %14 = sbr.rel (%p12) target = $region8
  $region5: #{usr_forward.17} parent=0 // loop_body
    %s16 = ssub.s32 %s11, 1
    %s17 = ssub.s32 %s11, 2
    %s18 = sadd.s32 %s11, 1
    %s19 = ssub.s32 %s11, %s18
    %p20 = scmp.eq.s32.totalorder %s19, 0
    %s22 = sadd.s32 %s21, 1
    %s23 = scalar_select %p20, %s21, %s22
    %p26 = pneg %p20
    %p27 = scmp.eq.s32.totalorder %s11, 1
    %p28 = por %p26, %p27
    %p29 = scmp.ne.s32.totalorder %s21, %s24
    %p30 = scmp.eq.s32.totalorder %s11, 0
    %p31 = por %p29, %p30
    %p32 = scmp.ne.s32.totalorder %s21, %s24
    %p33 = scmp.eq.s32.totalorder %s16, 1
    %p34 = por %p32, %p33
    %p35 = scmp.ne.s32.totalorder %s24, %s25
    %p36 = scmp.eq.s32.totalorder %s16, 0
    %p37 = por %p35, %p36
    %p38 = scmp.ne.s32.totalorder %s24, %s25
    %p39 = scmp.eq.s32.totalorder %s17, 1
    %p40 = por %p38, %p39
    %p42 = scmp.ne.s32.totalorder %s25, %s41
    %p43 = scmp.eq.s32.totalorder %s17, 0
    %p44 = por %p42, %p43
    %s46 = sadd.s32 %s45, 1
    %p49 = scmp.eq.s32.totalorder %s11, 1
    %p50 = scmp.ne.s32.totalorder %s45, %s47
    %p51 = scmp.eq.s32.totalorder %s11, 0
    %p52 = por %p50, %p51
    %p53 = scmp.ne.s32.totalorder %s45, %s47
    %p54 = scmp.eq.s32.totalorder %s16, 1
    %p55 = por %p53, %p54
    %p56 = scmp.ne.s32.totalorder %s47, %s48
    %p57 = scmp.eq.s32.totalorder %s16, 0
    %p58 = por %p56, %p57
    %p59 = scmp.ne.s32.totalorder %s47, %s48
    %p60 = scmp.eq.s32.totalorder %s17, 1
    %p61 = por %p59, %p60
    %p63 = scmp.ne.s32.totalorder %s48, %s62
    %p64 = scmp.eq.s32.totalorder %s17, 0
    %p65 = por %p63, %p64
    %s67 = sadd.s32 %s66, 1
    %p70 = scmp.eq.s32.totalorder %s11, 1
    %p71 = scmp.ne.s32.totalorder %s66, %s68
    %p72 = scmp.eq.s32.totalorder %s11, 0
    %p73 = por %p71, %p72
    %p74 = scmp.ne.s32.totalorder %s66, %s68
    %p75 = scmp.eq.s32.totalorder %s16, 1
    %p76 = por %p74, %p75
    %p77 = scmp.ne.s32.totalorder %s68, %s69
    %p78 = scmp.eq.s32.totalorder %s16, 0
    %p79 = por %p77, %p78
    %p80 = scmp.ne.s32.totalorder %s68, %s69
    %p81 = scmp.eq.s32.totalorder %s17, 1
    %p82 = por %p80, %p81
    %p84 = scmp.ne.s32.totalorder %s69, %s83
    %p85 = scmp.eq.s32.totalorder %s17, 0
    %p86 = por %p84, %p85
    %s88 = sadd.s32 %s87, 1
    %p91 = scmp.eq.s32.totalorder %s11, 1
    %p92 = scmp.ne.s32.totalorder %s87, %s89
    %p93 = scmp.eq.s32.totalorder %s11, 0
    %p94 = por %p92, %p93
    %p95 = scmp.ne.s32.totalorder %s87, %s89
    %p96 = scmp.eq.s32.totalorder %s16, 1
    %p97 = por %p95, %p96
    %p98 = scmp.ne.s32.totalorder %s89, %s90
    %p99 = scmp.eq.s32.totalorder %s16, 0
    %p100 = por %p98, %p99
    %p101 = scmp.ne.s32.totalorder %s89, %s90
    %p102 = scmp.eq.s32.totalorder %s17, 1
    %p103 = por %p101, %p102
    %p105 = scmp.ne.s32.totalorder %s90, %s104
    %p106 = scmp.eq.s32.totalorder %s17, 0
    %p107 = por %p105, %p106
    %s109 = sadd.s32 %s108, 1
    %p112 = scmp.eq.s32.totalorder %s11, 1
    %p113 = scmp.ne.s32.totalorder %s108, %s110
    %p114 = scmp.eq.s32.totalorder %s11, 0
    %p115 = por %p113, %p114
    %p116 = scmp.ne.s32.totalorder %s108, %s110
    %p117 = scmp.eq.s32.totalorder %s16, 1
    %p118 = por %p116, %p117
    %p119 = scmp.ne.s32.totalorder %s110, %s111
    %p120 = scmp.eq.s32.totalorder %s16, 0
    %p121 = por %p119, %p120
    %p122 = scmp.ne.s32.totalorder %s110, %s111
    %p123 = scmp.eq.s32.totalorder %s17, 1
    %p124 = por %p122, %p123
    %p126 = scmp.ne.s32.totalorder %s111, %s125
    %p127 = scmp.eq.s32.totalorder %s17, 0
    %p128 = por %p126, %p127
    %s129 = ssub.s32 %s11, %s18
    %p130 = scmp.eq.s32.totalorder %s129, 0
    %s132 = sadd.s32 %s131, 1
    %s133 = scalar_select %p130, %s131, %s132
    %p136 = pneg %p130
    %p137 = scmp.eq.s32.totalorder %s11, 1
    %p138 = por %p136, %p137
    %p139 = scmp.ne.s32.totalorder %s131, %s134
    %p140 = scmp.eq.s32.totalorder %s11, 0
    %p141 = por %p139, %p140
    %p142 = scmp.ne.s32.totalorder %s131, %s134
    %p143 = scmp.eq.s32.totalorder %s16, 1
    %p144 = por %p142, %p143
    %p145 = scmp.ne.s32.totalorder %s134, %s135
    %p146 = scmp.eq.s32.totalorder %s16, 0
    %p147 = por %p145, %p146
    %p148 = scmp.ne.s32.totalorder %s134, %s135
    %p149 = scmp.eq.s32.totalorder %s17, 1
    %p150 = por %p148, %p149
    %p152 = scmp.ne.s32.totalorder %s135, %s151
    %p153 = scmp.eq.s32.totalorder %s17, 0
    %p154 = por %p152, %p153
    %p155 = scmp.le.s32.totalorder 1, %s11
    %p156 = scmp.lt.s32.totalorder %s11, 3
    %p157 = pnand %p155, %p156
    %p158 = pneg %p157
    // Predicated region
    $region9: #{usr_forward.17} parent=5 // pred_check
      _
    $region10: #{usr_forward.17} parent=5 // pred_check_branch
      %160 = sbr.rel (%p157) target = $region12
    $region11: #{usr_forward.17} parent=5 // pred_region
      %s161 = ssub.s32 %s11, 1
      // Predicated region
      $region13: #{usr_forward.17} parent=11 // pred_check
        %p162 = pneg %p58
      $region14: #{usr_forward.17} parent=11 // pred_check_branch
        %164 = sbr.rel (%p162) target = $region16
      $region15: #{usr_forward.17} parent=11 // pred_region
        _
      $region16: #{usr_forward.17} parent=11 // pred_fallthru
        _
      // Predicated region
      $region17: #{usr_forward.17} parent=11 // pred_check
        %p165 = pneg %p79
      $region18: #{usr_forward.17} parent=11 // pred_check_branch
        %167 = sbr.rel (%p165) target = $region20
      $region19: #{usr_forward.17} parent=11 // pred_region
        _
      $region20: #{usr_forward.17} parent=11 // pred_fallthru
        _
      // Predicated region
      $region21: #{usr_forward.17} parent=11 // pred_check
        %p168 = pneg %p100
      $region22: #{usr_forward.17} parent=11 // pred_check_branch
        %170 = sbr.rel (%p168) target = $region24
      $region23: #{usr_forward.17} parent=11 // pred_region
        _
      $region24: #{usr_forward.17} parent=11 // pred_fallthru
        _
      // Predicated region
      $region25: #{usr_forward.17} parent=11 // pred_check
        %p171 = pneg %p121
      $region26: #{usr_forward.17} parent=11 // pred_check_branch
        %173 = sbr.rel (%p171) target = $region28
      $region27: #{usr_forward.17} parent=11 // pred_region
        _
      $region28: #{usr_forward.17} parent=11 // pred_fallthru
        _
    $region12: #{usr_forward.17} parent=5 // pred_fallthru
      _
    %p174 = scmp.lt.s32.totalorder %s11, 2
    // Predicated region
    $region29: #{usr_forward.17} parent=5 // pred_check
      %p175 = pneg %p174
    $region30: #{usr_forward.17} parent=5 // pred_check_branch
      %177 = sbr.rel (%p175) target = $region32
    $region31: #{usr_forward.17} parent=5 // pred_region
      // Predicated region
      $region33: #{usr_forward.17} parent=31 // pred_check
        %p178 = pneg %p31
      $region34: #{usr_forward.17} parent=31 // pred_check_branch
        %180 = sbr.rel (%p178) target = $region36
      $region35: #{usr_forward.17} parent=31 // pred_region
        %p181 = scmp.lt.s32.totalorder %s11, 1
        %s182 = scalar_select %p181, %s11, 1
        %s183 = smul.addr %s182, 9
        %s184 = smul.addr %s183, 8
        %s185 = scalar_lea.vmem %s0, %s184
      $region36: #{usr_forward.17} parent=31 // pred_fallthru
        _
    $region32: #{usr_forward.17} parent=5 // pred_fallthru
      _
    %p186 = scmp.le.s32.totalorder 1, %s11
    %p187 = scmp.lt.s32.totalorder %s11, 3
    %p188 = pnand %p186, %p187
    %p189 = pneg %p188
    // Predicated region
    $region37: #{usr_forward.17} parent=5 // pred_check
      _
    $region38: #{usr_forward.17} parent=5 // pred_check_branch
      %191 = sbr.rel (%p188) target = $region40
    $region39: #{usr_forward.17} parent=5 // pred_region
      %s192 = ssub.s32 %s11, 1
      %p193 = scmp.lt.s32.totalorder %s16, 1
      %s194 = scalar_select %p193, %s16, 1
      %s195 = smul.addr %s194, 9
      %s196 = smul.addr %s195, 8
      %s197 = scalar_lea.vmem %s0, %s196
      %p198 = pneg %p37
      %p199 = pneg %p34
      %p200 = pneg %p58
      %p201 = pneg %p55
      %p202 = pneg %p79
      %p203 = pneg %p76
      %p204 = pneg %p100
      %p205 = pneg %p97
      %p206 = pneg %p121
      %p207 = pneg %p118
      %p208 = pneg %p147
      %p209 = pneg %p144
      %p210 = scmp.lt.s32.totalorder %s16, 1
      %s211 = scalar_select %p210, %s16, 1
      %s212 = smul.addr %s211, 9
      %s213 = smul.addr %s212, 8
      %s214 = scalar_lea.vmem %s5, %s213
      %p215 = scmp.lt.s32.totalorder %s16, 1
      %s216 = scalar_select %p215, %s16, 1
      %s217 = smul.addr %s216, 9
      %s218 = smul.addr %s217, 8
      %s219 = scalar_lea.vmem %s0, %s218
      %p220 = scmp.lt.s32.totalorder %s16, 1
      %s221 = scalar_select %p220, %s16, 1
      %s222 = smul.addr %s221, 9
      %s223 = smul.addr %s222, 8
      %s224 = scalar_lea.vmem %s5, %s223
      %v225 = vld [vmem:[%s219] sm:$0xff]
      %v226 = vld [vmem:[%s219 + $0x8] sm:$0xff]
      %v227 = vld [vmem:[%s219 + $0x10] sm:$0xff]
      %v228 = vld [vmem:[%s219 + $0x18] sm:$0xff]
      %v229 = vld [vmem:[%s219 + $0x20] sm:$0xff]
      %v230 = vld [vmem:[%s219 + $0x28] sm:$0xff]
      %v231 = vld [vmem:[%s1] sm:$0xff]
      %v232 = vld [vmem:[%s1 + $0x8] sm:$0xff]
      %v233 = vld [vmem:[%s1 + $0x10] sm:$0xff]
      %v234 = vld [vmem:[%s1 + $0x18] sm:$0xff]
      %v235 = vld [vmem:[%s1 + $0x20] sm:$0xff]
      %v236 = vld [vmem:[%s1 + $0x28] sm:$0xff]
      %v237 = vld [vmem:[%s1 + $0x30] sm:$0xff]
      %v238 = vld [vmem:[%s1 + $0x38] sm:$0xff]
      %v239 = vld [vmem:[%s1 + $0x40] sm:$0xff]
      %v240 = vld [vmem:[%s1 + $0x48] sm:$0xff]
      %v241 = vld [vmem:[%s1 + $0x50] sm:$0xff]
      %v242 = vld [vmem:[%s1 + $0x58] sm:$0xff]
      %v243 = vld [vmem:[%s1 + $0x60] sm:$0xff]
      %v244 = vld [vmem:[%s1 + $0x68] sm:$0xff]
      %v245 = vld [vmem:[%s1 + $0x70] sm:$0xff]
      %v246 = vld [vmem:[%s1 + $0x78] sm:$0xff]
      %v247 = vld [vmem:[%s1 + $0x80] sm:$0xff]
      %v248 = vld [vmem:[%s1 + $0x88] sm:$0xff]
      %v249 = vld [vmem:[%s1 + $0x90] sm:$0xff]
      %v250 = vld [vmem:[%s1 + $0x98] sm:$0xff]
      %v251 = vld [vmem:[%s1 + $0xa0] sm:$0xff]
      %v252 = vld [vmem:[%s1 + $0xa8] sm:$0xff]
      %v253 = vld [vmem:[%s1 + $0xb0] sm:$0xff]
      %v254 = vld [vmem:[%s1 + $0xb8] sm:$0xff]
      %v255 = vld [vmem:[%s1 + $0xc0] sm:$0xff]
      %v256 = vld [vmem:[%s1 + $0xc8] sm:$0xff]
      %v257 = vld [vmem:[%s1 + $0xd0] sm:$0xff]
      %v258 = vld [vmem:[%s1 + $0xd8] sm:$0xff]
      %v259 = vld [vmem:[%s1 + $0xe0] sm:$0xff]
      %v260 = vld [vmem:[%s1 + $0xe8] sm:$0xff]
      %v261 = vld [vmem:[%s1 + $0xf0] sm:$0xff]
      %v262 = vld [vmem:[%s1 + $0xf8] sm:$0xff]
      %v263 = vld [vmem:[%s1 + $0x100] sm:$0xff]
      %v264 = vld [vmem:[%s1 + $0x108] sm:$0xff]
      %v265 = vld [vmem:[%s1 + $0x110] sm:$0xff]
      %v266 = vld [vmem:[%s1 + $0x118] sm:$0xff]
      %v267 = vld [vmem:[%s1 + $0x120] sm:$0xff]
      %v268 = vld [vmem:[%s1 + $0x128] sm:$0xff]
      %v269 = vld [vmem:[%s1 + $0x130] sm:$0xff]
      %v270 = vld [vmem:[%s1 + $0x138] sm:$0xff]
      %v271 = vld [vmem:[%s1 + $0x140] sm:$0xff]
      %v272 = vld [vmem:[%s1 + $0x148] sm:$0xff]
      %v273 = vld [vmem:[%s1 + $0x150] sm:$0xff]
      %v274 = vld [vmem:[%s1 + $0x158] sm:$0xff]
      %v275 = vld [vmem:[%s1 + $0x160] sm:$0xff]
      %v276 = vld [vmem:[%s1 + $0x168] sm:$0xff]
      %v277 = vld [vmem:[%s1 + $0x170] sm:$0xff]
      %v278 = vld [vmem:[%s1 + $0x178] sm:$0xff]
      %v279 = vld [vmem:[%s1 + $0x180] sm:$0xff]
      %v280 = vld [vmem:[%s1 + $0x188] sm:$0xff]
      %v281 = vld [vmem:[%s1 + $0x190] sm:$0xff]
      %v282 = vld [vmem:[%s1 + $0x198] sm:$0xff]
      %v283 = vld [vmem:[%s1 + $0x1a0] sm:$0xff]
      %v284 = vld [vmem:[%s1 + $0x1a8] sm:$0xff]
      %v285 = vld [vmem:[%s1 + $0x1b0] sm:$0xff]
      %v286 = vld [vmem:[%s1 + $0x1b8] sm:$0xff]
      %v287 = vld [vmem:[%s1 + $0x1c0] sm:$0xff]
      %v288 = vld [vmem:[%s1 + $0x1c8] sm:$0xff]
      %v289 = vld [vmem:[%s1 + $0x1d0] sm:$0xff]
      %v290 = vld [vmem:[%s1 + $0x1d8] sm:$0xff]
      %v291 = vld [vmem:[%s1 + $0x1e0] sm:$0xff]
      %v292 = vld [vmem:[%s1 + $0x1e8] sm:$0xff]
      %v293 = vld [vmem:[%s1 + $0x1f0] sm:$0xff]
      %v294 = vld [vmem:[%s1 + $0x1f8] sm:$0xff]
      %v295 = vld [vmem:[%s1 + $0x200] sm:$0xff]
      %v296 = vld [vmem:[%s1 + $0x208] sm:$0xff]
      %v297 = vld [vmem:[%s1 + $0x210] sm:$0xff]
      %v298 = vld [vmem:[%s1 + $0x218] sm:$0xff]
      %v299 = vld [vmem:[%s1 + $0x220] sm:$0xff]
      %v300 = vld [vmem:[%s1 + $0x228] sm:$0xff]
      %v301 = vld [vmem:[%s1 + $0x230] sm:$0xff]
      %v302 = vld [vmem:[%s1 + $0x238] sm:$0xff]
      %v303 = vld [vmem:[%s1 + $0x240] sm:$0xff]
      %v304 = vld [vmem:[%s1 + $0x248] sm:$0xff]
      %v305 = vld [vmem:[%s1 + $0x250] sm:$0xff]
      %v306 = vld [vmem:[%s1 + $0x258] sm:$0xff]
      %v307 = vld [vmem:[%s1 + $0x260] sm:$0xff]
      %v308 = vld [vmem:[%s1 + $0x268] sm:$0xff]
      %v309 = vld [vmem:[%s1 + $0x270] sm:$0xff]
      %v310 = vld [vmem:[%s1 + $0x278] sm:$0xff]
      %v311 = vld [vmem:[%s1 + $0x280] sm:$0xff]
      %v312 = vld [vmem:[%s1 + $0x288] sm:$0xff]
      %v313 = vld [vmem:[%s1 + $0x290] sm:$0xff]
      %v314 = vld [vmem:[%s1 + $0x298] sm:$0xff]
      %v315 = vld [vmem:[%s1 + $0x2a0] sm:$0xff]
      %v316 = vld [vmem:[%s1 + $0x2a8] sm:$0xff]
      %v317 = vld [vmem:[%s1 + $0x2b0] sm:$0xff]
      %v318 = vld [vmem:[%s1 + $0x2b8] sm:$0xff]
      %v319 = vld [vmem:[%s1 + $0x2c0] sm:$0xff]
      %v320 = vld [vmem:[%s1 + $0x2c8] sm:$0xff]
      %v321 = vld [vmem:[%s1 + $0x2d0] sm:$0xff]
      %v322 = vld [vmem:[%s1 + $0x2d8] sm:$0xff]
      %v323 = vld [vmem:[%s1 + $0x2e0] sm:$0xff]
      %v324 = vld [vmem:[%s1 + $0x2e8] sm:$0xff]
      %v325 = vld [vmem:[%s1 + $0x2f0] sm:$0xff]
      %v326 = vld [vmem:[%s1 + $0x2f8] sm:$0xff]
      %v327 = vld [vmem:[%s1 + $0x300] sm:$0xff]
      %v328 = vld [vmem:[%s1 + $0x308] sm:$0xff]
      %v329 = vld [vmem:[%s1 + $0x310] sm:$0xff]
      %v330 = vld [vmem:[%s1 + $0x318] sm:$0xff]
      %v331 = vld [vmem:[%s1 + $0x320] sm:$0xff]
      %v332 = vld [vmem:[%s1 + $0x328] sm:$0xff]
      %v333 = vld [vmem:[%s1 + $0x330] sm:$0xff]
      %v334 = vld [vmem:[%s1 + $0x338] sm:$0xff]
      %v335 = vld [vmem:[%s1 + $0x340] sm:$0xff]
      %v336 = vld [vmem:[%s1 + $0x348] sm:$0xff]
      %v337 = vld [vmem:[%s1 + $0x350] sm:$0xff]
      %v338 = vld [vmem:[%s1 + $0x358] sm:$0xff]
      %v339 = vld [vmem:[%s219] sm:$0xfe]
      %v340 = vld [vmem:[%s219 + $0x8] sm:$0xfe]
      %v341 = vld [vmem:[%s219 + $0x10] sm:$0xfe]
      %v342 = vld [vmem:[%s219 + $0x30] sm:$0x1]
      %v343 = vld [vmem:[%s219 + $0x38] sm:$0x1]
      %v344 = vld [vmem:[%s219 + $0x40] sm:$0x1]
      %s345 = scalar_lea.vmem %s1, 864
      %v346 = vld [vmem:[%s345] sm:$0xff]
      %v347 = vld [vmem:[%s345 + $0x8] sm:$0xff]
      %v348 = vld [vmem:[%s345 + $0x10] sm:$0xff]
      %v349 = vld [vmem:[%s345 + $0x18] sm:$0xff]
      %v350 = vld [vmem:[%s345 + $0x20] sm:$0xff]
      %v351 = vld [vmem:[%s345 + $0x28] sm:$0xff]
      %v352 = vld [vmem:[%s345 + $0x30] sm:$0xff]
      %v353 = vld [vmem:[%s345 + $0x38] sm:$0xff]
      %v354 = vld [vmem:[%s345 + $0x40] sm:$0xff]
      %v355 = vld [vmem:[%s345 + $0x48] sm:$0xff]
      %v356 = vld [vmem:[%s345 + $0x50] sm:$0xff]
      %v357 = vld [vmem:[%s345 + $0x58] sm:$0xff]
      %v358 = vld [vmem:[%s345 + $0x60] sm:$0xff]
      %v359 = vld [vmem:[%s345 + $0x68] sm:$0xff]
      %v360 = vld [vmem:[%s345 + $0x70] sm:$0xff]
      %v361 = vld [vmem:[%s345 + $0x78] sm:$0xff]
      %v362 = vld [vmem:[%s345 + $0x80] sm:$0xff]
      %v363 = vld [vmem:[%s345 + $0x88] sm:$0xff]
      %v364 = vld [vmem:[%s345 + $0x90] sm:$0xff]
      %v365 = vld [vmem:[%s345 + $0x98] sm:$0xff]
      %v366 = vld [vmem:[%s345 + $0xa0] sm:$0xff]
      %v367 = vld [vmem:[%s345 + $0xa8] sm:$0xff]
      %v368 = vld [vmem:[%s345 + $0xb0] sm:$0xff]
      %v369 = vld [vmem:[%s345 + $0xb8] sm:$0xff]
      %v370 = vld [vmem:[%s345 + $0xc0] sm:$0xff]
      %v371 = vld [vmem:[%s345 + $0xc8] sm:$0xff]
      %v372 = vld [vmem:[%s345 + $0xd0] sm:$0xff]
      %v373 = vld [vmem:[%s345 + $0xd8] sm:$0xff]
      %v374 = vld [vmem:[%s345 + $0xe0] sm:$0xff]
      %v375 = vld [vmem:[%s345 + $0xe8] sm:$0xff]
      %v376 = vld [vmem:[%s345 + $0xf0] sm:$0xff]
      %v377 = vld [vmem:[%s345 + $0xf8] sm:$0xff]
      %v378 = vld [vmem:[%s345 + $0x100] sm:$0xff]
      %v379 = vld [vmem:[%s345 + $0x108] sm:$0xff]
      %v380 = vld [vmem:[%s345 + $0x110] sm:$0xff]
      %v381 = vld [vmem:[%s345 + $0x118] sm:$0xff]
      %v382 = vld [vmem:[%s345 + $0x120] sm:$0xff]
      %v383 = vld [vmem:[%s345 + $0x128] sm:$0xff]
      %v384 = vld [vmem:[%s345 + $0x130] sm:$0xff]
      %v385 = vld [vmem:[%s345 + $0x138] sm:$0xff]
      %v386 = vld [vmem:[%s345 + $0x140] sm:$0xff]
      %v387 = vld [vmem:[%s345 + $0x148] sm:$0xff]
      %v388 = vld [vmem:[%s345 + $0x150] sm:$0xff]
      %v389 = vld [vmem:[%s345 + $0x158] sm:$0xff]
      %v390 = vld [vmem:[%s345 + $0x160] sm:$0xff]
      %v391 = vld [vmem:[%s345 + $0x168] sm:$0xff]
      %v392 = vld [vmem:[%s345 + $0x170] sm:$0xff]
      %v393 = vld [vmem:[%s345 + $0x178] sm:$0xff]
      %v394 = vld [vmem:[%s345 + $0x180] sm:$0xff]
      %v395 = vld [vmem:[%s345 + $0x188] sm:$0xff]
      %v396 = vld [vmem:[%s345 + $0x190] sm:$0xff]
      %v397 = vld [vmem:[%s345 + $0x198] sm:$0xff]
      %v398 = vld [vmem:[%s345 + $0x1a0] sm:$0xff]
      %v399 = vld [vmem:[%s345 + $0x1a8] sm:$0xff]
      %v400 = vld [vmem:[%s345 + $0x1b0] sm:$0xff]
      %v401 = vld [vmem:[%s345 + $0x1b8] sm:$0xff]
      %v402 = vld [vmem:[%s345 + $0x1c0] sm:$0xff]
      %v403 = vld [vmem:[%s345 + $0x1c8] sm:$0xff]
      %v404 = vld [vmem:[%s345 + $0x1d0] sm:$0xff]
      %v405 = vld [vmem:[%s345 + $0x1d8] sm:$0xff]
      %v406 = vld [vmem:[%s345 + $0x1e0] sm:$0xff]
      %v407 = vld [vmem:[%s345 + $0x1e8] sm:$0xff]
      %v408 = vld [vmem:[%s345 + $0x1f0] sm:$0xff]
      %v409 = vld [vmem:[%s345 + $0x1f8] sm:$0xff]
      %v410 = vld [vmem:[%s345 + $0x200] sm:$0xff]
      %v411 = vld [vmem:[%s345 + $0x208] sm:$0xff]
      %v412 = vld [vmem:[%s345 + $0x210] sm:$0xff]
      %v413 = vld [vmem:[%s345 + $0x218] sm:$0xff]
      %v414 = vld [vmem:[%s345 + $0x220] sm:$0xff]
      %v415 = vld [vmem:[%s345 + $0x228] sm:$0xff]
      %v416 = vld [vmem:[%s345 + $0x230] sm:$0xff]
      %v417 = vld [vmem:[%s345 + $0x238] sm:$0xff]
      %v418 = vld [vmem:[%s345 + $0x240] sm:$0xff]
      %v419 = vld [vmem:[%s345 + $0x248] sm:$0xff]
      %v420 = vld [vmem:[%s345 + $0x250] sm:$0xff]
      %v421 = vld [vmem:[%s345 + $0x258] sm:$0xff]
      %v422 = vld [vmem:[%s345 + $0x260] sm:$0xff]
      %v423 = vld [vmem:[%s345 + $0x268] sm:$0xff]
      %v424 = vld [vmem:[%s345 + $0x270] sm:$0xff]
      %v425 = vld [vmem:[%s345 + $0x278] sm:$0xff]
      %v426 = vld [vmem:[%s345 + $0x280] sm:$0xff]
      %v427 = vld [vmem:[%s345 + $0x288] sm:$0xff]
      %v428 = vld [vmem:[%s345 + $0x290] sm:$0xff]
      %v429 = vld [vmem:[%s345 + $0x298] sm:$0xff]
      %v430 = vld [vmem:[%s345 + $0x2a0] sm:$0xff]
      %v431 = vld [vmem:[%s345 + $0x2a8] sm:$0xff]
      %v432 = vld [vmem:[%s345 + $0x2b0] sm:$0xff]
      %v433 = vld [vmem:[%s345 + $0x2b8] sm:$0xff]
      %v434 = vld [vmem:[%s345 + $0x2c0] sm:$0xff]
      %v435 = vld [vmem:[%s345 + $0x2c8] sm:$0xff]
      %v436 = vld [vmem:[%s345 + $0x2d0] sm:$0xff]
      %v437 = vld [vmem:[%s345 + $0x2d8] sm:$0xff]
      %v438 = vld [vmem:[%s345 + $0x2e0] sm:$0xff]
      %v439 = vld [vmem:[%s345 + $0x2e8] sm:$0xff]
      %v440 = vld [vmem:[%s345 + $0x2f0] sm:$0xff]
      %v441 = vld [vmem:[%s345 + $0x2f8] sm:$0xff]
      %v442 = vld [vmem:[%s345 + $0x300] sm:$0xff]
      %v443 = vld [vmem:[%s345 + $0x308] sm:$0xff]
      %v444 = vld [vmem:[%s345 + $0x310] sm:$0xff]
      %v445 = vld [vmem:[%s345 + $0x318] sm:$0xff]
      %v446 = vld [vmem:[%s345 + $0x320] sm:$0xff]
      %v447 = vld [vmem:[%s345 + $0x328] sm:$0xff]
      %v448 = vld [vmem:[%s345 + $0x330] sm:$0xff]
      %v449 = vld [vmem:[%s345 + $0x338] sm:$0xff]
      %v450 = vld [vmem:[%s345 + $0x340] sm:$0xff]
      %v451 = vld [vmem:[%s345 + $0x348] sm:$0xff]
      %v452 = vld [vmem:[%s345 + $0x350] sm:$0xff]
      %v453 = vld [vmem:[%s345 + $0x358] sm:$0xff]
      %vm463 = vcmask 1046528
      %v464 = vrot.slane %v339, 1
      %v465 = vrot.slane %v228, 1
      %v466 = vsel %vm463, %v464, %v465
      %v467 = vrot.slane %v340, 1
      %v468 = vrot.slane %v229, 1
      %v469 = vsel %vm463, %v467, %v468
      %v470 = vrot.slane %v341, 1
      %v471 = vrot.slane %v230, 1
      %v472 = vsel %vm463, %v470, %v471
      %v473 = vrot.slane %v342, 1
      %v474 = vsel %vm463, %v465, %v473
      %v475 = vrot.slane %v343, 1
      %v476 = vsel %vm463, %v468, %v475
      %v477 = vrot.slane %v344, 1
      %v478 = vsel %vm463, %v471, %v477
      %vm483 = vcmask 261120
      %v484 = vsel %vm483, %v472, 0
      %v486 = vsel %vm483, %v478, 0
      %488 = vmatpush.msra.mxu0 %v391
      %489 = vmatpush.msra.mxu0 %v388
      %490 = vmatpush.msra.mxu0 %v385
      %491 = vmatpush.msra.mxu0 %v382
      %492 = vmatpush.msra.mxu0 %v379
      %493 = vmatpush.msra.mxu0 %v376
      %494 = vmatpush.msra.mxu0 %v373
      %495 = vmatpush.msra.mxu0 %v370
      %496 = vmatpush.msra.mxu0 %v367
      %497 = vmatpush.msra.mxu0 %v364
      %498 = vmatpush.msra.mxu0 %v361
      %499 = vmatpush.msra.mxu0 %v358
      %500 = vmatpush.msra.mxu0 %v355
      %501 = vmatpush.msra.mxu0 %v352
      %502 = vmatpush.msra.mxu0 %v349
      %503 = vmatpush.msra.mxu0 %v346
      %504 = vmatmul.f32.gmra.mxu0 %v466
      %v505 = vpop.f32.mrf.mxu0
      %v506 = vadd.f32 0.0, %v505
      %507 = vmatmul.f32.gmra.mxu0 %v474
      %v508 = vpop.f32.mrf.mxu0
      %v509 = vadd.f32 0.0, %v508
      %510 = vdwg.mxu0
      %511 = vmatpush.msra.mxu0 %v439
      %512 = vmatpush.msra.mxu0 %v436
      %513 = vmatpush.msra.mxu0 %v433
      %514 = vmatpush.msra.mxu0 %v430
      %515 = vmatpush.msra.mxu0 %v427
      %516 = vmatpush.msra.mxu0 %v424
      %517 = vmatpush.msra.mxu0 %v421
      %518 = vmatpush.msra.mxu0 %v418
      %519 = vmatpush.msra.mxu0 %v415
      %520 = vmatpush.msra.mxu0 %v412
      %521 = vmatpush.msra.mxu0 %v409
      %522 = vmatpush.msra.mxu0 %v406
      %523 = vmatpush.msra.mxu0 %v403
      %524 = vmatpush.msra.mxu0 %v400
      %525 = vmatpush.msra.mxu0 %v397
      %526 = vmatpush.msra.mxu0 %v394
      %527 = vmatmul.f32.gmra.mxu0 %v469
      %v528 = vpop.f32.mrf.mxu0
      %v529 = vadd.f32 %v506, %v528
      %530 = vmatmul.f32.gmra.mxu0 %v476
      %v531 = vpop.f32.mrf.mxu0
      %v532 = vadd.f32 %v509, %v531
      %533 = vdwg.mxu0
      %534 = vmatpush.msra.mxu0 0.0
      %535 = vmatpush.msra.mxu0 0.0
      %536 = vmatpush.msra.mxu0 0.0
      %537 = vmatpush.msra.mxu0 0.0
      %538 = vmatpush.msra.mxu0 0.0
      %539 = vmatpush.msra.mxu0 0.0
      %540 = vmatpush.msra.mxu0 0.0
      %541 = vmatpush.msra.mxu0 0.0
      %542 = vmatpush.msra.mxu0 0.0
      %543 = vmatpush.msra.mxu0 0.0
      %544 = vmatpush.msra.mxu0 0.0
      %545 = vmatpush.msra.mxu0 0.0
      %546 = vmatpush.msra.mxu0 %v451
      %547 = vmatpush.msra.mxu0 %v448
      %548 = vmatpush.msra.mxu0 %v445
      %549 = vmatpush.msra.mxu0 %v442
      %550 = vmatmul.f32.gmra.mxu0 %v484
      %v551 = vpop.f32.mrf.mxu0
      %v552 = vadd.f32 %v529, %v551
      %553 = vmatmul.f32.gmra.mxu0 %v486
      %v554 = vpop.f32.mrf.mxu0
      %v555 = vadd.f32 %v532, %v554
      %556 = vdwg.mxu0
      %557 = vmatpush.msra.mxu0 %v392
      %558 = vmatpush.msra.mxu0 %v389
      %559 = vmatpush.msra.mxu0 %v386
      %560 = vmatpush.msra.mxu0 %v383
      %561 = vmatpush.msra.mxu0 %v380
      %562 = vmatpush.msra.mxu0 %v377
      %563 = vmatpush.msra.mxu0 %v374
      %564 = vmatpush.msra.mxu0 %v371
      %565 = vmatpush.msra.mxu0 %v368
      %566 = vmatpush.msra.mxu0 %v365
      %567 = vmatpush.msra.mxu0 %v362
      %568 = vmatpush.msra.mxu0 %v359
      %569 = vmatpush.msra.mxu0 %v356
      %570 = vmatpush.msra.mxu0 %v353
      %571 = vmatpush.msra.mxu0 %v350
      %572 = vmatpush.msra.mxu0 %v347
      %573 = vmatmul.f32.gmra.mxu0 %v466
      %v574 = vpop.f32.mrf.mxu0
      %v575 = vadd.f32 0.0, %v574
      %576 = vmatmul.f32.gmra.mxu0 %v474
      %v577 = vpop.f32.mrf.mxu0
      %v578 = vadd.f32 0.0, %v577
      %579 = vdwg.mxu0
      %580 = vmatpush.msra.mxu0 %v440
      %581 = vmatpush.msra.mxu0 %v437
      %582 = vmatpush.msra.mxu0 %v434
      %583 = vmatpush.msra.mxu0 %v431
      %584 = vmatpush.msra.mxu0 %v428
      %585 = vmatpush.msra.mxu0 %v425
      %586 = vmatpush.msra.mxu0 %v422
      %587 = vmatpush.msra.mxu0 %v419
      %588 = vmatpush.msra.mxu0 %v416
      %589 = vmatpush.msra.mxu0 %v413
      %590 = vmatpush.msra.mxu0 %v410
      %591 = vmatpush.msra.mxu0 %v407
      %592 = vmatpush.msra.mxu0 %v404
      %593 = vmatpush.msra.mxu0 %v401
      %594 = vmatpush.msra.mxu0 %v398
      %595 = vmatpush.msra.mxu0 %v395
      %596 = vmatmul.f32.gmra.mxu0 %v469
      %v597 = vpop.f32.mrf.mxu0
      %v598 = vadd.f32 %v575, %v597
      %599 = vmatmul.f32.gmra.mxu0 %v476
      %v600 = vpop.f32.mrf.mxu0
      %v601 = vadd.f32 %v578, %v600
      %602 = vdwg.mxu0
      %603 = vmatpush.msra.mxu0 0.0
      %604 = vmatpush.msra.mxu0 0.0
      %605 = vmatpush.msra.mxu0 0.0
      %606 = vmatpush.msra.mxu0 0.0
      %607 = vmatpush.msra.mxu0 0.0
      %608 = vmatpush.msra.mxu0 0.0
      %609 = vmatpush.msra.mxu0 0.0
      %610 = vmatpush.msra.mxu0 0.0
      %611 = vmatpush.msra.mxu0 0.0
      %612 = vmatpush.msra.mxu0 0.0
      %613 = vmatpush.msra.mxu0 0.0
      %614 = vmatpush.msra.mxu0 0.0
      %615 = vmatpush.msra.mxu0 %v452
      %616 = vmatpush.msra.mxu0 %v449
      %617 = vmatpush.msra.mxu0 %v446
      %618 = vmatpush.msra.mxu0 %v443
      %619 = vmatmul.f32.gmra.mxu0 %v484
      %v620 = vpop.f32.mrf.mxu0
      %v621 = vadd.f32 %v598, %v620
      %622 = vmatmul.f32.gmra.mxu0 %v486
      %v623 = vpop.f32.mrf.mxu0
      %v624 = vadd.f32 %v601, %v623
      %625 = vdwg.mxu0
      %626 = vmatpush.msra.mxu0 %v393
      %627 = vmatpush.msra.mxu0 %v390
      %628 = vmatpush.msra.mxu0 %v387
      %629 = vmatpush.msra.mxu0 %v384
      %630 = vmatpush.msra.mxu0 %v381
      %631 = vmatpush.msra.mxu0 %v378
      %632 = vmatpush.msra.mxu0 %v375
      %633 = vmatpush.msra.mxu0 %v372
      %634 = vmatpush.msra.mxu0 %v369
      %635 = vmatpush.msra.mxu0 %v366
      %636 = vmatpush.msra.mxu0 %v363
      %637 = vmatpush.msra.mxu0 %v360
      %638 = vmatpush.msra.mxu0 %v357
      %639 = vmatpush.msra.mxu0 %v354
      %640 = vmatpush.msra.mxu0 %v351
      %641 = vmatpush.msra.mxu0 %v348
      %642 = vmatmul.f32.gmra.mxu0 %v466
      %v643 = vpop.f32.mrf.mxu0
      %v644 = vadd.f32 0.0, %v643
      %645 = vmatmul.f32.gmra.mxu0 %v474
      %v646 = vpop.f32.mrf.mxu0
      %v647 = vadd.f32 0.0, %v646
      %648 = vdwg.mxu0
      %649 = vmatpush.msra.mxu0 %v441
      %650 = vmatpush.msra.mxu0 %v438
      %651 = vmatpush.msra.mxu0 %v435
      %652 = vmatpush.msra.mxu0 %v432
      %653 = vmatpush.msra.mxu0 %v429
      %654 = vmatpush.msra.mxu0 %v426
      %655 = vmatpush.msra.mxu0 %v423
      %656 = vmatpush.msra.mxu0 %v420
      %657 = vmatpush.msra.mxu0 %v417
      %658 = vmatpush.msra.mxu0 %v414
      %659 = vmatpush.msra.mxu0 %v411
      %660 = vmatpush.msra.mxu0 %v408
      %661 = vmatpush.msra.mxu0 %v405
      %662 = vmatpush.msra.mxu0 %v402
      %663 = vmatpush.msra.mxu0 %v399
      %664 = vmatpush.msra.mxu0 %v396
      %665 = vmatmul.f32.gmra.mxu0 %v469
      %v666 = vpop.f32.mrf.mxu0
      %v667 = vadd.f32 %v644, %v666
      %668 = vmatmul.f32.gmra.mxu0 %v476
      %v669 = vpop.f32.mrf.mxu0
      %v670 = vadd.f32 %v647, %v669
      %671 = vdwg.mxu0
      %672 = vmatpush.msra.mxu0 0.0
      %673 = vmatpush.msra.mxu0 0.0
      %674 = vmatpush.msra.mxu0 0.0
      %675 = vmatpush.msra.mxu0 0.0
      %676 = vmatpush.msra.mxu0 0.0
      %677 = vmatpush.msra.mxu0 0.0
      %678 = vmatpush.msra.mxu0 0.0
      %679 = vmatpush.msra.mxu0 0.0
      %680 = vmatpush.msra.mxu0 0.0
      %681 = vmatpush.msra.mxu0 0.0
      %682 = vmatpush.msra.mxu0 0.0
      %683 = vmatpush.msra.mxu0 0.0
      %684 = vmatpush.msra.mxu0 %v453
      %685 = vmatpush.msra.mxu0 %v450
      %686 = vmatpush.msra.mxu0 %v447
      %687 = vmatpush.msra.mxu0 %v444
      %688 = vmatmul.f32.gmra.mxu0 %v484
      %v689 = vpop.f32.mrf.mxu0
      %v690 = vadd.f32 %v667, %v689
      %691 = vmatmul.f32.gmra.mxu0 %v486
      %v692 = vpop.f32.mrf.mxu0
      %v693 = vadd.f32 %v670, %v692
      %694 = vdwg.mxu0
      %v696 = vsel %vm483, %v227, 0
      %v698 = vsel %vm483, %v230, 0
      %700 = vmatpush.msra.mxu0 %v276
      %701 = vmatpush.msra.mxu0 %v273
      %702 = vmatpush.msra.mxu0 %v270
      %703 = vmatpush.msra.mxu0 %v267
      %704 = vmatpush.msra.mxu0 %v264
      %705 = vmatpush.msra.mxu0 %v261
      %706 = vmatpush.msra.mxu0 %v258
      %707 = vmatpush.msra.mxu0 %v255
      %708 = vmatpush.msra.mxu0 %v252
      %709 = vmatpush.msra.mxu0 %v249
      %710 = vmatpush.msra.mxu0 %v246
      %711 = vmatpush.msra.mxu0 %v243
      %712 = vmatpush.msra.mxu0 %v240
      %713 = vmatpush.msra.mxu0 %v237
      %714 = vmatpush.msra.mxu0 %v234
      %715 = vmatpush.msra.mxu0 %v231
      %716 = vmatmul.f32.gmra.mxu0 %v225
      %v717 = vpop.f32.mrf.mxu0
      %v718 = vadd.f32 %v552, %v717
      %719 = vmatmul.f32.gmra.mxu0 %v228
      %v720 = vpop.f32.mrf.mxu0
      %v721 = vadd.f32 %v555, %v720
      %722 = vdwg.mxu0
      %723 = vmatpush.msra.mxu0 %v324
      %724 = vmatpush.msra.mxu0 %v321
      %725 = vmatpush.msra.mxu0 %v318
      %726 = vmatpush.msra.mxu0 %v315
      %727 = vmatpush.msra.mxu0 %v312
      %728 = vmatpush.msra.mxu0 %v309
      %729 = vmatpush.msra.mxu0 %v306
      %730 = vmatpush.msra.mxu0 %v303
      %731 = vmatpush.msra.mxu0 %v300
      %732 = vmatpush.msra.mxu0 %v297
      %733 = vmatpush.msra.mxu0 %v294
      %734 = vmatpush.msra.mxu0 %v291
      %735 = vmatpush.msra.mxu0 %v288
      %736 = vmatpush.msra.mxu0 %v285
      %737 = vmatpush.msra.mxu0 %v282
      %738 = vmatpush.msra.mxu0 %v279
      %739 = vmatmul.f32.gmra.mxu0 %v226
      %v740 = vpop.f32.mrf.mxu0
      %v741 = vadd.f32 %v718, %v740
      %742 = vmatmul.f32.gmra.mxu0 %v229
      %v743 = vpop.f32.mrf.mxu0
      %v744 = vadd.f32 %v721, %v743
      %745 = vdwg.mxu0
      %746 = vmatpush.msra.mxu0 0.0
      %747 = vmatpush.msra.mxu0 0.0
      %748 = vmatpush.msra.mxu0 0.0
      %749 = vmatpush.msra.mxu0 0.0
      %750 = vmatpush.msra.mxu0 0.0
      %751 = vmatpush.msra.mxu0 0.0
      %752 = vmatpush.msra.mxu0 0.0
      %753 = vmatpush.msra.mxu0 0.0
      %754 = vmatpush.msra.mxu0 0.0
      %755 = vmatpush.msra.mxu0 0.0
      %756 = vmatpush.msra.mxu0 0.0
      %757 = vmatpush.msra.mxu0 0.0
      %758 = vmatpush.msra.mxu0 %v336
      %759 = vmatpush.msra.mxu0 %v333
      %760 = vmatpush.msra.mxu0 %v330
      %761 = vmatpush.msra.mxu0 %v327
      %762 = vmatmul.f32.gmra.mxu0 %v696
      %v763 = vpop.f32.mrf.mxu0
      %v764 = vadd.f32 %v741, %v763
      %765 = vmatmul.f32.gmra.mxu0 %v698
      %v766 = vpop.f32.mrf.mxu0
      %v767 = vadd.f32 %v744, %v766
      %768 = vdwg.mxu0
      %769 = vmatpush.msra.mxu0 %v277
      %770 = vmatpush.msra.mxu0 %v274
      %771 = vmatpush.msra.mxu0 %v271
      %772 = vmatpush.msra.mxu0 %v268
      %773 = vmatpush.msra.mxu0 %v265
      %774 = vmatpush.msra.mxu0 %v262
      %775 = vmatpush.msra.mxu0 %v259
      %776 = vmatpush.msra.mxu0 %v256
      %777 = vmatpush.msra.mxu0 %v253
      %778 = vmatpush.msra.mxu0 %v250
      %779 = vmatpush.msra.mxu0 %v247
      %780 = vmatpush.msra.mxu0 %v244
      %781 = vmatpush.msra.mxu0 %v241
      %782 = vmatpush.msra.mxu0 %v238
      %783 = vmatpush.msra.mxu0 %v235
      %784 = vmatpush.msra.mxu0 %v232
      %785 = vmatmul.f32.gmra.mxu0 %v225
      %v786 = vpop.f32.mrf.mxu0
      %v787 = vadd.f32 %v621, %v786
      %788 = vmatmul.f32.gmra.mxu0 %v228
      %v789 = vpop.f32.mrf.mxu0
      %v790 = vadd.f32 %v624, %v789
      %791 = vdwg.mxu0
      %792 = vmatpush.msra.mxu0 %v325
      %793 = vmatpush.msra.mxu0 %v322
      %794 = vmatpush.msra.mxu0 %v319
      %795 = vmatpush.msra.mxu0 %v316
      %796 = vmatpush.msra.mxu0 %v313
      %797 = vmatpush.msra.mxu0 %v310
      %798 = vmatpush.msra.mxu0 %v307
      %799 = vmatpush.msra.mxu0 %v304
      %800 = vmatpush.msra.mxu0 %v301
      %801 = vmatpush.msra.mxu0 %v298
      %802 = vmatpush.msra.mxu0 %v295
      %803 = vmatpush.msra.mxu0 %v292
      %804 = vmatpush.msra.mxu0 %v289
      %805 = vmatpush.msra.mxu0 %v286
      %806 = vmatpush.msra.mxu0 %v283
      %807 = vmatpush.msra.mxu0 %v280
      %808 = vmatmul.f32.gmra.mxu0 %v226
      %v809 = vpop.f32.mrf.mxu0
      %v810 = vadd.f32 %v787, %v809
      %811 = vmatmul.f32.gmra.mxu0 %v229
      %v812 = vpop.f32.mrf.mxu0
      %v813 = vadd.f32 %v790, %v812
      %814 = vdwg.mxu0
      %815 = vmatpush.msra.mxu0 0.0
      %816 = vmatpush.msra.mxu0 0.0
      %817 = vmatpush.msra.mxu0 0.0
      %818 = vmatpush.msra.mxu0 0.0
      %819 = vmatpush.msra.mxu0 0.0
      %820 = vmatpush.msra.mxu0 0.0
      %821 = vmatpush.msra.mxu0 0.0
      %822 = vmatpush.msra.mxu0 0.0
      %823 = vmatpush.msra.mxu0 0.0
      %824 = vmatpush.msra.mxu0 0.0
      %825 = vmatpush.msra.mxu0 0.0
      %826 = vmatpush.msra.mxu0 0.0
      %827 = vmatpush.msra.mxu0 %v337
      %828 = vmatpush.msra.mxu0 %v334
      %829 = vmatpush.msra.mxu0 %v331
      %830 = vmatpush.msra.mxu0 %v328
      %831 = vmatmul.f32.gmra.mxu0 %v696
      %v832 = vpop.f32.mrf.mxu0
      %v833 = vadd.f32 %v810, %v832
      %834 = vmatmul.f32.gmra.mxu0 %v698
      %v835 = vpop.f32.mrf.mxu0
      %v836 = vadd.f32 %v813, %v835
      %837 = vdwg.mxu0
      %838 = vmatpush.msra.mxu0 %v278
      %839 = vmatpush.msra.mxu0 %v275
      %840 = vmatpush.msra.mxu0 %v272
      %841 = vmatpush.msra.mxu0 %v269
      %842 = vmatpush.msra.mxu0 %v266
      %843 = vmatpush.msra.mxu0 %v263
      %844 = vmatpush.msra.mxu0 %v260
      %845 = vmatpush.msra.mxu0 %v257
      %846 = vmatpush.msra.mxu0 %v254
      %847 = vmatpush.msra.mxu0 %v251
      %848 = vmatpush.msra.mxu0 %v248
      %849 = vmatpush.msra.mxu0 %v245
      %850 = vmatpush.msra.mxu0 %v242
      %851 = vmatpush.msra.mxu0 %v239
      %852 = vmatpush.msra.mxu0 %v236
      %853 = vmatpush.msra.mxu0 %v233
      %854 = vmatmul.f32.gmra.mxu0 %v225
      %v855 = vpop.f32.mrf.mxu0
      %v856 = vadd.f32 %v690, %v855
      %857 = vmatmul.f32.gmra.mxu0 %v228
      %v858 = vpop.f32.mrf.mxu0
      %v859 = vadd.f32 %v693, %v858
      %860 = vdwg.mxu0
      %861 = vmatpush.msra.mxu0 %v326
      %862 = vmatpush.msra.mxu0 %v323
      %863 = vmatpush.msra.mxu0 %v320
      %864 = vmatpush.msra.mxu0 %v317
      %865 = vmatpush.msra.mxu0 %v314
      %866 = vmatpush.msra.mxu0 %v311
      %867 = vmatpush.msra.mxu0 %v308
      %868 = vmatpush.msra.mxu0 %v305
      %869 = vmatpush.msra.mxu0 %v302
      %870 = vmatpush.msra.mxu0 %v299
      %871 = vmatpush.msra.mxu0 %v296
      %872 = vmatpush.msra.mxu0 %v293
      %873 = vmatpush.msra.mxu0 %v290
      %874 = vmatpush.msra.mxu0 %v287
      %875 = vmatpush.msra.mxu0 %v284
      %876 = vmatpush.msra.mxu0 %v281
      %877 = vmatmul.f32.gmra.mxu0 %v226
      %v878 = vpop.f32.mrf.mxu0
      %v879 = vadd.f32 %v856, %v878
      %880 = vmatmul.f32.gmra.mxu0 %v229
      %v881 = vpop.f32.mrf.mxu0
      %v882 = vadd.f32 %v859, %v881
      %883 = vdwg.mxu0
      %884 = vmatpush.msra.mxu0 0.0
      %885 = vmatpush.msra.mxu0 0.0
      %886 = vmatpush.msra.mxu0 0.0
      %887 = vmatpush.msra.mxu0 0.0
      %888 = vmatpush.msra.mxu0 0.0
      %889 = vmatpush.msra.mxu0 0.0
      %890 = vmatpush.msra.mxu0 0.0
      %891 = vmatpush.msra.mxu0 0.0
      %892 = vmatpush.msra.mxu0 0.0
      %893 = vmatpush.msra.mxu0 0.0
      %894 = vmatpush.msra.mxu0 0.0
      %895 = vmatpush.msra.mxu0 0.0
      %896 = vmatpush.msra.mxu0 %v338
      %897 = vmatpush.msra.mxu0 %v335
      %898 = vmatpush.msra.mxu0 %v332
      %899 = vmatpush.msra.mxu0 %v329
      %900 = vmatmul.f32.gmra.mxu0 %v696
      %v901 = vpop.f32.mrf.mxu0
      %v902 = vadd.f32 %v879, %v901
      %903 = vmatmul.f32.gmra.mxu0 %v698
      %v904 = vpop.f32.mrf.mxu0
      %v905 = vadd.f32 %v882, %v904
      %906 = vdwg.mxu0
      %v907 = vld [vmem:[%s219] sm:$0xfc]
      %v908 = vld [vmem:[%s219 + $0x8] sm:$0xfc]
      %v909 = vld [vmem:[%s219 + $0x10] sm:$0xfc]
      %v910 = vld [vmem:[%s219 + $0x30] sm:$0x3]
      %v911 = vld [vmem:[%s219 + $0x38] sm:$0x3]
      %v912 = vld [vmem:[%s219 + $0x40] sm:$0x3]
      %s913 = scalar_lea.vmem %s1, 1728
      %v914 = vld [vmem:[%s913] sm:$0xff]
      %v915 = vld [vmem:[%s913 + $0x8] sm:$0xff]
      %v916 = vld [vmem:[%s913 + $0x10] sm:$0xff]
      %v917 = vld [vmem:[%s913 + $0x18] sm:$0xff]
      %v918 = vld [vmem:[%s913 + $0x20] sm:$0xff]
      %v919 = vld [vmem:[%s913 + $0x28] sm:$0xff]
      %v920 = vld [vmem:[%s913 + $0x30] sm:$0xff]
      %v921 = vld [vmem:[%s913 + $0x38] sm:$0xff]
      %v922 = vld [vmem:[%s913 + $0x40] sm:$0xff]
      %v923 = vld [vmem:[%s913 + $0x48] sm:$0xff]
      %v924 = vld [vmem:[%s913 + $0x50] sm:$0xff]
      %v925 = vld [vmem:[%s913 + $0x58] sm:$0xff]
      %v926 = vld [vmem:[%s913 + $0x60] sm:$0xff]
      %v927 = vld [vmem:[%s913 + $0x68] sm:$0xff]
      %v928 = vld [vmem:[%s913 + $0x70] sm:$0xff]
      %v929 = vld [vmem:[%s913 + $0x78] sm:$0xff]
      %v930 = vld [vmem:[%s913 + $0x80] sm:$0xff]
      %v931 = vld [vmem:[%s913 + $0x88] sm:$0xff]
      %v932 = vld [vmem:[%s913 + $0x90] sm:$0xff]
      %v933 = vld [vmem:[%s913 + $0x98] sm:$0xff]
      %v934 = vld [vmem:[%s913 + $0xa0] sm:$0xff]
      %v935 = vld [vmem:[%s913 + $0xa8] sm:$0xff]
      %v936 = vld [vmem:[%s913 + $0xb0] sm:$0xff]
      %v937 = vld [vmem:[%s913 + $0xb8] sm:$0xff]
      %v938 = vld [vmem:[%s913 + $0xc0] sm:$0xff]
      %v939 = vld [vmem:[%s913 + $0xc8] sm:$0xff]
      %v940 = vld [vmem:[%s913 + $0xd0] sm:$0xff]
      %v941 = vld [vmem:[%s913 + $0xd8] sm:$0xff]
      %v942 = vld [vmem:[%s913 + $0xe0] sm:$0xff]
      %v943 = vld [vmem:[%s913 + $0xe8] sm:$0xff]
      %v944 = vld [vmem:[%s913 + $0xf0] sm:$0xff]
      %v945 = vld [vmem:[%s913 + $0xf8] sm:$0xff]
      %v946 = vld [vmem:[%s913 + $0x100] sm:$0xff]
      %v947 = vld [vmem:[%s913 + $0x108] sm:$0xff]
      %v948 = vld [vmem:[%s913 + $0x110] sm:$0xff]
      %v949 = vld [vmem:[%s913 + $0x118] sm:$0xff]
      %v950 = vld [vmem:[%s913 + $0x120] sm:$0xff]
      %v951 = vld [vmem:[%s913 + $0x128] sm:$0xff]
      %v952 = vld [vmem:[%s913 + $0x130] sm:$0xff]
      %v953 = vld [vmem:[%s913 + $0x138] sm:$0xff]
      %v954 = vld [vmem:[%s913 + $0x140] sm:$0xff]
      %v955 = vld [vmem:[%s913 + $0x148] sm:$0xff]
      %v956 = vld [vmem:[%s913 + $0x150] sm:$0xff]
      %v957 = vld [vmem:[%s913 + $0x158] sm:$0xff]
      %v958 = vld [vmem:[%s913 + $0x160] sm:$0xff]
      %v959 = vld [vmem:[%s913 + $0x168] sm:$0xff]
      %v960 = vld [vmem:[%s913 + $0x170] sm:$0xff]
      %v961 = vld [vmem:[%s913 + $0x178] sm:$0xff]
      %v962 = vld [vmem:[%s913 + $0x180] sm:$0xff]
      %v963 = vld [vmem:[%s913 + $0x188] sm:$0xff]
      %v964 = vld [vmem:[%s913 + $0x190] sm:$0xff]
      %v965 = vld [vmem:[%s913 + $0x198] sm:$0xff]
      %v966 = vld [vmem:[%s913 + $0x1a0] sm:$0xff]
      %v967 = vld [vmem:[%s913 + $0x1a8] sm:$0xff]
      %v968 = vld [vmem:[%s913 + $0x1b0] sm:$0xff]
      %v969 = vld [vmem:[%s913 + $0x1b8] sm:$0xff]
      %v970 = vld [vmem:[%s913 + $0x1c0] sm:$0xff]
      %v971 = vld [vmem:[%s913 + $0x1c8] sm:$0xff]
      %v972 = vld [vmem:[%s913 + $0x1d0] sm:$0xff]
      %v973 = vld [vmem:[%s913 + $0x1d8] sm:$0xff]
      %v974 = vld [vmem:[%s913 + $0x1e0] sm:$0xff]
      %v975 = vld [vmem:[%s913 + $0x1e8] sm:$0xff]
      %v976 = vld [vmem:[%s913 + $0x1f0] sm:$0xff]
      %v977 = vld [vmem:[%s913 + $0x1f8] sm:$0xff]
      %v978 = vld [vmem:[%s913 + $0x200] sm:$0xff]
      %v979 = vld [vmem:[%s913 + $0x208] sm:$0xff]
      %v980 = vld [vmem:[%s913 + $0x210] sm:$0xff]
      %v981 = vld [vmem:[%s913 + $0x218] sm:$0xff]
      %v982 = vld [vmem:[%s913 + $0x220] sm:$0xff]
      %v983 = vld [vmem:[%s913 + $0x228] sm:$0xff]
      %v984 = vld [vmem:[%s913 + $0x230] sm:$0xff]
      %v985 = vld [vmem:[%s913 + $0x238] sm:$0xff]
      %v986 = vld [vmem:[%s913 + $0x240] sm:$0xff]
      %v987 = vld [vmem:[%s913 + $0x248] sm:$0xff]
      %v988 = vld [vmem:[%s913 + $0x250] sm:$0xff]
      %v989 = vld [vmem:[%s913 + $0x258] sm:$0xff]
      %v990 = vld [vmem:[%s913 + $0x260] sm:$0xff]
      %v991 = vld [vmem:[%s913 + $0x268] sm:$0xff]
      %v992 = vld [vmem:[%s913 + $0x270] sm:$0xff]
      %v993 = vld [vmem:[%s913 + $0x278] sm:$0xff]
      %v994 = vld [vmem:[%s913 + $0x280] sm:$0xff]
      %v995 = vld [vmem:[%s913 + $0x288] sm:$0xff]
      %v996 = vld [vmem:[%s913 + $0x290] sm:$0xff]
      %v997 = vld [vmem:[%s913 + $0x298] sm:$0xff]
      %v998 = vld [vmem:[%s913 + $0x2a0] sm:$0xff]
      %v999 = vld [vmem:[%s913 + $0x2a8] sm:$0xff]
      %v1000 = vld [vmem:[%s913 + $0x2b0] sm:$0xff]
      %v1001 = vld [vmem:[%s913 + $0x2b8] sm:$0xff]
      %v1002 = vld [vmem:[%s913 + $0x2c0] sm:$0xff]
      %v1003 = vld [vmem:[%s913 + $0x2c8] sm:$0xff]
      %v1004 = vld [vmem:[%s913 + $0x2d0] sm:$0xff]
      %v1005 = vld [vmem:[%s913 + $0x2d8] sm:$0xff]
      %v1006 = vld [vmem:[%s913 + $0x2e0] sm:$0xff]
      %v1007 = vld [vmem:[%s913 + $0x2e8] sm:$0xff]
      %v1008 = vld [vmem:[%s913 + $0x2f0] sm:$0xff]
      %v1009 = vld [vmem:[%s913 + $0x2f8] sm:$0xff]
      %v1010 = vld [vmem:[%s913 + $0x300] sm:$0xff]
      %v1011 = vld [vmem:[%s913 + $0x308] sm:$0xff]
      %v1012 = vld [vmem:[%s913 + $0x310] sm:$0xff]
      %v1013 = vld [vmem:[%s913 + $0x318] sm:$0xff]
      %v1014 = vld [vmem:[%s913 + $0x320] sm:$0xff]
      %v1015 = vld [vmem:[%s913 + $0x328] sm:$0xff]
      %v1016 = vld [vmem:[%s913 + $0x330] sm:$0xff]
      %v1017 = vld [vmem:[%s913 + $0x338] sm:$0xff]
      %v1018 = vld [vmem:[%s913 + $0x340] sm:$0xff]
      %v1019 = vld [vmem:[%s913 + $0x348] sm:$0xff]
      %v1020 = vld [vmem:[%s913 + $0x350] sm:$0xff]
      %v1021 = vld [vmem:[%s913 + $0x358] sm:$0xff]
      %vm1028 = vcmask 1045504
      %v1029 = vrot.slane %v907, 2
      %v1030 = vrot.slane %v228, 2
      %v1031 = vsel %vm1028, %v1029, %v1030
      %v1032 = vrot.slane %v908, 2
      %v1033 = vrot.slane %v229, 2
      %v1034 = vsel %vm1028, %v1032, %v1033
      %v1035 = vrot.slane %v909, 2
      %v1036 = vrot.slane %v230, 2
      %v1037 = vsel %vm1028, %v1035, %v1036
      %v1038 = vrot.slane %v910, 2
      %v1039 = vsel %vm1028, %v1030, %v1038
      %v1040 = vrot.slane %v911, 2
      %v1041 = vsel %vm1028, %v1033, %v1040
      %v1042 = vrot.slane %v912, 2
      %v1043 = vsel %vm1028, %v1036, %v1042
      %v1048 = vsel %vm483, %v1037, 0
      %v1050 = vsel %vm483, %v1043, 0
      %1052 = vmatpush.msra.mxu0 %v959
      %1053 = vmatpush.msra.mxu0 %v956
      %1054 = vmatpush.msra.mxu0 %v953
      %1055 = vmatpush.msra.mxu0 %v950
      %1056 = vmatpush.msra.mxu0 %v947
      %1057 = vmatpush.msra.mxu0 %v944
      %1058 = vmatpush.msra.mxu0 %v941
      %1059 = vmatpush.msra.mxu0 %v938
      %1060 = vmatpush.msra.mxu0 %v935
      %1061 = vmatpush.msra.mxu0 %v932
      %1062 = vmatpush.msra.mxu0 %v929
      %1063 = vmatpush.msra.mxu0 %v926
      %1064 = vmatpush.msra.mxu0 %v923
      %1065 = vmatpush.msra.mxu0 %v920
      %1066 = vmatpush.msra.mxu0 %v917
      %1067 = vmatpush.msra.mxu0 %v914
      %1068 = vmatmul.f32.gmra.mxu0 %v1031
      %v1069 = vpop.f32.mrf.mxu0
      %v1070 = vadd.f32 0.0, %v1069
      %1071 = vmatmul.f32.gmra.mxu0 %v1039
      %v1072 = vpop.f32.mrf.mxu0
      %v1073 = vadd.f32 0.0, %v1072
      %1074 = vdwg.mxu0
      %1075 = vmatpush.msra.mxu0 %v1007
      %1076 = vmatpush.msra.mxu0 %v1004
      %1077 = vmatpush.msra.mxu0 %v1001
      %1078 = vmatpush.msra.mxu0 %v998
      %1079 = vmatpush.msra.mxu0 %v995
      %1080 = vmatpush.msra.mxu0 %v992
      %1081 = vmatpush.msra.mxu0 %v989
      %1082 = vmatpush.msra.mxu0 %v986
      %1083 = vmatpush.msra.mxu0 %v983
      %1084 = vmatpush.msra.mxu0 %v980
      %1085 = vmatpush.msra.mxu0 %v977
      %1086 = vmatpush.msra.mxu0 %v974
      %1087 = vmatpush.msra.mxu0 %v971
      %1088 = vmatpush.msra.mxu0 %v968
      %1089 = vmatpush.msra.mxu0 %v965
      %1090 = vmatpush.msra.mxu0 %v962
      %1091 = vmatmul.f32.gmra.mxu0 %v1034
      %v1092 = vpop.f32.mrf.mxu0
      %v1093 = vadd.f32 %v1070, %v1092
      %1094 = vmatmul.f32.gmra.mxu0 %v1041
      %v1095 = vpop.f32.mrf.mxu0
      %v1096 = vadd.f32 %v1073, %v1095
      %1097 = vdwg.mxu0
      %1098 = vmatpush.msra.mxu0 0.0
      %1099 = vmatpush.msra.mxu0 0.0
      %1100 = vmatpush.msra.mxu0 0.0
      %1101 = vmatpush.msra.mxu0 0.0
      %1102 = vmatpush.msra.mxu0 0.0
      %1103 = vmatpush.msra.mxu0 0.0
      %1104 = vmatpush.msra.mxu0 0.0
      %1105 = vmatpush.msra.mxu0 0.0
      %1106 = vmatpush.msra.mxu0 0.0
      %1107 = vmatpush.msra.mxu0 0.0
      %1108 = vmatpush.msra.mxu0 0.0
      %1109 = vmatpush.msra.mxu0 0.0
      %1110 = vmatpush.msra.mxu0 %v1019
      %1111 = vmatpush.msra.mxu0 %v1016
      %1112 = vmatpush.msra.mxu0 %v1013
      %1113 = vmatpush.msra.mxu0 %v1010
      %1114 = vmatmul.f32.gmra.mxu0 %v1048
      %v1115 = vpop.f32.mrf.mxu0
      %v1116 = vadd.f32 %v1093, %v1115
      %1117 = vmatmul.f32.gmra.mxu0 %v1050
      %v1118 = vpop.f32.mrf.mxu0
      %v1119 = vadd.f32 %v1096, %v1118
      %1120 = vdwg.mxu0
      %1121 = vmatpush.msra.mxu0 %v960
      %1122 = vmatpush.msra.mxu0 %v957
      %1123 = vmatpush.msra.mxu0 %v954
      %1124 = vmatpush.msra.mxu0 %v951
      %1125 = vmatpush.msra.mxu0 %v948
      %1126 = vmatpush.msra.mxu0 %v945
      %1127 = vmatpush.msra.mxu0 %v942
      %1128 = vmatpush.msra.mxu0 %v939
      %1129 = vmatpush.msra.mxu0 %v936
      %1130 = vmatpush.msra.mxu0 %v933
      %1131 = vmatpush.msra.mxu0 %v930
      %1132 = vmatpush.msra.mxu0 %v927
      %1133 = vmatpush.msra.mxu0 %v924
      %1134 = vmatpush.msra.mxu0 %v921
      %1135 = vmatpush.msra.mxu0 %v918
      %1136 = vmatpush.msra.mxu0 %v915
      %1137 = vmatmul.f32.gmra.mxu0 %v1031
      %v1138 = vpop.f32.mrf.mxu0
      %v1139 = vadd.f32 0.0, %v1138
      %1140 = vmatmul.f32.gmra.mxu0 %v1039
      %v1141 = vpop.f32.mrf.mxu0
      %v1142 = vadd.f32 0.0, %v1141
      %1143 = vdwg.mxu0
      %1144 = vmatpush.msra.mxu0 %v1008
      %1145 = vmatpush.msra.mxu0 %v1005
      %1146 = vmatpush.msra.mxu0 %v1002
      %1147 = vmatpush.msra.mxu0 %v999
      %1148 = vmatpush.msra.mxu0 %v996
      %1149 = vmatpush.msra.mxu0 %v993
      %1150 = vmatpush.msra.mxu0 %v990
      %1151 = vmatpush.msra.mxu0 %v987
      %1152 = vmatpush.msra.mxu0 %v984
      %1153 = vmatpush.msra.mxu0 %v981
      %1154 = vmatpush.msra.mxu0 %v978
      %1155 = vmatpush.msra.mxu0 %v975
      %1156 = vmatpush.msra.mxu0 %v972
      %1157 = vmatpush.msra.mxu0 %v969
      %1158 = vmatpush.msra.mxu0 %v966
      %1159 = vmatpush.msra.mxu0 %v963
      %1160 = vmatmul.f32.gmra.mxu0 %v1034
      %v1161 = vpop.f32.mrf.mxu0
      %v1162 = vadd.f32 %v1139, %v1161
      %1163 = vmatmul.f32.gmra.mxu0 %v1041
      %v1164 = vpop.f32.mrf.mxu0
      %v1165 = vadd.f32 %v1142, %v1164
      %1166 = vdwg.mxu0
      %1167 = vmatpush.msra.mxu0 0.0
      %1168 = vmatpush.msra.mxu0 0.0
      %1169 = vmatpush.msra.mxu0 0.0
      %1170 = vmatpush.msra.mxu0 0.0
      %1171 = vmatpush.msra.mxu0 0.0
      %1172 = vmatpush.msra.mxu0 0.0
      %1173 = vmatpush.msra.mxu0 0.0
      %1174 = vmatpush.msra.mxu0 0.0
      %1175 = vmatpush.msra.mxu0 0.0
      %1176 = vmatpush.msra.mxu0 0.0
      %1177 = vmatpush.msra.mxu0 0.0
      %1178 = vmatpush.msra.mxu0 0.0
      %1179 = vmatpush.msra.mxu0 %v1020
      %1180 = vmatpush.msra.mxu0 %v1017
      %1181 = vmatpush.msra.mxu0 %v1014
      %1182 = vmatpush.msra.mxu0 %v1011
      %1183 = vmatmul.f32.gmra.mxu0 %v1048
      %v1184 = vpop.f32.mrf.mxu0
      %v1185 = vadd.f32 %v1162, %v1184
      %1186 = vmatmul.f32.gmra.mxu0 %v1050
      %v1187 = vpop.f32.mrf.mxu0
      %v1188 = vadd.f32 %v1165, %v1187
      %1189 = vdwg.mxu0
      %1190 = vmatpush.msra.mxu0 %v961
      %1191 = vmatpush.msra.mxu0 %v958
      %1192 = vmatpush.msra.mxu0 %v955
      %1193 = vmatpush.msra.mxu0 %v952
      %1194 = vmatpush.msra.mxu0 %v949
      %1195 = vmatpush.msra.mxu0 %v946
      %1196 = vmatpush.msra.mxu0 %v943
      %1197 = vmatpush.msra.mxu0 %v940
      %1198 = vmatpush.msra.mxu0 %v937
      %1199 = vmatpush.msra.mxu0 %v934
      %1200 = vmatpush.msra.mxu0 %v931
      %1201 = vmatpush.msra.mxu0 %v928
      %1202 = vmatpush.msra.mxu0 %v925
      %1203 = vmatpush.msra.mxu0 %v922
      %1204 = vmatpush.msra.mxu0 %v919
      %1205 = vmatpush.msra.mxu0 %v916
      %1206 = vmatmul.f32.gmra.mxu0 %v1031
      %v1207 = vpop.f32.mrf.mxu0
      %v1208 = vadd.f32 0.0, %v1207
      %1209 = vmatmul.f32.gmra.mxu0 %v1039
      %v1210 = vpop.f32.mrf.mxu0
      %v1211 = vadd.f32 0.0, %v1210
      %1212 = vdwg.mxu0
      %1213 = vmatpush.msra.mxu0 %v1009
      %1214 = vmatpush.msra.mxu0 %v1006
      %1215 = vmatpush.msra.mxu0 %v1003
      %1216 = vmatpush.msra.mxu0 %v1000
      %1217 = vmatpush.msra.mxu0 %v997
      %1218 = vmatpush.msra.mxu0 %v994
      %1219 = vmatpush.msra.mxu0 %v991
      %1220 = vmatpush.msra.mxu0 %v988
      %1221 = vmatpush.msra.mxu0 %v985
      %1222 = vmatpush.msra.mxu0 %v982
      %1223 = vmatpush.msra.mxu0 %v979
      %1224 = vmatpush.msra.mxu0 %v976
      %1225 = vmatpush.msra.mxu0 %v973
      %1226 = vmatpush.msra.mxu0 %v970
      %1227 = vmatpush.msra.mxu0 %v967
      %1228 = vmatpush.msra.mxu0 %v964
      %1229 = vmatmul.f32.gmra.mxu0 %v1034
      %v1230 = vpop.f32.mrf.mxu0
      %v1231 = vadd.f32 %v1208, %v1230
      %1232 = vmatmul.f32.gmra.mxu0 %v1041
      %v1233 = vpop.f32.mrf.mxu0
      %v1234 = vadd.f32 %v1211, %v1233
      %1235 = vdwg.mxu0
      %1236 = vmatpush.msra.mxu0 0.0
      %1237 = vmatpush.msra.mxu0 0.0
      %1238 = vmatpush.msra.mxu0 0.0
      %1239 = vmatpush.msra.mxu0 0.0
      %1240 = vmatpush.msra.mxu0 0.0
      %1241 = vmatpush.msra.mxu0 0.0
      %1242 = vmatpush.msra.mxu0 0.0
      %1243 = vmatpush.msra.mxu0 0.0
      %1244 = vmatpush.msra.mxu0 0.0
      %1245 = vmatpush.msra.mxu0 0.0
      %1246 = vmatpush.msra.mxu0 0.0
      %1247 = vmatpush.msra.mxu0 0.0
      %1248 = vmatpush.msra.mxu0 %v1021
      %1249 = vmatpush.msra.mxu0 %v1018
      %1250 = vmatpush.msra.mxu0 %v1015
      %1251 = vmatpush.msra.mxu0 %v1012
      %1252 = vmatmul.f32.gmra.mxu0 %v1048
      %v1253 = vpop.f32.mrf.mxu0
      %v1254 = vadd.f32 %v1231, %v1253
      %1255 = vmatmul.f32.gmra.mxu0 %v1050
      %v1256 = vpop.f32.mrf.mxu0
      %v1257 = vadd.f32 %v1234, %v1256
      %1258 = vdwg.mxu0
      %v1259 = vadd.f32 %v764, %v1116
      %v1260 = vadd.f32 %v833, %v1185
      %v1261 = vadd.f32 %v902, %v1254
      %v1262 = vadd.f32 %v767, %v1119
      %v1263 = vadd.f32 %v836, %v1188
      %v1264 = vadd.f32 %v905, %v1257
      %v1265 = vld [vmem:[%s2] sm:$0x7]
      %v1267 = vperm.slane %v1265, 0
      %v1268 = vperm.slane %v1265, 1
      %v1269 = vperm.slane %v1265, 2
      %v1273 = vadd.f32 %v1259, %v1267
      %v1274 = vadd.f32 %v1260, %v1268
      %v1275 = vadd.f32 %v1261, %v1269
      %v1276 = vadd.f32 %v1262, %v1267
      %v1277 = vadd.f32 %v1263, %v1268
      %v1278 = vadd.f32 %v1264, %v1269
      %v1279 = vmax.f32 %v1273, 0.0
      %v1280 = vmax.f32 %v1274, 0.0
      %v1281 = vmax.f32 %v1275, 0.0
      %v1282 = vmax.f32 %v1276, 0.0
      %v1283 = vmax.f32 %v1277, 0.0
      %v1284 = vmax.f32 %v1278, 0.0
      %1285 = vst [vmem:[#allocation2] sm:$0xff] 0.0
      %1286 = vst [vmem:[#allocation2 + $0x8] sm:$0xff] 0.0
      %1287 = vst.msk [vmem:[#allocation2 + $0x10] sm:$0xff] %vm483, 0.0
      %1288 = vst [vmem:[#allocation2 + $0x18] sm:$0xff] 0.0
      %1289 = vst [vmem:[#allocation2 + $0x20] sm:$0xff] 0.0
      %1290 = vst.msk [vmem:[#allocation2 + $0x28] sm:$0xff] %vm483, 0.0
      %1291 = vst [vmem:[#allocation2 + $0x30] sm:$0x3] 0.0
      %1292 = vst [vmem:[#allocation2 + $0x38] sm:$0x3] 0.0
      %vm1293 = vcmask 254976
      %1294 = vst.msk [vmem:[#allocation2 + $0x40] sm:$0x3] %vm1293, 0.0
      %vm1301 = vcmask 1040384
      %v1302 = vrot.slane %v1279, 7
      %v1303 = vrot.slane %v1280, 7
      %v1304 = vrot.slane %v1281, 7
      %v1305 = vrot.slane %v1282, 7
      %v1306 = vsel %vm1301, %v1302, %v1305
      %v1307 = vrot.slane %v1283, 7
      %v1308 = vsel %vm1301, %v1303, %v1307
      %v1309 = vrot.slane %v1284, 7
      %v1310 = vsel %vm1301, %v1304, %v1309
      %1320 = vst [vmem:[#allocation2] sm:$0xfe] %v1302
      %1321 = vst [vmem:[#allocation2 + $0x8] sm:$0xfe] %v1303
      %vm1322 = vcmask 261121
      %1323 = vst.msk [vmem:[#allocation2 + $0x10] sm:$0xfe] %vm1322, %v1304
      %1324 = vst [vmem:[#allocation2 + $0x18] sm:$0xff] %v1306
      %1325 = vst [vmem:[#allocation2 + $0x20] sm:$0xff] %v1308
      %1326 = vst.msk [vmem:[#allocation2 + $0x28] sm:$0xff] %vm483, %v1310
      %1327 = vst [vmem:[#allocation2 + $0x30] sm:$0x1] %v1305
      %1328 = vst [vmem:[#allocation2 + $0x38] sm:$0x1] %v1307
      %vm1329 = vcmask 253952
      %1330 = vst.msk [vmem:[#allocation2 + $0x40] sm:$0x1] %vm1329, %v1309
      %v1331 = vld [vmem:[#allocation2] sm:$0xff]
      %v1332 = vld [vmem:[#allocation2 + $0x8] sm:$0xff]
      %v1333 = vld [vmem:[#allocation2 + $0x10] sm:$0xff]
      %v1334 = vld [vmem:[#allocation2 + $0x18] sm:$0xff]
      %v1335 = vld [vmem:[#allocation2 + $0x20] sm:$0xff]
      %v1336 = vld [vmem:[#allocation2 + $0x28] sm:$0xff]
      %v1337 = vld [vmem:[%s3] sm:$0xff]
      %v1338 = vld [vmem:[%s3 + $0x8] sm:$0xff]
      %v1339 = vld [vmem:[%s3 + $0x10] sm:$0xff]
      %v1340 = vld [vmem:[%s3 + $0x18] sm:$0xff]
      %v1341 = vld [vmem:[%s3 + $0x20] sm:$0xff]
      %v1342 = vld [vmem:[%s3 + $0x28] sm:$0xff]
      %v1343 = vld [vmem:[%s3 + $0x30] sm:$0xff]
      %v1344 = vld [vmem:[%s3 + $0x38] sm:$0xff]
      %v1345 = vld [vmem:[%s3 + $0x40] sm:$0xff]
      %v1346 = vld [vmem:[%s3 + $0x48] sm:$0xff]
      %v1347 = vld [vmem:[%s3 + $0x50] sm:$0xff]
      %v1348 = vld [vmem:[%s3 + $0x58] sm:$0xff]
      %v1349 = vld [vmem:[%s3 + $0x60] sm:$0xff]
      %v1350 = vld [vmem:[%s3 + $0x68] sm:$0xff]
      %v1351 = vld [vmem:[%s3 + $0x70] sm:$0xff]
      %v1352 = vld [vmem:[%s3 + $0x78] sm:$0xff]
      %v1353 = vld [vmem:[%s3 + $0x80] sm:$0xff]
      %v1354 = vld [vmem:[%s3 + $0x88] sm:$0xff]
      %v1355 = vld [vmem:[%s3 + $0x90] sm:$0xff]
      %v1356 = vld [vmem:[%s3 + $0x98] sm:$0xff]
      %v1357 = vld [vmem:[%s3 + $0xa0] sm:$0xff]
      %v1358 = vld [vmem:[%s3 + $0xa8] sm:$0xff]
      %v1359 = vld [vmem:[%s3 + $0xb0] sm:$0xff]
      %v1360 = vld [vmem:[%s3 + $0xb8] sm:$0xff]
      %v1361 = vld [vmem:[%s3 + $0xc0] sm:$0xff]
      %v1362 = vld [vmem:[%s3 + $0xc8] sm:$0xff]
      %v1363 = vld [vmem:[%s3 + $0xd0] sm:$0xff]
      %v1364 = vld [vmem:[%s3 + $0xd8] sm:$0xff]
      %v1365 = vld [vmem:[%s3 + $0xe0] sm:$0xff]
      %v1366 = vld [vmem:[%s3 + $0xe8] sm:$0xff]
      %v1367 = vld [vmem:[%s3 + $0xf0] sm:$0xff]
      %v1368 = vld [vmem:[%s3 + $0xf8] sm:$0xff]
      %v1369 = vld [vmem:[%s3 + $0x100] sm:$0xff]
      %v1370 = vld [vmem:[%s3 + $0x108] sm:$0xff]
      %v1371 = vld [vmem:[%s3 + $0x110] sm:$0xff]
      %v1372 = vld [vmem:[%s3 + $0x118] sm:$0xff]
      %v1373 = vld [vmem:[%s3 + $0x120] sm:$0xff]
      %v1374 = vld [vmem:[%s3 + $0x128] sm:$0xff]
      %v1375 = vld [vmem:[%s3 + $0x130] sm:$0xff]
      %v1376 = vld [vmem:[%s3 + $0x138] sm:$0xff]
      %v1377 = vld [vmem:[%s3 + $0x140] sm:$0xff]
      %v1378 = vld [vmem:[%s3 + $0x148] sm:$0xff]
      %v1379 = vld [vmem:[%s3 + $0x150] sm:$0xff]
      %v1380 = vld [vmem:[%s3 + $0x158] sm:$0xff]
      %v1381 = vld [vmem:[%s3 + $0x160] sm:$0xff]
      %v1382 = vld [vmem:[%s3 + $0x168] sm:$0xff]
      %v1383 = vld [vmem:[%s3 + $0x170] sm:$0xff]
      %v1384 = vld [vmem:[%s3 + $0x178] sm:$0xff]
      %v1385 = vld [vmem:[%s3 + $0x180] sm:$0xff]
      %v1386 = vld [vmem:[%s3 + $0x188] sm:$0xff]
      %v1387 = vld [vmem:[%s3 + $0x190] sm:$0xff]
      %v1388 = vld [vmem:[%s3 + $0x198] sm:$0xff]
      %v1389 = vld [vmem:[%s3 + $0x1a0] sm:$0xff]
      %v1390 = vld [vmem:[%s3 + $0x1a8] sm:$0xff]
      %v1391 = vld [vmem:[%s3 + $0x1b0] sm:$0xff]
      %v1392 = vld [vmem:[%s3 + $0x1b8] sm:$0xff]
      %v1393 = vld [vmem:[%s3 + $0x1c0] sm:$0xff]
      %v1394 = vld [vmem:[%s3 + $0x1c8] sm:$0xff]
      %v1395 = vld [vmem:[%s3 + $0x1d0] sm:$0xff]
      %v1396 = vld [vmem:[%s3 + $0x1d8] sm:$0xff]
      %v1397 = vld [vmem:[%s3 + $0x1e0] sm:$0xff]
      %v1398 = vld [vmem:[%s3 + $0x1e8] sm:$0xff]
      %v1399 = vld [vmem:[%s3 + $0x1f0] sm:$0xff]
      %v1400 = vld [vmem:[%s3 + $0x1f8] sm:$0xff]
      %v1401 = vld [vmem:[%s3 + $0x200] sm:$0xff]
      %v1402 = vld [vmem:[%s3 + $0x208] sm:$0xff]
      %v1403 = vld [vmem:[%s3 + $0x210] sm:$0xff]
      %v1404 = vld [vmem:[%s3 + $0x218] sm:$0xff]
      %v1405 = vld [vmem:[%s3 + $0x220] sm:$0xff]
      %v1406 = vld [vmem:[%s3 + $0x228] sm:$0xff]
      %v1407 = vld [vmem:[%s3 + $0x230] sm:$0xff]
      %v1408 = vld [vmem:[%s3 + $0x238] sm:$0xff]
      %v1409 = vld [vmem:[%s3 + $0x240] sm:$0xff]
      %v1410 = vld [vmem:[%s3 + $0x248] sm:$0xff]
      %v1411 = vld [vmem:[%s3 + $0x250] sm:$0xff]
      %v1412 = vld [vmem:[%s3 + $0x258] sm:$0xff]
      %v1413 = vld [vmem:[%s3 + $0x260] sm:$0xff]
      %v1414 = vld [vmem:[%s3 + $0x268] sm:$0xff]
      %v1415 = vld [vmem:[%s3 + $0x270] sm:$0xff]
      %v1416 = vld [vmem:[%s3 + $0x278] sm:$0xff]
      %v1417 = vld [vmem:[%s3 + $0x280] sm:$0xff]
      %v1418 = vld [vmem:[%s3 + $0x288] sm:$0xff]
      %v1419 = vld [vmem:[%s3 + $0x290] sm:$0xff]
      %v1420 = vld [vmem:[%s3 + $0x298] sm:$0xff]
      %v1421 = vld [vmem:[%s3 + $0x2a0] sm:$0xff]
      %v1422 = vld [vmem:[%s3 + $0x2a8] sm:$0xff]
      %v1423 = vld [vmem:[%s3 + $0x2b0] sm:$0xff]
      %v1424 = vld [vmem:[%s3 + $0x2b8] sm:$0xff]
      %v1425 = vld [vmem:[%s3 + $0x2c0] sm:$0xff]
      %v1426 = vld [vmem:[%s3 + $0x2c8] sm:$0xff]
      %v1427 = vld [vmem:[%s3 + $0x2d0] sm:$0xff]
      %v1428 = vld [vmem:[%s3 + $0x2d8] sm:$0xff]
      %v1429 = vld [vmem:[%s3 + $0x2e0] sm:$0xff]
      %v1430 = vld [vmem:[%s3 + $0x2e8] sm:$0xff]
      %v1431 = vld [vmem:[%s3 + $0x2f0] sm:$0xff]
      %v1432 = vld [vmem:[%s3 + $0x2f8] sm:$0xff]
      %v1433 = vld [vmem:[%s3 + $0x300] sm:$0xff]
      %v1434 = vld [vmem:[%s3 + $0x308] sm:$0xff]
      %v1435 = vld [vmem:[%s3 + $0x310] sm:$0xff]
      %v1436 = vld [vmem:[%s3 + $0x318] sm:$0xff]
      %v1437 = vld [vmem:[%s3 + $0x320] sm:$0xff]
      %v1438 = vld [vmem:[%s3 + $0x328] sm:$0xff]
      %v1439 = vld [vmem:[%s3 + $0x330] sm:$0xff]
      %v1440 = vld [vmem:[%s3 + $0x338] sm:$0xff]
      %v1441 = vld [vmem:[%s3 + $0x340] sm:$0xff]
      %v1442 = vld [vmem:[%s3 + $0x348] sm:$0xff]
      %v1443 = vld [vmem:[%s3 + $0x350] sm:$0xff]
      %v1444 = vld [vmem:[%s3 + $0x358] sm:$0xff]
      %v1445 = vld [vmem:[#allocation2] sm:$0xfe]
      %v1446 = vld [vmem:[#allocation2 + $0x8] sm:$0xfe]
      %v1447 = vld [vmem:[#allocation2 + $0x10] sm:$0xfe]
      %v1448 = vld [vmem:[#allocation2 + $0x30] sm:$0x1]
      %v1449 = vld [vmem:[#allocation2 + $0x38] sm:$0x1]
      %v1450 = vld [vmem:[#allocation2 + $0x40] sm:$0x1]
      %s1451 = scalar_lea.vmem %s3, 864
      %v1452 = vld [vmem:[%s1451] sm:$0xff]
      %v1453 = vld [vmem:[%s1451 + $0x8] sm:$0xff]
      %v1454 = vld [vmem:[%s1451 + $0x10] sm:$0xff]
      %v1455 = vld [vmem:[%s1451 + $0x18] sm:$0xff]
      %v1456 = vld [vmem:[%s1451 + $0x20] sm:$0xff]
      %v1457 = vld [vmem:[%s1451 + $0x28] sm:$0xff]
      %v1458 = vld [vmem:[%s1451 + $0x30] sm:$0xff]
      %v1459 = vld [vmem:[%s1451 + $0x38] sm:$0xff]
      %v1460 = vld [vmem:[%s1451 + $0x40] sm:$0xff]
      %v1461 = vld [vmem:[%s1451 + $0x48] sm:$0xff]
      %v1462 = vld [vmem:[%s1451 + $0x50] sm:$0xff]
      %v1463 = vld [vmem:[%s1451 + $0x58] sm:$0xff]
      %v1464 = vld [vmem:[%s1451 + $0x60] sm:$0xff]
      %v1465 = vld [vmem:[%s1451 + $0x68] sm:$0xff]
      %v1466 = vld [vmem:[%s1451 + $0x70] sm:$0xff]
      %v1467 = vld [vmem:[%s1451 + $0x78] sm:$0xff]
      %v1468 = vld [vmem:[%s1451 + $0x80] sm:$0xff]
      %v1469 = vld [vmem:[%s1451 + $0x88] sm:$0xff]
      %v1470 = vld [vmem:[%s1451 + $0x90] sm:$0xff]
      %v1471 = vld [vmem:[%s1451 + $0x98] sm:$0xff]
      %v1472 = vld [vmem:[%s1451 + $0xa0] sm:$0xff]
      %v1473 = vld [vmem:[%s1451 + $0xa8] sm:$0xff]
      %v1474 = vld [vmem:[%s1451 + $0xb0] sm:$0xff]
      %v1475 = vld [vmem:[%s1451 + $0xb8] sm:$0xff]
      %v1476 = vld [vmem:[%s1451 + $0xc0] sm:$0xff]
      %v1477 = vld [vmem:[%s1451 + $0xc8] sm:$0xff]
      %v1478 = vld [vmem:[%s1451 + $0xd0] sm:$0xff]
      %v1479 = vld [vmem:[%s1451 + $0xd8] sm:$0xff]
      %v1480 = vld [vmem:[%s1451 + $0xe0] sm:$0xff]
      %v1481 = vld [vmem:[%s1451 + $0xe8] sm:$0xff]
      %v1482 = vld [vmem:[%s1451 + $0xf0] sm:$0xff]
      %v1483 = vld [vmem:[%s1451 + $0xf8] sm:$0xff]
      %v1484 = vld [vmem:[%s1451 + $0x100] sm:$0xff]
      %v1485 = vld [vmem:[%s1451 + $0x108] sm:$0xff]
      %v1486 = vld [vmem:[%s1451 + $0x110] sm:$0xff]
      %v1487 = vld [vmem:[%s1451 + $0x118] sm:$0xff]
      %v1488 = vld [vmem:[%s1451 + $0x120] sm:$0xff]
      %v1489 = vld [vmem:[%s1451 + $0x128] sm:$0xff]
      %v1490 = vld [vmem:[%s1451 + $0x130] sm:$0xff]
      %v1491 = vld [vmem:[%s1451 + $0x138] sm:$0xff]
      %v1492 = vld [vmem:[%s1451 + $0x140] sm:$0xff]
      %v1493 = vld [vmem:[%s1451 + $0x148] sm:$0xff]
      %v1494 = vld [vmem:[%s1451 + $0x150] sm:$0xff]
      %v1495 = vld [vmem:[%s1451 + $0x158] sm:$0xff]
      %v1496 = vld [vmem:[%s1451 + $0x160] sm:$0xff]
      %v1497 = vld [vmem:[%s1451 + $0x168] sm:$0xff]
      %v1498 = vld [vmem:[%s1451 + $0x170] sm:$0xff]
      %v1499 = vld [vmem:[%s1451 + $0x178] sm:$0xff]
      %v1500 = vld [vmem:[%s1451 + $0x180] sm:$0xff]
      %v1501 = vld [vmem:[%s1451 + $0x188] sm:$0xff]
      %v1502 = vld [vmem:[%s1451 + $0x190] sm:$0xff]
      %v1503 = vld [vmem:[%s1451 + $0x198] sm:$0xff]
      %v1504 = vld [vmem:[%s1451 + $0x1a0] sm:$0xff]
      %v1505 = vld [vmem:[%s1451 + $0x1a8] sm:$0xff]
      %v1506 = vld [vmem:[%s1451 + $0x1b0] sm:$0xff]
      %v1507 = vld [vmem:[%s1451 + $0x1b8] sm:$0xff]
      %v1508 = vld [vmem:[%s1451 + $0x1c0] sm:$0xff]
      %v1509 = vld [vmem:[%s1451 + $0x1c8] sm:$0xff]
      %v1510 = vld [vmem:[%s1451 + $0x1d0] sm:$0xff]
      %v1511 = vld [vmem:[%s1451 + $0x1d8] sm:$0xff]
      %v1512 = vld [vmem:[%s1451 + $0x1e0] sm:$0xff]
      %v1513 = vld [vmem:[%s1451 + $0x1e8] sm:$0xff]
      %v1514 = vld [vmem:[%s1451 + $0x1f0] sm:$0xff]
      %v1515 = vld [vmem:[%s1451 + $0x1f8] sm:$0xff]
      %v1516 = vld [vmem:[%s1451 + $0x200] sm:$0xff]
      %v1517 = vld [vmem:[%s1451 + $0x208] sm:$0xff]
      %v1518 = vld [vmem:[%s1451 + $0x210] sm:$0xff]
      %v1519 = vld [vmem:[%s1451 + $0x218] sm:$0xff]
      %v1520 = vld [vmem:[%s1451 + $0x220] sm:$0xff]
      %v1521 = vld [vmem:[%s1451 + $0x228] sm:$0xff]
      %v1522 = vld [vmem:[%s1451 + $0x230] sm:$0xff]
      %v1523 = vld [vmem:[%s1451 + $0x238] sm:$0xff]
      %v1524 = vld [vmem:[%s1451 + $0x240] sm:$0xff]
      %v1525 = vld [vmem:[%s1451 + $0x248] sm:$0xff]
      %v1526 = vld [vmem:[%s1451 + $0x250] sm:$0xff]
      %v1527 = vld [vmem:[%s1451 + $0x258] sm:$0xff]
      %v1528 = vld [vmem:[%s1451 + $0x260] sm:$0xff]
      %v1529 = vld [vmem:[%s1451 + $0x268] sm:$0xff]
      %v1530 = vld [vmem:[%s1451 + $0x270] sm:$0xff]
      %v1531 = vld [vmem:[%s1451 + $0x278] sm:$0xff]
      %v1532 = vld [vmem:[%s1451 + $0x280] sm:$0xff]
      %v1533 = vld [vmem:[%s1451 + $0x288] sm:$0xff]
      %v1534 = vld [vmem:[%s1451 + $0x290] sm:$0xff]
      %v1535 = vld [vmem:[%s1451 + $0x298] sm:$0xff]
      %v1536 = vld [vmem:[%s1451 + $0x2a0] sm:$0xff]
      %v1537 = vld [vmem:[%s1451 + $0x2a8] sm:$0xff]
      %v1538 = vld [vmem:[%s1451 + $0x2b0] sm:$0xff]
      %v1539 = vld [vmem:[%s1451 + $0x2b8] sm:$0xff]
      %v1540 = vld [vmem:[%s1451 + $0x2c0] sm:$0xff]
      %v1541 = vld [vmem:[%s1451 + $0x2c8] sm:$0xff]
      %v1542 = vld [vmem:[%s1451 + $0x2d0] sm:$0xff]
      %v1543 = vld [vmem:[%s1451 + $0x2d8] sm:$0xff]
      %v1544 = vld [vmem:[%s1451 + $0x2e0] sm:$0xff]
      %v1545 = vld [vmem:[%s1451 + $0x2e8] sm:$0xff]
      %v1546 = vld [vmem:[%s1451 + $0x2f0] sm:$0xff]
      %v1547 = vld [vmem:[%s1451 + $0x2f8] sm:$0xff]
      %v1548 = vld [vmem:[%s1451 + $0x300] sm:$0xff]
      %v1549 = vld [vmem:[%s1451 + $0x308] sm:$0xff]
      %v1550 = vld [vmem:[%s1451 + $0x310] sm:$0xff]
      %v1551 = vld [vmem:[%s1451 + $0x318] sm:$0xff]
      %v1552 = vld [vmem:[%s1451 + $0x320] sm:$0xff]
      %v1553 = vld [vmem:[%s1451 + $0x328] sm:$0xff]
      %v1554 = vld [vmem:[%s1451 + $0x330] sm:$0xff]
      %v1555 = vld [vmem:[%s1451 + $0x338] sm:$0xff]
      %v1556 = vld [vmem:[%s1451 + $0x340] sm:$0xff]
      %v1557 = vld [vmem:[%s1451 + $0x348] sm:$0xff]
      %v1558 = vld [vmem:[%s1451 + $0x350] sm:$0xff]
      %v1559 = vld [vmem:[%s1451 + $0x358] sm:$0xff]
      %v1569 = vrot.slane %v1445, 1
      %v1570 = vrot.slane %v1334, 1
      %v1571 = vsel %vm463, %v1569, %v1570
      %v1572 = vrot.slane %v1446, 1
      %v1573 = vrot.slane %v1335, 1
      %v1574 = vsel %vm463, %v1572, %v1573
      %v1575 = vrot.slane %v1447, 1
      %v1576 = vrot.slane %v1336, 1
      %v1577 = vsel %vm463, %v1575, %v1576
      %v1578 = vrot.slane %v1448, 1
      %v1579 = vsel %vm463, %v1570, %v1578
      %v1580 = vrot.slane %v1449, 1
      %v1581 = vsel %vm463, %v1573, %v1580
      %v1582 = vrot.slane %v1450, 1
      %v1583 = vsel %vm463, %v1576, %v1582
      %v1588 = vsel %vm483, %v1577, 0
      %v1590 = vsel %vm483, %v1583, 0
      %1592 = vmatpush.msra.mxu0 %v1497
      %1593 = vmatpush.msra.mxu0 %v1494
      %1594 = vmatpush.msra.mxu0 %v1491
      %1595 = vmatpush.msra.mxu0 %v1488
      %1596 = vmatpush.msra.mxu0 %v1485
      %1597 = vmatpush.msra.mxu0 %v1482
      %1598 = vmatpush.msra.mxu0 %v1479
      %1599 = vmatpush.msra.mxu0 %v1476
      %1600 = vmatpush.msra.mxu0 %v1473
      %1601 = vmatpush.msra.mxu0 %v1470
      %1602 = vmatpush.msra.mxu0 %v1467
      %1603 = vmatpush.msra.mxu0 %v1464
      %1604 = vmatpush.msra.mxu0 %v1461
      %1605 = vmatpush.msra.mxu0 %v1458
      %1606 = vmatpush.msra.mxu0 %v1455
      %1607 = vmatpush.msra.mxu0 %v1452
      %1608 = vmatmul.f32.gmra.mxu0 %v1571
      %v1609 = vpop.f32.mrf.mxu0
      %v1610 = vadd.f32 0.0, %v1609
      %1611 = vmatmul.f32.gmra.mxu0 %v1579
      %v1612 = vpop.f32.mrf.mxu0
      %v1613 = vadd.f32 0.0, %v1612
      %1614 = vdwg.mxu0
      %1615 = vmatpush.msra.mxu0 %v1545
      %1616 = vmatpush.msra.mxu0 %v1542
      %1617 = vmatpush.msra.mxu0 %v1539
      %1618 = vmatpush.msra.mxu0 %v1536
      %1619 = vmatpush.msra.mxu0 %v1533
      %1620 = vmatpush.msra.mxu0 %v1530
      %1621 = vmatpush.msra.mxu0 %v1527
      %1622 = vmatpush.msra.mxu0 %v1524
      %1623 = vmatpush.msra.mxu0 %v1521
      %1624 = vmatpush.msra.mxu0 %v1518
      %1625 = vmatpush.msra.mxu0 %v1515
      %1626 = vmatpush.msra.mxu0 %v1512
      %1627 = vmatpush.msra.mxu0 %v1509
      %1628 = vmatpush.msra.mxu0 %v1506
      %1629 = vmatpush.msra.mxu0 %v1503
      %1630 = vmatpush.msra.mxu0 %v1500
      %1631 = vmatmul.f32.gmra.mxu0 %v1574
      %v1632 = vpop.f32.mrf.mxu0
      %v1633 = vadd.f32 %v1610, %v1632
      %1634 = vmatmul.f32.gmra.mxu0 %v1581
      %v1635 = vpop.f32.mrf.mxu0
      %v1636 = vadd.f32 %v1613, %v1635
      %1637 = vdwg.mxu0
      %1638 = vmatpush.msra.mxu0 0.0
      %1639 = vmatpush.msra.mxu0 0.0
      %1640 = vmatpush.msra.mxu0 0.0
      %1641 = vmatpush.msra.mxu0 0.0
      %1642 = vmatpush.msra.mxu0 0.0
      %1643 = vmatpush.msra.mxu0 0.0
      %1644 = vmatpush.msra.mxu0 0.0
      %1645 = vmatpush.msra.mxu0 0.0
      %1646 = vmatpush.msra.mxu0 0.0
      %1647 = vmatpush.msra.mxu0 0.0
      %1648 = vmatpush.msra.mxu0 0.0
      %1649 = vmatpush.msra.mxu0 0.0
      %1650 = vmatpush.msra.mxu0 %v1557
      %1651 = vmatpush.msra.mxu0 %v1554
      %1652 = vmatpush.msra.mxu0 %v1551
      %1653 = vmatpush.msra.mxu0 %v1548
      %1654 = vmatmul.f32.gmra.mxu0 %v1588
      %v1655 = vpop.f32.mrf.mxu0
      %v1656 = vadd.f32 %v1633, %v1655
      %1657 = vmatmul.f32.gmra.mxu0 %v1590
      %v1658 = vpop.f32.mrf.mxu0
      %v1659 = vadd.f32 %v1636, %v1658
      %1660 = vdwg.mxu0
      %1661 = vmatpush.msra.mxu0 %v1498
      %1662 = vmatpush.msra.mxu0 %v1495
      %1663 = vmatpush.msra.mxu0 %v1492
      %1664 = vmatpush.msra.mxu0 %v1489
      %1665 = vmatpush.msra.mxu0 %v1486
      %1666 = vmatpush.msra.mxu0 %v1483
      %1667 = vmatpush.msra.mxu0 %v1480
      %1668 = vmatpush.msra.mxu0 %v1477
      %1669 = vmatpush.msra.mxu0 %v1474
      %1670 = vmatpush.msra.mxu0 %v1471
      %1671 = vmatpush.msra.mxu0 %v1468
      %1672 = vmatpush.msra.mxu0 %v1465
      %1673 = vmatpush.msra.mxu0 %v1462
      %1674 = vmatpush.msra.mxu0 %v1459
      %1675 = vmatpush.msra.mxu0 %v1456
      %1676 = vmatpush.msra.mxu0 %v1453
      %1677 = vmatmul.f32.gmra.mxu0 %v1571
      %v1678 = vpop.f32.mrf.mxu0
      %v1679 = vadd.f32 0.0, %v1678
      %1680 = vmatmul.f32.gmra.mxu0 %v1579
      %v1681 = vpop.f32.mrf.mxu0
      %v1682 = vadd.f32 0.0, %v1681
      %1683 = vdwg.mxu0
      %1684 = vmatpush.msra.mxu0 %v1546
      %1685 = vmatpush.msra.mxu0 %v1543
      %1686 = vmatpush.msra.mxu0 %v1540
      %1687 = vmatpush.msra.mxu0 %v1537
      %1688 = vmatpush.msra.mxu0 %v1534
      %1689 = vmatpush.msra.mxu0 %v1531
      %1690 = vmatpush.msra.mxu0 %v1528
      %1691 = vmatpush.msra.mxu0 %v1525
      %1692 = vmatpush.msra.mxu0 %v1522
      %1693 = vmatpush.msra.mxu0 %v1519
      %1694 = vmatpush.msra.mxu0 %v1516
      %1695 = vmatpush.msra.mxu0 %v1513
      %1696 = vmatpush.msra.mxu0 %v1510
      %1697 = vmatpush.msra.mxu0 %v1507
      %1698 = vmatpush.msra.mxu0 %v1504
      %1699 = vmatpush.msra.mxu0 %v1501
      %1700 = vmatmul.f32.gmra.mxu0 %v1574
      %v1701 = vpop.f32.mrf.mxu0
      %v1702 = vadd.f32 %v1679, %v1701
      %1703 = vmatmul.f32.gmra.mxu0 %v1581
      %v1704 = vpop.f32.mrf.mxu0
      %v1705 = vadd.f32 %v1682, %v1704
      %1706 = vdwg.mxu0
      %1707 = vmatpush.msra.mxu0 0.0
      %1708 = vmatpush.msra.mxu0 0.0
      %1709 = vmatpush.msra.mxu0 0.0
      %1710 = vmatpush.msra.mxu0 0.0
      %1711 = vmatpush.msra.mxu0 0.0
      %1712 = vmatpush.msra.mxu0 0.0
      %1713 = vmatpush.msra.mxu0 0.0
      %1714 = vmatpush.msra.mxu0 0.0
      %1715 = vmatpush.msra.mxu0 0.0
      %1716 = vmatpush.msra.mxu0 0.0
      %1717 = vmatpush.msra.mxu0 0.0
      %1718 = vmatpush.msra.mxu0 0.0
      %1719 = vmatpush.msra.mxu0 %v1558
      %1720 = vmatpush.msra.mxu0 %v1555
      %1721 = vmatpush.msra.mxu0 %v1552
      %1722 = vmatpush.msra.mxu0 %v1549
      %1723 = vmatmul.f32.gmra.mxu0 %v1588
      %v1724 = vpop.f32.mrf.mxu0
      %v1725 = vadd.f32 %v1702, %v1724
      %1726 = vmatmul.f32.gmra.mxu0 %v1590
      %v1727 = vpop.f32.mrf.mxu0
      %v1728 = vadd.f32 %v1705, %v1727
      %1729 = vdwg.mxu0
      %1730 = vmatpush.msra.mxu0 %v1499
      %1731 = vmatpush.msra.mxu0 %v1496
      %1732 = vmatpush.msra.mxu0 %v1493
      %1733 = vmatpush.msra.mxu0 %v1490
      %1734 = vmatpush.msra.mxu0 %v1487
      %1735 = vmatpush.msra.mxu0 %v1484
      %1736 = vmatpush.msra.mxu0 %v1481
      %1737 = vmatpush.msra.mxu0 %v1478
      %1738 = vmatpush.msra.mxu0 %v1475
      %1739 = vmatpush.msra.mxu0 %v1472
      %1740 = vmatpush.msra.mxu0 %v1469
      %1741 = vmatpush.msra.mxu0 %v1466
      %1742 = vmatpush.msra.mxu0 %v1463
      %1743 = vmatpush.msra.mxu0 %v1460
      %1744 = vmatpush.msra.mxu0 %v1457
      %1745 = vmatpush.msra.mxu0 %v1454
      %1746 = vmatmul.f32.gmra.mxu0 %v1571
      %v1747 = vpop.f32.mrf.mxu0
      %v1748 = vadd.f32 0.0, %v1747
      %1749 = vmatmul.f32.gmra.mxu0 %v1579
      %v1750 = vpop.f32.mrf.mxu0
      %v1751 = vadd.f32 0.0, %v1750
      %1752 = vdwg.mxu0
      %1753 = vmatpush.msra.mxu0 %v1547
      %1754 = vmatpush.msra.mxu0 %v1544
      %1755 = vmatpush.msra.mxu0 %v1541
      %1756 = vmatpush.msra.mxu0 %v1538
      %1757 = vmatpush.msra.mxu0 %v1535
      %1758 = vmatpush.msra.mxu0 %v1532
      %1759 = vmatpush.msra.mxu0 %v1529
      %1760 = vmatpush.msra.mxu0 %v1526
      %1761 = vmatpush.msra.mxu0 %v1523
      %1762 = vmatpush.msra.mxu0 %v1520
      %1763 = vmatpush.msra.mxu0 %v1517
      %1764 = vmatpush.msra.mxu0 %v1514
      %1765 = vmatpush.msra.mxu0 %v1511
      %1766 = vmatpush.msra.mxu0 %v1508
      %1767 = vmatpush.msra.mxu0 %v1505
      %1768 = vmatpush.msra.mxu0 %v1502
      %1769 = vmatmul.f32.gmra.mxu0 %v1574
      %v1770 = vpop.f32.mrf.mxu0
      %v1771 = vadd.f32 %v1748, %v1770
      %1772 = vmatmul.f32.gmra.mxu0 %v1581
      %v1773 = vpop.f32.mrf.mxu0
      %v1774 = vadd.f32 %v1751, %v1773
      %1775 = vdwg.mxu0
      %1776 = vmatpush.msra.mxu0 0.0
      %1777 = vmatpush.msra.mxu0 0.0
      %1778 = vmatpush.msra.mxu0 0.0
      %1779 = vmatpush.msra.mxu0 0.0
      %1780 = vmatpush.msra.mxu0 0.0
      %1781 = vmatpush.msra.mxu0 0.0
      %1782 = vmatpush.msra.mxu0 0.0
      %1783 = vmatpush.msra.mxu0 0.0
      %1784 = vmatpush.msra.mxu0 0.0
      %1785 = vmatpush.msra.mxu0 0.0
      %1786 = vmatpush.msra.mxu0 0.0
      %1787 = vmatpush.msra.mxu0 0.0
      %1788 = vmatpush.msra.mxu0 %v1559
      %1789 = vmatpush.msra.mxu0 %v1556
      %1790 = vmatpush.msra.mxu0 %v1553
      %1791 = vmatpush.msra.mxu0 %v1550
      %1792 = vmatmul.f32.gmra.mxu0 %v1588
      %v1793 = vpop.f32.mrf.mxu0
      %v1794 = vadd.f32 %v1771, %v1793
      %1795 = vmatmul.f32.gmra.mxu0 %v1590
      %v1796 = vpop.f32.mrf.mxu0
      %v1797 = vadd.f32 %v1774, %v1796
      %1798 = vdwg.mxu0
      %v1800 = vsel %vm483, %v1333, 0
      %v1802 = vsel %vm483, %v1336, 0
      %1804 = vmatpush.msra.mxu0 %v1382
      %1805 = vmatpush.msra.mxu0 %v1379
      %1806 = vmatpush.msra.mxu0 %v1376
      %1807 = vmatpush.msra.mxu0 %v1373
      %1808 = vmatpush.msra.mxu0 %v1370
      %1809 = vmatpush.msra.mxu0 %v1367
      %1810 = vmatpush.msra.mxu0 %v1364
      %1811 = vmatpush.msra.mxu0 %v1361
      %1812 = vmatpush.msra.mxu0 %v1358
      %1813 = vmatpush.msra.mxu0 %v1355
      %1814 = vmatpush.msra.mxu0 %v1352
      %1815 = vmatpush.msra.mxu0 %v1349
      %1816 = vmatpush.msra.mxu0 %v1346
      %1817 = vmatpush.msra.mxu0 %v1343
      %1818 = vmatpush.msra.mxu0 %v1340
      %1819 = vmatpush.msra.mxu0 %v1337
      %1820 = vmatmul.f32.gmra.mxu0 %v1331
      %v1821 = vpop.f32.mrf.mxu0
      %v1822 = vadd.f32 %v1656, %v1821
      %1823 = vmatmul.f32.gmra.mxu0 %v1334
      %v1824 = vpop.f32.mrf.mxu0
      %v1825 = vadd.f32 %v1659, %v1824
      %1826 = vdwg.mxu0
      %1827 = vmatpush.msra.mxu0 %v1430
      %1828 = vmatpush.msra.mxu0 %v1427
      %1829 = vmatpush.msra.mxu0 %v1424
      %1830 = vmatpush.msra.mxu0 %v1421
      %1831 = vmatpush.msra.mxu0 %v1418
      %1832 = vmatpush.msra.mxu0 %v1415
      %1833 = vmatpush.msra.mxu0 %v1412
      %1834 = vmatpush.msra.mxu0 %v1409
      %1835 = vmatpush.msra.mxu0 %v1406
      %1836 = vmatpush.msra.mxu0 %v1403
      %1837 = vmatpush.msra.mxu0 %v1400
      %1838 = vmatpush.msra.mxu0 %v1397
      %1839 = vmatpush.msra.mxu0 %v1394
      %1840 = vmatpush.msra.mxu0 %v1391
      %1841 = vmatpush.msra.mxu0 %v1388
      %1842 = vmatpush.msra.mxu0 %v1385
      %1843 = vmatmul.f32.gmra.mxu0 %v1332
      %v1844 = vpop.f32.mrf.mxu0
      %v1845 = vadd.f32 %v1822, %v1844
      %1846 = vmatmul.f32.gmra.mxu0 %v1335
      %v1847 = vpop.f32.mrf.mxu0
      %v1848 = vadd.f32 %v1825, %v1847
      %1849 = vdwg.mxu0
      %1850 = vmatpush.msra.mxu0 0.0
      %1851 = vmatpush.msra.mxu0 0.0
      %1852 = vmatpush.msra.mxu0 0.0
      %1853 = vmatpush.msra.mxu0 0.0
      %1854 = vmatpush.msra.mxu0 0.0
      %1855 = vmatpush.msra.mxu0 0.0
      %1856 = vmatpush.msra.mxu0 0.0
      %1857 = vmatpush.msra.mxu0 0.0
      %1858 = vmatpush.msra.mxu0 0.0
      %1859 = vmatpush.msra.mxu0 0.0
      %1860 = vmatpush.msra.mxu0 0.0
      %1861 = vmatpush.msra.mxu0 0.0
      %1862 = vmatpush.msra.mxu0 %v1442
      %1863 = vmatpush.msra.mxu0 %v1439
      %1864 = vmatpush.msra.mxu0 %v1436
      %1865 = vmatpush.msra.mxu0 %v1433
      %1866 = vmatmul.f32.gmra.mxu0 %v1800
      %v1867 = vpop.f32.mrf.mxu0
      %v1868 = vadd.f32 %v1845, %v1867
      %1869 = vmatmul.f32.gmra.mxu0 %v1802
      %v1870 = vpop.f32.mrf.mxu0
      %v1871 = vadd.f32 %v1848, %v1870
      %1872 = vdwg.mxu0
      %1873 = vmatpush.msra.mxu0 %v1383
      %1874 = vmatpush.msra.mxu0 %v1380
      %1875 = vmatpush.msra.mxu0 %v1377
      %1876 = vmatpush.msra.mxu0 %v1374
      %1877 = vmatpush.msra.mxu0 %v1371
      %1878 = vmatpush.msra.mxu0 %v1368
      %1879 = vmatpush.msra.mxu0 %v1365
      %1880 = vmatpush.msra.mxu0 %v1362
      %1881 = vmatpush.msra.mxu0 %v1359
      %1882 = vmatpush.msra.mxu0 %v1356
      %1883 = vmatpush.msra.mxu0 %v1353
      %1884 = vmatpush.msra.mxu0 %v1350
      %1885 = vmatpush.msra.mxu0 %v1347
      %1886 = vmatpush.msra.mxu0 %v1344
      %1887 = vmatpush.msra.mxu0 %v1341
      %1888 = vmatpush.msra.mxu0 %v1338
      %1889 = vmatmul.f32.gmra.mxu0 %v1331
      %v1890 = vpop.f32.mrf.mxu0
      %v1891 = vadd.f32 %v1725, %v1890
      %1892 = vmatmul.f32.gmra.mxu0 %v1334
      %v1893 = vpop.f32.mrf.mxu0
      %v1894 = vadd.f32 %v1728, %v1893
      %1895 = vdwg.mxu0
      %1896 = vmatpush.msra.mxu0 %v1431
      %1897 = vmatpush.msra.mxu0 %v1428
      %1898 = vmatpush.msra.mxu0 %v1425
      %1899 = vmatpush.msra.mxu0 %v1422
      %1900 = vmatpush.msra.mxu0 %v1419
      %1901 = vmatpush.msra.mxu0 %v1416
      %1902 = vmatpush.msra.mxu0 %v1413
      %1903 = vmatpush.msra.mxu0 %v1410
      %1904 = vmatpush.msra.mxu0 %v1407
      %1905 = vmatpush.msra.mxu0 %v1404
      %1906 = vmatpush.msra.mxu0 %v1401
      %1907 = vmatpush.msra.mxu0 %v1398
      %1908 = vmatpush.msra.mxu0 %v1395
      %1909 = vmatpush.msra.mxu0 %v1392
      %1910 = vmatpush.msra.mxu0 %v1389
      %1911 = vmatpush.msra.mxu0 %v1386
      %1912 = vmatmul.f32.gmra.mxu0 %v1332
      %v1913 = vpop.f32.mrf.mxu0
      %v1914 = vadd.f32 %v1891, %v1913
      %1915 = vmatmul.f32.gmra.mxu0 %v1335
      %v1916 = vpop.f32.mrf.mxu0
      %v1917 = vadd.f32 %v1894, %v1916
      %1918 = vdwg.mxu0
      %1919 = vmatpush.msra.mxu0 0.0
      %1920 = vmatpush.msra.mxu0 0.0
      %1921 = vmatpush.msra.mxu0 0.0
      %1922 = vmatpush.msra.mxu0 0.0
      %1923 = vmatpush.msra.mxu0 0.0
      %1924 = vmatpush.msra.mxu0 0.0
      %1925 = vmatpush.msra.mxu0 0.0
      %1926 = vmatpush.msra.mxu0 0.0
      %1927 = vmatpush.msra.mxu0 0.0
      %1928 = vmatpush.msra.mxu0 0.0
      %1929 = vmatpush.msra.mxu0 0.0
      %1930 = vmatpush.msra.mxu0 0.0
      %1931 = vmatpush.msra.mxu0 %v1443
      %1932 = vmatpush.msra.mxu0 %v1440
      %1933 = vmatpush.msra.mxu0 %v1437
      %1934 = vmatpush.msra.mxu0 %v1434
      %1935 = vmatmul.f32.gmra.mxu0 %v1800
      %v1936 = vpop.f32.mrf.mxu0
      %v1937 = vadd.f32 %v1914, %v1936
      %1938 = vmatmul.f32.gmra.mxu0 %v1802
      %v1939 = vpop.f32.mrf.mxu0
      %v1940 = vadd.f32 %v1917, %v1939
      %1941 = vdwg.mxu0
      %1942 = vmatpush.msra.mxu0 %v1384
      %1943 = vmatpush.msra.mxu0 %v1381
      %1944 = vmatpush.msra.mxu0 %v1378
      %1945 = vmatpush.msra.mxu0 %v1375
      %1946 = vmatpush.msra.mxu0 %v1372
      %1947 = vmatpush.msra.mxu0 %v1369
      %1948 = vmatpush.msra.mxu0 %v1366
      %1949 = vmatpush.msra.mxu0 %v1363
      %1950 = vmatpush.msra.mxu0 %v1360
      %1951 = vmatpush.msra.mxu0 %v1357
      %1952 = vmatpush.msra.mxu0 %v1354
      %1953 = vmatpush.msra.mxu0 %v1351
      %1954 = vmatpush.msra.mxu0 %v1348
      %1955 = vmatpush.msra.mxu0 %v1345
      %1956 = vmatpush.msra.mxu0 %v1342
      %1957 = vmatpush.msra.mxu0 %v1339
      %1958 = vmatmul.f32.gmra.mxu0 %v1331
      %v1959 = vpop.f32.mrf.mxu0
      %v1960 = vadd.f32 %v1794, %v1959
      %1961 = vmatmul.f32.gmra.mxu0 %v1334
      %v1962 = vpop.f32.mrf.mxu0
      %v1963 = vadd.f32 %v1797, %v1962
      %1964 = vdwg.mxu0
      %1965 = vmatpush.msra.mxu0 %v1432
      %1966 = vmatpush.msra.mxu0 %v1429
      %1967 = vmatpush.msra.mxu0 %v1426
      %1968 = vmatpush.msra.mxu0 %v1423
      %1969 = vmatpush.msra.mxu0 %v1420
      %1970 = vmatpush.msra.mxu0 %v1417
      %1971 = vmatpush.msra.mxu0 %v1414
      %1972 = vmatpush.msra.mxu0 %v1411
      %1973 = vmatpush.msra.mxu0 %v1408
      %1974 = vmatpush.msra.mxu0 %v1405
      %1975 = vmatpush.msra.mxu0 %v1402
      %1976 = vmatpush.msra.mxu0 %v1399
      %1977 = vmatpush.msra.mxu0 %v1396
      %1978 = vmatpush.msra.mxu0 %v1393
      %1979 = vmatpush.msra.mxu0 %v1390
      %1980 = vmatpush.msra.mxu0 %v1387
      %1981 = vmatmul.f32.gmra.mxu0 %v1332
      %v1982 = vpop.f32.mrf.mxu0
      %v1983 = vadd.f32 %v1960, %v1982
      %1984 = vmatmul.f32.gmra.mxu0 %v1335
      %v1985 = vpop.f32.mrf.mxu0
      %v1986 = vadd.f32 %v1963, %v1985
      %1987 = vdwg.mxu0
      %1988 = vmatpush.msra.mxu0 0.0
      %1989 = vmatpush.msra.mxu0 0.0
      %1990 = vmatpush.msra.mxu0 0.0
      %1991 = vmatpush.msra.mxu0 0.0
      %1992 = vmatpush.msra.mxu0 0.0
      %1993 = vmatpush.msra.mxu0 0.0
      %1994 = vmatpush.msra.mxu0 0.0
      %1995 = vmatpush.msra.mxu0 0.0
      %1996 = vmatpush.msra.mxu0 0.0
      %1997 = vmatpush.msra.mxu0 0.0
      %1998 = vmatpush.msra.mxu0 0.0
      %1999 = vmatpush.msra.mxu0 0.0
      %2000 = vmatpush.msra.mxu0 %v1444
      %2001 = vmatpush.msra.mxu0 %v1441
      %2002 = vmatpush.msra.mxu0 %v1438
      %2003 = vmatpush.msra.mxu0 %v1435
      %2004 = vmatmul.f32.gmra.mxu0 %v1800
      %v2005 = vpop.f32.mrf.mxu0
      %v2006 = vadd.f32 %v1983, %v2005
      %2007 = vmatmul.f32.gmra.mxu0 %v1802
      %v2008 = vpop.f32.mrf.mxu0
      %v2009 = vadd.f32 %v1986, %v2008
      %2010 = vdwg.mxu0
      %v2011 = vld [vmem:[#allocation2] sm:$0xfc]
      %v2012 = vld [vmem:[#allocation2 + $0x8] sm:$0xfc]
      %v2013 = vld [vmem:[#allocation2 + $0x10] sm:$0xfc]
      %v2014 = vld [vmem:[#allocation2 + $0x30] sm:$0x3]
      %v2015 = vld [vmem:[#allocation2 + $0x38] sm:$0x3]
      %v2016 = vld [vmem:[#allocation2 + $0x40] sm:$0x3]
      %s2017 = scalar_lea.vmem %s3, 1728
      %v2018 = vld [vmem:[%s2017] sm:$0xff]
      %v2019 = vld [vmem:[%s2017 + $0x8] sm:$0xff]
      %v2020 = vld [vmem:[%s2017 + $0x10] sm:$0xff]
      %v2021 = vld [vmem:[%s2017 + $0x18] sm:$0xff]
      %v2022 = vld [vmem:[%s2017 + $0x20] sm:$0xff]
      %v2023 = vld [vmem:[%s2017 + $0x28] sm:$0xff]
      %v2024 = vld [vmem:[%s2017 + $0x30] sm:$0xff]
      %v2025 = vld [vmem:[%s2017 + $0x38] sm:$0xff]
      %v2026 = vld [vmem:[%s2017 + $0x40] sm:$0xff]
      %v2027 = vld [vmem:[%s2017 + $0x48] sm:$0xff]
      %v2028 = vld [vmem:[%s2017 + $0x50] sm:$0xff]
      %v2029 = vld [vmem:[%s2017 + $0x58] sm:$0xff]
      %v2030 = vld [vmem:[%s2017 + $0x60] sm:$0xff]
      %v2031 = vld [vmem:[%s2017 + $0x68] sm:$0xff]
      %v2032 = vld [vmem:[%s2017 + $0x70] sm:$0xff]
      %v2033 = vld [vmem:[%s2017 + $0x78] sm:$0xff]
      %v2034 = vld [vmem:[%s2017 + $0x80] sm:$0xff]
      %v2035 = vld [vmem:[%s2017 + $0x88] sm:$0xff]
      %v2036 = vld [vmem:[%s2017 + $0x90] sm:$0xff]
      %v2037 = vld [vmem:[%s2017 + $0x98] sm:$0xff]
      %v2038 = vld [vmem:[%s2017 + $0xa0] sm:$0xff]
      %v2039 = vld [vmem:[%s2017 + $0xa8] sm:$0xff]
      %v2040 = vld [vmem:[%s2017 + $0xb0] sm:$0xff]
      %v2041 = vld [vmem:[%s2017 + $0xb8] sm:$0xff]
      %v2042 = vld [vmem:[%s2017 + $0xc0] sm:$0xff]
      %v2043 = vld [vmem:[%s2017 + $0xc8] sm:$0xff]
      %v2044 = vld [vmem:[%s2017 + $0xd0] sm:$0xff]
      %v2045 = vld [vmem:[%s2017 + $0xd8] sm:$0xff]
      %v2046 = vld [vmem:[%s2017 + $0xe0] sm:$0xff]
      %v2047 = vld [vmem:[%s2017 + $0xe8] sm:$0xff]
      %v2048 = vld [vmem:[%s2017 + $0xf0] sm:$0xff]
      %v2049 = vld [vmem:[%s2017 + $0xf8] sm:$0xff]
      %v2050 = vld [vmem:[%s2017 + $0x100] sm:$0xff]
      %v2051 = vld [vmem:[%s2017 + $0x108] sm:$0xff]
      %v2052 = vld [vmem:[%s2017 + $0x110] sm:$0xff]
      %v2053 = vld [vmem:[%s2017 + $0x118] sm:$0xff]
      %v2054 = vld [vmem:[%s2017 + $0x120] sm:$0xff]
      %v2055 = vld [vmem:[%s2017 + $0x128] sm:$0xff]
      %v2056 = vld [vmem:[%s2017 + $0x130] sm:$0xff]
      %v2057 = vld [vmem:[%s2017 + $0x138] sm:$0xff]
      %v2058 = vld [vmem:[%s2017 + $0x140] sm:$0xff]
      %v2059 = vld [vmem:[%s2017 + $0x148] sm:$0xff]
      %v2060 = vld [vmem:[%s2017 + $0x150] sm:$0xff]
      %v2061 = vld [vmem:[%s2017 + $0x158] sm:$0xff]
      %v2062 = vld [vmem:[%s2017 + $0x160] sm:$0xff]
      %v2063 = vld [vmem:[%s2017 + $0x168] sm:$0xff]
      %v2064 = vld [vmem:[%s2017 + $0x170] sm:$0xff]
      %v2065 = vld [vmem:[%s2017 + $0x178] sm:$0xff]
      %v2066 = vld [vmem:[%s2017 + $0x180] sm:$0xff]
      %v2067 = vld [vmem:[%s2017 + $0x188] sm:$0xff]
      %v2068 = vld [vmem:[%s2017 + $0x190] sm:$0xff]
      %v2069 = vld [vmem:[%s2017 + $0x198] sm:$0xff]
      %v2070 = vld [vmem:[%s2017 + $0x1a0] sm:$0xff]
      %v2071 = vld [vmem:[%s2017 + $0x1a8] sm:$0xff]
      %v2072 = vld [vmem:[%s2017 + $0x1b0] sm:$0xff]
      %v2073 = vld [vmem:[%s2017 + $0x1b8] sm:$0xff]
      %v2074 = vld [vmem:[%s2017 + $0x1c0] sm:$0xff]
      %v2075 = vld [vmem:[%s2017 + $0x1c8] sm:$0xff]
      %v2076 = vld [vmem:[%s2017 + $0x1d0] sm:$0xff]
      %v2077 = vld [vmem:[%s2017 + $0x1d8] sm:$0xff]
      %v2078 = vld [vmem:[%s2017 + $0x1e0] sm:$0xff]
      %v2079 = vld [vmem:[%s2017 + $0x1e8] sm:$0xff]
      %v2080 = vld [vmem:[%s2017 + $0x1f0] sm:$0xff]
      %v2081 = vld [vmem:[%s2017 + $0x1f8] sm:$0xff]
      %v2082 = vld [vmem:[%s2017 + $0x200] sm:$0xff]
      %v2083 = vld [vmem:[%s2017 + $0x208] sm:$0xff]
      %v2084 = vld [vmem:[%s2017 + $0x210] sm:$0xff]
      %v2085 = vld [vmem:[%s2017 + $0x218] sm:$0xff]
      %v2086 = vld [vmem:[%s2017 + $0x220] sm:$0xff]
      %v2087 = vld [vmem:[%s2017 + $0x228] sm:$0xff]
      %v2088 = vld [vmem:[%s2017 + $0x230] sm:$0xff]
      %v2089 = vld [vmem:[%s2017 + $0x238] sm:$0xff]
      %v2090 = vld [vmem:[%s2017 + $0x240] sm:$0xff]
      %v2091 = vld [vmem:[%s2017 + $0x248] sm:$0xff]
      %v2092 = vld [vmem:[%s2017 + $0x250] sm:$0xff]
      %v2093 = vld [vmem:[%s2017 + $0x258] sm:$0xff]
      %v2094 = vld [vmem:[%s2017 + $0x260] sm:$0xff]
      %v2095 = vld [vmem:[%s2017 + $0x268] sm:$0xff]
      %v2096 = vld [vmem:[%s2017 + $0x270] sm:$0xff]
      %v2097 = vld [vmem:[%s2017 + $0x278] sm:$0xff]
      %v2098 = vld [vmem:[%s2017 + $0x280] sm:$0xff]
      %v2099 = vld [vmem:[%s2017 + $0x288] sm:$0xff]
      %v2100 = vld [vmem:[%s2017 + $0x290] sm:$0xff]
      %v2101 = vld [vmem:[%s2017 + $0x298] sm:$0xff]
      %v2102 = vld [vmem:[%s2017 + $0x2a0] sm:$0xff]
      %v2103 = vld [vmem:[%s2017 + $0x2a8] sm:$0xff]
      %v2104 = vld [vmem:[%s2017 + $0x2b0] sm:$0xff]
      %v2105 = vld [vmem:[%s2017 + $0x2b8] sm:$0xff]
      %v2106 = vld [vmem:[%s2017 + $0x2c0] sm:$0xff]
      %v2107 = vld [vmem:[%s2017 + $0x2c8] sm:$0xff]
      %v2108 = vld [vmem:[%s2017 + $0x2d0] sm:$0xff]
      %v2109 = vld [vmem:[%s2017 + $0x2d8] sm:$0xff]
      %v2110 = vld [vmem:[%s2017 + $0x2e0] sm:$0xff]
      %v2111 = vld [vmem:[%s2017 + $0x2e8] sm:$0xff]
      %v2112 = vld [vmem:[%s2017 + $0x2f0] sm:$0xff]
      %v2113 = vld [vmem:[%s2017 + $0x2f8] sm:$0xff]
      %v2114 = vld [vmem:[%s2017 + $0x300] sm:$0xff]
      %v2115 = vld [vmem:[%s2017 + $0x308] sm:$0xff]
      %v2116 = vld [vmem:[%s2017 + $0x310] sm:$0xff]
      %v2117 = vld [vmem:[%s2017 + $0x318] sm:$0xff]
      %v2118 = vld [vmem:[%s2017 + $0x320] sm:$0xff]
      %v2119 = vld [vmem:[%s2017 + $0x328] sm:$0xff]
      %v2120 = vld [vmem:[%s2017 + $0x330] sm:$0xff]
      %v2121 = vld [vmem:[%s2017 + $0x338] sm:$0xff]
      %v2122 = vld [vmem:[%s2017 + $0x340] sm:$0xff]
      %v2123 = vld [vmem:[%s2017 + $0x348] sm:$0xff]
      %v2124 = vld [vmem:[%s2017 + $0x350] sm:$0xff]
      %v2125 = vld [vmem:[%s2017 + $0x358] sm:$0xff]
      %v2132 = vrot.slane %v2011, 2
      %v2133 = vrot.slane %v1334, 2
      %v2134 = vsel %vm1028, %v2132, %v2133
      %v2135 = vrot.slane %v2012, 2
      %v2136 = vrot.slane %v1335, 2
      %v2137 = vsel %vm1028, %v2135, %v2136
      %v2138 = vrot.slane %v2013, 2
      %v2139 = vrot.slane %v1336, 2
      %v2140 = vsel %vm1028, %v2138, %v2139
      %v2141 = vrot.slane %v2014, 2
      %v2142 = vsel %vm1028, %v2133, %v2141
      %v2143 = vrot.slane %v2015, 2
      %v2144 = vsel %vm1028, %v2136, %v2143
      %v2145 = vrot.slane %v2016, 2
      %v2146 = vsel %vm1028, %v2139, %v2145
      %v2151 = vsel %vm483, %v2140, 0
      %v2153 = vsel %vm483, %v2146, 0
      %2155 = vmatpush.msra.mxu0 %v2063
      %2156 = vmatpush.msra.mxu0 %v2060
      %2157 = vmatpush.msra.mxu0 %v2057
      %2158 = vmatpush.msra.mxu0 %v2054
      %2159 = vmatpush.msra.mxu0 %v2051
      %2160 = vmatpush.msra.mxu0 %v2048
      %2161 = vmatpush.msra.mxu0 %v2045
      %2162 = vmatpush.msra.mxu0 %v2042
      %2163 = vmatpush.msra.mxu0 %v2039
      %2164 = vmatpush.msra.mxu0 %v2036
      %2165 = vmatpush.msra.mxu0 %v2033
      %2166 = vmatpush.msra.mxu0 %v2030
      %2167 = vmatpush.msra.mxu0 %v2027
      %2168 = vmatpush.msra.mxu0 %v2024
      %2169 = vmatpush.msra.mxu0 %v2021
      %2170 = vmatpush.msra.mxu0 %v2018
      %2171 = vmatmul.f32.gmra.mxu0 %v2134
      %v2172 = vpop.f32.mrf.mxu0
      %v2173 = vadd.f32 0.0, %v2172
      %2174 = vmatmul.f32.gmra.mxu0 %v2142
      %v2175 = vpop.f32.mrf.mxu0
      %v2176 = vadd.f32 0.0, %v2175
      %2177 = vdwg.mxu0
      %2178 = vmatpush.msra.mxu0 %v2111
      %2179 = vmatpush.msra.mxu0 %v2108
      %2180 = vmatpush.msra.mxu0 %v2105
      %2181 = vmatpush.msra.mxu0 %v2102
      %2182 = vmatpush.msra.mxu0 %v2099
      %2183 = vmatpush.msra.mxu0 %v2096
      %2184 = vmatpush.msra.mxu0 %v2093
      %2185 = vmatpush.msra.mxu0 %v2090
      %2186 = vmatpush.msra.mxu0 %v2087
      %2187 = vmatpush.msra.mxu0 %v2084
      %2188 = vmatpush.msra.mxu0 %v2081
      %2189 = vmatpush.msra.mxu0 %v2078
      %2190 = vmatpush.msra.mxu0 %v2075
      %2191 = vmatpush.msra.mxu0 %v2072
      %2192 = vmatpush.msra.mxu0 %v2069
      %2193 = vmatpush.msra.mxu0 %v2066
      %2194 = vmatmul.f32.gmra.mxu0 %v2137
      %v2195 = vpop.f32.mrf.mxu0
      %v2196 = vadd.f32 %v2173, %v2195
      %2197 = vmatmul.f32.gmra.mxu0 %v2144
      %v2198 = vpop.f32.mrf.mxu0
      %v2199 = vadd.f32 %v2176, %v2198
      %2200 = vdwg.mxu0
      %2201 = vmatpush.msra.mxu0 0.0
      %2202 = vmatpush.msra.mxu0 0.0
      %2203 = vmatpush.msra.mxu0 0.0
      %2204 = vmatpush.msra.mxu0 0.0
      %2205 = vmatpush.msra.mxu0 0.0
      %2206 = vmatpush.msra.mxu0 0.0
      %2207 = vmatpush.msra.mxu0 0.0
      %2208 = vmatpush.msra.mxu0 0.0
      %2209 = vmatpush.msra.mxu0 0.0
      %2210 = vmatpush.msra.mxu0 0.0
      %2211 = vmatpush.msra.mxu0 0.0
      %2212 = vmatpush.msra.mxu0 0.0
      %2213 = vmatpush.msra.mxu0 %v2123
      %2214 = vmatpush.msra.mxu0 %v2120
      %2215 = vmatpush.msra.mxu0 %v2117
      %2216 = vmatpush.msra.mxu0 %v2114
      %2217 = vmatmul.f32.gmra.mxu0 %v2151
      %v2218 = vpop.f32.mrf.mxu0
      %v2219 = vadd.f32 %v2196, %v2218
      %2220 = vmatmul.f32.gmra.mxu0 %v2153
      %v2221 = vpop.f32.mrf.mxu0
      %v2222 = vadd.f32 %v2199, %v2221
      %2223 = vdwg.mxu0
      %2224 = vmatpush.msra.mxu0 %v2064
      %2225 = vmatpush.msra.mxu0 %v2061
      %2226 = vmatpush.msra.mxu0 %v2058
      %2227 = vmatpush.msra.mxu0 %v2055
      %2228 = vmatpush.msra.mxu0 %v2052
      %2229 = vmatpush.msra.mxu0 %v2049
      %2230 = vmatpush.msra.mxu0 %v2046
      %2231 = vmatpush.msra.mxu0 %v2043
      %2232 = vmatpush.msra.mxu0 %v2040
      %2233 = vmatpush.msra.mxu0 %v2037
      %2234 = vmatpush.msra.mxu0 %v2034
      %2235 = vmatpush.msra.mxu0 %v2031
      %2236 = vmatpush.msra.mxu0 %v2028
      %2237 = vmatpush.msra.mxu0 %v2025
      %2238 = vmatpush.msra.mxu0 %v2022
      %2239 = vmatpush.msra.mxu0 %v2019
      %2240 = vmatmul.f32.gmra.mxu0 %v2134
      %v2241 = vpop.f32.mrf.mxu0
      %v2242 = vadd.f32 0.0, %v2241
      %2243 = vmatmul.f32.gmra.mxu0 %v2142
      %v2244 = vpop.f32.mrf.mxu0
      %v2245 = vadd.f32 0.0, %v2244
      %2246 = vdwg.mxu0
      %2247 = vmatpush.msra.mxu0 %v2112
      %2248 = vmatpush.msra.mxu0 %v2109
      %2249 = vmatpush.msra.mxu0 %v2106
      %2250 = vmatpush.msra.mxu0 %v2103
      %2251 = vmatpush.msra.mxu0 %v2100
      %2252 = vmatpush.msra.mxu0 %v2097
      %2253 = vmatpush.msra.mxu0 %v2094
      %2254 = vmatpush.msra.mxu0 %v2091
      %2255 = vmatpush.msra.mxu0 %v2088
      %2256 = vmatpush.msra.mxu0 %v2085
      %2257 = vmatpush.msra.mxu0 %v2082
      %2258 = vmatpush.msra.mxu0 %v2079
      %2259 = vmatpush.msra.mxu0 %v2076
      %2260 = vmatpush.msra.mxu0 %v2073
      %2261 = vmatpush.msra.mxu0 %v2070
      %2262 = vmatpush.msra.mxu0 %v2067
      %2263 = vmatmul.f32.gmra.mxu0 %v2137
      %v2264 = vpop.f32.mrf.mxu0
      %v2265 = vadd.f32 %v2242, %v2264
      %2266 = vmatmul.f32.gmra.mxu0 %v2144
      %v2267 = vpop.f32.mrf.mxu0
      %v2268 = vadd.f32 %v2245, %v2267
      %2269 = vdwg.mxu0
      %2270 = vmatpush.msra.mxu0 0.0
      %2271 = vmatpush.msra.mxu0 0.0
      %2272 = vmatpush.msra.mxu0 0.0
      %2273 = vmatpush.msra.mxu0 0.0
      %2274 = vmatpush.msra.mxu0 0.0
      %2275 = vmatpush.msra.mxu0 0.0
      %2276 = vmatpush.msra.mxu0 0.0
      %2277 = vmatpush.msra.mxu0 0.0
      %2278 = vmatpush.msra.mxu0 0.0
      %2279 = vmatpush.msra.mxu0 0.0
      %2280 = vmatpush.msra.mxu0 0.0
      %2281 = vmatpush.msra.mxu0 0.0
      %2282 = vmatpush.msra.mxu0 %v2124
      %2283 = vmatpush.msra.mxu0 %v2121
      %2284 = vmatpush.msra.mxu0 %v2118
      %2285 = vmatpush.msra.mxu0 %v2115
      %2286 = vmatmul.f32.gmra.mxu0 %v2151
      %v2287 = vpop.f32.mrf.mxu0
      %v2288 = vadd.f32 %v2265, %v2287
      %2289 = vmatmul.f32.gmra.mxu0 %v2153
      %v2290 = vpop.f32.mrf.mxu0
      %v2291 = vadd.f32 %v2268, %v2290
      %2292 = vdwg.mxu0
      %2293 = vmatpush.msra.mxu0 %v2065
      %2294 = vmatpush.msra.mxu0 %v2062
      %2295 = vmatpush.msra.mxu0 %v2059
      %2296 = vmatpush.msra.mxu0 %v2056
      %2297 = vmatpush.msra.mxu0 %v2053
      %2298 = vmatpush.msra.mxu0 %v2050
      %2299 = vmatpush.msra.mxu0 %v2047
      %2300 = vmatpush.msra.mxu0 %v2044
      %2301 = vmatpush.msra.mxu0 %v2041
      %2302 = vmatpush.msra.mxu0 %v2038
      %2303 = vmatpush.msra.mxu0 %v2035
      %2304 = vmatpush.msra.mxu0 %v2032
      %2305 = vmatpush.msra.mxu0 %v2029
      %2306 = vmatpush.msra.mxu0 %v2026
      %2307 = vmatpush.msra.mxu0 %v2023
      %2308 = vmatpush.msra.mxu0 %v2020
      %2309 = vmatmul.f32.gmra.mxu0 %v2134
      %v2310 = vpop.f32.mrf.mxu0
      %v2311 = vadd.f32 0.0, %v2310
      %2312 = vmatmul.f32.gmra.mxu0 %v2142
      %v2313 = vpop.f32.mrf.mxu0
      %v2314 = vadd.f32 0.0, %v2313
      %2315 = vdwg.mxu0
      %2316 = vmatpush.msra.mxu0 %v2113
      %2317 = vmatpush.msra.mxu0 %v2110
      %2318 = vmatpush.msra.mxu0 %v2107
      %2319 = vmatpush.msra.mxu0 %v2104
      %2320 = vmatpush.msra.mxu0 %v2101
      %2321 = vmatpush.msra.mxu0 %v2098
      %2322 = vmatpush.msra.mxu0 %v2095
      %2323 = vmatpush.msra.mxu0 %v2092
      %2324 = vmatpush.msra.mxu0 %v2089
      %2325 = vmatpush.msra.mxu0 %v2086
      %2326 = vmatpush.msra.mxu0 %v2083
      %2327 = vmatpush.msra.mxu0 %v2080
      %2328 = vmatpush.msra.mxu0 %v2077
      %2329 = vmatpush.msra.mxu0 %v2074
      %2330 = vmatpush.msra.mxu0 %v2071
      %2331 = vmatpush.msra.mxu0 %v2068
      %2332 = vmatmul.f32.gmra.mxu0 %v2137
      %v2333 = vpop.f32.mrf.mxu0
      %v2334 = vadd.f32 %v2311, %v2333
      %2335 = vmatmul.f32.gmra.mxu0 %v2144
      %v2336 = vpop.f32.mrf.mxu0
      %v2337 = vadd.f32 %v2314, %v2336
      %2338 = vdwg.mxu0
      %2339 = vmatpush.msra.mxu0 0.0
      %2340 = vmatpush.msra.mxu0 0.0
      %2341 = vmatpush.msra.mxu0 0.0
      %2342 = vmatpush.msra.mxu0 0.0
      %2343 = vmatpush.msra.mxu0 0.0
      %2344 = vmatpush.msra.mxu0 0.0
      %2345 = vmatpush.msra.mxu0 0.0
      %2346 = vmatpush.msra.mxu0 0.0
      %2347 = vmatpush.msra.mxu0 0.0
      %2348 = vmatpush.msra.mxu0 0.0
      %2349 = vmatpush.msra.mxu0 0.0
      %2350 = vmatpush.msra.mxu0 0.0
      %2351 = vmatpush.msra.mxu0 %v2125
      %2352 = vmatpush.msra.mxu0 %v2122
      %2353 = vmatpush.msra.mxu0 %v2119
      %2354 = vmatpush.msra.mxu0 %v2116
      %2355 = vmatmul.f32.gmra.mxu0 %v2151
      %v2356 = vpop.f32.mrf.mxu0
      %v2357 = vadd.f32 %v2334, %v2356
      %2358 = vmatmul.f32.gmra.mxu0 %v2153
      %v2359 = vpop.f32.mrf.mxu0
      %v2360 = vadd.f32 %v2337, %v2359
      %2361 = vdwg.mxu0
      %v2362 = vadd.f32 %v1868, %v2219
      %v2363 = vadd.f32 %v1937, %v2288
      %v2364 = vadd.f32 %v2006, %v2357
      %v2365 = vadd.f32 %v1871, %v2222
      %v2366 = vadd.f32 %v1940, %v2291
      %v2367 = vadd.f32 %v2009, %v2360
      %v2368 = vld [vmem:[%s4] sm:$0x7]
      %v2370 = vperm.slane %v2368, 0
      %v2371 = vperm.slane %v2368, 1
      %v2372 = vperm.slane %v2368, 2
      %v2376 = vadd.f32 %v2362, %v2370
      %v2377 = vadd.f32 %v2363, %v2371
      %v2378 = vadd.f32 %v2364, %v2372
      %v2379 = vadd.f32 %v2365, %v2370
      %v2380 = vadd.f32 %v2366, %v2371
      %v2381 = vadd.f32 %v2367, %v2372
      %v2382 = vld [vmem:[%s219] sm:$0xfe]
      %v2383 = vld [vmem:[%s219 + $0x8] sm:$0xfe]
      %v2384 = vld [vmem:[%s219 + $0x10] sm:$0xfe]
      %v2385 = vld [vmem:[%s219 + $0x18] sm:$0xff]
      %v2386 = vld [vmem:[%s219 + $0x20] sm:$0xff]
      %v2387 = vld [vmem:[%s219 + $0x28] sm:$0xff]
      %v2388 = vld [vmem:[%s219 + $0x30] sm:$0x1]
      %v2389 = vld [vmem:[%s219 + $0x38] sm:$0x1]
      %v2390 = vld [vmem:[%s219 + $0x40] sm:$0x1]
      %v2400 = vrot.slane %v2382, 1
      %v2401 = vrot.slane %v2385, 1
      %v2402 = vsel %vm463, %v2400, %v2401
      %v2403 = vrot.slane %v2383, 1
      %v2404 = vrot.slane %v2386, 1
      %v2405 = vsel %vm463, %v2403, %v2404
      %v2406 = vrot.slane %v2384, 1
      %v2407 = vrot.slane %v2387, 1
      %v2408 = vsel %vm463, %v2406, %v2407
      %v2409 = vrot.slane %v2388, 1
      %v2410 = vsel %vm463, %v2401, %v2409
      %v2411 = vrot.slane %v2389, 1
      %v2412 = vsel %vm463, %v2404, %v2411
      %v2413 = vrot.slane %v2390, 1
      %v2414 = vsel %vm463, %v2407, %v2413
      %v2421 = vadd.f32 %v2376, %v2402
      %v2422 = vadd.f32 %v2377, %v2405
      %v2423 = vadd.f32 %v2378, %v2408
      %v2424 = vadd.f32 %v2379, %v2410
      %v2425 = vadd.f32 %v2380, %v2412
      %v2426 = vadd.f32 %v2381, %v2414
      %2427 = vst [vmem:[%s224] sm:$0xff] 0.0
      %2428 = vst [vmem:[%s224 + $0x8] sm:$0xff] 0.0
      %2429 = vst.msk [vmem:[%s224 + $0x10] sm:$0xff] %vm483, 0.0
      %2430 = vst [vmem:[%s224 + $0x18] sm:$0xff] 0.0
      %2431 = vst [vmem:[%s224 + $0x20] sm:$0xff] 0.0
      %2432 = vst.msk [vmem:[%s224 + $0x28] sm:$0xff] %vm483, 0.0
      %2433 = vst [vmem:[%s224 + $0x30] sm:$0x3] 0.0
      %2434 = vst [vmem:[%s224 + $0x38] sm:$0x3] 0.0
      %2435 = vst.msk [vmem:[%s224 + $0x40] sm:$0x3] %vm1293, 0.0
      %v2442 = vrot.slane %v2421, 7
      %v2443 = vrot.slane %v2422, 7
      %v2444 = vrot.slane %v2423, 7
      %v2445 = vrot.slane %v2424, 7
      %v2446 = vsel %vm1301, %v2442, %v2445
      %v2447 = vrot.slane %v2425, 7
      %v2448 = vsel %vm1301, %v2443, %v2447
      %v2449 = vrot.slane %v2426, 7
      %v2450 = vsel %vm1301, %v2444, %v2449
      %2460 = vst [vmem:[%s224] sm:$0xfe] %v2442
      %2461 = vst [vmem:[%s224 + $0x8] sm:$0xfe] %v2443
      %2462 = vst.msk [vmem:[%s224 + $0x10] sm:$0xfe] %vm1322, %v2444
      %2463 = vst [vmem:[%s224 + $0x18] sm:$0xff] %v2446
      %2464 = vst [vmem:[%s224 + $0x20] sm:$0xff] %v2448
      %2465 = vst.msk [vmem:[%s224 + $0x28] sm:$0xff] %vm483, %v2450
      %2466 = vst [vmem:[%s224 + $0x30] sm:$0x1] %v2445
      %2467 = vst [vmem:[%s224 + $0x38] sm:$0x1] %v2447
      %2468 = vst.msk [vmem:[%s224 + $0x40] sm:$0x1] %vm1329, %v2449
      %p2469 = scmp.lt.s32.totalorder %s16, 1
      %s2470 = scalar_select %p2469, %s16, 1
      %s2471 = smul.addr %s2470, 9
      %s2472 = smul.addr %s2471, 8
      %s2473 = scalar_lea.vmem %s5, %s2472
      // Predicated region
      $region41: #{usr_forward.17} parent=39 // pred_check
        %p2474 = pneg %p144
      $region42: #{usr_forward.17} parent=39 // pred_check_branch
        %2476 = sbr.rel (%p2474) target = $region44
      $region43: #{usr_forward.17} parent=39 // pred_region
        _
      $region44: #{usr_forward.17} parent=39 // pred_fallthru
        _
    $region40: #{usr_forward.17} parent=5 // pred_fallthru
      _
    %p2477 = scmp.le.s32.totalorder 2, %s11
    // Predicated region
    $region45: #{usr_forward.17} parent=5 // pred_check
      %p2478 = pneg %p2477
    $region46: #{usr_forward.17} parent=5 // pred_check_branch
      %2480 = sbr.rel (%p2478) target = $region48
    $region47: #{usr_forward.17} parent=5 // pred_region
      %s2481 = ssub.s32 %s11, 2
      // Predicated region
      $region49: #{usr_forward.17} parent=47 // pred_check
        %p2482 = pneg %p150
      $region50: #{usr_forward.17} parent=47 // pred_check_branch
        %2484 = sbr.rel (%p2482) target = $region52
      $region51: #{usr_forward.17} parent=47 // pred_region
        %p2485 = scmp.lt.s32.totalorder %s17, 1
        %s2486 = scalar_select %p2485, %s17, 1
        %s2487 = smul.addr %s2486, 9
        %s2488 = smul.addr %s2487, 8
        %s2489 = scalar_lea.vmem %s5, %s2488
      $region52: #{usr_forward.17} parent=47 // pred_fallthru
        _
    $region48: #{usr_forward.17} parent=5 // pred_fallthru
      _
  $region6: #{usr_forward.17} parent=0 // loop_footer
    %s15 = sadd.s32 1, %s11
  $region7: #{usr_forward.17} parent=0 // loop_footer_branch
    %10 = sbr.rel target = $region3
  $region8: #{usr_forward.17} parent=0 // loop_exit
    _

// kernel: tile.169
$region0: #{tile.169}
  %s0 = inlined_call_operand.vmem [shape: f32[16,3], index: 0, kind: input, shape index: {}]
  %s1 = inlined_call_operand.vmem [shape: f32[1,48], index: 1, kind: output, shape index: {}]
  $region1: #{tile.169} parent=0
    #allocation0 [shape = 'u8[4096]{0}', space=vmem, size = 0x1000, scoped, tag = 'scoped mem for output reshape']
    %v2 = vld [vmem:[%s0] sm:$0x1]
    %vm3 = vcmask 23552
    %4 = vst.msk [vmem:[#allocation0] sm:$0x1] %vm3, %v2
    %s5 = scalar_lea.vmem %s0, 15
    %v6 = vld [vmem:[%s5] sm:$0x1]
    %7 = vrot.lane.b32.xlu0 %v6, 45
    %v8 = vpop.permute.xlu0 %7
    %vm9 = vcmask 392552
    %10 = vst.msk [vmem:[#allocation0] sm:$0x1] %vm9, %v8
    %s11 = scalar_lea.vmem %s0, 14
    %v12 = vld [vmem:[%s11] sm:$0x1]
    %13 = vrot.lane.b32.xlu0 %v12, 42
    %v14 = vpop.permute.xlu0 %13
    %vm15 = vcmask 367952
    %16 = vst.msk [vmem:[#allocation0] sm:$0x1] %vm15, %v14
    %s17 = scalar_lea.vmem %s0, 13
    %v18 = vld [vmem:[%s17] sm:$0x1]
    %19 = vrot.lane.b32.xlu0 %v18, 39
    %v20 = vpop.permute.xlu0 %19
    %vm21 = vcmask 343352
    %22 = vst.msk [vmem:[#allocation0] sm:$0x1] %vm21, %v20
    %s23 = scalar_lea.vmem %s0, 12
    %v24 = vld [vmem:[%s23] sm:$0x1]
    %25 = vrot.lane.b32.xlu0 %v24, 36
    %v26 = vpop.permute.xlu0 %25
    %vm27 = vcmask 318752
    %28 = vst.msk [vmem:[#allocation0] sm:$0x1] %vm27, %v26
    %s29 = scalar_lea.vmem %s0, 11
    %v30 = vld [vmem:[%s29] sm:$0x1]
    %31 = vrot.lane.b32.xlu0 %v30, 33
    %v32 = vpop.permute.xlu0 %31
    %vm33 = vcmask 294152
    %34 = vst.msk [vmem:[#allocation0] sm:$0x1] %vm33, %v32
    %s35 = scalar_lea.vmem %s0, 10
    %v36 = vld [vmem:[%s35] sm:$0x1]
    %37 = vrot.lane.b32.xlu0 %v36, 30
    %v38 = vpop.permute.xlu0 %37
    %vm39 = vcmask 269552
    %40 = vst.msk [vmem:[#allocation0] sm:$0x1] %vm39, %v38
    %s41 = scalar_lea.vmem %s0, 9
    %v42 = vld [vmem:[%s41] sm:$0x1]
    %43 = vrot.lane.b32.xlu0 %v42, 27
    %v44 = vpop.permute.xlu0 %43
    %vm45 = vcmask 244952
    %46 = vst.msk [vmem:[#allocation0] sm:$0x1] %vm45, %v44
    %s47 = scalar_lea.vmem %s0, 8
    %v48 = vld [vmem:[%s47] sm:$0x1]
    %49 = vrot.lane.b32.xlu0 %v48, 24
    %v50 = vpop.permute.xlu0 %49
    %vm51 = vcmask 220352
    %52 = vst.msk [vmem:[#allocation0] sm:$0x1] %vm51, %v50
    %s53 = scalar_lea.vmem %s0, 7
    %v54 = vld [vmem:[%s53] sm:$0x1]
    %55 = vrot.lane.b32.xlu0 %v54, 21
    %v56 = vpop.permute.xlu0 %55
    %vm57 = vcmask 195752
    %58 = vst.msk [vmem:[#allocation0] sm:$0x1] %vm57, %v56
    %s59 = scalar_lea.vmem %s0, 6
    %v60 = vld [vmem:[%s59] sm:$0x1]
    %61 = vrot.lane.b32.xlu0 %v60, 18
    %v62 = vpop.permute.xlu0 %61
    %vm63 = vcmask 171152
    %64 = vst.msk [vmem:[#allocation0] sm:$0x1] %vm63, %v62
    %s65 = scalar_lea.vmem %s0, 5
    %v66 = vld [vmem:[%s65] sm:$0x1]
    %67 = vrot.lane.b32.xlu0 %v66, 15
    %v68 = vpop.permute.xlu0 %67
    %vm69 = vcmask 146552
    %70 = vst.msk [vmem:[#allocation0] sm:$0x1] %vm69, %v68
    %s71 = scalar_lea.vmem %s0, 4
    %v72 = vld [vmem:[%s71] sm:$0x1]
    %73 = vrot.lane.b32.xlu0 %v72, 12
    %v74 = vpop.permute.xlu0 %73
    %vm75 = vcmask 121952
    %76 = vst.msk [vmem:[#allocation0] sm:$0x1] %vm75, %v74
    %s77 = scalar_lea.vmem %s0, 3
    %v78 = vld [vmem:[%s77] sm:$0x1]
    %79 = vrot.lane.b32.xlu0 %v78, 9
    %v80 = vpop.permute.xlu0 %79
    %vm81 = vcmask 97352
    %82 = vst.msk [vmem:[#allocation0] sm:$0x1] %vm81, %v80
    %s83 = scalar_lea.vmem %s0, 2
    %v84 = vld [vmem:[%s83] sm:$0x1]
    %85 = vrot.lane.b32.xlu0 %v84, 6
    %v86 = vpop.permute.xlu0 %85
    %vm87 = vcmask 72752
    %88 = vst.msk [vmem:[#allocation0] sm:$0x1] %vm87, %v86
    %s89 = scalar_lea.vmem %s0, 1
    %v90 = vld [vmem:[%s89] sm:$0x1]
    %91 = vrot.lane.b32.xlu0 %v90, 3
    %v92 = vpop.permute.xlu0 %91
    %vm93 = vcmask 48152
    %94 = vst.msk [vmem:[#allocation0] sm:$0x1] %vm93, %v92
    %s96 = ssub.s32 2, 1
    %v97 = vld [vmem:[#allocation0] sm:%s96]
    %s99 = ssub.s32 2, 1
    %100 = vst [vmem:[%s1] sm:%s99] %v97

// kernel: usr_forward.21
$region0: #{usr_forward.21}
  #allocation0 [shape = 'u32[]', space=smem, size = 0x4, offset = 0x4, fixed_abs, tag = 'smem constant byte address 0x4 - core index']
  #allocation1 [shape = 'u32[72,128]{1,0:T(1,128)}', space=vmem, size = 0x9000, scoped, tag = 'internal scratch']
  %s0 = inlined_call_operand.vmem [shape: f32[2,18,288], index: 0, kind: input, shape index: {}]
  %s1 = inlined_call_operand.vmem [shape: f32[3,288,48], index: 1, kind: input, shape index: {}]
  %s2 = inlined_call_operand.vmem [shape: f32[1,48], index: 2, kind: input, shape index: {}]
  %s3 = inlined_call_operand.vmem [shape: f32[2,16,48], index: 3, kind: input, shape index: {}]
  %s4 = inlined_call_operand.vmem [shape: f32[2,16,48], index: 4, kind: output, shape index: {}]
  %s5 = sld [smem:[#allocation0]]
  $region49: #{usr_forward.21} parent=0
    _
  %s7 = ssub.s32 1, %s5
  %s8 = scalar_select 0, %s7, %s5
  loop: start=0, step=1, limit=4
  $region2: #{usr_forward.21} parent=0 // loop_pre_header
    _
  $region3: #{usr_forward.21} parent=0 // loop_header
    %s10 = sphi 0, %s14
    %p11 = scmp.ge.s32.totalorder %s10, 4
    %s20 = sphi 0, %s22
    %s23 = sphi 0, %s20
    %s24 = sphi 0, %s23
    %s40 = sphi 0, %s24
    %s44 = sphi 0, %s44
    %s46 = sphi 0, %s44
    %s47 = sphi 0, %s46
    %s61 = sphi 0, %s47
    %s65 = sphi 0, %s65
    %s67 = sphi 0, %s65
    %s68 = sphi 0, %s67
    %s82 = sphi 0, %s68
    %s88 = sphi 0, %s90
    %s91 = sphi 0, %s88
    %s92 = sphi 0, %s91
    %s108 = sphi 0, %s92
    %s114 = sphi 0, %s116
    %s117 = sphi 0, %s114
    %s118 = sphi 0, %s117
    %s134 = sphi 0, %s118
  $region4: #{usr_forward.21} parent=0 // loop_header_branch
    %13 = sbr.rel (%p11) target = $region8
  $region5: #{usr_forward.21} parent=0 // loop_body
    %s15 = ssub.s32 %s10, 1
    %s16 = ssub.s32 %s10, 2
    %s17 = sadd.s32 %s10, 1
    %s18 = ssub.s32 %s10, %s17
    %p19 = scmp.eq.s32.totalorder %s18, 0
    %s21 = sadd.s32 %s20, 1
    %s22 = scalar_select %p19, %s20, %s21
    %p25 = pneg %p19
    %p26 = scmp.eq.s32.totalorder %s10, 1
    %p27 = por %p25, %p26
    %p28 = scmp.ne.s32.totalorder %s20, %s23
    %p29 = scmp.eq.s32.totalorder %s10, 0
    %p30 = por %p28, %p29
    %p31 = scmp.ne.s32.totalorder %s20, %s23
    %p32 = scmp.eq.s32.totalorder %s15, 1
    %p33 = por %p31, %p32
    %p34 = scmp.ne.s32.totalorder %s23, %s24
    %p35 = scmp.eq.s32.totalorder %s15, 0
    %p36 = por %p34, %p35
    %p37 = scmp.ne.s32.totalorder %s23, %s24
    %p38 = scmp.eq.s32.totalorder %s16, 1
    %p39 = por %p37, %p38
    %p41 = scmp.ne.s32.totalorder %s24, %s40
    %p42 = scmp.eq.s32.totalorder %s16, 0
    %p43 = por %p41, %p42
    %s45 = sadd.s32 %s44, 1
    %p48 = scmp.eq.s32.totalorder %s10, 1
    %p49 = scmp.ne.s32.totalorder %s44, %s46
    %p50 = scmp.eq.s32.totalorder %s10, 0
    %p51 = por %p49, %p50
    %p52 = scmp.ne.s32.totalorder %s44, %s46
    %p53 = scmp.eq.s32.totalorder %s15, 1
    %p54 = por %p52, %p53
    %p55 = scmp.ne.s32.totalorder %s46, %s47
    %p56 = scmp.eq.s32.totalorder %s15, 0
    %p57 = por %p55, %p56
    %p58 = scmp.ne.s32.totalorder %s46, %s47
    %p59 = scmp.eq.s32.totalorder %s16, 1
    %p60 = por %p58, %p59
    %p62 = scmp.ne.s32.totalorder %s47, %s61
    %p63 = scmp.eq.s32.totalorder %s16, 0
    %p64 = por %p62, %p63
    %s66 = sadd.s32 %s65, 1
    %p69 = scmp.eq.s32.totalorder %s10, 1
    %p70 = scmp.ne.s32.totalorder %s65, %s67
    %p71 = scmp.eq.s32.totalorder %s10, 0
    %p72 = por %p70, %p71
    %p73 = scmp.ne.s32.totalorder %s65, %s67
    %p74 = scmp.eq.s32.totalorder %s15, 1
    %p75 = por %p73, %p74
    %p76 = scmp.ne.s32.totalorder %s67, %s68
    %p77 = scmp.eq.s32.totalorder %s15, 0
    %p78 = por %p76, %p77
    %p79 = scmp.ne.s32.totalorder %s67, %s68
    %p80 = scmp.eq.s32.totalorder %s16, 1
    %p81 = por %p79, %p80
    %p83 = scmp.ne.s32.totalorder %s68, %s82
    %p84 = scmp.eq.s32.totalorder %s16, 0
    %p85 = por %p83, %p84
    %s86 = ssub.s32 %s10, %s17
    %p87 = scmp.eq.s32.totalorder %s86, 0
    %s89 = sadd.s32 %s88, 1
    %s90 = scalar_select %p87, %s88, %s89
    %p93 = pneg %p87
    %p94 = scmp.eq.s32.totalorder %s10, 1
    %p95 = por %p93, %p94
    %p96 = scmp.ne.s32.totalorder %s88, %s91
    %p97 = scmp.eq.s32.totalorder %s10, 0
    %p98 = por %p96, %p97
    %p99 = scmp.ne.s32.totalorder %s88, %s91
    %p100 = scmp.eq.s32.totalorder %s15, 1
    %p101 = por %p99, %p100
    %p102 = scmp.ne.s32.totalorder %s91, %s92
    %p103 = scmp.eq.s32.totalorder %s15, 0
    %p104 = por %p102, %p103
    %p105 = scmp.ne.s32.totalorder %s91, %s92
    %p106 = scmp.eq.s32.totalorder %s16, 1
    %p107 = por %p105, %p106
    %p109 = scmp.ne.s32.totalorder %s92, %s108
    %p110 = scmp.eq.s32.totalorder %s16, 0
    %p111 = por %p109, %p110
    %s112 = ssub.s32 %s10, %s17
    %p113 = scmp.eq.s32.totalorder %s112, 0
    %s115 = sadd.s32 %s114, 1
    %s116 = scalar_select %p113, %s114, %s115
    %p119 = pneg %p113
    %p120 = scmp.eq.s32.totalorder %s10, 1
    %p121 = por %p119, %p120
    %p122 = scmp.ne.s32.totalorder %s114, %s117
    %p123 = scmp.eq.s32.totalorder %s10, 0
    %p124 = por %p122, %p123
    %p125 = scmp.ne.s32.totalorder %s114, %s117
    %p126 = scmp.eq.s32.totalorder %s15, 1
    %p127 = por %p125, %p126
    %p128 = scmp.ne.s32.totalorder %s117, %s118
    %p129 = scmp.eq.s32.totalorder %s15, 0
    %p130 = por %p128, %p129
    %p131 = scmp.ne.s32.totalorder %s117, %s118
    %p132 = scmp.eq.s32.totalorder %s16, 1
    %p133 = por %p131, %p132
    %p135 = scmp.ne.s32.totalorder %s118, %s134
    %p136 = scmp.eq.s32.totalorder %s16, 0
    %p137 = por %p135, %p136
    %p138 = scmp.le.s32.totalorder 1, %s10
    %p139 = scmp.lt.s32.totalorder %s10, 3
    %p140 = pnand %p138, %p139
    %p141 = pneg %p140
    // Predicated region
    $region9: #{usr_forward.21} parent=5 // pred_check
      _
    $region10: #{usr_forward.21} parent=5 // pred_check_branch
      %143 = sbr.rel (%p140) target = $region12
    $region11: #{usr_forward.21} parent=5 // pred_region
      %s144 = ssub.s32 %s10, 1
      // Predicated region
      $region13: #{usr_forward.21} parent=11 // pred_check
        %p145 = pneg %p57
      $region14: #{usr_forward.21} parent=11 // pred_check_branch
        %147 = sbr.rel (%p145) target = $region16
      $region15: #{usr_forward.21} parent=11 // pred_region
        _
      $region16: #{usr_forward.21} parent=11 // pred_fallthru
        _
      // Predicated region
      $region17: #{usr_forward.21} parent=11 // pred_check
        %p148 = pneg %p78
      $region18: #{usr_forward.21} parent=11 // pred_check_branch
        %150 = sbr.rel (%p148) target = $region20
      $region19: #{usr_forward.21} parent=11 // pred_region
        _
      $region20: #{usr_forward.21} parent=11 // pred_fallthru
        _
    $region12: #{usr_forward.21} parent=5 // pred_fallthru
      _
    %p151 = scmp.lt.s32.totalorder %s10, 2
    // Predicated region
    $region21: #{usr_forward.21} parent=5 // pred_check
      %p152 = pneg %p151
    $region22: #{usr_forward.21} parent=5 // pred_check_branch
      %154 = sbr.rel (%p152) target = $region24
    $region23: #{usr_forward.21} parent=5 // pred_region
      // Predicated region
      $region25: #{usr_forward.21} parent=23 // pred_check
        %p155 = pneg %p30
      $region26: #{usr_forward.21} parent=23 // pred_check_branch
        %157 = sbr.rel (%p155) target = $region28
      $region27: #{usr_forward.21} parent=23 // pred_region
        %p158 = scmp.lt.s32.totalorder %s10, 1
        %s159 = scalar_select %p158, %s10, 1
        %s160 = smul.addr %s159, 9
        %s161 = smul.addr %s160, 8
        %s162 = scalar_lea.vmem %s0, %s161
      $region28: #{usr_forward.21} parent=23 // pred_fallthru
        _
      // Predicated region
      $region29: #{usr_forward.21} parent=23 // pred_check
        %p163 = pneg %p98
      $region30: #{usr_forward.21} parent=23 // pred_check_branch
        %165 = sbr.rel (%p163) target = $region32
      $region31: #{usr_forward.21} parent=23 // pred_region
        %p166 = scmp.lt.s32.totalorder %s10, 1
        %s167 = scalar_select %p166, %s10, 1
        %s168 = smul.addr %s167, 2
        %s169 = smul.addr %s168, 8
        %s170 = scalar_lea.vmem %s3, %s169
      $region32: #{usr_forward.21} parent=23 // pred_fallthru
        _
    $region24: #{usr_forward.21} parent=5 // pred_fallthru
      _
    %p171 = scmp.le.s32.totalorder 1, %s10
    %p172 = scmp.lt.s32.totalorder %s10, 3
    %p173 = pnand %p171, %p172
    %p174 = pneg %p173
    // Predicated region
    $region33: #{usr_forward.21} parent=5 // pred_check
      _
    $region34: #{usr_forward.21} parent=5 // pred_check_branch
      %176 = sbr.rel (%p173) target = $region36
    $region35: #{usr_forward.21} parent=5 // pred_region
      %s177 = ssub.s32 %s10, 1
      %p178 = scmp.lt.s32.totalorder %s15, 1
      %s179 = scalar_select %p178, %s15, 1
      %s180 = smul.addr %s179, 9
      %s181 = smul.addr %s180, 8
      %s182 = scalar_lea.vmem %s0, %s181
      %p183 = pneg %p36
      %p184 = pneg %p33
      %p185 = pneg %p57
      %p186 = pneg %p54
      %p187 = pneg %p78
      %p188 = pneg %p75
      %p189 = scmp.lt.s32.totalorder %s15, 1
      %s190 = scalar_select %p189, %s15, 1
      %s191 = smul.addr %s190, 2
      %s192 = smul.addr %s191, 8
      %s193 = scalar_lea.vmem %s3, %s192
      %p194 = pneg %p104
      %p195 = pneg %p101
      %p196 = pneg %p130
      %p197 = pneg %p127
      %p198 = scmp.lt.s32.totalorder %s15, 1
      %s199 = scalar_select %p198, %s15, 1
      %s200 = smul.addr %s199, 2
      %s201 = smul.addr %s200, 8
      %s202 = scalar_lea.vmem %s4, %s201
      %p203 = scmp.lt.s32.totalorder %s15, 1
      %s204 = scalar_select %p203, %s15, 1
      %s205 = smul.addr %s204, 9
      %s206 = smul.addr %s205, 8
      %s207 = scalar_lea.vmem %s0, %s206
      %p208 = scmp.lt.s32.totalorder %s15, 1
      %s209 = scalar_select %p208, %s15, 1
      %s210 = smul.addr %s209, 2
      %s211 = smul.addr %s210, 8
      %s212 = scalar_lea.vmem %s3, %s211
      %p213 = scmp.lt.s32.totalorder %s15, 1
      %s214 = scalar_select %p213, %s15, 1
      %s215 = smul.addr %s214, 2
      %s216 = smul.addr %s215, 8
      %s217 = scalar_lea.vmem %s4, %s216
      %v218 = vld [vmem:[%s207] sm:$0xff]
      %v219 = vld [vmem:[%s207 + $0x8] sm:$0xff]
      %v220 = vld [vmem:[%s207 + $0x10] sm:$0xff]
      %v221 = vld [vmem:[%s207 + $0x18] sm:$0xff]
      %v222 = vld [vmem:[%s207 + $0x20] sm:$0xff]
      %v223 = vld [vmem:[%s207 + $0x28] sm:$0xff]
      %v224 = vld [vmem:[%s1] sm:$0xff]
      %v225 = vld [vmem:[%s1 + $0x8] sm:$0xff]
      %v226 = vld [vmem:[%s1 + $0x10] sm:$0xff]
      %v227 = vld [vmem:[%s1 + $0x18] sm:$0xff]
      %v228 = vld [vmem:[%s1 + $0x20] sm:$0xff]
      %v229 = vld [vmem:[%s1 + $0x28] sm:$0xff]
      %v230 = vld [vmem:[%s1 + $0x30] sm:$0xff]
      %v231 = vld [vmem:[%s1 + $0x38] sm:$0xff]
      %v232 = vld [vmem:[%s1 + $0x40] sm:$0xff]
      %v233 = vld [vmem:[%s1 + $0x48] sm:$0xff]
      %v234 = vld [vmem:[%s1 + $0x50] sm:$0xff]
      %v235 = vld [vmem:[%s1 + $0x58] sm:$0xff]
      %v236 = vld [vmem:[%s1 + $0x60] sm:$0xff]
      %v237 = vld [vmem:[%s1 + $0x68] sm:$0xff]
      %v238 = vld [vmem:[%s1 + $0x70] sm:$0xff]
      %v239 = vld [vmem:[%s1 + $0x78] sm:$0xff]
      %v240 = vld [vmem:[%s1 + $0x80] sm:$0xff]
      %v241 = vld [vmem:[%s1 + $0x88] sm:$0xff]
      %v242 = vld [vmem:[%s1 + $0x90] sm:$0xff]
      %v243 = vld [vmem:[%s1 + $0x98] sm:$0xff]
      %v244 = vld [vmem:[%s1 + $0xa0] sm:$0xff]
      %v245 = vld [vmem:[%s1 + $0xa8] sm:$0xff]
      %v246 = vld [vmem:[%s1 + $0xb0] sm:$0xff]
      %v247 = vld [vmem:[%s1 + $0xb8] sm:$0xff]
      %v248 = vld [vmem:[%s1 + $0xc0] sm:$0xff]
      %v249 = vld [vmem:[%s1 + $0xc8] sm:$0xff]
      %v250 = vld [vmem:[%s1 + $0xd0] sm:$0xff]
      %v251 = vld [vmem:[%s1 + $0xd8] sm:$0xff]
      %v252 = vld [vmem:[%s1 + $0xe0] sm:$0xff]
      %v253 = vld [vmem:[%s1 + $0xe8] sm:$0xff]
      %v254 = vld [vmem:[%s1 + $0xf0] sm:$0xff]
      %v255 = vld [vmem:[%s1 + $0xf8] sm:$0xff]
      %v256 = vld [vmem:[%s1 + $0x100] sm:$0xff]
      %v257 = vld [vmem:[%s1 + $0x108] sm:$0xff]
      %v258 = vld [vmem:[%s1 + $0x110] sm:$0xff]
      %v259 = vld [vmem:[%s1 + $0x118] sm:$0xff]
      %v260 = vld [vmem:[%s207] sm:$0xfe]
      %v261 = vld [vmem:[%s207 + $0x8] sm:$0xfe]
      %v262 = vld [vmem:[%s207 + $0x10] sm:$0xfe]
      %v263 = vld [vmem:[%s207 + $0x30] sm:$0x1]
      %v264 = vld [vmem:[%s207 + $0x38] sm:$0x1]
      %v265 = vld [vmem:[%s207 + $0x40] sm:$0x1]
      %s266 = scalar_lea.vmem %s1, 288
      %v267 = vld [vmem:[%s266] sm:$0xff]
      %v268 = vld [vmem:[%s266 + $0x8] sm:$0xff]
      %v269 = vld [vmem:[%s266 + $0x10] sm:$0xff]
      %v270 = vld [vmem:[%s266 + $0x18] sm:$0xff]
      %v271 = vld [vmem:[%s266 + $0x20] sm:$0xff]
      %v272 = vld [vmem:[%s266 + $0x28] sm:$0xff]
      %v273 = vld [vmem:[%s266 + $0x30] sm:$0xff]
      %v274 = vld [vmem:[%s266 + $0x38] sm:$0xff]
      %v275 = vld [vmem:[%s266 + $0x40] sm:$0xff]
      %v276 = vld [vmem:[%s266 + $0x48] sm:$0xff]
      %v277 = vld [vmem:[%s266 + $0x50] sm:$0xff]
      %v278 = vld [vmem:[%s266 + $0x58] sm:$0xff]
      %v279 = vld [vmem:[%s266 + $0x60] sm:$0xff]
      %v280 = vld [vmem:[%s266 + $0x68] sm:$0xff]
      %v281 = vld [vmem:[%s266 + $0x70] sm:$0xff]
      %v282 = vld [vmem:[%s266 + $0x78] sm:$0xff]
      %v283 = vld [vmem:[%s266 + $0x80] sm:$0xff]
      %v284 = vld [vmem:[%s266 + $0x88] sm:$0xff]
      %v285 = vld [vmem:[%s266 + $0x90] sm:$0xff]
      %v286 = vld [vmem:[%s266 + $0x98] sm:$0xff]
      %v287 = vld [vmem:[%s266 + $0xa0] sm:$0xff]
      %v288 = vld [vmem:[%s266 + $0xa8] sm:$0xff]
      %v289 = vld [vmem:[%s266 + $0xb0] sm:$0xff]
      %v290 = vld [vmem:[%s266 + $0xb8] sm:$0xff]
      %v291 = vld [vmem:[%s266 + $0xc0] sm:$0xff]
      %v292 = vld [vmem:[%s266 + $0xc8] sm:$0xff]
      %v293 = vld [vmem:[%s266 + $0xd0] sm:$0xff]
      %v294 = vld [vmem:[%s266 + $0xd8] sm:$0xff]
      %v295 = vld [vmem:[%s266 + $0xe0] sm:$0xff]
      %v296 = vld [vmem:[%s266 + $0xe8] sm:$0xff]
      %v297 = vld [vmem:[%s266 + $0xf0] sm:$0xff]
      %v298 = vld [vmem:[%s266 + $0xf8] sm:$0xff]
      %v299 = vld [vmem:[%s266 + $0x100] sm:$0xff]
      %v300 = vld [vmem:[%s266 + $0x108] sm:$0xff]
      %v301 = vld [vmem:[%s266 + $0x110] sm:$0xff]
      %v302 = vld [vmem:[%s266 + $0x118] sm:$0xff]
      %vm312 = vcmask 1046528
      %v313 = vrot.slane %v260, 1
      %v314 = vrot.slane %v221, 1
      %v315 = vsel %vm312, %v313, %v314
      %v316 = vrot.slane %v261, 1
      %v317 = vrot.slane %v222, 1
      %v318 = vsel %vm312, %v316, %v317
      %v319 = vrot.slane %v262, 1
      %v320 = vrot.slane %v223, 1
      %v321 = vsel %vm312, %v319, %v320
      %v322 = vrot.slane %v263, 1
      %v323 = vsel %vm312, %v314, %v322
      %v324 = vrot.slane %v264, 1
      %v325 = vsel %vm312, %v317, %v324
      %v326 = vrot.slane %v265, 1
      %v327 = vsel %vm312, %v320, %v326
      %vm332 = vcmask 261120
      %v333 = vsel %vm332, %v321, 0
      %v335 = vsel %vm332, %v327, 0
      %337 = vmatpush.msra.mxu0 %v282
      %338 = vmatpush.msra.mxu0 %v281
      %339 = vmatpush.msra.mxu0 %v280
      %340 = vmatpush.msra.mxu0 %v279
      %341 = vmatpush.msra.mxu0 %v278
      %342 = vmatpush.msra.mxu0 %v277
      %343 = vmatpush.msra.mxu0 %v276
      %344 = vmatpush.msra.mxu0 %v275
      %345 = vmatpush.msra.mxu0 %v274
      %346 = vmatpush.msra.mxu0 %v273
      %347 = vmatpush.msra.mxu0 %v272
      %348 = vmatpush.msra.mxu0 %v271
      %349 = vmatpush.msra.mxu0 %v270
      %350 = vmatpush.msra.mxu0 %v269
      %351 = vmatpush.msra.mxu0 %v268
      %352 = vmatpush.msra.mxu0 %v267
      %353 = vmatmul.f32.gmra.mxu0 %v315
      %v354 = vpop.f32.mrf.mxu0
      %v355 = vadd.f32 0.0, %v354
      %356 = vmatmul.f32.gmra.mxu0 %v323
      %v357 = vpop.f32.mrf.mxu0
      %v358 = vadd.f32 0.0, %v357
      %359 = vdwg.mxu0
      %360 = vmatpush.msra.mxu0 %v298
      %361 = vmatpush.msra.mxu0 %v297
      %362 = vmatpush.msra.mxu0 %v296
      %363 = vmatpush.msra.mxu0 %v295
      %364 = vmatpush.msra.mxu0 %v294
      %365 = vmatpush.msra.mxu0 %v293
      %366 = vmatpush.msra.mxu0 %v292
      %367 = vmatpush.msra.mxu0 %v291
      %368 = vmatpush.msra.mxu0 %v290
      %369 = vmatpush.msra.mxu0 %v289
      %370 = vmatpush.msra.mxu0 %v288
      %371 = vmatpush.msra.mxu0 %v287
      %372 = vmatpush.msra.mxu0 %v286
      %373 = vmatpush.msra.mxu0 %v285
      %374 = vmatpush.msra.mxu0 %v284
      %375 = vmatpush.msra.mxu0 %v283
      %376 = vmatmul.f32.gmra.mxu0 %v318
      %v377 = vpop.f32.mrf.mxu0
      %v378 = vadd.f32 %v355, %v377
      %379 = vmatmul.f32.gmra.mxu0 %v325
      %v380 = vpop.f32.mrf.mxu0
      %v381 = vadd.f32 %v358, %v380
      %382 = vdwg.mxu0
      %383 = vmatpush.msra.mxu0 0.0
      %384 = vmatpush.msra.mxu0 0.0
      %385 = vmatpush.msra.mxu0 0.0
      %386 = vmatpush.msra.mxu0 0.0
      %387 = vmatpush.msra.mxu0 0.0
      %388 = vmatpush.msra.mxu0 0.0
      %389 = vmatpush.msra.mxu0 0.0
      %390 = vmatpush.msra.mxu0 0.0
      %391 = vmatpush.msra.mxu0 0.0
      %392 = vmatpush.msra.mxu0 0.0
      %393 = vmatpush.msra.mxu0 0.0
      %394 = vmatpush.msra.mxu0 0.0
      %395 = vmatpush.msra.mxu0 %v302
      %396 = vmatpush.msra.mxu0 %v301
      %397 = vmatpush.msra.mxu0 %v300
      %398 = vmatpush.msra.mxu0 %v299
      %399 = vmatmul.f32.gmra.mxu0 %v333
      %v400 = vpop.f32.mrf.mxu0
      %v401 = vadd.f32 %v378, %v400
      %402 = vmatmul.f32.gmra.mxu0 %v335
      %v403 = vpop.f32.mrf.mxu0
      %v404 = vadd.f32 %v381, %v403
      %405 = vdwg.mxu0
      %v407 = vsel %vm332, %v220, 0
      %v409 = vsel %vm332, %v223, 0
      %411 = vmatpush.msra.mxu0 %v239
      %412 = vmatpush.msra.mxu0 %v238
      %413 = vmatpush.msra.mxu0 %v237
      %414 = vmatpush.msra.mxu0 %v236
      %415 = vmatpush.msra.mxu0 %v235
      %416 = vmatpush.msra.mxu0 %v234
      %417 = vmatpush.msra.mxu0 %v233
      %418 = vmatpush.msra.mxu0 %v232
      %419 = vmatpush.msra.mxu0 %v231
      %420 = vmatpush.msra.mxu0 %v230
      %421 = vmatpush.msra.mxu0 %v229
      %422 = vmatpush.msra.mxu0 %v228
      %423 = vmatpush.msra.mxu0 %v227
      %424 = vmatpush.msra.mxu0 %v226
      %425 = vmatpush.msra.mxu0 %v225
      %426 = vmatpush.msra.mxu0 %v224
      %427 = vmatmul.f32.gmra.mxu0 %v218
      %v428 = vpop.f32.mrf.mxu0
      %v429 = vadd.f32 %v401, %v428
      %430 = vmatmul.f32.gmra.mxu0 %v221
      %v431 = vpop.f32.mrf.mxu0
      %v432 = vadd.f32 %v404, %v431
      %433 = vdwg.mxu0
      %434 = vmatpush.msra.mxu0 %v255
      %435 = vmatpush.msra.mxu0 %v254
      %436 = vmatpush.msra.mxu0 %v253
      %437 = vmatpush.msra.mxu0 %v252
      %438 = vmatpush.msra.mxu0 %v251
      %439 = vmatpush.msra.mxu0 %v250
      %440 = vmatpush.msra.mxu0 %v249
      %441 = vmatpush.msra.mxu0 %v248
      %442 = vmatpush.msra.mxu0 %v247
      %443 = vmatpush.msra.mxu0 %v246
      %444 = vmatpush.msra.mxu0 %v245
      %445 = vmatpush.msra.mxu0 %v244
      %446 = vmatpush.msra.mxu0 %v243
      %447 = vmatpush.msra.mxu0 %v242
      %448 = vmatpush.msra.mxu0 %v241
      %449 = vmatpush.msra.mxu0 %v240
      %450 = vmatmul.f32.gmra.mxu0 %v219
      %v451 = vpop.f32.mrf.mxu0
      %v452 = vadd.f32 %v429, %v451
      %453 = vmatmul.f32.gmra.mxu0 %v222
      %v454 = vpop.f32.mrf.mxu0
      %v455 = vadd.f32 %v432, %v454
      %456 = vdwg.mxu0
      %457 = vmatpush.msra.mxu0 0.0
      %458 = vmatpush.msra.mxu0 0.0
      %459 = vmatpush.msra.mxu0 0.0
      %460 = vmatpush.msra.mxu0 0.0
      %461 = vmatpush.msra.mxu0 0.0
      %462 = vmatpush.msra.mxu0 0.0
      %463 = vmatpush.msra.mxu0 0.0
      %464 = vmatpush.msra.mxu0 0.0
      %465 = vmatpush.msra.mxu0 0.0
      %466 = vmatpush.msra.mxu0 0.0
      %467 = vmatpush.msra.mxu0 0.0
      %468 = vmatpush.msra.mxu0 0.0
      %469 = vmatpush.msra.mxu0 %v259
      %470 = vmatpush.msra.mxu0 %v258
      %471 = vmatpush.msra.mxu0 %v257
      %472 = vmatpush.msra.mxu0 %v256
      %473 = vmatmul.f32.gmra.mxu0 %v407
      %v474 = vpop.f32.mrf.mxu0
      %v475 = vadd.f32 %v452, %v474
      %476 = vmatmul.f32.gmra.mxu0 %v409
      %v477 = vpop.f32.mrf.mxu0
      %v478 = vadd.f32 %v455, %v477
      %479 = vdwg.mxu0
      %v480 = vld [vmem:[%s207] sm:$0xfc]
      %v481 = vld [vmem:[%s207 + $0x8] sm:$0xfc]
      %v482 = vld [vmem:[%s207 + $0x10] sm:$0xfc]
      %v483 = vld [vmem:[%s207 + $0x30] sm:$0x3]
      %v484 = vld [vmem:[%s207 + $0x38] sm:$0x3]
      %v485 = vld [vmem:[%s207 + $0x40] sm:$0x3]
      %s486 = scalar_lea.vmem %s1, 576
      %v487 = vld [vmem:[%s486] sm:$0xff]
      %v488 = vld [vmem:[%s486 + $0x8] sm:$0xff]
      %v489 = vld [vmem:[%s486 + $0x10] sm:$0xff]
      %v490 = vld [vmem:[%s486 + $0x18] sm:$0xff]
      %v491 = vld [vmem:[%s486 + $0x20] sm:$0xff]
      %v492 = vld [vmem:[%s486 + $0x28] sm:$0xff]
      %v493 = vld [vmem:[%s486 + $0x30] sm:$0xff]
      %v494 = vld [vmem:[%s486 + $0x38] sm:$0xff]
      %v495 = vld [vmem:[%s486 + $0x40] sm:$0xff]
      %v496 = vld [vmem:[%s486 + $0x48] sm:$0xff]
      %v497 = vld [vmem:[%s486 + $0x50] sm:$0xff]
      %v498 = vld [vmem:[%s486 + $0x58] sm:$0xff]
      %v499 = vld [vmem:[%s486 + $0x60] sm:$0xff]
      %v500 = vld [vmem:[%s486 + $0x68] sm:$0xff]
      %v501 = vld [vmem:[%s486 + $0x70] sm:$0xff]
      %v502 = vld [vmem:[%s486 + $0x78] sm:$0xff]
      %v503 = vld [vmem:[%s486 + $0x80] sm:$0xff]
      %v504 = vld [vmem:[%s486 + $0x88] sm:$0xff]
      %v505 = vld [vmem:[%s486 + $0x90] sm:$0xff]
      %v506 = vld [vmem:[%s486 + $0x98] sm:$0xff]
      %v507 = vld [vmem:[%s486 + $0xa0] sm:$0xff]
      %v508 = vld [vmem:[%s486 + $0xa8] sm:$0xff]
      %v509 = vld [vmem:[%s486 + $0xb0] sm:$0xff]
      %v510 = vld [vmem:[%s486 + $0xb8] sm:$0xff]
      %v511 = vld [vmem:[%s486 + $0xc0] sm:$0xff]
      %v512 = vld [vmem:[%s486 + $0xc8] sm:$0xff]
      %v513 = vld [vmem:[%s486 + $0xd0] sm:$0xff]
      %v514 = vld [vmem:[%s486 + $0xd8] sm:$0xff]
      %v515 = vld [vmem:[%s486 + $0xe0] sm:$0xff]
      %v516 = vld [vmem:[%s486 + $0xe8] sm:$0xff]
      %v517 = vld [vmem:[%s486 + $0xf0] sm:$0xff]
      %v518 = vld [vmem:[%s486 + $0xf8] sm:$0xff]
      %v519 = vld [vmem:[%s486 + $0x100] sm:$0xff]
      %v520 = vld [vmem:[%s486 + $0x108] sm:$0xff]
      %v521 = vld [vmem:[%s486 + $0x110] sm:$0xff]
      %v522 = vld [vmem:[%s486 + $0x118] sm:$0xff]
      %vm529 = vcmask 1045504
      %v530 = vrot.slane %v480, 2
      %v531 = vrot.slane %v221, 2
      %v532 = vsel %vm529, %v530, %v531
      %v533 = vrot.slane %v481, 2
      %v534 = vrot.slane %v222, 2
      %v535 = vsel %vm529, %v533, %v534
      %v536 = vrot.slane %v482, 2
      %v537 = vrot.slane %v223, 2
      %v538 = vsel %vm529, %v536, %v537
      %v539 = vrot.slane %v483, 2
      %v540 = vsel %vm529, %v531, %v539
      %v541 = vrot.slane %v484, 2
      %v542 = vsel %vm529, %v534, %v541
      %v543 = vrot.slane %v485, 2
      %v544 = vsel %vm529, %v537, %v543
      %v549 = vsel %vm332, %v538, 0
      %v551 = vsel %vm332, %v544, 0
      %553 = vmatpush.msra.mxu0 %v502
      %554 = vmatpush.msra.mxu0 %v501
      %555 = vmatpush.msra.mxu0 %v500
      %556 = vmatpush.msra.mxu0 %v499
      %557 = vmatpush.msra.mxu0 %v498
      %558 = vmatpush.msra.mxu0 %v497
      %559 = vmatpush.msra.mxu0 %v496
      %560 = vmatpush.msra.mxu0 %v495
      %561 = vmatpush.msra.mxu0 %v494
      %562 = vmatpush.msra.mxu0 %v493
      %563 = vmatpush.msra.mxu0 %v492
      %564 = vmatpush.msra.mxu0 %v491
      %565 = vmatpush.msra.mxu0 %v490
      %566 = vmatpush.msra.mxu0 %v489
      %567 = vmatpush.msra.mxu0 %v488
      %568 = vmatpush.msra.mxu0 %v487
      %569 = vmatmul.f32.gmra.mxu0 %v532
      %v570 = vpop.f32.mrf.mxu0
      %v571 = vadd.f32 0.0, %v570
      %572 = vmatmul.f32.gmra.mxu0 %v540
      %v573 = vpop.f32.mrf.mxu0
      %v574 = vadd.f32 0.0, %v573
      %575 = vdwg.mxu0
      %576 = vmatpush.msra.mxu0 %v518
      %577 = vmatpush.msra.mxu0 %v517
      %578 = vmatpush.msra.mxu0 %v516
      %579 = vmatpush.msra.mxu0 %v515
      %580 = vmatpush.msra.mxu0 %v514
      %581 = vmatpush.msra.mxu0 %v513
      %582 = vmatpush.msra.mxu0 %v512
      %583 = vmatpush.msra.mxu0 %v511
      %584 = vmatpush.msra.mxu0 %v510
      %585 = vmatpush.msra.mxu0 %v509
      %586 = vmatpush.msra.mxu0 %v508
      %587 = vmatpush.msra.mxu0 %v507
      %588 = vmatpush.msra.mxu0 %v506
      %589 = vmatpush.msra.mxu0 %v505
      %590 = vmatpush.msra.mxu0 %v504
      %591 = vmatpush.msra.mxu0 %v503
      %592 = vmatmul.f32.gmra.mxu0 %v535
      %v593 = vpop.f32.mrf.mxu0
      %v594 = vadd.f32 %v571, %v593
      %595 = vmatmul.f32.gmra.mxu0 %v542
      %v596 = vpop.f32.mrf.mxu0
      %v597 = vadd.f32 %v574, %v596
      %598 = vdwg.mxu0
      %599 = vmatpush.msra.mxu0 0.0
      %600 = vmatpush.msra.mxu0 0.0
      %601 = vmatpush.msra.mxu0 0.0
      %602 = vmatpush.msra.mxu0 0.0
      %603 = vmatpush.msra.mxu0 0.0
      %604 = vmatpush.msra.mxu0 0.0
      %605 = vmatpush.msra.mxu0 0.0
      %606 = vmatpush.msra.mxu0 0.0
      %607 = vmatpush.msra.mxu0 0.0
      %608 = vmatpush.msra.mxu0 0.0
      %609 = vmatpush.msra.mxu0 0.0
      %610 = vmatpush.msra.mxu0 0.0
      %611 = vmatpush.msra.mxu0 %v522
      %612 = vmatpush.msra.mxu0 %v521
      %613 = vmatpush.msra.mxu0 %v520
      %614 = vmatpush.msra.mxu0 %v519
      %615 = vmatmul.f32.gmra.mxu0 %v549
      %v616 = vpop.f32.mrf.mxu0
      %v617 = vadd.f32 %v594, %v616
      %618 = vmatmul.f32.gmra.mxu0 %v551
      %v619 = vpop.f32.mrf.mxu0
      %v620 = vadd.f32 %v597, %v619
      %621 = vdwg.mxu0
      %v622 = vadd.f32 %v475, %v617
      %v623 = vadd.f32 %v478, %v620
      %v624 = vld [vmem:[%s2] sm:$0x1]
      %v626 = vperm.slane %v624, 0
      %v628 = vadd.f32 %v622, %v626
      %v629 = vadd.f32 %v623, %v626
      %v630 = vld [vmem:[%s212] sm:$0xff]
      %v631 = vld [vmem:[%s212 + $0x8] sm:$0xff]
      %v632 = vadd.f32 %v628, %v630
      %v633 = vadd.f32 %v629, %v631
      %vm634 = vcmask 392192
      %635 = vst.msk [vmem:[%s217] sm:$0xff] %vm634, %v632
      %636 = vst.msk [vmem:[%s217 + $0x8] sm:$0xff] %vm634, %v633
      %p637 = scmp.lt.s32.totalorder %s15, 1
      %s638 = scalar_select %p637, %s15, 1
      %s639 = smul.addr %s638, 2
      %s640 = smul.addr %s639, 8
      %s641 = scalar_lea.vmem %s4, %s640
      // Predicated region
      $region37: #{usr_forward.21} parent=35 // pred_check
        %p642 = pneg %p127
      $region38: #{usr_forward.21} parent=35 // pred_check_branch
        %644 = sbr.rel (%p642) target = $region40
      $region39: #{usr_forward.21} parent=35 // pred_region
        _
      $region40: #{usr_forward.21} parent=35 // pred_fallthru
        _
    $region36: #{usr_forward.21} parent=5 // pred_fallthru
      _
    %p645 = scmp.le.s32.totalorder 2, %s10
    // Predicated region
    $region41: #{usr_forward.21} parent=5 // pred_check
      %p646 = pneg %p645
    $region42: #{usr_forward.21} parent=5 // pred_check_branch
      %648 = sbr.rel (%p646) target = $region44
    $region43: #{usr_forward.21} parent=5 // pred_region
      %s649 = ssub.s32 %s10, 2
      // Predicated region
      $region45: #{usr_forward.21} parent=43 // pred_check
        %p650 = pneg %p133
      $region46: #{usr_forward.21} parent=43 // pred_check_branch
        %652 = sbr.rel (%p650) target = $region48
      $region47: #{usr_forward.21} parent=43 // pred_region
        %p653 = scmp.lt.s32.totalorder %s16, 1
        %s654 = scalar_select %p653, %s16, 1
        %s655 = smul.addr %s654, 2
        %s656 = smul.addr %s655, 8
        %s657 = scalar_lea.vmem %s4, %s656
      $region48: #{usr_forward.21} parent=43 // pred_fallthru
        _
    $region44: #{usr_forward.21} parent=5 // pred_fallthru
      _
  $region6: #{usr_forward.21} parent=0 // loop_footer
    %s14 = sadd.s32 1, %s10
  $region7: #{usr_forward.21} parent=0 // loop_footer_branch
    %9 = sbr.rel target = $region3
  $region8: #{usr_forward.21} parent=0 // loop_exit
    _

</llo_original>
